<compile_context>
chip_gen: v7x
topology: tpu7x:2x2x1
jax: 0.10.0
libtpu: 0.0.40
codegen_flags: <defaults>
</compile_context>

<pallas_src>
import functools

import jax
import jax.numpy as jnp
from jax.experimental import pallas as pl
from jax.experimental.pallas import tpu as pltpu


# ---------------------------------------------------------------------------
# In-kernel helpers (operate on VMEM scratch refs / values)
# ---------------------------------------------------------------------------
def _reflect_pad_into(pad_ref, x_hwc, *, p, H, W):
    """Write x_hwc (H, W, C) into pad_ref (H+2p, W+2p, C) with reflect padding."""
    pad_ref[p:p + H, p:p + W, :] = x_hwc
    # mirror rows (top / bottom), center columns only
    for k in range(1, p + 1):
        pad_ref[p - k:p - k + 1, p:p + W, :] = pad_ref[p + k:p + k + 1, p:p + W, :]
        pad_ref[p + H - 1 + k:p + H + k, p:p + W, :] = (
            pad_ref[p + H - 1 - k:p + H - k, p:p + W, :])
    # mirror columns (left / right), all rows (also fills corners)
    for k in range(1, p + 1):
        pad_ref[:, p - k:p - k + 1, :] = pad_ref[:, p + k:p + k + 1, :]
        pad_ref[:, p + W - 1 + k:p + W + k, :] = (
            pad_ref[:, p + W - 1 - k:p + W - k, :])


def _im2col_into(col_ref, pad_ref, *, H, W, ks, cin):
    """col_ref[y*W+x, (dy*ks+dx)*cin + c] = pad_ref[y+dy, x+dx, c] (conv1 only)."""
    t = 0
    for dy in range(ks):
        for dx in range(ks):
            col_ref[:, t * cin:(t + 1) * cin] = (
                pad_ref[dy:dy + H, dx:dx + W, :].reshape(H * W, cin))
            t += 1


def _tap_groups(pad_ref, *, H, W, ks, cin, kmax=256):
    """Yield (t0, g, slab) with slab (H*W, g*cin): taps t0..t0+g-1 concatenated
    along K in (dy, dx, cin) order (matches row-major HWIO weight flattening).
    Group size is chosen so each matmul has K up to 256 (full v6e/v7x MXU depth,
    harmless 2-pass on v5e)."""
    HW = H * W
    taps = [(dy, dx) for dy in range(ks) for dx in range(ks)]
    group = max(1, kmax // cin)
    t = 0
    while t < len(taps):
        g = min(group, len(taps) - t)
        parts = [pad_ref[dy:dy + H, dx:dx + W, :].reshape(HW, cin)
                 for dy, dx in taps[t:t + g]]
        slab = parts[0] if g == 1 else jnp.concatenate(parts, axis=1)
        yield t, g, slab
        t += g


# ---------------------------------------------------------------------------
# Fused kernel: one batch element per grid step
# ---------------------------------------------------------------------------
def _fused_kernel(x_ref, ref_ref, w1_ref, w2_ref, w3_ref, o_ref,
                  pad1, col1, pad2, pad3, acc2,
                  *, H, W, C, ks, nh):
    p = ks // 2
    HW = H * W
    nh2 = nh // 2
    f32 = jnp.float32
    bf16 = jnp.bfloat16

    # ---- InstanceNorm2d(ref), affine=False: per-channel over spatial,
    #      biased variance, eps=1e-5.  Block is lane-dense (C, H*W).
    ref = ref_ref[0].astype(f32)                                   # (C, HW)
    rmean = jnp.mean(ref, axis=1, keepdims=True)
    rvar = jnp.mean((ref - rmean) ** 2, axis=1, keepdims=True)
    ref_n = (ref - rmean) * jax.lax.rsqrt(rvar + 1e-5)             # (C, HW)

    # ---- conv1 (reflect, no bias) + LeakyReLU(0.1): tiny K = ks*ks*C im2col
    #      matmul kept in f32 (narrow-lane pad1/col1 writes are negligible here).
    _reflect_pad_into(pad1, ref_n.T.reshape(H, W, C), p=p, H=H, W=W)
    _im2col_into(col1, pad1, H=H, W=W, ks=ks, cin=C)
    h1 = jnp.dot(col1[...], w1_ref[...], preferred_element_type=f32)   # (HW, nh)
    h1 = jnp.where(h1 >= 0, h1, 0.1 * h1)

    # ---- conv2 + LeakyReLU(0.1): per-tap-pair accumulating matmuls (no im2col).
    #      Slabs are cast to bf16 right before the dot; accumulation is f32 in a
    #      VMEM scratch (MRB-accumulate path on v7x).
    _reflect_pad_into(pad2, h1.reshape(H, W, nh), p=p, H=H, W=W)
    for t, g, slab in _tap_groups(pad2, H=H, W=W, ks=ks, cin=nh):
        part = jnp.dot(slab.astype(bf16), w2_ref[t * nh:(t + g) * nh, :],
                       preferred_element_type=f32)                 # (HW, nh2)
        if t == 0:
            acc2[...] = part
        else:
            acc2[...] += part
    h2 = acc2[...]
    h2 = jnp.where(h2 >= 0, h2, 0.1 * h2)                          # f32 LeakyReLU

    # ---- conv3 (no activation), computed directly in (C, HW) orientation:
    #      off(C, HW) += w3t(C, g*nh2) x slab(HW, g*nh2) contracting both minor
    #      dims (standard QK^T MXU pattern) -> no off.T, lane-dense result.
    _reflect_pad_into(pad3, h2.reshape(H, W, nh2), p=p, H=H, W=W)
    off = jnp.zeros((C, HW), f32)
    for t, g, slab in _tap_groups(pad3, H=H, W=W, ks=ks, cin=nh2):
        off = off + jax.lax.dot_general(
            w3_ref[:, t * nh2:(t + g) * nh2], slab.astype(bf16),
            dimension_numbers=(((1,), (1,)), ((), ())),
            preferred_element_type=f32)                            # (C, HW)

    # ---- combine: out = x + std(x, dims=(H,W), unbiased) * offset
    x = x_ref[0].astype(f32)                                       # (C, HW)
    xmean = jnp.mean(x, axis=1, keepdims=True)
    xvar = jnp.sum((x - xmean) ** 2, axis=1, keepdims=True) / max(HW - 1, 1)
    sigma = jnp.sqrt(xvar)                                         # (C, 1)
    o_ref[0] = (x + sigma * off).astype(o_ref.dtype)               # lane-dense store


# ---------------------------------------------------------------------------
# Module: parameter init + forward
# ---------------------------------------------------------------------------
def init_spatial_offset_block(key, ch_in, ch_ref, ks):
    # PyTorch module feeds InstanceNorm(ref) [ch_ref channels] into a conv that
    # expects ch_in channels, so ch_in == ch_ref is required.
    assert ch_in == ch_ref, "SpatialOffsetBlock forward requires ch_in == ch_ref"
    assert ks % 2 == 1, "reflect-padding path assumes odd kernel size"
    nhidden = 128
    k1, k2, k3 = jax.random.split(key, 3)

    def init_w(k, ci, co):
        fan_in = ci * ks * ks
        bound = (1.0 / fan_in) ** 0.5
        return jax.random.uniform(k, (ks, ks, ci, co), jnp.float32, -bound, bound)

    return {
        "w1": init_w(k1, ch_in, nhidden),         # Conv2d(ch_in, 128, ks)  HWIO
        "w2": init_w(k2, nhidden, nhidden // 2),  # Conv2d(128, 64, ks)     HWIO
        "w3": init_w(k3, nhidden // 2, ch_in),    # Conv2d(64, ch_in, ks)   HWIO
    }


def _vmem_limit_bytes(scratch_bytes):
    """Generation-aware VMEM request: scale with actual need, capped at ~75% of
    the queried per-core VMEM (v7x: 64 MiB -> 48 MiB, v5e/v6e: 128 -> 96 MiB)."""
    cap = 64 * 1024 * 1024          # conservative fallback = smallest per-core VMEM
    try:
        cap = int(pltpu.get_tpu_info().vmem_capacity_bytes)
    except Exception:
        pass
    want = max(32 * 1024 * 1024, 2 * int(scratch_bytes))
    return int(min(want, (cap * 3) // 4, 100 * 1024 * 1024))


@jax.jit
def spatial_offset_block_forward(params, x_nchw, ref_nchw):
    N, C, H, W = x_nchw.shape
    ks = params["w1"].shape[0]
    nh = params["w1"].shape[-1]
    nh2 = nh // 2
    HW = H * W
    p = ks // 2
    Hp, Wp = H + 2 * p, W + 2 * p

    # NCHW -> (N, C, H*W): pure reshape (no transpose); H*W maps to lanes.
    x2 = x_nchw.reshape(N, C, HW)
    r2 = ref_nchw.reshape(N, C, HW)
    # HWIO weights -> flattened (dy, dx, cin) K ordering.
    w1f = params["w1"].reshape(ks * ks * C, nh)                           # f32
    w2f = params["w2"].reshape(ks * ks * nh, nh2).astype(jnp.bfloat16)    # bf16
    w3t = jnp.transpose(params["w3"], (3, 0, 1, 2)).reshape(C, ks * ks * nh2)
    w3t = w3t.astype(jnp.bfloat16)                                        # (C, K) bf16

    # Cost hint for XLA's scheduler.
    flops = 2 * N * HW * ks * ks * (C * nh + nh * nh2 + nh2 * C)
    bytes_accessed = (3 * N * C * HW * 4
                      + ks * ks * C * nh * 4
                      + (ks * ks * nh * nh2 + C * ks * ks * nh2) * 2)

    # Scratch / residency estimate (drives the vmem limit request).
    scratch_bytes = (
        Hp * Wp * C * 4 + HW * ks * ks * C * 4        # pad1, col1
        + Hp * Wp * nh * 4 + Hp * Wp * nh2 * 4        # pad2, pad3
        + HW * nh2 * 4                                # acc2
        + 2 * 3 * C * HW * 4                          # double-buffered x/ref/out blocks
        + ks * ks * C * nh * 4                        # w1 (f32)
        + (ks * ks * nh * nh2 + C * ks * ks * nh2) * 2  # w2, w3 (bf16)
        + 4 * HW * nh * 4)                            # transient value headroom

    kern = functools.partial(_fused_kernel, H=H, W=W, C=C, ks=ks, nh=nh)
    out = pl.pallas_call(
        kern,
        out_shape=jax.ShapeDtypeStruct((N, C, HW), x_nchw.dtype),
        grid=(N,),
        in_specs=[
            pl.BlockSpec((1, C, HW), lambda n: (n, 0, 0)),                 # x
            pl.BlockSpec((1, C, HW), lambda n: (n, 0, 0)),                 # ref
            pl.BlockSpec((ks * ks * C, nh), lambda n: (0, 0)),             # w1 (K, 128)
            pl.BlockSpec((ks * ks * nh, nh2), lambda n: (0, 0)),           # w2 (K, 64)
            pl.BlockSpec((C, ks * ks * nh2), lambda n: (0, 0)),            # w3 (C, K)
        ],
        out_specs=pl.BlockSpec((1, C, HW), lambda n: (n, 0, 0)),
        scratch_shapes=[
            pltpu.VMEM((Hp, Wp, C), jnp.float32),                  # pad1
            pltpu.VMEM((HW, ks * ks * C), jnp.float32),            # col1 (conv1 only)
            pltpu.VMEM((Hp, Wp, nh), jnp.float32),                 # pad2
            pltpu.VMEM((Hp, Wp, nh2), jnp.float32),                # pad3
            pltpu.VMEM((HW, nh2), jnp.float32),                    # conv2 f32 accumulator
        ],
        compiler_params=pltpu.CompilerParams(
            dimension_semantics=("parallel",),          # batch shards across TCs (v7x)
            vmem_limit_bytes=_vmem_limit_bytes(scratch_bytes)),
        cost_estimate=pl.CostEstimate(
            flops=int(flops),
            transcendentals=int(2 * N * C),
            bytes_accessed=int(bytes_accessed)),
    )(x2, r2, w1f, w2f, w3t)
    return out.reshape(N, C, H, W)


# ---------------------------------------------------------------------------
# Pure-JAX reference (correctness check only; f32 end-to-end)
# ---------------------------------------------------------------------------
def _ref_conv(x_nhwc, w, leaky):
    p = w.shape[0] // 2
    xp = jnp.pad(x_nhwc, ((0, 0), (p, p), (p, p), (0, 0)), mode="reflect")
    y = jax.lax.conv_general_dilated(
        xp, w, (1, 1), "VALID", dimension_numbers=("NHWC", "HWIO", "NHWC"))
    return jnp.where(y >= 0, y, 0.1 * y) if leaky else y


def _ref_forward(params, x_nchw, ref_nchw):
    x = jnp.transpose(x_nchw, (0, 2, 3, 1))
    ref = jnp.transpose(ref_nchw, (0, 2, 3, 1))
    mean = jnp.mean(ref, axis=(1, 2), keepdims=True)
    var = jnp.mean((ref - mean) ** 2, axis=(1, 2), keepdims=True)
    ref_norm = (ref - mean) * jax.lax.rsqrt(var + 1e-5)
    h = _ref_conv(ref_norm, params["w1"], True)
    h = _ref_conv(h, params["w2"], True)
    offset = _ref_conv(h, params["w3"], False)
    sigma = jnp.std(x, axis=(1, 2), keepdims=True, ddof=1)
    out = x + sigma * offset
    return jnp.transpose(out, (0, 3, 1, 2))


# ---------------------------------------------------------------------------
if __name__ == "__main__":
    N, C, H, W = 2, 4, 16, 16   # ch_in == ch_ref == 4, ks = 3
    ks = 3

    key = jax.random.PRNGKey(0)
    kx, kr, kp = jax.random.split(key, 3)
    x = jax.random.normal(kx, (N, C, H, W), jnp.float32)
    ref = jax.random.normal(kr, (N, C, H, W), jnp.float32)

    params = init_spatial_offset_block(kp, ch_in=C, ch_ref=C, ks=ks)

    out = spatial_offset_block_forward(params, x, ref)
    out = jax.block_until_ready(out)

    expected = _ref_forward(params, x, ref)
    assert out.shape == (N, C, H, W)
    # Tolerance accounts for bf16 MXU operands in conv2/conv3 (f32 reference);
    # structural errors (padding / tap alignment / norm) would be O(0.1-1).
    assert jnp.allclose(out, expected, rtol=2e-2, atol=5e-2), (
        float(jnp.max(jnp.abs(out - expected))))

    print("KERNEL_OK")
</pallas_src>

<mosaic_0001>
module attributes {stable_mosaic.version = 11 : i64} {
  func.func @_fused_kernel(%arg0: i32, %arg1: memref<1x4x256xf32, #tpu.memory_space<vmem>>, %arg2: memref<1x4x256xf32, #tpu.memory_space<vmem>>, %arg3: memref<36x128xf32, #tpu.memory_space<vmem>>, %arg4: memref<1152x64xbf16, #tpu.memory_space<vmem>>, %arg5: memref<4x576xbf16, #tpu.memory_space<vmem>>, %arg6: memref<1x4x256xf32, #tpu.memory_space<vmem>>, %arg7: memref<18x18x4xf32, #tpu.memory_space<vmem>>, %arg8: memref<256x36xf32, #tpu.memory_space<vmem>>, %arg9: memref<18x18x128xf32, #tpu.memory_space<vmem>>, %arg10: memref<18x18x64xf32, #tpu.memory_space<vmem>>, %arg11: memref<256x64xf32, #tpu.memory_space<vmem>>) attributes {dimension_semantics = [#tpu.dimension_semantics<parallel>], iteration_bounds = array<i64: 2>, scalar_prefetch = 0 : i64, scratch_operands = 5 : i64, tpu.core_type = #tpu.core_type<tc>, window_params = [{transform_indices = @transform_0, window_bounds = array<i64: 1, 4, 256>}, {transform_indices = @transform_1, window_bounds = array<i64: 1, 4, 256>}, {pipeline_mode = #tpu.pipeline_mode<synchronous>, transform_indices = @transform_2, window_bounds = array<i64: 36, 128>}, {pipeline_mode = #tpu.pipeline_mode<synchronous>, transform_indices = @transform_3, window_bounds = array<i64: 1152, 64>}, {pipeline_mode = #tpu.pipeline_mode<synchronous>, transform_indices = @transform_4, window_bounds = array<i64: 4, 576>}, {transform_indices = @transform_5, window_bounds = array<i64: 1, 4, 256>}]} {
    %c0 = arith.constant 0 : index
    %c0_0 = arith.constant 0 : index
    %c0_1 = arith.constant 0 : index
    %0 = vector.load %arg2[%c0, %c0_0, %c0_1] : memref<1x4x256xf32, #tpu.memory_space<vmem>>, vector<1x4x256xf32>
    %1 = vector.shape_cast %0 : vector<1x4x256xf32> to vector<4x256xf32>
    %cst = arith.constant dense<0.000000e+00> : vector<4xf32>
    %2 = vector.multi_reduction <add>, %1, %cst [1] : vector<4x256xf32> to vector<4xf32>
    %3 = vector.shape_cast %2 : vector<4xf32> to vector<4x1xf32>
    %cst_2 = arith.constant 2.560000e+02 : f32
    %4 = vector.broadcast %cst_2 : f32 to vector<4x1xf32>
    %5 = arith.divf %3, %4 : vector<4x1xf32>
    %6 = vector.broadcast %5 : vector<4x1xf32> to vector<4x256xf32>
    %7 = arith.subf %1, %6 : vector<4x256xf32>
    %8 = arith.mulf %7, %7 : vector<4x256xf32>
    %cst_3 = arith.constant dense<0.000000e+00> : vector<4xf32>
    %9 = vector.multi_reduction <add>, %8, %cst_3 [1] : vector<4x256xf32> to vector<4xf32>
    %10 = vector.shape_cast %9 : vector<4xf32> to vector<4x1xf32>
    %cst_4 = arith.constant 2.560000e+02 : f32
    %11 = vector.broadcast %cst_4 : f32 to vector<4x1xf32>
    %12 = arith.divf %10, %11 : vector<4x1xf32>
    %13 = vector.broadcast %5 : vector<4x1xf32> to vector<4x256xf32>
    %14 = arith.subf %1, %13 : vector<4x256xf32>
    %cst_5 = arith.constant 9.99999974E-6 : f32
    %15 = vector.broadcast %cst_5 : f32 to vector<4x1xf32>
    %16 = arith.addf %12, %15 : vector<4x1xf32>
    %17 = math.rsqrt %16 : vector<4x1xf32>
    %18 = vector.broadcast %17 : vector<4x1xf32> to vector<4x256xf32>
    %19 = arith.mulf %14, %18 : vector<4x256xf32>
    %20 = tpu.transpose %19, [1, 0] : vector<4x256xf32> -> vector<256x4xf32>
    %21 = vector.shape_cast %20 : vector<256x4xf32> to vector<16x16x4xf32>
    %c1 = arith.constant 1 : index
    %c1_6 = arith.constant 1 : index
    %c0_7 = arith.constant 0 : index
    %22 = vector.load %arg7[%c1, %c1_6, %c0_7] : memref<18x18x4xf32, #tpu.memory_space<vmem>>, vector<16x16x4xf32>
    tpu.vector_store %arg7[%c1, %c1_6, %c0_7], %21 {strides = array<i32>} : memref<18x18x4xf32, #tpu.memory_space<vmem>>, vector<16x16x4xf32>,
    %c2 = arith.constant 2 : index
    %c1_8 = arith.constant 1 : index
    %c0_9 = arith.constant 0 : index
    %23 = vector.load %arg7[%c2, %c1_8, %c0_9] : memref<18x18x4xf32, #tpu.memory_space<vmem>>, vector<1x16x4xf32>
    %c0_10 = arith.constant 0 : index
    %c1_11 = arith.constant 1 : index
    %c0_12 = arith.constant 0 : index
    %24 = vector.load %arg7[%c0_10, %c1_11, %c0_12] : memref<18x18x4xf32, #tpu.memory_space<vmem>>, vector<1x16x4xf32>
    tpu.vector_store %arg7[%c0_10, %c1_11, %c0_12], %23 {strides = array<i32>} : memref<18x18x4xf32, #tpu.memory_space<vmem>>, vector<1x16x4xf32>,
    %c15 = arith.constant 15 : index
    %c1_13 = arith.constant 1 : index
    %c0_14 = arith.constant 0 : index
    %25 = vector.load %arg7[%c15, %c1_13, %c0_14] : memref<18x18x4xf32, #tpu.memory_space<vmem>>, vector<1x16x4xf32>
    %c17 = arith.constant 17 : index
    %c1_15 = arith.constant 1 : index
    %c0_16 = arith.constant 0 : index
    %26 = vector.load %arg7[%c17, %c1_15, %c0_16] : memref<18x18x4xf32, #tpu.memory_space<vmem>>, vector<1x16x4xf32>
    tpu.vector_store %arg7[%c17, %c1_15, %c0_16], %25 {strides = array<i32>} : memref<18x18x4xf32, #tpu.memory_space<vmem>>, vector<1x16x4xf32>,
    %c0_17 = arith.constant 0 : index
    %c2_18 = arith.constant 2 : index
    %c0_19 = arith.constant 0 : index
    %27 = vector.load %arg7[%c0_17, %c2_18, %c0_19] : memref<18x18x4xf32, #tpu.memory_space<vmem>>, vector<18x1x4xf32>
    %c0_20 = arith.constant 0 : index
    %c0_21 = arith.constant 0 : index
    %c0_22 = arith.constant 0 : index
    %28 = vector.load %arg7[%c0_20, %c0_21, %c0_22] : memref<18x18x4xf32, #tpu.memory_space<vmem>>, vector<18x1x4xf32>
    tpu.vector_store %arg7[%c0_20, %c0_21, %c0_22], %27 {strides = array<i32>} : memref<18x18x4xf32, #tpu.memory_space<vmem>>, vector<18x1x4xf32>,
    %c0_23 = arith.constant 0 : index
    %c15_24 = arith.constant 15 : index
    %c0_25 = arith.constant 0 : index
    %29 = vector.load %arg7[%c0_23, %c15_24, %c0_25] : memref<18x18x4xf32, #tpu.memory_space<vmem>>, vector<18x1x4xf32>
    %c0_26 = arith.constant 0 : index
    %c17_27 = arith.constant 17 : index
    %c0_28 = arith.constant 0 : index
    %30 = vector.load %arg7[%c0_26, %c17_27, %c0_28] : memref<18x18x4xf32, #tpu.memory_space<vmem>>, vector<18x1x4xf32>
    tpu.vector_store %arg7[%c0_26, %c17_27, %c0_28], %29 {strides = array<i32>} : memref<18x18x4xf32, #tpu.memory_space<vmem>>, vector<18x1x4xf32>,
    %c0_29 = arith.constant 0 : index
    %c0_30 = arith.constant 0 : index
    %c0_31 = arith.constant 0 : index
    %31 = vector.load %arg7[%c0_29, %c0_30, %c0_31] : memref<18x18x4xf32, #tpu.memory_space<vmem>>, vector<16x16x4xf32>
    %32 = vector.shape_cast %31 : vector<16x16x4xf32> to vector<256x4xf32>
    %c0_32 = arith.constant 0 : index
    %c0_33 = arith.constant 0 : index
    %33 = vector.load %arg8[%c0_32, %c0_33] : memref<256x36xf32, #tpu.memory_space<vmem>>, vector<256x4xf32>
    tpu.vector_store %arg8[%c0_32, %c0_33], %32 {strides = array<i32>} : memref<256x36xf32, #tpu.memory_space<vmem>>, vector<256x4xf32>,
    %c0_34 = arith.constant 0 : index
    %c1_35 = arith.constant 1 : index
    %c0_36 = arith.constant 0 : index
    %34 = vector.load %arg7[%c0_34, %c1_35, %c0_36] : memref<18x18x4xf32, #tpu.memory_space<vmem>>, vector<16x16x4xf32>
    %35 = vector.shape_cast %34 : vector<16x16x4xf32> to vector<256x4xf32>
    %c0_37 = arith.constant 0 : index
    %c4 = arith.constant 4 : index
    %36 = vector.load %arg8[%c0_37, %c4] : memref<256x36xf32, #tpu.memory_space<vmem>>, vector<256x4xf32>
    tpu.vector_store %arg8[%c0_37, %c4], %35 {strides = array<i32>} : memref<256x36xf32, #tpu.memory_space<vmem>>, vector<256x4xf32>,
    %c0_38 = arith.constant 0 : index
    %c2_39 = arith.constant 2 : index
    %c0_40 = arith.constant 0 : index
    %37 = vector.load %arg7[%c0_38, %c2_39, %c0_40] : memref<18x18x4xf32, #tpu.memory_space<vmem>>, vector<16x16x4xf32>
    %38 = vector.shape_cast %37 : vector<16x16x4xf32> to vector<256x4xf32>
    %c0_41 = arith.constant 0 : index
    %c8 = arith.constant 8 : index
    %39 = vector.load %arg8[%c0_41, %c8] : memref<256x36xf32, #tpu.memory_space<vmem>>, vector<256x4xf32>
    tpu.vector_store %arg8[%c0_41, %c8], %38 {strides = array<i32>} : memref<256x36xf32, #tpu.memory_space<vmem>>, vector<256x4xf32>,
    %c1_42 = arith.constant 1 : index
    %c0_43 = arith.constant 0 : index
    %c0_44 = arith.constant 0 : index
    %40 = vector.load %arg7[%c1_42, %c0_43, %c0_44] : memref<18x18x4xf32, #tpu.memory_space<vmem>>, vector<16x16x4xf32>
    %41 = vector.shape_cast %40 : vector<16x16x4xf32> to vector<256x4xf32>
    %c0_45 = arith.constant 0 : index
    %c12 = arith.constant 12 : index
    %42 = vector.load %arg8[%c0_45, %c12] : memref<256x36xf32, #tpu.memory_space<vmem>>, vector<256x4xf32>
    tpu.vector_store %arg8[%c0_45, %c12], %41 {strides = array<i32>} : memref<256x36xf32, #tpu.memory_space<vmem>>, vector<256x4xf32>,
    %c1_46 = arith.constant 1 : index
    %c1_47 = arith.constant 1 : index
    %c0_48 = arith.constant 0 : index
    %43 = vector.load %arg7[%c1_46, %c1_47, %c0_48] : memref<18x18x4xf32, #tpu.memory_space<vmem>>, vector<16x16x4xf32>
    %44 = vector.shape_cast %43 : vector<16x16x4xf32> to vector<256x4xf32>
    %c0_49 = arith.constant 0 : index
    %c16 = arith.constant 16 : index
    %45 = vector.load %arg8[%c0_49, %c16] : memref<256x36xf32, #tpu.memory_space<vmem>>, vector<256x4xf32>
    tpu.vector_store %arg8[%c0_49, %c16], %44 {strides = array<i32>} : memref<256x36xf32, #tpu.memory_space<vmem>>, vector<256x4xf32>,
    %c1_50 = arith.constant 1 : index
    %c2_51 = arith.constant 2 : index
    %c0_52 = arith.constant 0 : index
    %46 = vector.load %arg7[%c1_50, %c2_51, %c0_52] : memref<18x18x4xf32, #tpu.memory_space<vmem>>, vector<16x16x4xf32>
    %47 = vector.shape_cast %46 : vector<16x16x4xf32> to vector<256x4xf32>
    %c0_53 = arith.constant 0 : index
    %c20 = arith.constant 20 : index
    %48 = vector.load %arg8[%c0_53, %c20] : memref<256x36xf32, #tpu.memory_space<vmem>>, vector<256x4xf32>
    tpu.vector_store %arg8[%c0_53, %c20], %47 {strides = array<i32>} : memref<256x36xf32, #tpu.memory_space<vmem>>, vector<256x4xf32>,
    %c2_54 = arith.constant 2 : index
    %c0_55 = arith.constant 0 : index
    %c0_56 = arith.constant 0 : index
    %49 = vector.load %arg7[%c2_54, %c0_55, %c0_56] : memref<18x18x4xf32, #tpu.memory_space<vmem>>, vector<16x16x4xf32>
    %50 = vector.shape_cast %49 : vector<16x16x4xf32> to vector<256x4xf32>
    %c0_57 = arith.constant 0 : index
    %c24 = arith.constant 24 : index
    %51 = vector.load %arg8[%c0_57, %c24] : memref<256x36xf32, #tpu.memory_space<vmem>>, vector<256x4xf32>
    tpu.vector_store %arg8[%c0_57, %c24], %50 {strides = array<i32>} : memref<256x36xf32, #tpu.memory_space<vmem>>, vector<256x4xf32>,
    %c2_58 = arith.constant 2 : index
    %c1_59 = arith.constant 1 : index
    %c0_60 = arith.constant 0 : index
    %52 = vector.load %arg7[%c2_58, %c1_59, %c0_60] : memref<18x18x4xf32, #tpu.memory_space<vmem>>, vector<16x16x4xf32>
    %53 = vector.shape_cast %52 : vector<16x16x4xf32> to vector<256x4xf32>
    %c0_61 = arith.constant 0 : index
    %c28 = arith.constant 28 : index
    %54 = vector.load %arg8[%c0_61, %c28] : memref<256x36xf32, #tpu.memory_space<vmem>>, vector<256x4xf32>
    tpu.vector_store %arg8[%c0_61, %c28], %53 {strides = array<i32>} : memref<256x36xf32, #tpu.memory_space<vmem>>, vector<256x4xf32>,
    %c2_62 = arith.constant 2 : index
    %c2_63 = arith.constant 2 : index
    %c0_64 = arith.constant 0 : index
    %55 = vector.load %arg7[%c2_62, %c2_63, %c0_64] : memref<18x18x4xf32, #tpu.memory_space<vmem>>, vector<16x16x4xf32>
    %56 = vector.shape_cast %55 : vector<16x16x4xf32> to vector<256x4xf32>
    %c0_65 = arith.constant 0 : index
    %c32 = arith.constant 32 : index
    %57 = vector.load %arg8[%c0_65, %c32] : memref<256x36xf32, #tpu.memory_space<vmem>>, vector<256x4xf32>
    tpu.vector_store %arg8[%c0_65, %c32], %56 {strides = array<i32>} : memref<256x36xf32, #tpu.memory_space<vmem>>, vector<256x4xf32>,
    %c0_66 = arith.constant 0 : index
    %c0_67 = arith.constant 0 : index
    %58 = vector.load %arg8[%c0_66, %c0_67] : memref<256x36xf32, #tpu.memory_space<vmem>>, vector<256x36xf32>
    %c0_68 = arith.constant 0 : index
    %c0_69 = arith.constant 0 : index
    %59 = vector.load %arg3[%c0_68, %c0_69] : memref<36x128xf32, #tpu.memory_space<vmem>>, vector<36x128xf32>
    %cst_70 = arith.constant dense<0.000000e+00> : vector<256x128xf32>
    %60 = tpu.matmul %58, %59, %cst_70 {dimension_numbers = #tpu.dot_dimension_numbers<[1], [0], [0], [1], [0, 0, 1, 1], [], []>} : vector<256x36xf32>, vector<36x128xf32>, vector<256x128xf32> -> vector<256x128xf32>
    %cst_71 = arith.constant 0.000000e+00 : f32
    %61 = vector.broadcast %cst_71 : f32 to vector<256x128xf32>
    %62 = arith.cmpf oge, %60, %61 : vector<256x128xf32>
    %cst_72 = arith.constant 1.000000e-01 : f32
    %63 = vector.broadcast %cst_72 : f32 to vector<256x128xf32>
    %64 = arith.mulf %63, %60 : vector<256x128xf32>
    %65 = arith.select %62, %60, %64 : vector<256x128xi1>, vector<256x128xf32>
    %66 = vector.shape_cast %65 : vector<256x128xf32> to vector<16x16x128xf32>
    %c1_73 = arith.constant 1 : index
    %c1_74 = arith.constant 1 : index
    %c0_75 = arith.constant 0 : index
    %67 = vector.load %arg9[%c1_73, %c1_74, %c0_75] : memref<18x18x128xf32, #tpu.memory_space<vmem>>, vector<16x16x128xf32>
    tpu.vector_store %arg9[%c1_73, %c1_74, %c0_75], %66 {strides = array<i32>} : memref<18x18x128xf32, #tpu.memory_space<vmem>>, vector<16x16x128xf32>,
    %c2_76 = arith.constant 2 : index
    %c1_77 = arith.constant 1 : index
    %c0_78 = arith.constant 0 : index
    %68 = vector.load %arg9[%c2_76, %c1_77, %c0_78] : memref<18x18x128xf32, #tpu.memory_space<vmem>>, vector<1x16x128xf32>
    %c0_79 = arith.constant 0 : index
    %c1_80 = arith.constant 1 : index
    %c0_81 = arith.constant 0 : index
    %69 = vector.load %arg9[%c0_79, %c1_80, %c0_81] : memref<18x18x128xf32, #tpu.memory_space<vmem>>, vector<1x16x128xf32>
    tpu.vector_store %arg9[%c0_79, %c1_80, %c0_81], %68 {strides = array<i32>} : memref<18x18x128xf32, #tpu.memory_space<vmem>>, vector<1x16x128xf32>,
    %c15_82 = arith.constant 15 : index
    %c1_83 = arith.constant 1 : index
    %c0_84 = arith.constant 0 : index
    %70 = vector.load %arg9[%c15_82, %c1_83, %c0_84] : memref<18x18x128xf32, #tpu.memory_space<vmem>>, vector<1x16x128xf32>
    %c17_85 = arith.constant 17 : index
    %c1_86 = arith.constant 1 : index
    %c0_87 = arith.constant 0 : index
    %71 = vector.load %arg9[%c17_85, %c1_86, %c0_87] : memref<18x18x128xf32, #tpu.memory_space<vmem>>, vector<1x16x128xf32>
    tpu.vector_store %arg9[%c17_85, %c1_86, %c0_87], %70 {strides = array<i32>} : memref<18x18x128xf32, #tpu.memory_space<vmem>>, vector<1x16x128xf32>,
    %c0_88 = arith.constant 0 : index
    %c2_89 = arith.constant 2 : index
    %c0_90 = arith.constant 0 : index
    %72 = vector.load %arg9[%c0_88, %c2_89, %c0_90] : memref<18x18x128xf32, #tpu.memory_space<vmem>>, vector<18x1x128xf32>
    %c0_91 = arith.constant 0 : index
    %c0_92 = arith.constant 0 : index
    %c0_93 = arith.constant 0 : index
    %73 = vector.load %arg9[%c0_91, %c0_92, %c0_93] : memref<18x18x128xf32, #tpu.memory_space<vmem>>, vector<18x1x128xf32>
    tpu.vector_store %arg9[%c0_91, %c0_92, %c0_93], %72 {strides = array<i32>} : memref<18x18x128xf32, #tpu.memory_space<vmem>>, vector<18x1x128xf32>,
    %c0_94 = arith.constant 0 : index
    %c15_95 = arith.constant 15 : index
    %c0_96 = arith.constant 0 : index
    %74 = vector.load %arg9[%c0_94, %c15_95, %c0_96] : memref<18x18x128xf32, #tpu.memory_space<vmem>>, vector<18x1x128xf32>
    %c0_97 = arith.constant 0 : index
    %c17_98 = arith.constant 17 : index
    %c0_99 = arith.constant 0 : index
    %75 = vector.load %arg9[%c0_97, %c17_98, %c0_99] : memref<18x18x128xf32, #tpu.memory_space<vmem>>, vector<18x1x128xf32>
    tpu.vector_store %arg9[%c0_97, %c17_98, %c0_99], %74 {strides = array<i32>} : memref<18x18x128xf32, #tpu.memory_space<vmem>>, vector<18x1x128xf32>,
    %c0_100 = arith.constant 0 : index
    %c0_101 = arith.constant 0 : index
    %c0_102 = arith.constant 0 : index
    %76 = vector.load %arg9[%c0_100, %c0_101, %c0_102] : memref<18x18x128xf32, #tpu.memory_space<vmem>>, vector<16x16x128xf32>
    %77 = vector.shape_cast %76 : vector<16x16x128xf32> to vector<256x128xf32>
    %c0_103 = arith.constant 0 : index
    %c1_104 = arith.constant 1 : index
    %c0_105 = arith.constant 0 : index
    %78 = vector.load %arg9[%c0_103, %c1_104, %c0_105] : memref<18x18x128xf32, #tpu.memory_space<vmem>>, vector<16x16x128xf32>
    %79 = vector.shape_cast %78 : vector<16x16x128xf32> to vector<256x128xf32>
    %80 = tpu.concatenate %77, %79 in 1 : vector<256x128xf32>, vector<256x128xf32> -> vector<256x256xf32>
    %81 = arith.truncf %80 : vector<256x256xf32> to vector<256x256xbf16>
    %c0_106 = arith.constant 0 : index
    %c0_107 = arith.constant 0 : index
    %82 = vector.load %arg4[%c0_106, %c0_107] : memref<1152x64xbf16, #tpu.memory_space<vmem>>, vector<256x64xbf16>
    %cst_108 = arith.constant dense<0.000000e+00> : vector<256x64xf32>
    %83 = tpu.matmul %81, %82, %cst_108 {dimension_numbers = #tpu.dot_dimension_numbers<[1], [0], [0], [1], [0, 0, 1, 1], [], []>} : vector<256x256xbf16>, vector<256x64xbf16>, vector<256x64xf32> -> vector<256x64xf32>
    %c0_109 = arith.constant 0 : index
    %c0_110 = arith.constant 0 : index
    %84 = vector.load %arg11[%c0_109, %c0_110] : memref<256x64xf32, #tpu.memory_space<vmem>>, vector<256x64xf32>
    tpu.vector_store %arg11[%c0_109, %c0_110], %83 {strides = array<i32>} : memref<256x64xf32, #tpu.memory_space<vmem>>, vector<256x64xf32>,
    %c0_111 = arith.constant 0 : index
    %c2_112 = arith.constant 2 : index
    %c0_113 = arith.constant 0 : index
    %85 = vector.load %arg9[%c0_111, %c2_112, %c0_113] : memref<18x18x128xf32, #tpu.memory_space<vmem>>, vector<16x16x128xf32>
    %86 = vector.shape_cast %85 : vector<16x16x128xf32> to vector<256x128xf32>
    %c1_114 = arith.constant 1 : index
    %c0_115 = arith.constant 0 : index
    %c0_116 = arith.constant 0 : index
    %87 = vector.load %arg9[%c1_114, %c0_115, %c0_116] : memref<18x18x128xf32, #tpu.memory_space<vmem>>, vector<16x16x128xf32>
    %88 = vector.shape_cast %87 : vector<16x16x128xf32> to vector<256x128xf32>
    %89 = tpu.concatenate %86, %88 in 1 : vector<256x128xf32>, vector<256x128xf32> -> vector<256x256xf32>
    %90 = arith.truncf %89 : vector<256x256xf32> to vector<256x256xbf16>
    %c256 = arith.constant 256 : index
    %c0_117 = arith.constant 0 : index
    %91 = vector.load %arg4[%c256, %c0_117] : memref<1152x64xbf16, #tpu.memory_space<vmem>>, vector<256x64xbf16>
    %cst_118 = arith.constant dense<0.000000e+00> : vector<256x64xf32>
    %92 = tpu.matmul %90, %91, %cst_118 {dimension_numbers = #tpu.dot_dimension_numbers<[1], [0], [0], [1], [0, 0, 1, 1], [], []>} : vector<256x256xbf16>, vector<256x64xbf16>, vector<256x64xf32> -> vector<256x64xf32>
    %c0_119 = arith.constant 0 : index
    %c0_120 = arith.constant 0 : index
    %93 = vector.load %arg11[%c0_119, %c0_120] : memref<256x64xf32, #tpu.memory_space<vmem>>, vector<256x64xf32>
    %94 = arith.addf %93, %92 : vector<256x64xf32>
    %c0_121 = arith.constant 0 : index
    %c0_122 = arith.constant 0 : index
    %95 = vector.load %arg11[%c0_121, %c0_122] : memref<256x64xf32, #tpu.memory_space<vmem>>, vector<256x64xf32>
    tpu.vector_store %arg11[%c0_121, %c0_122], %94 {strides = array<i32>} : memref<256x64xf32, #tpu.memory_space<vmem>>, vector<256x64xf32>,
    %c1_123 = arith.constant 1 : index
    %c1_124 = arith.constant 1 : index
    %c0_125 = arith.constant 0 : index
    %96 = vector.load %arg9[%c1_123, %c1_124, %c0_125] : memref<18x18x128xf32, #tpu.memory_space<vmem>>, vector<16x16x128xf32>
    %97 = vector.shape_cast %96 : vector<16x16x128xf32> to vector<256x128xf32>
    %c1_126 = arith.constant 1 : index
    %c2_127 = arith.constant 2 : index
    %c0_128 = arith.constant 0 : index
    %98 = vector.load %arg9[%c1_126, %c2_127, %c0_128] : memref<18x18x128xf32, #tpu.memory_space<vmem>>, vector<16x16x128xf32>
    %99 = vector.shape_cast %98 : vector<16x16x128xf32> to vector<256x128xf32>
    %100 = tpu.concatenate %97, %99 in 1 : vector<256x128xf32>, vector<256x128xf32> -> vector<256x256xf32>
    %101 = arith.truncf %100 : vector<256x256xf32> to vector<256x256xbf16>
    %c512 = arith.constant 512 : index
    %c0_129 = arith.constant 0 : index
    %102 = vector.load %arg4[%c512, %c0_129] : memref<1152x64xbf16, #tpu.memory_space<vmem>>, vector<256x64xbf16>
    %cst_130 = arith.constant dense<0.000000e+00> : vector<256x64xf32>
    %103 = tpu.matmul %101, %102, %cst_130 {dimension_numbers = #tpu.dot_dimension_numbers<[1], [0], [0], [1], [0, 0, 1, 1], [], []>} : vector<256x256xbf16>, vector<256x64xbf16>, vector<256x64xf32> -> vector<256x64xf32>
    %c0_131 = arith.constant 0 : index
    %c0_132 = arith.constant 0 : index
    %104 = vector.load %arg11[%c0_131, %c0_132] : memref<256x64xf32, #tpu.memory_space<vmem>>, vector<256x64xf32>
    %105 = arith.addf %104, %103 : vector<256x64xf32>
    %c0_133 = arith.constant 0 : index
    %c0_134 = arith.constant 0 : index
    %106 = vector.load %arg11[%c0_133, %c0_134] : memref<256x64xf32, #tpu.memory_space<vmem>>, vector<256x64xf32>
    tpu.vector_store %arg11[%c0_133, %c0_134], %105 {strides = array<i32>} : memref<256x64xf32, #tpu.memory_space<vmem>>, vector<256x64xf32>,
    %c2_135 = arith.constant 2 : index
    %c0_136 = arith.constant 0 : index
    %c0_137 = arith.constant 0 : index
    %107 = vector.load %arg9[%c2_135, %c0_136, %c0_137] : memref<18x18x128xf32, #tpu.memory_space<vmem>>, vector<16x16x128xf32>
    %108 = vector.shape_cast %107 : vector<16x16x128xf32> to vector<256x128xf32>
    %c2_138 = arith.constant 2 : index
    %c1_139 = arith.constant 1 : index
    %c0_140 = arith.constant 0 : index
    %109 = vector.load %arg9[%c2_138, %c1_139, %c0_140] : memref<18x18x128xf32, #tpu.memory_space<vmem>>, vector<16x16x128xf32>
    %110 = vector.shape_cast %109 : vector<16x16x128xf32> to vector<256x128xf32>
    %111 = tpu.concatenate %108, %110 in 1 : vector<256x128xf32>, vector<256x128xf32> -> vector<256x256xf32>
    %112 = arith.truncf %111 : vector<256x256xf32> to vector<256x256xbf16>
    %c768 = arith.constant 768 : index
    %c0_141 = arith.constant 0 : index
    %113 = vector.load %arg4[%c768, %c0_141] : memref<1152x64xbf16, #tpu.memory_space<vmem>>, vector<256x64xbf16>
    %cst_142 = arith.constant dense<0.000000e+00> : vector<256x64xf32>
    %114 = tpu.matmul %112, %113, %cst_142 {dimension_numbers = #tpu.dot_dimension_numbers<[1], [0], [0], [1], [0, 0, 1, 1], [], []>} : vector<256x256xbf16>, vector<256x64xbf16>, vector<256x64xf32> -> vector<256x64xf32>
    %c0_143 = arith.constant 0 : index
    %c0_144 = arith.constant 0 : index
    %115 = vector.load %arg11[%c0_143, %c0_144] : memref<256x64xf32, #tpu.memory_space<vmem>>, vector<256x64xf32>
    %116 = arith.addf %115, %114 : vector<256x64xf32>
    %c0_145 = arith.constant 0 : index
    %c0_146 = arith.constant 0 : index
    %117 = vector.load %arg11[%c0_145, %c0_146] : memref<256x64xf32, #tpu.memory_space<vmem>>, vector<256x64xf32>
    tpu.vector_store %arg11[%c0_145, %c0_146], %116 {strides = array<i32>} : memref<256x64xf32, #tpu.memory_space<vmem>>, vector<256x64xf32>,
    %c2_147 = arith.constant 2 : index
    %c2_148 = arith.constant 2 : index
    %c0_149 = arith.constant 0 : index
    %118 = vector.load %arg9[%c2_147, %c2_148, %c0_149] : memref<18x18x128xf32, #tpu.memory_space<vmem>>, vector<16x16x128xf32>
    %119 = vector.shape_cast %118 : vector<16x16x128xf32> to vector<256x128xf32>
    %120 = arith.truncf %119 : vector<256x128xf32> to vector<256x128xbf16>
    %c1024 = arith.constant 1024 : index
    %c0_150 = arith.constant 0 : index
    %121 = vector.load %arg4[%c1024, %c0_150] : memref<1152x64xbf16, #tpu.memory_space<vmem>>, vector<128x64xbf16>
    %cst_151 = arith.constant dense<0.000000e+00> : vector<256x64xf32>
    %122 = tpu.matmul %120, %121, %cst_151 {dimension_numbers = #tpu.dot_dimension_numbers<[1], [0], [0], [1], [0, 0, 1, 1], [], []>} : vector<256x128xbf16>, vector<128x64xbf16>, vector<256x64xf32> -> vector<256x64xf32>
    %c0_152 = arith.constant 0 : index
    %c0_153 = arith.constant 0 : index
    %123 = vector.load %arg11[%c0_152, %c0_153] : memref<256x64xf32, #tpu.memory_space<vmem>>, vector<256x64xf32>
    %124 = arith.addf %123, %122 : vector<256x64xf32>
    %c0_154 = arith.constant 0 : index
    %c0_155 = arith.constant 0 : index
    %125 = vector.load %arg11[%c0_154, %c0_155] : memref<256x64xf32, #tpu.memory_space<vmem>>, vector<256x64xf32>
    tpu.vector_store %arg11[%c0_154, %c0_155], %124 {strides = array<i32>} : memref<256x64xf32, #tpu.memory_space<vmem>>, vector<256x64xf32>,
    %c0_156 = arith.constant 0 : index
    %c0_157 = arith.constant 0 : index
    %126 = vector.load %arg11[%c0_156, %c0_157] : memref<256x64xf32, #tpu.memory_space<vmem>>, vector<256x64xf32>
    %cst_158 = arith.constant 0.000000e+00 : f32
    %127 = vector.broadcast %cst_158 : f32 to vector<256x64xf32>
    %128 = arith.cmpf oge, %126, %127 : vector<256x64xf32>
    %cst_159 = arith.constant 1.000000e-01 : f32
    %129 = vector.broadcast %cst_159 : f32 to vector<256x64xf32>
    %130 = arith.mulf %129, %126 : vector<256x64xf32>
    %131 = arith.select %128, %126, %130 : vector<256x64xi1>, vector<256x64xf32>
    %132 = vector.shape_cast %131 : vector<256x64xf32> to vector<16x16x64xf32>
    %c1_160 = arith.constant 1 : index
    %c1_161 = arith.constant 1 : index
    %c0_162 = arith.constant 0 : index
    %133 = vector.load %arg10[%c1_160, %c1_161, %c0_162] : memref<18x18x64xf32, #tpu.memory_space<vmem>>, vector<16x16x64xf32>
    tpu.vector_store %arg10[%c1_160, %c1_161, %c0_162], %132 {strides = array<i32>} : memref<18x18x64xf32, #tpu.memory_space<vmem>>, vector<16x16x64xf32>,
    %c2_163 = arith.constant 2 : index
    %c1_164 = arith.constant 1 : index
    %c0_165 = arith.constant 0 : index
    %134 = vector.load %arg10[%c2_163, %c1_164, %c0_165] : memref<18x18x64xf32, #tpu.memory_space<vmem>>, vector<1x16x64xf32>
    %c0_166 = arith.constant 0 : index
    %c1_167 = arith.constant 1 : index
    %c0_168 = arith.constant 0 : index
    %135 = vector.load %arg10[%c0_166, %c1_167, %c0_168] : memref<18x18x64xf32, #tpu.memory_space<vmem>>, vector<1x16x64xf32>
    tpu.vector_store %arg10[%c0_166, %c1_167, %c0_168], %134 {strides = array<i32>} : memref<18x18x64xf32, #tpu.memory_space<vmem>>, vector<1x16x64xf32>,
    %c15_169 = arith.constant 15 : index
    %c1_170 = arith.constant 1 : index
    %c0_171 = arith.constant 0 : index
    %136 = vector.load %arg10[%c15_169, %c1_170, %c0_171] : memref<18x18x64xf32, #tpu.memory_space<vmem>>, vector<1x16x64xf32>
    %c17_172 = arith.constant 17 : index
    %c1_173 = arith.constant 1 : index
    %c0_174 = arith.constant 0 : index
    %137 = vector.load %arg10[%c17_172, %c1_173, %c0_174] : memref<18x18x64xf32, #tpu.memory_space<vmem>>, vector<1x16x64xf32>
    tpu.vector_store %arg10[%c17_172, %c1_173, %c0_174], %136 {strides = array<i32>} : memref<18x18x64xf32, #tpu.memory_space<vmem>>, vector<1x16x64xf32>,
    %c0_175 = arith.constant 0 : index
    %c2_176 = arith.constant 2 : index
    %c0_177 = arith.constant 0 : index
    %138 = vector.load %arg10[%c0_175, %c2_176, %c0_177] : memref<18x18x64xf32, #tpu.memory_space<vmem>>, vector<18x1x64xf32>
    %c0_178 = arith.constant 0 : index
    %c0_179 = arith.constant 0 : index
    %c0_180 = arith.constant 0 : index
    %139 = vector.load %arg10[%c0_178, %c0_179, %c0_180] : memref<18x18x64xf32, #tpu.memory_space<vmem>>, vector<18x1x64xf32>
    tpu.vector_store %arg10[%c0_178, %c0_179, %c0_180], %138 {strides = array<i32>} : memref<18x18x64xf32, #tpu.memory_space<vmem>>, vector<18x1x64xf32>,
    %c0_181 = arith.constant 0 : index
    %c15_182 = arith.constant 15 : index
    %c0_183 = arith.constant 0 : index
    %140 = vector.load %arg10[%c0_181, %c15_182, %c0_183] : memref<18x18x64xf32, #tpu.memory_space<vmem>>, vector<18x1x64xf32>
    %c0_184 = arith.constant 0 : index
    %c17_185 = arith.constant 17 : index
    %c0_186 = arith.constant 0 : index
    %141 = vector.load %arg10[%c0_184, %c17_185, %c0_186] : memref<18x18x64xf32, #tpu.memory_space<vmem>>, vector<18x1x64xf32>
    tpu.vector_store %arg10[%c0_184, %c17_185, %c0_186], %140 {strides = array<i32>} : memref<18x18x64xf32, #tpu.memory_space<vmem>>, vector<18x1x64xf32>,
    %cst_187 = arith.constant 0.000000e+00 : f32
    %142 = vector.broadcast %cst_187 : f32 to vector<4x256xf32>
    %c0_188 = arith.constant 0 : index
    %c0_189 = arith.constant 0 : index
    %c0_190 = arith.constant 0 : index
    %143 = vector.load %arg10[%c0_188, %c0_189, %c0_190] : memref<18x18x64xf32, #tpu.memory_space<vmem>>, vector<16x16x64xf32>
    %144 = vector.shape_cast %143 : vector<16x16x64xf32> to vector<256x64xf32>
    %c0_191 = arith.constant 0 : index
    %c1_192 = arith.constant 1 : index
    %c0_193 = arith.constant 0 : index
    %145 = vector.load %arg10[%c0_191, %c1_192, %c0_193] : memref<18x18x64xf32, #tpu.memory_space<vmem>>, vector<16x16x64xf32>
    %146 = vector.shape_cast %145 : vector<16x16x64xf32> to vector<256x64xf32>
    %c0_194 = arith.constant 0 : index
    %c2_195 = arith.constant 2 : index
    %c0_196 = arith.constant 0 : index
    %147 = vector.load %arg10[%c0_194, %c2_195, %c0_196] : memref<18x18x64xf32, #tpu.memory_space<vmem>>, vector<16x16x64xf32>
    %148 = vector.shape_cast %147 : vector<16x16x64xf32> to vector<256x64xf32>
    %c1_197 = arith.constant 1 : index
    %c0_198 = arith.constant 0 : index
    %c0_199 = arith.constant 0 : index
    %149 = vector.load %arg10[%c1_197, %c0_198, %c0_199] : memref<18x18x64xf32, #tpu.memory_space<vmem>>, vector<16x16x64xf32>
    %150 = vector.shape_cast %149 : vector<16x16x64xf32> to vector<256x64xf32>
    %151 = tpu.concatenate %144, %146, %148, %150 in 1 : vector<256x64xf32>, vector<256x64xf32>, vector<256x64xf32>, vector<256x64xf32> -> vector<256x256xf32>
    %c0_200 = arith.constant 0 : index
    %c0_201 = arith.constant 0 : index
    %152 = vector.load %arg5[%c0_200, %c0_201] : memref<4x576xbf16, #tpu.memory_space<vmem>>, vector<4x256xbf16>
    %153 = arith.truncf %151 : vector<256x256xf32> to vector<256x256xbf16>
    %cst_202 = arith.constant dense<0.000000e+00> : vector<4x256xf32>
    %154 = tpu.matmul %152, %153, %cst_202 {dimension_numbers = #tpu.dot_dimension_numbers<[1], [1], [0], [0], [0, 0, 1, 0], [], []>} : vector<4x256xbf16>, vector<256x256xbf16>, vector<4x256xf32> -> vector<4x256xf32>
    %155 = arith.addf %142, %154 : vector<4x256xf32>
    %c1_203 = arith.constant 1 : index
    %c1_204 = arith.constant 1 : index
    %c0_205 = arith.constant 0 : index
    %156 = vector.load %arg10[%c1_203, %c1_204, %c0_205] : memref<18x18x64xf32, #tpu.memory_space<vmem>>, vector<16x16x64xf32>
    %157 = vector.shape_cast %156 : vector<16x16x64xf32> to vector<256x64xf32>
    %c1_206 = arith.constant 1 : index
    %c2_207 = arith.constant 2 : index
    %c0_208 = arith.constant 0 : index
    %158 = vector.load %arg10[%c1_206, %c2_207, %c0_208] : memref<18x18x64xf32, #tpu.memory_space<vmem>>, vector<16x16x64xf32>
    %159 = vector.shape_cast %158 : vector<16x16x64xf32> to vector<256x64xf32>
    %c2_209 = arith.constant 2 : index
    %c0_210 = arith.constant 0 : index
    %c0_211 = arith.constant 0 : index
    %160 = vector.load %arg10[%c2_209, %c0_210, %c0_211] : memref<18x18x64xf32, #tpu.memory_space<vmem>>, vector<16x16x64xf32>
    %161 = vector.shape_cast %160 : vector<16x16x64xf32> to vector<256x64xf32>
    %c2_212 = arith.constant 2 : index
    %c1_213 = arith.constant 1 : index
    %c0_214 = arith.constant 0 : index
    %162 = vector.load %arg10[%c2_212, %c1_213, %c0_214] : memref<18x18x64xf32, #tpu.memory_space<vmem>>, vector<16x16x64xf32>
    %163 = vector.shape_cast %162 : vector<16x16x64xf32> to vector<256x64xf32>
    %164 = tpu.concatenate %157, %159, %161, %163 in 1 : vector<256x64xf32>, vector<256x64xf32>, vector<256x64xf32>, vector<256x64xf32> -> vector<256x256xf32>
    %c0_215 = arith.constant 0 : index
    %c256_216 = arith.constant 256 : index
    %165 = vector.load %arg5[%c0_215, %c256_216] : memref<4x576xbf16, #tpu.memory_space<vmem>>, vector<4x256xbf16>
    %166 = arith.truncf %164 : vector<256x256xf32> to vector<256x256xbf16>
    %cst_217 = arith.constant dense<0.000000e+00> : vector<4x256xf32>
    %167 = tpu.matmul %165, %166, %cst_217 {dimension_numbers = #tpu.dot_dimension_numbers<[1], [1], [0], [0], [0, 0, 1, 0], [], []>} : vector<4x256xbf16>, vector<256x256xbf16>, vector<4x256xf32> -> vector<4x256xf32>
    %168 = arith.addf %155, %167 : vector<4x256xf32>
    %c2_218 = arith.constant 2 : index
    %c2_219 = arith.constant 2 : index
    %c0_220 = arith.constant 0 : index
    %169 = vector.load %arg10[%c2_218, %c2_219, %c0_220] : memref<18x18x64xf32, #tpu.memory_space<vmem>>, vector<16x16x64xf32>
    %170 = vector.shape_cast %169 : vector<16x16x64xf32> to vector<256x64xf32>
    %c0_221 = arith.constant 0 : index
    %c512_222 = arith.constant 512 : index
    %171 = vector.load %arg5[%c0_221, %c512_222] : memref<4x576xbf16, #tpu.memory_space<vmem>>, vector<4x64xbf16>
    %172 = arith.truncf %170 : vector<256x64xf32> to vector<256x64xbf16>
    %cst_223 = arith.constant dense<0.000000e+00> : vector<4x256xf32>
    %173 = tpu.matmul %171, %172, %cst_223 {dimension_numbers = #tpu.dot_dimension_numbers<[1], [1], [0], [0], [0, 0, 1, 0], [], []>} : vector<4x64xbf16>, vector<256x64xbf16>, vector<4x256xf32> -> vector<4x256xf32>
    %174 = arith.addf %168, %173 : vector<4x256xf32>
    %c0_224 = arith.constant 0 : index
    %c0_225 = arith.constant 0 : index
    %c0_226 = arith.constant 0 : index
    %175 = vector.load %arg1[%c0_224, %c0_225, %c0_226] : memref<1x4x256xf32, #tpu.memory_space<vmem>>, vector<1x4x256xf32>
    %176 = vector.shape_cast %175 : vector<1x4x256xf32> to vector<4x256xf32>
    %cst_227 = arith.constant dense<0.000000e+00> : vector<4xf32>
    %177 = vector.multi_reduction <add>, %176, %cst_227 [1] : vector<4x256xf32> to vector<4xf32>
    %178 = vector.shape_cast %177 : vector<4xf32> to vector<4x1xf32>
    %cst_228 = arith.constant 2.560000e+02 : f32
    %179 = vector.broadcast %cst_228 : f32 to vector<4x1xf32>
    %180 = arith.divf %178, %179 : vector<4x1xf32>
    %181 = vector.broadcast %180 : vector<4x1xf32> to vector<4x256xf32>
    %182 = arith.subf %176, %181 : vector<4x256xf32>
    %183 = arith.mulf %182, %182 : vector<4x256xf32>
    %cst_229 = arith.constant dense<0.000000e+00> : vector<4xf32>
    %184 = vector.multi_reduction <add>, %183, %cst_229 [1] : vector<4x256xf32> to vector<4xf32>
    %185 = vector.shape_cast %184 : vector<4xf32> to vector<4x1xf32>
    %cst_230 = arith.constant 2.550000e+02 : f32
    %186 = vector.broadcast %cst_230 : f32 to vector<4x1xf32>
    %187 = arith.divf %185, %186 : vector<4x1xf32>
    %188 = math.sqrt %187 : vector<4x1xf32>
    %189 = vector.broadcast %188 : vector<4x1xf32> to vector<4x256xf32>
    %190 = arith.mulf %189, %174 : vector<4x256xf32>
    %191 = arith.addf %176, %190 : vector<4x256xf32>
    %c0_231 = arith.constant 0 : index
    %c0_232 = arith.constant 0 : index
    %c0_233 = arith.constant 0 : index
    %192 = vector.load %arg6[%c0_231, %c0_232, %c0_233] : memref<1x4x256xf32, #tpu.memory_space<vmem>>, vector<1x4x256xf32>
    %193 = vector.shape_cast %192 : vector<1x4x256xf32> to vector<4x256xf32>
    %194 = vector.shape_cast %191 : vector<4x256xf32> to vector<1x4x256xf32>
    tpu.vector_store %arg6[%c0_231, %c0_232, %c0_233], %194 {strides = array<i32>} : memref<1x4x256xf32, #tpu.memory_space<vmem>>, vector<1x4x256xf32>,
    return
  }
  func.func @transform_0(%arg0: i32) -> (i32, i32, i32) {
    %c0_i32 = arith.constant 0 : i32
    %c0_i32_0 = arith.constant 0 : i32
    %c0_i32_1 = arith.constant 0 : i32
    return %arg0, %c0_i32, %c0_i32_0 : i32, i32, i32
  }
  func.func @transform_1(%arg0: i32) -> (i32, i32, i32) {
    %c0_i32 = arith.constant 0 : i32
    %c0_i32_0 = arith.constant 0 : i32
    %c0_i32_1 = arith.constant 0 : i32
    return %arg0, %c0_i32, %c0_i32_0 : i32, i32, i32
  }
  func.func @transform_2(%arg0: i32) -> (i32, i32) {
    %c0_i32 = arith.constant 0 : i32
    %c0_i32_0 = arith.constant 0 : i32
    %c0_i32_1 = arith.constant 0 : i32
    return %c0_i32, %c0_i32_0 : i32, i32
  }
  func.func @transform_3(%arg0: i32) -> (i32, i32) {
    %c0_i32 = arith.constant 0 : i32
    %c0_i32_0 = arith.constant 0 : i32
    %c0_i32_1 = arith.constant 0 : i32
    return %c0_i32, %c0_i32_0 : i32, i32
  }
  func.func @transform_4(%arg0: i32) -> (i32, i32) {
    %c0_i32 = arith.constant 0 : i32
    %c0_i32_0 = arith.constant 0 : i32
    %c0_i32_1 = arith.constant 0 : i32
    return %c0_i32, %c0_i32_0 : i32, i32
  }
  func.func @transform_5(%arg0: i32) -> (i32, i32, i32) {
    %c0_i32 = arith.constant 0 : i32
    %c0_i32_0 = arith.constant 0 : i32
    %c0_i32_1 = arith.constant 0 : i32
    return %arg0, %c0_i32, %c0_i32_0 : i32, i32, i32
  }
}

</mosaic_0001>

<llo_original>
// kernel: spatial_offset_block_forward.1
$region0: #{spatial_offset_block_forward.1}
  #allocation0 [shape = 'u32[]', space=smem, size = 0x4, offset = 0x4, fixed_abs, tag = 'smem constant byte address 0x4 - core index']
  #allocation1 [shape = 'u32[144,128]{1,0:T(1,128)}', space=vmem, size = 0x12000, scoped, tag = 'internal scratch']
  #allocation2 [shape = 'f32[18,18,4]{2,1,0:T(8,128)}', space=vmem, size = 0x36000, scoped, tag = 'scratch operand']
  #allocation3 [shape = 'f32[256,36]{1,0:T(8,128)}', space=vmem, size = 0x20000, scoped, tag = 'scratch operand']
  #allocation4 [shape = 'f32[18,18,128]{2,1,0:T(8,128)}', space=vmem, size = 0x36000, scoped, tag = 'scratch operand']
  #allocation5 [shape = 'f32[18,18,64]{2,1,0:T(8,128)}', space=vmem, size = 0x36000, scoped, tag = 'scratch operand']
  #allocation6 [shape = 'f32[256,64]{1,0:T(8,128)}', space=vmem, size = 0x20000, scoped, tag = 'scratch operand']
  %s0 = inlined_call_operand.vmem [shape: f32[2,4,256], index: 0, kind: input, shape index: {}]
  %s1 = inlined_call_operand.vmem [shape: f32[2,4,256], index: 1, kind: input, shape index: {}]
  %s2 = inlined_call_operand.vmem [shape: f32[36,128], index: 2, kind: input, shape index: {}]
  %s3 = inlined_call_operand.vmem [shape: bf16[1152,64], index: 3, kind: input, shape index: {}]
  %s4 = inlined_call_operand.vmem [shape: bf16[4,576], index: 4, kind: input, shape index: {}]
  %s5 = inlined_call_operand.vmem [shape: f32[2,4,256], index: 5, kind: output, shape index: {}]
  %s6 = sld [smem:[#allocation0]]
  $region53: #{spatial_offset_block_forward.1} parent=0
    _
  %s8 = ssub.s32 1, %s6
  %s9 = scalar_select 0, %s8, %s6
  loop: start=0, step=1, limit=4
  $region2: #{spatial_offset_block_forward.1} parent=0 // loop_pre_header
    _
  $region3: #{spatial_offset_block_forward.1} parent=0 // loop_header
    %s11 = sphi 0, %s15
    %p12 = scmp.ge.s32.totalorder %s11, 4
    %s21 = sphi 0, %s23
    %s24 = sphi 0, %s21
    %s25 = sphi 0, %s24
    %s41 = sphi 0, %s25
    %s47 = sphi 0, %s49
    %s50 = sphi 0, %s47
    %s51 = sphi 0, %s50
    %s67 = sphi 0, %s51
    %s71 = sphi 0, %s71
    %s73 = sphi 0, %s71
    %s74 = sphi 0, %s73
    %s88 = sphi 0, %s74
    %s92 = sphi 0, %s92
    %s94 = sphi 0, %s92
    %s95 = sphi 0, %s94
    %s109 = sphi 0, %s95
    %s113 = sphi 0, %s113
    %s115 = sphi 0, %s113
    %s116 = sphi 0, %s115
    %s130 = sphi 0, %s116
    %s136 = sphi 0, %s138
    %s139 = sphi 0, %s136
    %s140 = sphi 0, %s139
    %s156 = sphi 0, %s140
  $region4: #{spatial_offset_block_forward.1} parent=0 // loop_header_branch
    %14 = sbr.rel (%p12) target = $region8
  $region5: #{spatial_offset_block_forward.1} parent=0 // loop_body
    %s16 = ssub.s32 %s11, 1
    %s17 = ssub.s32 %s11, 2
    %s18 = sadd.s32 %s11, 1
    %s19 = ssub.s32 %s11, %s18
    %p20 = scmp.eq.s32.totalorder %s19, 0
    %s22 = sadd.s32 %s21, 1
    %s23 = scalar_select %p20, %s21, %s22
    %p26 = pneg %p20
    %p27 = scmp.eq.s32.totalorder %s11, 1
    %p28 = por %p26, %p27
    %p29 = scmp.ne.s32.totalorder %s21, %s24
    %p30 = scmp.eq.s32.totalorder %s11, 0
    %p31 = por %p29, %p30
    %p32 = scmp.ne.s32.totalorder %s21, %s24
    %p33 = scmp.eq.s32.totalorder %s16, 1
    %p34 = por %p32, %p33
    %p35 = scmp.ne.s32.totalorder %s24, %s25
    %p36 = scmp.eq.s32.totalorder %s16, 0
    %p37 = por %p35, %p36
    %p38 = scmp.ne.s32.totalorder %s24, %s25
    %p39 = scmp.eq.s32.totalorder %s17, 1
    %p40 = por %p38, %p39
    %p42 = scmp.ne.s32.totalorder %s25, %s41
    %p43 = scmp.eq.s32.totalorder %s17, 0
    %p44 = por %p42, %p43
    %s45 = ssub.s32 %s11, %s18
    %p46 = scmp.eq.s32.totalorder %s45, 0
    %s48 = sadd.s32 %s47, 1
    %s49 = scalar_select %p46, %s47, %s48
    %p52 = pneg %p46
    %p53 = scmp.eq.s32.totalorder %s11, 1
    %p54 = por %p52, %p53
    %p55 = scmp.ne.s32.totalorder %s47, %s50
    %p56 = scmp.eq.s32.totalorder %s11, 0
    %p57 = por %p55, %p56
    %p58 = scmp.ne.s32.totalorder %s47, %s50
    %p59 = scmp.eq.s32.totalorder %s16, 1
    %p60 = por %p58, %p59
    %p61 = scmp.ne.s32.totalorder %s50, %s51
    %p62 = scmp.eq.s32.totalorder %s16, 0
    %p63 = por %p61, %p62
    %p64 = scmp.ne.s32.totalorder %s50, %s51
    %p65 = scmp.eq.s32.totalorder %s17, 1
    %p66 = por %p64, %p65
    %p68 = scmp.ne.s32.totalorder %s51, %s67
    %p69 = scmp.eq.s32.totalorder %s17, 0
    %p70 = por %p68, %p69
    %s72 = sadd.s32 %s71, 1
    %p75 = scmp.eq.s32.totalorder %s11, 1
    %p76 = scmp.ne.s32.totalorder %s71, %s73
    %p77 = scmp.eq.s32.totalorder %s11, 0
    %p78 = por %p76, %p77
    %p79 = scmp.ne.s32.totalorder %s71, %s73
    %p80 = scmp.eq.s32.totalorder %s16, 1
    %p81 = por %p79, %p80
    %p82 = scmp.ne.s32.totalorder %s73, %s74
    %p83 = scmp.eq.s32.totalorder %s16, 0
    %p84 = por %p82, %p83
    %p85 = scmp.ne.s32.totalorder %s73, %s74
    %p86 = scmp.eq.s32.totalorder %s17, 1
    %p87 = por %p85, %p86
    %p89 = scmp.ne.s32.totalorder %s74, %s88
    %p90 = scmp.eq.s32.totalorder %s17, 0
    %p91 = por %p89, %p90
    %s93 = sadd.s32 %s92, 1
    %p96 = scmp.eq.s32.totalorder %s11, 1
    %p97 = scmp.ne.s32.totalorder %s92, %s94
    %p98 = scmp.eq.s32.totalorder %s11, 0
    %p99 = por %p97, %p98
    %p100 = scmp.ne.s32.totalorder %s92, %s94
    %p101 = scmp.eq.s32.totalorder %s16, 1
    %p102 = por %p100, %p101
    %p103 = scmp.ne.s32.totalorder %s94, %s95
    %p104 = scmp.eq.s32.totalorder %s16, 0
    %p105 = por %p103, %p104
    %p106 = scmp.ne.s32.totalorder %s94, %s95
    %p107 = scmp.eq.s32.totalorder %s17, 1
    %p108 = por %p106, %p107
    %p110 = scmp.ne.s32.totalorder %s95, %s109
    %p111 = scmp.eq.s32.totalorder %s17, 0
    %p112 = por %p110, %p111
    %s114 = sadd.s32 %s113, 1
    %p117 = scmp.eq.s32.totalorder %s11, 1
    %p118 = scmp.ne.s32.totalorder %s113, %s115
    %p119 = scmp.eq.s32.totalorder %s11, 0
    %p120 = por %p118, %p119
    %p121 = scmp.ne.s32.totalorder %s113, %s115
    %p122 = scmp.eq.s32.totalorder %s16, 1
    %p123 = por %p121, %p122
    %p124 = scmp.ne.s32.totalorder %s115, %s116
    %p125 = scmp.eq.s32.totalorder %s16, 0
    %p126 = por %p124, %p125
    %p127 = scmp.ne.s32.totalorder %s115, %s116
    %p128 = scmp.eq.s32.totalorder %s17, 1
    %p129 = por %p127, %p128
    %p131 = scmp.ne.s32.totalorder %s116, %s130
    %p132 = scmp.eq.s32.totalorder %s17, 0
    %p133 = por %p131, %p132
    %s134 = ssub.s32 %s11, %s18
    %p135 = scmp.eq.s32.totalorder %s134, 0
    %s137 = sadd.s32 %s136, 1
    %s138 = scalar_select %p135, %s136, %s137
    %p141 = pneg %p135
    %p142 = scmp.eq.s32.totalorder %s11, 1
    %p143 = por %p141, %p142
    %p144 = scmp.ne.s32.totalorder %s136, %s139
    %p145 = scmp.eq.s32.totalorder %s11, 0
    %p146 = por %p144, %p145
    %p147 = scmp.ne.s32.totalorder %s136, %s139
    %p148 = scmp.eq.s32.totalorder %s16, 1
    %p149 = por %p147, %p148
    %p150 = scmp.ne.s32.totalorder %s139, %s140
    %p151 = scmp.eq.s32.totalorder %s16, 0
    %p152 = por %p150, %p151
    %p153 = scmp.ne.s32.totalorder %s139, %s140
    %p154 = scmp.eq.s32.totalorder %s17, 1
    %p155 = por %p153, %p154
    %p157 = scmp.ne.s32.totalorder %s140, %s156
    %p158 = scmp.eq.s32.totalorder %s17, 0
    %p159 = por %p157, %p158
    %p160 = scmp.le.s32.totalorder 1, %s11
    %p161 = scmp.lt.s32.totalorder %s11, 3
    %p162 = pnand %p160, %p161
    %p163 = pneg %p162
    // Predicated region
    $region9: #{spatial_offset_block_forward.1} parent=5 // pred_check
      _
    $region10: #{spatial_offset_block_forward.1} parent=5 // pred_check_branch
      %165 = sbr.rel (%p162) target = $region12
    $region11: #{spatial_offset_block_forward.1} parent=5 // pred_region
      %s166 = ssub.s32 %s11, 1
      // Predicated region
      $region13: #{spatial_offset_block_forward.1} parent=11 // pred_check
        %p167 = pneg %p84
      $region14: #{spatial_offset_block_forward.1} parent=11 // pred_check_branch
        %169 = sbr.rel (%p167) target = $region16
      $region15: #{spatial_offset_block_forward.1} parent=11 // pred_region
        _
      $region16: #{spatial_offset_block_forward.1} parent=11 // pred_fallthru
        _
      // Predicated region
      $region17: #{spatial_offset_block_forward.1} parent=11 // pred_check
        %p170 = pneg %p105
      $region18: #{spatial_offset_block_forward.1} parent=11 // pred_check_branch
        %172 = sbr.rel (%p170) target = $region20
      $region19: #{spatial_offset_block_forward.1} parent=11 // pred_region
        _
      $region20: #{spatial_offset_block_forward.1} parent=11 // pred_fallthru
        _
      // Predicated region
      $region21: #{spatial_offset_block_forward.1} parent=11 // pred_check
        %p173 = pneg %p126
      $region22: #{spatial_offset_block_forward.1} parent=11 // pred_check_branch
        %175 = sbr.rel (%p173) target = $region24
      $region23: #{spatial_offset_block_forward.1} parent=11 // pred_region
        _
      $region24: #{spatial_offset_block_forward.1} parent=11 // pred_fallthru
        _
    $region12: #{spatial_offset_block_forward.1} parent=5 // pred_fallthru
      _
    %p176 = scmp.lt.s32.totalorder %s11, 2
    // Predicated region
    $region25: #{spatial_offset_block_forward.1} parent=5 // pred_check
      %p177 = pneg %p176
    $region26: #{spatial_offset_block_forward.1} parent=5 // pred_check_branch
      %179 = sbr.rel (%p177) target = $region28
    $region27: #{spatial_offset_block_forward.1} parent=5 // pred_region
      // Predicated region
      $region29: #{spatial_offset_block_forward.1} parent=27 // pred_check
        %p180 = pneg %p31
      $region30: #{spatial_offset_block_forward.1} parent=27 // pred_check_branch
        %182 = sbr.rel (%p180) target = $region32
      $region31: #{spatial_offset_block_forward.1} parent=27 // pred_region
        %p183 = scmp.lt.s32.totalorder %s11, 1
        %s184 = scalar_select %p183, %s11, 1
        %s185 = smul.addr %s184, 2
        %s186 = smul.addr %s185, 4
        %s187 = scalar_lea.vmem %s0, %s186
      $region32: #{spatial_offset_block_forward.1} parent=27 // pred_fallthru
        _
      // Predicated region
      $region33: #{spatial_offset_block_forward.1} parent=27 // pred_check
        %p188 = pneg %p57
      $region34: #{spatial_offset_block_forward.1} parent=27 // pred_check_branch
        %190 = sbr.rel (%p188) target = $region36
      $region35: #{spatial_offset_block_forward.1} parent=27 // pred_region
        %p191 = scmp.lt.s32.totalorder %s11, 1
        %s192 = scalar_select %p191, %s11, 1
        %s193 = smul.addr %s192, 2
        %s194 = smul.addr %s193, 4
        %s195 = scalar_lea.vmem %s1, %s194
      $region36: #{spatial_offset_block_forward.1} parent=27 // pred_fallthru
        _
    $region28: #{spatial_offset_block_forward.1} parent=5 // pred_fallthru
      _
    %p196 = scmp.le.s32.totalorder 1, %s11
    %p197 = scmp.lt.s32.totalorder %s11, 3
    %p198 = pnand %p196, %p197
    %p199 = pneg %p198
    // Predicated region
    $region37: #{spatial_offset_block_forward.1} parent=5 // pred_check
      _
    $region38: #{spatial_offset_block_forward.1} parent=5 // pred_check_branch
      %201 = sbr.rel (%p198) target = $region40
    $region39: #{spatial_offset_block_forward.1} parent=5 // pred_region
      %s202 = ssub.s32 %s11, 1
      %p203 = scmp.lt.s32.totalorder %s16, 1
      %s204 = scalar_select %p203, %s16, 1
      %s205 = smul.addr %s204, 2
      %s206 = smul.addr %s205, 4
      %s207 = scalar_lea.vmem %s0, %s206
      %p208 = pneg %p37
      %p209 = pneg %p34
      %p210 = scmp.lt.s32.totalorder %s16, 1
      %s211 = scalar_select %p210, %s16, 1
      %s212 = smul.addr %s211, 2
      %s213 = smul.addr %s212, 4
      %s214 = scalar_lea.vmem %s1, %s213
      %p215 = pneg %p63
      %p216 = pneg %p60
      %p217 = pneg %p84
      %p218 = pneg %p81
      %p219 = pneg %p105
      %p220 = pneg %p102
      %p221 = pneg %p126
      %p222 = pneg %p123
      %p223 = pneg %p152
      %p224 = pneg %p149
      %p225 = scmp.lt.s32.totalorder %s16, 1
      %s226 = scalar_select %p225, %s16, 1
      %s227 = smul.addr %s226, 2
      %s228 = smul.addr %s227, 4
      %s229 = scalar_lea.vmem %s5, %s228
      %p230 = scmp.lt.s32.totalorder %s16, 1
      %s231 = scalar_select %p230, %s16, 1
      %s232 = smul.addr %s231, 2
      %s233 = smul.addr %s232, 4
      %s234 = scalar_lea.vmem %s0, %s233
      %p235 = scmp.lt.s32.totalorder %s16, 1
      %s236 = scalar_select %p235, %s16, 1
      %s237 = smul.addr %s236, 2
      %s238 = smul.addr %s237, 4
      %s239 = scalar_lea.vmem %s1, %s238
      %p240 = scmp.lt.s32.totalorder %s16, 1
      %s241 = scalar_select %p240, %s16, 1
      %s242 = smul.addr %s241, 2
      %s243 = smul.addr %s242, 4
      %s244 = scalar_lea.vmem %s5, %s243
      %v246 = vld [vmem:[%s239] sm:$0xff]
      %v248 = vcombine.high %v246, %v246
      %vm250 = vcmask 1043456
      %v251 = vsel %vm250, %v246, 0.0
      %v252 = vsel %vm250, %v248, 0.0
      %v253 = vadd.f32 %v251, %v252
      %254 = vadd.xlane.f32.xlu0 %v253
      %v255 = vpop.xlane.xlu0 %254
      %v256 = vrcp.pop 256.0
      %v257 = vmul.f32 %v255, %v256
      %v260 = vunpack.c.l.s4 839922192
      %v261 = vunpack.c.0.s8 %v260
      %v262 = vlaneseq
      %v263 = vshrl.u32 %v262, 7
      %v264 = vsub.s32 %v261, %v263
      %v265 = vrot.slane %v257, %v264
      %v267 = vsub.f32 %v246, %v265
      %v268 = vmul.f32 %v267, %v267
      %v270 = vcombine.high %v268, %v268
      %v272 = vsel %vm250, %v268, 0.0
      %v273 = vsel %vm250, %v270, 0.0
      %v274 = vadd.f32 %v272, %v273
      %275 = vadd.xlane.f32.xlu0 %v274
      %v276 = vpop.xlane.xlu0 %275
      %v277 = vmul.f32 %v276, %v256
      %v278 = vadd.f32 %v277, 1e-05
      %v279 = vrsqrt.pop %v278
      %v282 = vunpack.c.l.s4 839922192
      %v283 = vunpack.c.0.s8 %v282
      %v284 = vlaneseq
      %v285 = vshrl.u32 %v284, 7
      %v286 = vsub.s32 %v283, %v285
      %v287 = vrot.slane %v279, %v286
      %v289 = vmul.f32 %v267, %v287
      %v291 = vcombine.high %v289, %v289
      %293 = vxpose.xlu0.b32.start [1/16] %v289, 128
      %294 = vxpose.xlu0.b32.cont [2/16] 0.0, 128
      %295 = vxpose.xlu0.b32.cont [3/16] 0.0, 128
      %296 = vxpose.xlu0.b32.cont [4/16] 0.0, 128
      %297 = vxpose.xlu0.b32.cont [5/16] 0.0, 128
      %298 = vxpose.xlu0.b32.cont [6/16] 0.0, 128
      %299 = vxpose.xlu0.b32.cont [7/16] 0.0, 128
      %300 = vxpose.xlu0.b32.cont [8/16] 0.0, 128
      %301 = vxpose.xlu0.b32.cont [9/16] 0.0, 128
      %302 = vxpose.xlu0.b32.cont [10/16] 0.0, 128
      %303 = vxpose.xlu0.b32.cont [11/16] 0.0, 128
      %304 = vxpose.xlu0.b32.cont [12/16] 0.0, 128
      %305 = vxpose.xlu0.b32.cont [13/16] 0.0, 128
      %306 = vxpose.xlu0.b32.cont [14/16] 0.0, 128
      %307 = vxpose.xlu0.b32.cont [15/16] 0.0, 128
      %308 = vxpose.xlu0.b32.end [16/16] 0.0, 128
      %v309 = vpop.trf.xlu0
      %v310 = vpop.trf.xlu0
      %v311 = vpop.trf.xlu0
      %v312 = vpop.trf.xlu0
      %v313 = vpop.trf.xlu0
      %v314 = vpop.trf.xlu0
      %v315 = vpop.trf.xlu0
      %v316 = vpop.trf.xlu0
      %v317 = vpop.trf.xlu0
      %v318 = vpop.trf.xlu0
      %v319 = vpop.trf.xlu0
      %v320 = vpop.trf.xlu0
      %v321 = vpop.trf.xlu0
      %v322 = vpop.trf.xlu0
      %v323 = vpop.trf.xlu0
      %v324 = vpop.trf.xlu0
      %325 = vxpose.xlu0.b32.start [1/16] %v291, 128
      %326 = vxpose.xlu0.b32.cont [2/16] 0.0, 128
      %327 = vxpose.xlu0.b32.cont [3/16] 0.0, 128
      %328 = vxpose.xlu0.b32.cont [4/16] 0.0, 128
      %329 = vxpose.xlu0.b32.cont [5/16] 0.0, 128
      %330 = vxpose.xlu0.b32.cont [6/16] 0.0, 128
      %331 = vxpose.xlu0.b32.cont [7/16] 0.0, 128
      %332 = vxpose.xlu0.b32.cont [8/16] 0.0, 128
      %333 = vxpose.xlu0.b32.cont [9/16] 0.0, 128
      %334 = vxpose.xlu0.b32.cont [10/16] 0.0, 128
      %335 = vxpose.xlu0.b32.cont [11/16] 0.0, 128
      %336 = vxpose.xlu0.b32.cont [12/16] 0.0, 128
      %337 = vxpose.xlu0.b32.cont [13/16] 0.0, 128
      %338 = vxpose.xlu0.b32.cont [14/16] 0.0, 128
      %339 = vxpose.xlu0.b32.cont [15/16] 0.0, 128
      %340 = vxpose.xlu0.b32.end [16/16] 0.0, 128
      %v341 = vpop.trf.xlu0
      %v342 = vpop.trf.xlu0
      %v343 = vpop.trf.xlu0
      %v344 = vpop.trf.xlu0
      %v345 = vpop.trf.xlu0
      %v346 = vpop.trf.xlu0
      %v347 = vpop.trf.xlu0
      %v348 = vpop.trf.xlu0
      %v349 = vpop.trf.xlu0
      %v350 = vpop.trf.xlu0
      %v351 = vpop.trf.xlu0
      %v352 = vpop.trf.xlu0
      %v353 = vpop.trf.xlu0
      %v354 = vpop.trf.xlu0
      %v355 = vpop.trf.xlu0
      %v356 = vpop.trf.xlu0
      %s357 = scalar_lea.vmem [#allocation2], 24
      %vm358 = vcmask 31744
      %359 = vst.msk [vmem:[%s357 + $0x1] sm:$0xff] %vm358, %v309
      %360 = vst.msk [vmem:[%s357 + $0x9] sm:$0xff] %vm358, %v310
      %361 = vst.msk [vmem:[%s357 + $0x19] sm:$0xff] %vm358, %v311
      %362 = vst.msk [vmem:[%s357 + $0x21] sm:$0xff] %vm358, %v312
      %363 = vst.msk [vmem:[%s357 + $0x31] sm:$0xff] %vm358, %v313
      %364 = vst.msk [vmem:[%s357 + $0x39] sm:$0xff] %vm358, %v314
      %365 = vst.msk [vmem:[%s357 + $0x49] sm:$0xff] %vm358, %v315
      %366 = vst.msk [vmem:[%s357 + $0x51] sm:$0xff] %vm358, %v316
      %367 = vst.msk [vmem:[%s357 + $0x61] sm:$0xff] %vm358, %v317
      %368 = vst.msk [vmem:[%s357 + $0x69] sm:$0xff] %vm358, %v318
      %369 = vst.msk [vmem:[%s357 + $0x79] sm:$0xff] %vm358, %v319
      %370 = vst.msk [vmem:[%s357 + $0x81] sm:$0xff] %vm358, %v320
      %371 = vst.msk [vmem:[%s357 + $0x91] sm:$0xff] %vm358, %v321
      %372 = vst.msk [vmem:[%s357 + $0x99] sm:$0xff] %vm358, %v322
      %373 = vst.msk [vmem:[%s357 + $0xa9] sm:$0xff] %vm358, %v323
      %374 = vst.msk [vmem:[%s357 + $0xb1] sm:$0xff] %vm358, %v324
      %375 = vst.msk [vmem:[%s357 + $0xc1] sm:$0xff] %vm358, %v341
      %376 = vst.msk [vmem:[%s357 + $0xc9] sm:$0xff] %vm358, %v342
      %377 = vst.msk [vmem:[%s357 + $0xd9] sm:$0xff] %vm358, %v343
      %378 = vst.msk [vmem:[%s357 + $0xe1] sm:$0xff] %vm358, %v344
      %379 = vst.msk [vmem:[%s357 + $0xf1] sm:$0xff] %vm358, %v345
      %380 = vst.msk [vmem:[%s357 + $0xf9] sm:$0xff] %vm358, %v346
      %381 = vst.msk [vmem:[%s357 + $0x109] sm:$0xff] %vm358, %v347
      %382 = vst.msk [vmem:[%s357 + $0x111] sm:$0xff] %vm358, %v348
      %383 = vst.msk [vmem:[%s357 + $0x121] sm:$0xff] %vm358, %v349
      %384 = vst.msk [vmem:[%s357 + $0x129] sm:$0xff] %vm358, %v350
      %385 = vst.msk [vmem:[%s357 + $0x139] sm:$0xff] %vm358, %v351
      %386 = vst.msk [vmem:[%s357 + $0x141] sm:$0xff] %vm358, %v352
      %387 = vst.msk [vmem:[%s357 + $0x151] sm:$0xff] %vm358, %v353
      %388 = vst.msk [vmem:[%s357 + $0x159] sm:$0xff] %vm358, %v354
      %389 = vst.msk [vmem:[%s357 + $0x169] sm:$0xff] %vm358, %v355
      %390 = vst.msk [vmem:[%s357 + $0x171] sm:$0xff] %vm358, %v356
      %s391 = scalar_lea.vmem [#allocation2], 48
      %v392 = vld [vmem:[%s391 + $0x1] sm:$0xff]
      %v393 = vld [vmem:[%s391 + $0x9] sm:$0xff]
      %394 = vst.msk [vmem:[#allocation2 + $0x1] sm:$0xff] %vm358, %v392
      %395 = vst.msk [vmem:[#allocation2 + $0x9] sm:$0xff] %vm358, %v393
      %s396 = scalar_lea.vmem [#allocation2], 360
      %v397 = vld [vmem:[%s396 + $0x1] sm:$0xff]
      %v398 = vld [vmem:[%s396 + $0x9] sm:$0xff]
      %s399 = scalar_lea.vmem [#allocation2], 408
      %400 = vst.msk [vmem:[%s399 + $0x1] sm:$0xff] %vm358, %v397
      %401 = vst.msk [vmem:[%s399 + $0x9] sm:$0xff] %vm358, %v398
      %v402 = vld [vmem:[#allocation2 + $0x2] sm:$0x1]
      %v403 = vld [vmem:[#allocation2 + $0x1a] sm:$0x1]
      %v404 = vld [vmem:[#allocation2 + $0x32] sm:$0x1]
      %v405 = vld [vmem:[#allocation2 + $0x4a] sm:$0x1]
      %v406 = vld [vmem:[#allocation2 + $0x62] sm:$0x1]
      %v407 = vld [vmem:[#allocation2 + $0x7a] sm:$0x1]
      %v408 = vld [vmem:[#allocation2 + $0x92] sm:$0x1]
      %v409 = vld [vmem:[#allocation2 + $0xaa] sm:$0x1]
      %v410 = vld [vmem:[#allocation2 + $0xc2] sm:$0x1]
      %v411 = vld [vmem:[#allocation2 + $0xda] sm:$0x1]
      %v412 = vld [vmem:[#allocation2 + $0xf2] sm:$0x1]
      %v413 = vld [vmem:[#allocation2 + $0x10a] sm:$0x1]
      %v414 = vld [vmem:[#allocation2 + $0x122] sm:$0x1]
      %v415 = vld [vmem:[#allocation2 + $0x13a] sm:$0x1]
      %v416 = vld [vmem:[#allocation2 + $0x152] sm:$0x1]
      %v417 = vld [vmem:[#allocation2 + $0x16a] sm:$0x1]
      %v418 = vld [vmem:[#allocation2 + $0x182] sm:$0x1]
      %v419 = vld [vmem:[#allocation2 + $0x19a] sm:$0x1]
      %vm420 = vcmask 24576
      %421 = vst.msk [vmem:[#allocation2] sm:$0x1] %vm420, %v402
      %422 = vst.msk [vmem:[#allocation2 + $0x18] sm:$0x1] %vm420, %v403
      %423 = vst.msk [vmem:[#allocation2 + $0x30] sm:$0x1] %vm420, %v404
      %424 = vst.msk [vmem:[#allocation2 + $0x48] sm:$0x1] %vm420, %v405
      %425 = vst.msk [vmem:[#allocation2 + $0x60] sm:$0x1] %vm420, %v406
      %426 = vst.msk [vmem:[#allocation2 + $0x78] sm:$0x1] %vm420, %v407
      %427 = vst.msk [vmem:[#allocation2 + $0x90] sm:$0x1] %vm420, %v408
      %428 = vst.msk [vmem:[#allocation2 + $0xa8] sm:$0x1] %vm420, %v409
      %429 = vst.msk [vmem:[#allocation2 + $0xc0] sm:$0x1] %vm420, %v410
      %430 = vst.msk [vmem:[#allocation2 + $0xd8] sm:$0x1] %vm420, %v411
      %431 = vst.msk [vmem:[#allocation2 + $0xf0] sm:$0x1] %vm420, %v412
      %432 = vst.msk [vmem:[#allocation2 + $0x108] sm:$0x1] %vm420, %v413
      %433 = vst.msk [vmem:[#allocation2 + $0x120] sm:$0x1] %vm420, %v414
      %434 = vst.msk [vmem:[#allocation2 + $0x138] sm:$0x1] %vm420, %v415
      %435 = vst.msk [vmem:[#allocation2 + $0x150] sm:$0x1] %vm420, %v416
      %436 = vst.msk [vmem:[#allocation2 + $0x168] sm:$0x1] %vm420, %v417
      %437 = vst.msk [vmem:[#allocation2 + $0x180] sm:$0x1] %vm420, %v418
      %438 = vst.msk [vmem:[#allocation2 + $0x198] sm:$0x1] %vm420, %v419
      %v439 = vld [vmem:[#allocation2 + $0xf] sm:$0x1]
      %v440 = vld [vmem:[#allocation2 + $0x27] sm:$0x1]
      %v441 = vld [vmem:[#allocation2 + $0x3f] sm:$0x1]
      %v442 = vld [vmem:[#allocation2 + $0x57] sm:$0x1]
      %v443 = vld [vmem:[#allocation2 + $0x6f] sm:$0x1]
      %v444 = vld [vmem:[#allocation2 + $0x87] sm:$0x1]
      %v445 = vld [vmem:[#allocation2 + $0x9f] sm:$0x1]
      %v446 = vld [vmem:[#allocation2 + $0xb7] sm:$0x1]
      %v447 = vld [vmem:[#allocation2 + $0xcf] sm:$0x1]
      %v448 = vld [vmem:[#allocation2 + $0xe7] sm:$0x1]
      %v449 = vld [vmem:[#allocation2 + $0xff] sm:$0x1]
      %v450 = vld [vmem:[#allocation2 + $0x117] sm:$0x1]
      %v451 = vld [vmem:[#allocation2 + $0x12f] sm:$0x1]
      %v452 = vld [vmem:[#allocation2 + $0x147] sm:$0x1]
      %v453 = vld [vmem:[#allocation2 + $0x15f] sm:$0x1]
      %v454 = vld [vmem:[#allocation2 + $0x177] sm:$0x1]
      %v455 = vld [vmem:[#allocation2 + $0x18f] sm:$0x1]
      %v456 = vld [vmem:[#allocation2 + $0x1a7] sm:$0x1]
      %457 = vst.msk [vmem:[#allocation2 + $0x11] sm:$0x1] %vm420, %v439
      %458 = vst.msk [vmem:[#allocation2 + $0x29] sm:$0x1] %vm420, %v440
      %459 = vst.msk [vmem:[#allocation2 + $0x41] sm:$0x1] %vm420, %v441
      %460 = vst.msk [vmem:[#allocation2 + $0x59] sm:$0x1] %vm420, %v442
      %461 = vst.msk [vmem:[#allocation2 + $0x71] sm:$0x1] %vm420, %v443
      %462 = vst.msk [vmem:[#allocation2 + $0x89] sm:$0x1] %vm420, %v444
      %463 = vst.msk [vmem:[#allocation2 + $0xa1] sm:$0x1] %vm420, %v445
      %464 = vst.msk [vmem:[#allocation2 + $0xb9] sm:$0x1] %vm420, %v446
      %465 = vst.msk [vmem:[#allocation2 + $0xd1] sm:$0x1] %vm420, %v447
      %466 = vst.msk [vmem:[#allocation2 + $0xe9] sm:$0x1] %vm420, %v448
      %467 = vst.msk [vmem:[#allocation2 + $0x101] sm:$0x1] %vm420, %v449
      %468 = vst.msk [vmem:[#allocation2 + $0x119] sm:$0x1] %vm420, %v450
      %469 = vst.msk [vmem:[#allocation2 + $0x131] sm:$0x1] %vm420, %v451
      %470 = vst.msk [vmem:[#allocation2 + $0x149] sm:$0x1] %vm420, %v452
      %471 = vst.msk [vmem:[#allocation2 + $0x161] sm:$0x1] %vm420, %v453
      %472 = vst.msk [vmem:[#allocation2 + $0x179] sm:$0x1] %vm420, %v454
      %473 = vst.msk [vmem:[#allocation2 + $0x191] sm:$0x1] %vm420, %v455
      %474 = vst.msk [vmem:[#allocation2 + $0x1a9] sm:$0x1] %vm420, %v456
      %v475 = vld [vmem:[#allocation2] sm:$0xff]
      %v476 = vld [vmem:[#allocation2 + $0x8] sm:$0xff]
      %v477 = vld [vmem:[#allocation2 + $0x18] sm:$0xff]
      %v478 = vld [vmem:[#allocation2 + $0x20] sm:$0xff]
      %v479 = vld [vmem:[#allocation2 + $0x30] sm:$0xff]
      %v480 = vld [vmem:[#allocation2 + $0x38] sm:$0xff]
      %v481 = vld [vmem:[#allocation2 + $0x48] sm:$0xff]
      %v482 = vld [vmem:[#allocation2 + $0x50] sm:$0xff]
      %v483 = vld [vmem:[#allocation2 + $0x60] sm:$0xff]
      %v484 = vld [vmem:[#allocation2 + $0x68] sm:$0xff]
      %v485 = vld [vmem:[#allocation2 + $0x78] sm:$0xff]
      %v486 = vld [vmem:[#allocation2 + $0x80] sm:$0xff]
      %v487 = vld [vmem:[#allocation2 + $0x90] sm:$0xff]
      %v488 = vld [vmem:[#allocation2 + $0x98] sm:$0xff]
      %v489 = vld [vmem:[#allocation2 + $0xa8] sm:$0xff]
      %v490 = vld [vmem:[#allocation2 + $0xb0] sm:$0xff]
      %v491 = vld [vmem:[#allocation2 + $0xc0] sm:$0xff]
      %v492 = vld [vmem:[#allocation2 + $0xc8] sm:$0xff]
      %v493 = vld [vmem:[#allocation2 + $0xd8] sm:$0xff]
      %v494 = vld [vmem:[#allocation2 + $0xe0] sm:$0xff]
      %v495 = vld [vmem:[#allocation2 + $0xf0] sm:$0xff]
      %v496 = vld [vmem:[#allocation2 + $0xf8] sm:$0xff]
      %v497 = vld [vmem:[#allocation2 + $0x108] sm:$0xff]
      %v498 = vld [vmem:[#allocation2 + $0x110] sm:$0xff]
      %v499 = vld [vmem:[#allocation2 + $0x120] sm:$0xff]
      %v500 = vld [vmem:[#allocation2 + $0x128] sm:$0xff]
      %v501 = vld [vmem:[#allocation2 + $0x138] sm:$0xff]
      %v502 = vld [vmem:[#allocation2 + $0x140] sm:$0xff]
      %v503 = vld [vmem:[#allocation2 + $0x150] sm:$0xff]
      %v504 = vld [vmem:[#allocation2 + $0x158] sm:$0xff]
      %v505 = vld [vmem:[#allocation2 + $0x168] sm:$0xff]
      %v506 = vld [vmem:[#allocation2 + $0x170] sm:$0xff]
      %507 = vst.msk [vmem:[#allocation3] sm:$0xff] %vm358, %v475
      %508 = vst.msk [vmem:[#allocation3 + $0x8] sm:$0xff] %vm358, %v476
      %509 = vst.msk [vmem:[#allocation3 + $0x10] sm:$0xff] %vm358, %v477
      %510 = vst.msk [vmem:[#allocation3 + $0x18] sm:$0xff] %vm358, %v478
      %511 = vst.msk [vmem:[#allocation3 + $0x20] sm:$0xff] %vm358, %v479
      %512 = vst.msk [vmem:[#allocation3 + $0x28] sm:$0xff] %vm358, %v480
      %513 = vst.msk [vmem:[#allocation3 + $0x30] sm:$0xff] %vm358, %v481
      %514 = vst.msk [vmem:[#allocation3 + $0x38] sm:$0xff] %vm358, %v482
      %515 = vst.msk [vmem:[#allocation3 + $0x40] sm:$0xff] %vm358, %v483
      %516 = vst.msk [vmem:[#allocation3 + $0x48] sm:$0xff] %vm358, %v484
      %517 = vst.msk [vmem:[#allocation3 + $0x50] sm:$0xff] %vm358, %v485
      %518 = vst.msk [vmem:[#allocation3 + $0x58] sm:$0xff] %vm358, %v486
      %519 = vst.msk [vmem:[#allocation3 + $0x60] sm:$0xff] %vm358, %v487
      %520 = vst.msk [vmem:[#allocation3 + $0x68] sm:$0xff] %vm358, %v488
      %521 = vst.msk [vmem:[#allocation3 + $0x70] sm:$0xff] %vm358, %v489
      %522 = vst.msk [vmem:[#allocation3 + $0x78] sm:$0xff] %vm358, %v490
      %523 = vst.msk [vmem:[#allocation3 + $0x80] sm:$0xff] %vm358, %v491
      %524 = vst.msk [vmem:[#allocation3 + $0x88] sm:$0xff] %vm358, %v492
      %525 = vst.msk [vmem:[#allocation3 + $0x90] sm:$0xff] %vm358, %v493
      %526 = vst.msk [vmem:[#allocation3 + $0x98] sm:$0xff] %vm358, %v494
      %527 = vst.msk [vmem:[#allocation3 + $0xa0] sm:$0xff] %vm358, %v495
      %528 = vst.msk [vmem:[#allocation3 + $0xa8] sm:$0xff] %vm358, %v496
      %529 = vst.msk [vmem:[#allocation3 + $0xb0] sm:$0xff] %vm358, %v497
      %530 = vst.msk [vmem:[#allocation3 + $0xb8] sm:$0xff] %vm358, %v498
      %531 = vst.msk [vmem:[#allocation3 + $0xc0] sm:$0xff] %vm358, %v499
      %532 = vst.msk [vmem:[#allocation3 + $0xc8] sm:$0xff] %vm358, %v500
      %533 = vst.msk [vmem:[#allocation3 + $0xd0] sm:$0xff] %vm358, %v501
      %534 = vst.msk [vmem:[#allocation3 + $0xd8] sm:$0xff] %vm358, %v502
      %535 = vst.msk [vmem:[#allocation3 + $0xe0] sm:$0xff] %vm358, %v503
      %536 = vst.msk [vmem:[#allocation3 + $0xe8] sm:$0xff] %vm358, %v504
      %537 = vst.msk [vmem:[#allocation3 + $0xf0] sm:$0xff] %vm358, %v505
      %538 = vst.msk [vmem:[#allocation3 + $0xf8] sm:$0xff] %vm358, %v506
      %v539 = vld [vmem:[#allocation2 + $0x1] sm:$0xff]
      %v540 = vld [vmem:[#allocation2 + $0x9] sm:$0xff]
      %v541 = vld [vmem:[#allocation2 + $0x19] sm:$0xff]
      %v542 = vld [vmem:[#allocation2 + $0x21] sm:$0xff]
      %v543 = vld [vmem:[#allocation2 + $0x31] sm:$0xff]
      %v544 = vld [vmem:[#allocation2 + $0x39] sm:$0xff]
      %v545 = vld [vmem:[#allocation2 + $0x49] sm:$0xff]
      %v546 = vld [vmem:[#allocation2 + $0x51] sm:$0xff]
      %v547 = vld [vmem:[#allocation2 + $0x61] sm:$0xff]
      %v548 = vld [vmem:[#allocation2 + $0x69] sm:$0xff]
      %v549 = vld [vmem:[#allocation2 + $0x79] sm:$0xff]
      %v550 = vld [vmem:[#allocation2 + $0x81] sm:$0xff]
      %v551 = vld [vmem:[#allocation2 + $0x91] sm:$0xff]
      %v552 = vld [vmem:[#allocation2 + $0x99] sm:$0xff]
      %v553 = vld [vmem:[#allocation2 + $0xa9] sm:$0xff]
      %v554 = vld [vmem:[#allocation2 + $0xb1] sm:$0xff]
      %v555 = vld [vmem:[#allocation2 + $0xc1] sm:$0xff]
      %v556 = vld [vmem:[#allocation2 + $0xc9] sm:$0xff]
      %v557 = vld [vmem:[#allocation2 + $0xd9] sm:$0xff]
      %v558 = vld [vmem:[#allocation2 + $0xe1] sm:$0xff]
      %v559 = vld [vmem:[#allocation2 + $0xf1] sm:$0xff]
      %v560 = vld [vmem:[#allocation2 + $0xf9] sm:$0xff]
      %v561 = vld [vmem:[#allocation2 + $0x109] sm:$0xff]
      %v562 = vld [vmem:[#allocation2 + $0x111] sm:$0xff]
      %v563 = vld [vmem:[#allocation2 + $0x121] sm:$0xff]
      %v564 = vld [vmem:[#allocation2 + $0x129] sm:$0xff]
      %v565 = vld [vmem:[#allocation2 + $0x139] sm:$0xff]
      %v566 = vld [vmem:[#allocation2 + $0x141] sm:$0xff]
      %v567 = vld [vmem:[#allocation2 + $0x151] sm:$0xff]
      %v568 = vld [vmem:[#allocation2 + $0x159] sm:$0xff]
      %v569 = vld [vmem:[#allocation2 + $0x169] sm:$0xff]
      %v570 = vld [vmem:[#allocation2 + $0x171] sm:$0xff]
      %603 = vrot.lane.b32.xlu0 %v539, 4
      %v604 = vpop.permute.xlu0 %603
      %605 = vrot.lane.b32.xlu0 %v540, 4
      %v606 = vpop.permute.xlu0 %605
      %607 = vrot.lane.b32.xlu0 %v541, 4
      %v608 = vpop.permute.xlu0 %607
      %609 = vrot.lane.b32.xlu0 %v542, 4
      %v610 = vpop.permute.xlu0 %609
      %611 = vrot.lane.b32.xlu0 %v543, 4
      %v612 = vpop.permute.xlu0 %611
      %613 = vrot.lane.b32.xlu0 %v544, 4
      %v614 = vpop.permute.xlu0 %613
      %615 = vrot.lane.b32.xlu0 %v545, 4
      %v616 = vpop.permute.xlu0 %615
      %617 = vrot.lane.b32.xlu0 %v546, 4
      %v618 = vpop.permute.xlu0 %617
      %619 = vrot.lane.b32.xlu0 %v547, 4
      %v620 = vpop.permute.xlu0 %619
      %621 = vrot.lane.b32.xlu0 %v548, 4
      %v622 = vpop.permute.xlu0 %621
      %623 = vrot.lane.b32.xlu0 %v549, 4
      %v624 = vpop.permute.xlu0 %623
      %625 = vrot.lane.b32.xlu0 %v550, 4
      %v626 = vpop.permute.xlu0 %625
      %627 = vrot.lane.b32.xlu0 %v551, 4
      %v628 = vpop.permute.xlu0 %627
      %629 = vrot.lane.b32.xlu0 %v552, 4
      %v630 = vpop.permute.xlu0 %629
      %631 = vrot.lane.b32.xlu0 %v553, 4
      %v632 = vpop.permute.xlu0 %631
      %633 = vrot.lane.b32.xlu0 %v554, 4
      %v634 = vpop.permute.xlu0 %633
      %635 = vrot.lane.b32.xlu0 %v555, 4
      %v636 = vpop.permute.xlu0 %635
      %637 = vrot.lane.b32.xlu0 %v556, 4
      %v638 = vpop.permute.xlu0 %637
      %639 = vrot.lane.b32.xlu0 %v557, 4
      %v640 = vpop.permute.xlu0 %639
      %641 = vrot.lane.b32.xlu0 %v558, 4
      %v642 = vpop.permute.xlu0 %641
      %643 = vrot.lane.b32.xlu0 %v559, 4
      %v644 = vpop.permute.xlu0 %643
      %645 = vrot.lane.b32.xlu0 %v560, 4
      %v646 = vpop.permute.xlu0 %645
      %647 = vrot.lane.b32.xlu0 %v561, 4
      %v648 = vpop.permute.xlu0 %647
      %649 = vrot.lane.b32.xlu0 %v562, 4
      %v650 = vpop.permute.xlu0 %649
      %651 = vrot.lane.b32.xlu0 %v563, 4
      %v652 = vpop.permute.xlu0 %651
      %653 = vrot.lane.b32.xlu0 %v564, 4
      %v654 = vpop.permute.xlu0 %653
      %655 = vrot.lane.b32.xlu0 %v565, 4
      %v656 = vpop.permute.xlu0 %655
      %657 = vrot.lane.b32.xlu0 %v566, 4
      %v658 = vpop.permute.xlu0 %657
      %659 = vrot.lane.b32.xlu0 %v567, 4
      %v660 = vpop.permute.xlu0 %659
      %661 = vrot.lane.b32.xlu0 %v568, 4
      %v662 = vpop.permute.xlu0 %661
      %663 = vrot.lane.b32.xlu0 %v569, 4
      %v664 = vpop.permute.xlu0 %663
      %665 = vrot.lane.b32.xlu0 %v570, 4
      %v666 = vpop.permute.xlu0 %665
      %vm699 = vcmask 64544
      %700 = vst.msk [vmem:[#allocation3] sm:$0xff] %vm699, %v604
      %701 = vst.msk [vmem:[#allocation3 + $0x8] sm:$0xff] %vm699, %v606
      %702 = vst.msk [vmem:[#allocation3 + $0x10] sm:$0xff] %vm699, %v608
      %703 = vst.msk [vmem:[#allocation3 + $0x18] sm:$0xff] %vm699, %v610
      %704 = vst.msk [vmem:[#allocation3 + $0x20] sm:$0xff] %vm699, %v612
      %705 = vst.msk [vmem:[#allocation3 + $0x28] sm:$0xff] %vm699, %v614
      %706 = vst.msk [vmem:[#allocation3 + $0x30] sm:$0xff] %vm699, %v616
      %707 = vst.msk [vmem:[#allocation3 + $0x38] sm:$0xff] %vm699, %v618
      %708 = vst.msk [vmem:[#allocation3 + $0x40] sm:$0xff] %vm699, %v620
      %709 = vst.msk [vmem:[#allocation3 + $0x48] sm:$0xff] %vm699, %v622
      %710 = vst.msk [vmem:[#allocation3 + $0x50] sm:$0xff] %vm699, %v624
      %711 = vst.msk [vmem:[#allocation3 + $0x58] sm:$0xff] %vm699, %v626
      %712 = vst.msk [vmem:[#allocation3 + $0x60] sm:$0xff] %vm699, %v628
      %713 = vst.msk [vmem:[#allocation3 + $0x68] sm:$0xff] %vm699, %v630
      %714 = vst.msk [vmem:[#allocation3 + $0x70] sm:$0xff] %vm699, %v632
      %715 = vst.msk [vmem:[#allocation3 + $0x78] sm:$0xff] %vm699, %v634
      %716 = vst.msk [vmem:[#allocation3 + $0x80] sm:$0xff] %vm699, %v636
      %717 = vst.msk [vmem:[#allocation3 + $0x88] sm:$0xff] %vm699, %v638
      %718 = vst.msk [vmem:[#allocation3 + $0x90] sm:$0xff] %vm699, %v640
      %719 = vst.msk [vmem:[#allocation3 + $0x98] sm:$0xff] %vm699, %v642
      %720 = vst.msk [vmem:[#allocation3 + $0xa0] sm:$0xff] %vm699, %v644
      %721 = vst.msk [vmem:[#allocation3 + $0xa8] sm:$0xff] %vm699, %v646
      %722 = vst.msk [vmem:[#allocation3 + $0xb0] sm:$0xff] %vm699, %v648
      %723 = vst.msk [vmem:[#allocation3 + $0xb8] sm:$0xff] %vm699, %v650
      %724 = vst.msk [vmem:[#allocation3 + $0xc0] sm:$0xff] %vm699, %v652
      %725 = vst.msk [vmem:[#allocation3 + $0xc8] sm:$0xff] %vm699, %v654
      %726 = vst.msk [vmem:[#allocation3 + $0xd0] sm:$0xff] %vm699, %v656
      %727 = vst.msk [vmem:[#allocation3 + $0xd8] sm:$0xff] %vm699, %v658
      %728 = vst.msk [vmem:[#allocation3 + $0xe0] sm:$0xff] %vm699, %v660
      %729 = vst.msk [vmem:[#allocation3 + $0xe8] sm:$0xff] %vm699, %v662
      %730 = vst.msk [vmem:[#allocation3 + $0xf0] sm:$0xff] %vm699, %v664
      %731 = vst.msk [vmem:[#allocation3 + $0xf8] sm:$0xff] %vm699, %v666
      %v732 = vld [vmem:[#allocation2 + $0x2] sm:$0xff]
      %v733 = vld [vmem:[#allocation2 + $0xa] sm:$0xff]
      %v734 = vld [vmem:[#allocation2 + $0x1a] sm:$0xff]
      %v735 = vld [vmem:[#allocation2 + $0x22] sm:$0xff]
      %v736 = vld [vmem:[#allocation2 + $0x32] sm:$0xff]
      %v737 = vld [vmem:[#allocation2 + $0x3a] sm:$0xff]
      %v738 = vld [vmem:[#allocation2 + $0x4a] sm:$0xff]
      %v739 = vld [vmem:[#allocation2 + $0x52] sm:$0xff]
      %v740 = vld [vmem:[#allocation2 + $0x62] sm:$0xff]
      %v741 = vld [vmem:[#allocation2 + $0x6a] sm:$0xff]
      %v742 = vld [vmem:[#allocation2 + $0x7a] sm:$0xff]
      %v743 = vld [vmem:[#allocation2 + $0x82] sm:$0xff]
      %v744 = vld [vmem:[#allocation2 + $0x92] sm:$0xff]
      %v745 = vld [vmem:[#allocation2 + $0x9a] sm:$0xff]
      %v746 = vld [vmem:[#allocation2 + $0xaa] sm:$0xff]
      %v747 = vld [vmem:[#allocation2 + $0xb2] sm:$0xff]
      %v748 = vld [vmem:[#allocation2 + $0xc2] sm:$0xff]
      %v749 = vld [vmem:[#allocation2 + $0xca] sm:$0xff]
      %v750 = vld [vmem:[#allocation2 + $0xda] sm:$0xff]
      %v751 = vld [vmem:[#allocation2 + $0xe2] sm:$0xff]
      %v752 = vld [vmem:[#allocation2 + $0xf2] sm:$0xff]
      %v753 = vld [vmem:[#allocation2 + $0xfa] sm:$0xff]
      %v754 = vld [vmem:[#allocation2 + $0x10a] sm:$0xff]
      %v755 = vld [vmem:[#allocation2 + $0x112] sm:$0xff]
      %v756 = vld [vmem:[#allocation2 + $0x122] sm:$0xff]
      %v757 = vld [vmem:[#allocation2 + $0x12a] sm:$0xff]
      %v758 = vld [vmem:[#allocation2 + $0x13a] sm:$0xff]
      %v759 = vld [vmem:[#allocation2 + $0x142] sm:$0xff]
      %v760 = vld [vmem:[#allocation2 + $0x152] sm:$0xff]
      %v761 = vld [vmem:[#allocation2 + $0x15a] sm:$0xff]
      %v762 = vld [vmem:[#allocation2 + $0x16a] sm:$0xff]
      %v763 = vld [vmem:[#allocation2 + $0x172] sm:$0xff]
      %796 = vrot.lane.b32.xlu0 %v732, 8
      %v797 = vpop.permute.xlu0 %796
      %798 = vrot.lane.b32.xlu0 %v733, 8
      %v799 = vpop.permute.xlu0 %798
      %800 = vrot.lane.b32.xlu0 %v734, 8
      %v801 = vpop.permute.xlu0 %800
      %802 = vrot.lane.b32.xlu0 %v735, 8
      %v803 = vpop.permute.xlu0 %802
      %804 = vrot.lane.b32.xlu0 %v736, 8
      %v805 = vpop.permute.xlu0 %804
      %806 = vrot.lane.b32.xlu0 %v737, 8
      %v807 = vpop.permute.xlu0 %806
      %808 = vrot.lane.b32.xlu0 %v738, 8
      %v809 = vpop.permute.xlu0 %808
      %810 = vrot.lane.b32.xlu0 %v739, 8
      %v811 = vpop.permute.xlu0 %810
      %812 = vrot.lane.b32.xlu0 %v740, 8
      %v813 = vpop.permute.xlu0 %812
      %814 = vrot.lane.b32.xlu0 %v741, 8
      %v815 = vpop.permute.xlu0 %814
      %816 = vrot.lane.b32.xlu0 %v742, 8
      %v817 = vpop.permute.xlu0 %816
      %818 = vrot.lane.b32.xlu0 %v743, 8
      %v819 = vpop.permute.xlu0 %818
      %820 = vrot.lane.b32.xlu0 %v744, 8
      %v821 = vpop.permute.xlu0 %820
      %822 = vrot.lane.b32.xlu0 %v745, 8
      %v823 = vpop.permute.xlu0 %822
      %824 = vrot.lane.b32.xlu0 %v746, 8
      %v825 = vpop.permute.xlu0 %824
      %826 = vrot.lane.b32.xlu0 %v747, 8
      %v827 = vpop.permute.xlu0 %826
      %828 = vrot.lane.b32.xlu0 %v748, 8
      %v829 = vpop.permute.xlu0 %828
      %830 = vrot.lane.b32.xlu0 %v749, 8
      %v831 = vpop.permute.xlu0 %830
      %832 = vrot.lane.b32.xlu0 %v750, 8
      %v833 = vpop.permute.xlu0 %832
      %834 = vrot.lane.b32.xlu0 %v751, 8
      %v835 = vpop.permute.xlu0 %834
      %836 = vrot.lane.b32.xlu0 %v752, 8
      %v837 = vpop.permute.xlu0 %836
      %838 = vrot.lane.b32.xlu0 %v753, 8
      %v839 = vpop.permute.xlu0 %838
      %840 = vrot.lane.b32.xlu0 %v754, 8
      %v841 = vpop.permute.xlu0 %840
      %842 = vrot.lane.b32.xlu0 %v755, 8
      %v843 = vpop.permute.xlu0 %842
      %844 = vrot.lane.b32.xlu0 %v756, 8
      %v845 = vpop.permute.xlu0 %844
      %846 = vrot.lane.b32.xlu0 %v757, 8
      %v847 = vpop.permute.xlu0 %846
      %848 = vrot.lane.b32.xlu0 %v758, 8
      %v849 = vpop.permute.xlu0 %848
      %850 = vrot.lane.b32.xlu0 %v759, 8
      %v851 = vpop.permute.xlu0 %850
      %852 = vrot.lane.b32.xlu0 %v760, 8
      %v853 = vpop.permute.xlu0 %852
      %854 = vrot.lane.b32.xlu0 %v761, 8
      %v855 = vpop.permute.xlu0 %854
      %856 = vrot.lane.b32.xlu0 %v762, 8
      %v857 = vpop.permute.xlu0 %856
      %858 = vrot.lane.b32.xlu0 %v763, 8
      %v859 = vpop.permute.xlu0 %858
      %vm892 = vcmask 97344
      %893 = vst.msk [vmem:[#allocation3] sm:$0xff] %vm892, %v797
      %894 = vst.msk [vmem:[#allocation3 + $0x8] sm:$0xff] %vm892, %v799
      %895 = vst.msk [vmem:[#allocation3 + $0x10] sm:$0xff] %vm892, %v801
      %896 = vst.msk [vmem:[#allocation3 + $0x18] sm:$0xff] %vm892, %v803
      %897 = vst.msk [vmem:[#allocation3 + $0x20] sm:$0xff] %vm892, %v805
      %898 = vst.msk [vmem:[#allocation3 + $0x28] sm:$0xff] %vm892, %v807
      %899 = vst.msk [vmem:[#allocation3 + $0x30] sm:$0xff] %vm892, %v809
      %900 = vst.msk [vmem:[#allocation3 + $0x38] sm:$0xff] %vm892, %v811
      %901 = vst.msk [vmem:[#allocation3 + $0x40] sm:$0xff] %vm892, %v813
      %902 = vst.msk [vmem:[#allocation3 + $0x48] sm:$0xff] %vm892, %v815
      %903 = vst.msk [vmem:[#allocation3 + $0x50] sm:$0xff] %vm892, %v817
      %904 = vst.msk [vmem:[#allocation3 + $0x58] sm:$0xff] %vm892, %v819
      %905 = vst.msk [vmem:[#allocation3 + $0x60] sm:$0xff] %vm892, %v821
      %906 = vst.msk [vmem:[#allocation3 + $0x68] sm:$0xff] %vm892, %v823
      %907 = vst.msk [vmem:[#allocation3 + $0x70] sm:$0xff] %vm892, %v825
      %908 = vst.msk [vmem:[#allocation3 + $0x78] sm:$0xff] %vm892, %v827
      %909 = vst.msk [vmem:[#allocation3 + $0x80] sm:$0xff] %vm892, %v829
      %910 = vst.msk [vmem:[#allocation3 + $0x88] sm:$0xff] %vm892, %v831
      %911 = vst.msk [vmem:[#allocation3 + $0x90] sm:$0xff] %vm892, %v833
      %912 = vst.msk [vmem:[#allocation3 + $0x98] sm:$0xff] %vm892, %v835
      %913 = vst.msk [vmem:[#allocation3 + $0xa0] sm:$0xff] %vm892, %v837
      %914 = vst.msk [vmem:[#allocation3 + $0xa8] sm:$0xff] %vm892, %v839
      %915 = vst.msk [vmem:[#allocation3 + $0xb0] sm:$0xff] %vm892, %v841
      %916 = vst.msk [vmem:[#allocation3 + $0xb8] sm:$0xff] %vm892, %v843
      %917 = vst.msk [vmem:[#allocation3 + $0xc0] sm:$0xff] %vm892, %v845
      %918 = vst.msk [vmem:[#allocation3 + $0xc8] sm:$0xff] %vm892, %v847
      %919 = vst.msk [vmem:[#allocation3 + $0xd0] sm:$0xff] %vm892, %v849
      %920 = vst.msk [vmem:[#allocation3 + $0xd8] sm:$0xff] %vm892, %v851
      %921 = vst.msk [vmem:[#allocation3 + $0xe0] sm:$0xff] %vm892, %v853
      %922 = vst.msk [vmem:[#allocation3 + $0xe8] sm:$0xff] %vm892, %v855
      %923 = vst.msk [vmem:[#allocation3 + $0xf0] sm:$0xff] %vm892, %v857
      %924 = vst.msk [vmem:[#allocation3 + $0xf8] sm:$0xff] %vm892, %v859
      %v925 = vld [vmem:[%s357] sm:$0xff]
      %v926 = vld [vmem:[%s357 + $0x8] sm:$0xff]
      %v927 = vld [vmem:[%s357 + $0x18] sm:$0xff]
      %v928 = vld [vmem:[%s357 + $0x20] sm:$0xff]
      %v929 = vld [vmem:[%s357 + $0x30] sm:$0xff]
      %v930 = vld [vmem:[%s357 + $0x38] sm:$0xff]
      %v931 = vld [vmem:[%s357 + $0x48] sm:$0xff]
      %v932 = vld [vmem:[%s357 + $0x50] sm:$0xff]
      %v933 = vld [vmem:[%s357 + $0x60] sm:$0xff]
      %v934 = vld [vmem:[%s357 + $0x68] sm:$0xff]
      %v935 = vld [vmem:[%s357 + $0x78] sm:$0xff]
      %v936 = vld [vmem:[%s357 + $0x80] sm:$0xff]
      %v937 = vld [vmem:[%s357 + $0x90] sm:$0xff]
      %v938 = vld [vmem:[%s357 + $0x98] sm:$0xff]
      %v939 = vld [vmem:[%s357 + $0xa8] sm:$0xff]
      %v940 = vld [vmem:[%s357 + $0xb0] sm:$0xff]
      %v941 = vld [vmem:[%s357 + $0xc0] sm:$0xff]
      %v942 = vld [vmem:[%s357 + $0xc8] sm:$0xff]
      %v943 = vld [vmem:[%s357 + $0xd8] sm:$0xff]
      %v944 = vld [vmem:[%s357 + $0xe0] sm:$0xff]
      %v945 = vld [vmem:[%s357 + $0xf0] sm:$0xff]
      %v946 = vld [vmem:[%s357 + $0xf8] sm:$0xff]
      %v947 = vld [vmem:[%s357 + $0x108] sm:$0xff]
      %v948 = vld [vmem:[%s357 + $0x110] sm:$0xff]
      %v949 = vld [vmem:[%s357 + $0x120] sm:$0xff]
      %v950 = vld [vmem:[%s357 + $0x128] sm:$0xff]
      %v951 = vld [vmem:[%s357 + $0x138] sm:$0xff]
      %v952 = vld [vmem:[%s357 + $0x140] sm:$0xff]
      %v953 = vld [vmem:[%s357 + $0x150] sm:$0xff]
      %v954 = vld [vmem:[%s357 + $0x158] sm:$0xff]
      %v955 = vld [vmem:[%s357 + $0x168] sm:$0xff]
      %v956 = vld [vmem:[%s357 + $0x170] sm:$0xff]
      %989 = vrot.lane.b32.xlu0 %v925, 12
      %v990 = vpop.permute.xlu0 %989
      %991 = vrot.lane.b32.xlu0 %v926, 12
      %v992 = vpop.permute.xlu0 %991
      %993 = vrot.lane.b32.xlu0 %v927, 12
      %v994 = vpop.permute.xlu0 %993
      %995 = vrot.lane.b32.xlu0 %v928, 12
      %v996 = vpop.permute.xlu0 %995
      %997 = vrot.lane.b32.xlu0 %v929, 12
      %v998 = vpop.permute.xlu0 %997
      %999 = vrot.lane.b32.xlu0 %v930, 12
      %v1000 = vpop.permute.xlu0 %999
      %1001 = vrot.lane.b32.xlu0 %v931, 12
      %v1002 = vpop.permute.xlu0 %1001
      %1003 = vrot.lane.b32.xlu0 %v932, 12
      %v1004 = vpop.permute.xlu0 %1003
      %1005 = vrot.lane.b32.xlu0 %v933, 12
      %v1006 = vpop.permute.xlu0 %1005
      %1007 = vrot.lane.b32.xlu0 %v934, 12
      %v1008 = vpop.permute.xlu0 %1007
      %1009 = vrot.lane.b32.xlu0 %v935, 12
      %v1010 = vpop.permute.xlu0 %1009
      %1011 = vrot.lane.b32.xlu0 %v936, 12
      %v1012 = vpop.permute.xlu0 %1011
      %1013 = vrot.lane.b32.xlu0 %v937, 12
      %v1014 = vpop.permute.xlu0 %1013
      %1015 = vrot.lane.b32.xlu0 %v938, 12
      %v1016 = vpop.permute.xlu0 %1015
      %1017 = vrot.lane.b32.xlu0 %v939, 12
      %v1018 = vpop.permute.xlu0 %1017
      %1019 = vrot.lane.b32.xlu0 %v940, 12
      %v1020 = vpop.permute.xlu0 %1019
      %1021 = vrot.lane.b32.xlu0 %v941, 12
      %v1022 = vpop.permute.xlu0 %1021
      %1023 = vrot.lane.b32.xlu0 %v942, 12
      %v1024 = vpop.permute.xlu0 %1023
      %1025 = vrot.lane.b32.xlu0 %v943, 12
      %v1026 = vpop.permute.xlu0 %1025
      %1027 = vrot.lane.b32.xlu0 %v944, 12
      %v1028 = vpop.permute.xlu0 %1027
      %1029 = vrot.lane.b32.xlu0 %v945, 12
      %v1030 = vpop.permute.xlu0 %1029
      %1031 = vrot.lane.b32.xlu0 %v946, 12
      %v1032 = vpop.permute.xlu0 %1031
      %1033 = vrot.lane.b32.xlu0 %v947, 12
      %v1034 = vpop.permute.xlu0 %1033
      %1035 = vrot.lane.b32.xlu0 %v948, 12
      %v1036 = vpop.permute.xlu0 %1035
      %1037 = vrot.lane.b32.xlu0 %v949, 12
      %v1038 = vpop.permute.xlu0 %1037
      %1039 = vrot.lane.b32.xlu0 %v950, 12
      %v1040 = vpop.permute.xlu0 %1039
      %1041 = vrot.lane.b32.xlu0 %v951, 12
      %v1042 = vpop.permute.xlu0 %1041
      %1043 = vrot.lane.b32.xlu0 %v952, 12
      %v1044 = vpop.permute.xlu0 %1043
      %1045 = vrot.lane.b32.xlu0 %v953, 12
      %v1046 = vpop.permute.xlu0 %1045
      %1047 = vrot.lane.b32.xlu0 %v954, 12
      %v1048 = vpop.permute.xlu0 %1047
      %1049 = vrot.lane.b32.xlu0 %v955, 12
      %v1050 = vpop.permute.xlu0 %1049
      %1051 = vrot.lane.b32.xlu0 %v956, 12
      %v1052 = vpop.permute.xlu0 %1051
      %vm1085 = vcmask 130144
      %1086 = vst.msk [vmem:[#allocation3] sm:$0xff] %vm1085, %v990
      %1087 = vst.msk [vmem:[#allocation3 + $0x8] sm:$0xff] %vm1085, %v992
      %1088 = vst.msk [vmem:[#allocation3 + $0x10] sm:$0xff] %vm1085, %v994
      %1089 = vst.msk [vmem:[#allocation3 + $0x18] sm:$0xff] %vm1085, %v996
      %1090 = vst.msk [vmem:[#allocation3 + $0x20] sm:$0xff] %vm1085, %v998
      %1091 = vst.msk [vmem:[#allocation3 + $0x28] sm:$0xff] %vm1085, %v1000
      %1092 = vst.msk [vmem:[#allocation3 + $0x30] sm:$0xff] %vm1085, %v1002
      %1093 = vst.msk [vmem:[#allocation3 + $0x38] sm:$0xff] %vm1085, %v1004
      %1094 = vst.msk [vmem:[#allocation3 + $0x40] sm:$0xff] %vm1085, %v1006
      %1095 = vst.msk [vmem:[#allocation3 + $0x48] sm:$0xff] %vm1085, %v1008
      %1096 = vst.msk [vmem:[#allocation3 + $0x50] sm:$0xff] %vm1085, %v1010
      %1097 = vst.msk [vmem:[#allocation3 + $0x58] sm:$0xff] %vm1085, %v1012
      %1098 = vst.msk [vmem:[#allocation3 + $0x60] sm:$0xff] %vm1085, %v1014
      %1099 = vst.msk [vmem:[#allocation3 + $0x68] sm:$0xff] %vm1085, %v1016
      %1100 = vst.msk [vmem:[#allocation3 + $0x70] sm:$0xff] %vm1085, %v1018
      %1101 = vst.msk [vmem:[#allocation3 + $0x78] sm:$0xff] %vm1085, %v1020
      %1102 = vst.msk [vmem:[#allocation3 + $0x80] sm:$0xff] %vm1085, %v1022
      %1103 = vst.msk [vmem:[#allocation3 + $0x88] sm:$0xff] %vm1085, %v1024
      %1104 = vst.msk [vmem:[#allocation3 + $0x90] sm:$0xff] %vm1085, %v1026
      %1105 = vst.msk [vmem:[#allocation3 + $0x98] sm:$0xff] %vm1085, %v1028
      %1106 = vst.msk [vmem:[#allocation3 + $0xa0] sm:$0xff] %vm1085, %v1030
      %1107 = vst.msk [vmem:[#allocation3 + $0xa8] sm:$0xff] %vm1085, %v1032
      %1108 = vst.msk [vmem:[#allocation3 + $0xb0] sm:$0xff] %vm1085, %v1034
      %1109 = vst.msk [vmem:[#allocation3 + $0xb8] sm:$0xff] %vm1085, %v1036
      %1110 = vst.msk [vmem:[#allocation3 + $0xc0] sm:$0xff] %vm1085, %v1038
      %1111 = vst.msk [vmem:[#allocation3 + $0xc8] sm:$0xff] %vm1085, %v1040
      %1112 = vst.msk [vmem:[#allocation3 + $0xd0] sm:$0xff] %vm1085, %v1042
      %1113 = vst.msk [vmem:[#allocation3 + $0xd8] sm:$0xff] %vm1085, %v1044
      %1114 = vst.msk [vmem:[#allocation3 + $0xe0] sm:$0xff] %vm1085, %v1046
      %1115 = vst.msk [vmem:[#allocation3 + $0xe8] sm:$0xff] %vm1085, %v1048
      %1116 = vst.msk [vmem:[#allocation3 + $0xf0] sm:$0xff] %vm1085, %v1050
      %1117 = vst.msk [vmem:[#allocation3 + $0xf8] sm:$0xff] %vm1085, %v1052
      %v1118 = vld [vmem:[%s357 + $0x1] sm:$0xff]
      %v1119 = vld [vmem:[%s357 + $0x9] sm:$0xff]
      %v1120 = vld [vmem:[%s357 + $0x19] sm:$0xff]
      %v1121 = vld [vmem:[%s357 + $0x21] sm:$0xff]
      %v1122 = vld [vmem:[%s357 + $0x31] sm:$0xff]
      %v1123 = vld [vmem:[%s357 + $0x39] sm:$0xff]
      %v1124 = vld [vmem:[%s357 + $0x49] sm:$0xff]
      %v1125 = vld [vmem:[%s357 + $0x51] sm:$0xff]
      %v1126 = vld [vmem:[%s357 + $0x61] sm:$0xff]
      %v1127 = vld [vmem:[%s357 + $0x69] sm:$0xff]
      %v1128 = vld [vmem:[%s357 + $0x79] sm:$0xff]
      %v1129 = vld [vmem:[%s357 + $0x81] sm:$0xff]
      %v1130 = vld [vmem:[%s357 + $0x91] sm:$0xff]
      %v1131 = vld [vmem:[%s357 + $0x99] sm:$0xff]
      %v1132 = vld [vmem:[%s357 + $0xa9] sm:$0xff]
      %v1133 = vld [vmem:[%s357 + $0xb1] sm:$0xff]
      %v1134 = vld [vmem:[%s357 + $0xc1] sm:$0xff]
      %v1135 = vld [vmem:[%s357 + $0xc9] sm:$0xff]
      %v1136 = vld [vmem:[%s357 + $0xd9] sm:$0xff]
      %v1137 = vld [vmem:[%s357 + $0xe1] sm:$0xff]
      %v1138 = vld [vmem:[%s357 + $0xf1] sm:$0xff]
      %v1139 = vld [vmem:[%s357 + $0xf9] sm:$0xff]
      %v1140 = vld [vmem:[%s357 + $0x109] sm:$0xff]
      %v1141 = vld [vmem:[%s357 + $0x111] sm:$0xff]
      %v1142 = vld [vmem:[%s357 + $0x121] sm:$0xff]
      %v1143 = vld [vmem:[%s357 + $0x129] sm:$0xff]
      %v1144 = vld [vmem:[%s357 + $0x139] sm:$0xff]
      %v1145 = vld [vmem:[%s357 + $0x141] sm:$0xff]
      %v1146 = vld [vmem:[%s357 + $0x151] sm:$0xff]
      %v1147 = vld [vmem:[%s357 + $0x159] sm:$0xff]
      %v1148 = vld [vmem:[%s357 + $0x169] sm:$0xff]
      %v1149 = vld [vmem:[%s357 + $0x171] sm:$0xff]
      %1182 = vrot.lane.b32.xlu0 %v1118, 16
      %v1183 = vpop.permute.xlu0 %1182
      %1184 = vrot.lane.b32.xlu0 %v1119, 16
      %v1185 = vpop.permute.xlu0 %1184
      %1186 = vrot.lane.b32.xlu0 %v1120, 16
      %v1187 = vpop.permute.xlu0 %1186
      %1188 = vrot.lane.b32.xlu0 %v1121, 16
      %v1189 = vpop.permute.xlu0 %1188
      %1190 = vrot.lane.b32.xlu0 %v1122, 16
      %v1191 = vpop.permute.xlu0 %1190
      %1192 = vrot.lane.b32.xlu0 %v1123, 16
      %v1193 = vpop.permute.xlu0 %1192
      %1194 = vrot.lane.b32.xlu0 %v1124, 16
      %v1195 = vpop.permute.xlu0 %1194
      %1196 = vrot.lane.b32.xlu0 %v1125, 16
      %v1197 = vpop.permute.xlu0 %1196
      %1198 = vrot.lane.b32.xlu0 %v1126, 16
      %v1199 = vpop.permute.xlu0 %1198
      %1200 = vrot.lane.b32.xlu0 %v1127, 16
      %v1201 = vpop.permute.xlu0 %1200
      %1202 = vrot.lane.b32.xlu0 %v1128, 16
      %v1203 = vpop.permute.xlu0 %1202
      %1204 = vrot.lane.b32.xlu0 %v1129, 16
      %v1205 = vpop.permute.xlu0 %1204
      %1206 = vrot.lane.b32.xlu0 %v1130, 16
      %v1207 = vpop.permute.xlu0 %1206
      %1208 = vrot.lane.b32.xlu0 %v1131, 16
      %v1209 = vpop.permute.xlu0 %1208
      %1210 = vrot.lane.b32.xlu0 %v1132, 16
      %v1211 = vpop.permute.xlu0 %1210
      %1212 = vrot.lane.b32.xlu0 %v1133, 16
      %v1213 = vpop.permute.xlu0 %1212
      %1214 = vrot.lane.b32.xlu0 %v1134, 16
      %v1215 = vpop.permute.xlu0 %1214
      %1216 = vrot.lane.b32.xlu0 %v1135, 16
      %v1217 = vpop.permute.xlu0 %1216
      %1218 = vrot.lane.b32.xlu0 %v1136, 16
      %v1219 = vpop.permute.xlu0 %1218
      %1220 = vrot.lane.b32.xlu0 %v1137, 16
      %v1221 = vpop.permute.xlu0 %1220
      %1222 = vrot.lane.b32.xlu0 %v1138, 16
      %v1223 = vpop.permute.xlu0 %1222
      %1224 = vrot.lane.b32.xlu0 %v1139, 16
      %v1225 = vpop.permute.xlu0 %1224
      %1226 = vrot.lane.b32.xlu0 %v1140, 16
      %v1227 = vpop.permute.xlu0 %1226
      %1228 = vrot.lane.b32.xlu0 %v1141, 16
      %v1229 = vpop.permute.xlu0 %1228
      %1230 = vrot.lane.b32.xlu0 %v1142, 16
      %v1231 = vpop.permute.xlu0 %1230
      %1232 = vrot.lane.b32.xlu0 %v1143, 16
      %v1233 = vpop.permute.xlu0 %1232
      %1234 = vrot.lane.b32.xlu0 %v1144, 16
      %v1235 = vpop.permute.xlu0 %1234
      %1236 = vrot.lane.b32.xlu0 %v1145, 16
      %v1237 = vpop.permute.xlu0 %1236
      %1238 = vrot.lane.b32.xlu0 %v1146, 16
      %v1239 = vpop.permute.xlu0 %1238
      %1240 = vrot.lane.b32.xlu0 %v1147, 16
      %v1241 = vpop.permute.xlu0 %1240
      %1242 = vrot.lane.b32.xlu0 %v1148, 16
      %v1243 = vpop.permute.xlu0 %1242
      %1244 = vrot.lane.b32.xlu0 %v1149, 16
      %v1245 = vpop.permute.xlu0 %1244
      %vm1278 = vcmask 162944
      %1279 = vst.msk [vmem:[#allocation3] sm:$0xff] %vm1278, %v1183
      %1280 = vst.msk [vmem:[#allocation3 + $0x8] sm:$0xff] %vm1278, %v1185
      %1281 = vst.msk [vmem:[#allocation3 + $0x10] sm:$0xff] %vm1278, %v1187
      %1282 = vst.msk [vmem:[#allocation3 + $0x18] sm:$0xff] %vm1278, %v1189
      %1283 = vst.msk [vmem:[#allocation3 + $0x20] sm:$0xff] %vm1278, %v1191
      %1284 = vst.msk [vmem:[#allocation3 + $0x28] sm:$0xff] %vm1278, %v1193
      %1285 = vst.msk [vmem:[#allocation3 + $0x30] sm:$0xff] %vm1278, %v1195
      %1286 = vst.msk [vmem:[#allocation3 + $0x38] sm:$0xff] %vm1278, %v1197
      %1287 = vst.msk [vmem:[#allocation3 + $0x40] sm:$0xff] %vm1278, %v1199
      %1288 = vst.msk [vmem:[#allocation3 + $0x48] sm:$0xff] %vm1278, %v1201
      %1289 = vst.msk [vmem:[#allocation3 + $0x50] sm:$0xff] %vm1278, %v1203
      %1290 = vst.msk [vmem:[#allocation3 + $0x58] sm:$0xff] %vm1278, %v1205
      %1291 = vst.msk [vmem:[#allocation3 + $0x60] sm:$0xff] %vm1278, %v1207
      %1292 = vst.msk [vmem:[#allocation3 + $0x68] sm:$0xff] %vm1278, %v1209
      %1293 = vst.msk [vmem:[#allocation3 + $0x70] sm:$0xff] %vm1278, %v1211
      %1294 = vst.msk [vmem:[#allocation3 + $0x78] sm:$0xff] %vm1278, %v1213
      %1295 = vst.msk [vmem:[#allocation3 + $0x80] sm:$0xff] %vm1278, %v1215
      %1296 = vst.msk [vmem:[#allocation3 + $0x88] sm:$0xff] %vm1278, %v1217
      %1297 = vst.msk [vmem:[#allocation3 + $0x90] sm:$0xff] %vm1278, %v1219
      %1298 = vst.msk [vmem:[#allocation3 + $0x98] sm:$0xff] %vm1278, %v1221
      %1299 = vst.msk [vmem:[#allocation3 + $0xa0] sm:$0xff] %vm1278, %v1223
      %1300 = vst.msk [vmem:[#allocation3 + $0xa8] sm:$0xff] %vm1278, %v1225
      %1301 = vst.msk [vmem:[#allocation3 + $0xb0] sm:$0xff] %vm1278, %v1227
      %1302 = vst.msk [vmem:[#allocation3 + $0xb8] sm:$0xff] %vm1278, %v1229
      %1303 = vst.msk [vmem:[#allocation3 + $0xc0] sm:$0xff] %vm1278, %v1231
      %1304 = vst.msk [vmem:[#allocation3 + $0xc8] sm:$0xff] %vm1278, %v1233
      %1305 = vst.msk [vmem:[#allocation3 + $0xd0] sm:$0xff] %vm1278, %v1235
      %1306 = vst.msk [vmem:[#allocation3 + $0xd8] sm:$0xff] %vm1278, %v1237
      %1307 = vst.msk [vmem:[#allocation3 + $0xe0] sm:$0xff] %vm1278, %v1239
      %1308 = vst.msk [vmem:[#allocation3 + $0xe8] sm:$0xff] %vm1278, %v1241
      %1309 = vst.msk [vmem:[#allocation3 + $0xf0] sm:$0xff] %vm1278, %v1243
      %1310 = vst.msk [vmem:[#allocation3 + $0xf8] sm:$0xff] %vm1278, %v1245
      %v1311 = vld [vmem:[%s357 + $0x2] sm:$0xff]
      %v1312 = vld [vmem:[%s357 + $0xa] sm:$0xff]
      %v1313 = vld [vmem:[%s357 + $0x1a] sm:$0xff]
      %v1314 = vld [vmem:[%s357 + $0x22] sm:$0xff]
      %v1315 = vld [vmem:[%s357 + $0x32] sm:$0xff]
      %v1316 = vld [vmem:[%s357 + $0x3a] sm:$0xff]
      %v1317 = vld [vmem:[%s357 + $0x4a] sm:$0xff]
      %v1318 = vld [vmem:[%s357 + $0x52] sm:$0xff]
      %v1319 = vld [vmem:[%s357 + $0x62] sm:$0xff]
      %v1320 = vld [vmem:[%s357 + $0x6a] sm:$0xff]
      %v1321 = vld [vmem:[%s357 + $0x7a] sm:$0xff]
      %v1322 = vld [vmem:[%s357 + $0x82] sm:$0xff]
      %v1323 = vld [vmem:[%s357 + $0x92] sm:$0xff]
      %v1324 = vld [vmem:[%s357 + $0x9a] sm:$0xff]
      %v1325 = vld [vmem:[%s357 + $0xaa] sm:$0xff]
      %v1326 = vld [vmem:[%s357 + $0xb2] sm:$0xff]
      %v1327 = vld [vmem:[%s357 + $0xc2] sm:$0xff]
      %v1328 = vld [vmem:[%s357 + $0xca] sm:$0xff]
      %v1329 = vld [vmem:[%s357 + $0xda] sm:$0xff]
      %v1330 = vld [vmem:[%s357 + $0xe2] sm:$0xff]
      %v1331 = vld [vmem:[%s357 + $0xf2] sm:$0xff]
      %v1332 = vld [vmem:[%s357 + $0xfa] sm:$0xff]
      %v1333 = vld [vmem:[%s357 + $0x10a] sm:$0xff]
      %v1334 = vld [vmem:[%s357 + $0x112] sm:$0xff]
      %v1335 = vld [vmem:[%s357 + $0x122] sm:$0xff]
      %v1336 = vld [vmem:[%s357 + $0x12a] sm:$0xff]
      %v1337 = vld [vmem:[%s357 + $0x13a] sm:$0xff]
      %v1338 = vld [vmem:[%s357 + $0x142] sm:$0xff]
      %v1339 = vld [vmem:[%s357 + $0x152] sm:$0xff]
      %v1340 = vld [vmem:[%s357 + $0x15a] sm:$0xff]
      %v1341 = vld [vmem:[%s357 + $0x16a] sm:$0xff]
      %v1342 = vld [vmem:[%s357 + $0x172] sm:$0xff]
      %1375 = vrot.lane.b32.xlu0 %v1311, 20
      %v1376 = vpop.permute.xlu0 %1375
      %1377 = vrot.lane.b32.xlu0 %v1312, 20
      %v1378 = vpop.permute.xlu0 %1377
      %1379 = vrot.lane.b32.xlu0 %v1313, 20
      %v1380 = vpop.permute.xlu0 %1379
      %1381 = vrot.lane.b32.xlu0 %v1314, 20
      %v1382 = vpop.permute.xlu0 %1381
      %1383 = vrot.lane.b32.xlu0 %v1315, 20
      %v1384 = vpop.permute.xlu0 %1383
      %1385 = vrot.lane.b32.xlu0 %v1316, 20
      %v1386 = vpop.permute.xlu0 %1385
      %1387 = vrot.lane.b32.xlu0 %v1317, 20
      %v1388 = vpop.permute.xlu0 %1387
      %1389 = vrot.lane.b32.xlu0 %v1318, 20
      %v1390 = vpop.permute.xlu0 %1389
      %1391 = vrot.lane.b32.xlu0 %v1319, 20
      %v1392 = vpop.permute.xlu0 %1391
      %1393 = vrot.lane.b32.xlu0 %v1320, 20
      %v1394 = vpop.permute.xlu0 %1393
      %1395 = vrot.lane.b32.xlu0 %v1321, 20
      %v1396 = vpop.permute.xlu0 %1395
      %1397 = vrot.lane.b32.xlu0 %v1322, 20
      %v1398 = vpop.permute.xlu0 %1397
      %1399 = vrot.lane.b32.xlu0 %v1323, 20
      %v1400 = vpop.permute.xlu0 %1399
      %1401 = vrot.lane.b32.xlu0 %v1324, 20
      %v1402 = vpop.permute.xlu0 %1401
      %1403 = vrot.lane.b32.xlu0 %v1325, 20
      %v1404 = vpop.permute.xlu0 %1403
      %1405 = vrot.lane.b32.xlu0 %v1326, 20
      %v1406 = vpop.permute.xlu0 %1405
      %1407 = vrot.lane.b32.xlu0 %v1327, 20
      %v1408 = vpop.permute.xlu0 %1407
      %1409 = vrot.lane.b32.xlu0 %v1328, 20
      %v1410 = vpop.permute.xlu0 %1409
      %1411 = vrot.lane.b32.xlu0 %v1329, 20
      %v1412 = vpop.permute.xlu0 %1411
      %1413 = vrot.lane.b32.xlu0 %v1330, 20
      %v1414 = vpop.permute.xlu0 %1413
      %1415 = vrot.lane.b32.xlu0 %v1331, 20
      %v1416 = vpop.permute.xlu0 %1415
      %1417 = vrot.lane.b32.xlu0 %v1332, 20
      %v1418 = vpop.permute.xlu0 %1417
      %1419 = vrot.lane.b32.xlu0 %v1333, 20
      %v1420 = vpop.permute.xlu0 %1419
      %1421 = vrot.lane.b32.xlu0 %v1334, 20
      %v1422 = vpop.permute.xlu0 %1421
      %1423 = vrot.lane.b32.xlu0 %v1335, 20
      %v1424 = vpop.permute.xlu0 %1423
      %1425 = vrot.lane.b32.xlu0 %v1336, 20
      %v1426 = vpop.permute.xlu0 %1425
      %1427 = vrot.lane.b32.xlu0 %v1337, 20
      %v1428 = vpop.permute.xlu0 %1427
      %1429 = vrot.lane.b32.xlu0 %v1338, 20
      %v1430 = vpop.permute.xlu0 %1429
      %1431 = vrot.lane.b32.xlu0 %v1339, 20
      %v1432 = vpop.permute.xlu0 %1431
      %1433 = vrot.lane.b32.xlu0 %v1340, 20
      %v1434 = vpop.permute.xlu0 %1433
      %1435 = vrot.lane.b32.xlu0 %v1341, 20
      %v1436 = vpop.permute.xlu0 %1435
      %1437 = vrot.lane.b32.xlu0 %v1342, 20
      %v1438 = vpop.permute.xlu0 %1437
      %vm1471 = vcmask 195744
      %1472 = vst.msk [vmem:[#allocation3] sm:$0xff] %vm1471, %v1376
      %1473 = vst.msk [vmem:[#allocation3 + $0x8] sm:$0xff] %vm1471, %v1378
      %1474 = vst.msk [vmem:[#allocation3 + $0x10] sm:$0xff] %vm1471, %v1380
      %1475 = vst.msk [vmem:[#allocation3 + $0x18] sm:$0xff] %vm1471, %v1382
      %1476 = vst.msk [vmem:[#allocation3 + $0x20] sm:$0xff] %vm1471, %v1384
      %1477 = vst.msk [vmem:[#allocation3 + $0x28] sm:$0xff] %vm1471, %v1386
      %1478 = vst.msk [vmem:[#allocation3 + $0x30] sm:$0xff] %vm1471, %v1388
      %1479 = vst.msk [vmem:[#allocation3 + $0x38] sm:$0xff] %vm1471, %v1390
      %1480 = vst.msk [vmem:[#allocation3 + $0x40] sm:$0xff] %vm1471, %v1392
      %1481 = vst.msk [vmem:[#allocation3 + $0x48] sm:$0xff] %vm1471, %v1394
      %1482 = vst.msk [vmem:[#allocation3 + $0x50] sm:$0xff] %vm1471, %v1396
      %1483 = vst.msk [vmem:[#allocation3 + $0x58] sm:$0xff] %vm1471, %v1398
      %1484 = vst.msk [vmem:[#allocation3 + $0x60] sm:$0xff] %vm1471, %v1400
      %1485 = vst.msk [vmem:[#allocation3 + $0x68] sm:$0xff] %vm1471, %v1402
      %1486 = vst.msk [vmem:[#allocation3 + $0x70] sm:$0xff] %vm1471, %v1404
      %1487 = vst.msk [vmem:[#allocation3 + $0x78] sm:$0xff] %vm1471, %v1406
      %1488 = vst.msk [vmem:[#allocation3 + $0x80] sm:$0xff] %vm1471, %v1408
      %1489 = vst.msk [vmem:[#allocation3 + $0x88] sm:$0xff] %vm1471, %v1410
      %1490 = vst.msk [vmem:[#allocation3 + $0x90] sm:$0xff] %vm1471, %v1412
      %1491 = vst.msk [vmem:[#allocation3 + $0x98] sm:$0xff] %vm1471, %v1414
      %1492 = vst.msk [vmem:[#allocation3 + $0xa0] sm:$0xff] %vm1471, %v1416
      %1493 = vst.msk [vmem:[#allocation3 + $0xa8] sm:$0xff] %vm1471, %v1418
      %1494 = vst.msk [vmem:[#allocation3 + $0xb0] sm:$0xff] %vm1471, %v1420
      %1495 = vst.msk [vmem:[#allocation3 + $0xb8] sm:$0xff] %vm1471, %v1422
      %1496 = vst.msk [vmem:[#allocation3 + $0xc0] sm:$0xff] %vm1471, %v1424
      %1497 = vst.msk [vmem:[#allocation3 + $0xc8] sm:$0xff] %vm1471, %v1426
      %1498 = vst.msk [vmem:[#allocation3 + $0xd0] sm:$0xff] %vm1471, %v1428
      %1499 = vst.msk [vmem:[#allocation3 + $0xd8] sm:$0xff] %vm1471, %v1430
      %1500 = vst.msk [vmem:[#allocation3 + $0xe0] sm:$0xff] %vm1471, %v1432
      %1501 = vst.msk [vmem:[#allocation3 + $0xe8] sm:$0xff] %vm1471, %v1434
      %1502 = vst.msk [vmem:[#allocation3 + $0xf0] sm:$0xff] %vm1471, %v1436
      %1503 = vst.msk [vmem:[#allocation3 + $0xf8] sm:$0xff] %vm1471, %v1438
      %v1504 = vld [vmem:[%s391] sm:$0xff]
      %v1505 = vld [vmem:[%s391 + $0x8] sm:$0xff]
      %v1506 = vld [vmem:[%s391 + $0x18] sm:$0xff]
      %v1507 = vld [vmem:[%s391 + $0x20] sm:$0xff]
      %v1508 = vld [vmem:[%s391 + $0x30] sm:$0xff]
      %v1509 = vld [vmem:[%s391 + $0x38] sm:$0xff]
      %v1510 = vld [vmem:[%s391 + $0x48] sm:$0xff]
      %v1511 = vld [vmem:[%s391 + $0x50] sm:$0xff]
      %v1512 = vld [vmem:[%s391 + $0x60] sm:$0xff]
      %v1513 = vld [vmem:[%s391 + $0x68] sm:$0xff]
      %v1514 = vld [vmem:[%s391 + $0x78] sm:$0xff]
      %v1515 = vld [vmem:[%s391 + $0x80] sm:$0xff]
      %v1516 = vld [vmem:[%s391 + $0x90] sm:$0xff]
      %v1517 = vld [vmem:[%s391 + $0x98] sm:$0xff]
      %v1518 = vld [vmem:[%s391 + $0xa8] sm:$0xff]
      %v1519 = vld [vmem:[%s391 + $0xb0] sm:$0xff]
      %v1520 = vld [vmem:[%s391 + $0xc0] sm:$0xff]
      %v1521 = vld [vmem:[%s391 + $0xc8] sm:$0xff]
      %v1522 = vld [vmem:[%s391 + $0xd8] sm:$0xff]
      %v1523 = vld [vmem:[%s391 + $0xe0] sm:$0xff]
      %v1524 = vld [vmem:[%s391 + $0xf0] sm:$0xff]
      %v1525 = vld [vmem:[%s391 + $0xf8] sm:$0xff]
      %v1526 = vld [vmem:[%s391 + $0x108] sm:$0xff]
      %v1527 = vld [vmem:[%s391 + $0x110] sm:$0xff]
      %v1528 = vld [vmem:[%s391 + $0x120] sm:$0xff]
      %v1529 = vld [vmem:[%s391 + $0x128] sm:$0xff]
      %v1530 = vld [vmem:[%s391 + $0x138] sm:$0xff]
      %v1531 = vld [vmem:[%s391 + $0x140] sm:$0xff]
      %v1532 = vld [vmem:[%s391 + $0x150] sm:$0xff]
      %v1533 = vld [vmem:[%s391 + $0x158] sm:$0xff]
      %v1534 = vld [vmem:[%s391 + $0x168] sm:$0xff]
      %v1535 = vld [vmem:[%s391 + $0x170] sm:$0xff]
      %1568 = vrot.lane.b32.xlu0 %v1504, 24
      %v1569 = vpop.permute.xlu0 %1568
      %1570 = vrot.lane.b32.xlu0 %v1505, 24
      %v1571 = vpop.permute.xlu0 %1570
      %1572 = vrot.lane.b32.xlu0 %v1506, 24
      %v1573 = vpop.permute.xlu0 %1572
      %1574 = vrot.lane.b32.xlu0 %v1507, 24
      %v1575 = vpop.permute.xlu0 %1574
      %1576 = vrot.lane.b32.xlu0 %v1508, 24
      %v1577 = vpop.permute.xlu0 %1576
      %1578 = vrot.lane.b32.xlu0 %v1509, 24
      %v1579 = vpop.permute.xlu0 %1578
      %1580 = vrot.lane.b32.xlu0 %v1510, 24
      %v1581 = vpop.permute.xlu0 %1580
      %1582 = vrot.lane.b32.xlu0 %v1511, 24
      %v1583 = vpop.permute.xlu0 %1582
      %1584 = vrot.lane.b32.xlu0 %v1512, 24
      %v1585 = vpop.permute.xlu0 %1584
      %1586 = vrot.lane.b32.xlu0 %v1513, 24
      %v1587 = vpop.permute.xlu0 %1586
      %1588 = vrot.lane.b32.xlu0 %v1514, 24
      %v1589 = vpop.permute.xlu0 %1588
      %1590 = vrot.lane.b32.xlu0 %v1515, 24
      %v1591 = vpop.permute.xlu0 %1590
      %1592 = vrot.lane.b32.xlu0 %v1516, 24
      %v1593 = vpop.permute.xlu0 %1592
      %1594 = vrot.lane.b32.xlu0 %v1517, 24
      %v1595 = vpop.permute.xlu0 %1594
      %1596 = vrot.lane.b32.xlu0 %v1518, 24
      %v1597 = vpop.permute.xlu0 %1596
      %1598 = vrot.lane.b32.xlu0 %v1519, 24
      %v1599 = vpop.permute.xlu0 %1598
      %1600 = vrot.lane.b32.xlu0 %v1520, 24
      %v1601 = vpop.permute.xlu0 %1600
      %1602 = vrot.lane.b32.xlu0 %v1521, 24
      %v1603 = vpop.permute.xlu0 %1602
      %1604 = vrot.lane.b32.xlu0 %v1522, 24
      %v1605 = vpop.permute.xlu0 %1604
      %1606 = vrot.lane.b32.xlu0 %v1523, 24
      %v1607 = vpop.permute.xlu0 %1606
      %1608 = vrot.lane.b32.xlu0 %v1524, 24
      %v1609 = vpop.permute.xlu0 %1608
      %1610 = vrot.lane.b32.xlu0 %v1525, 24
      %v1611 = vpop.permute.xlu0 %1610
      %1612 = vrot.lane.b32.xlu0 %v1526, 24
      %v1613 = vpop.permute.xlu0 %1612
      %1614 = vrot.lane.b32.xlu0 %v1527, 24
      %v1615 = vpop.permute.xlu0 %1614
      %1616 = vrot.lane.b32.xlu0 %v1528, 24
      %v1617 = vpop.permute.xlu0 %1616
      %1618 = vrot.lane.b32.xlu0 %v1529, 24
      %v1619 = vpop.permute.xlu0 %1618
      %1620 = vrot.lane.b32.xlu0 %v1530, 24
      %v1621 = vpop.permute.xlu0 %1620
      %1622 = vrot.lane.b32.xlu0 %v1531, 24
      %v1623 = vpop.permute.xlu0 %1622
      %1624 = vrot.lane.b32.xlu0 %v1532, 24
      %v1625 = vpop.permute.xlu0 %1624
      %1626 = vrot.lane.b32.xlu0 %v1533, 24
      %v1627 = vpop.permute.xlu0 %1626
      %1628 = vrot.lane.b32.xlu0 %v1534, 24
      %v1629 = vpop.permute.xlu0 %1628
      %1630 = vrot.lane.b32.xlu0 %v1535, 24
      %v1631 = vpop.permute.xlu0 %1630
      %vm1664 = vcmask 228544
      %1665 = vst.msk [vmem:[#allocation3] sm:$0xff] %vm1664, %v1569
      %1666 = vst.msk [vmem:[#allocation3 + $0x8] sm:$0xff] %vm1664, %v1571
      %1667 = vst.msk [vmem:[#allocation3 + $0x10] sm:$0xff] %vm1664, %v1573
      %1668 = vst.msk [vmem:[#allocation3 + $0x18] sm:$0xff] %vm1664, %v1575
      %1669 = vst.msk [vmem:[#allocation3 + $0x20] sm:$0xff] %vm1664, %v1577
      %1670 = vst.msk [vmem:[#allocation3 + $0x28] sm:$0xff] %vm1664, %v1579
      %1671 = vst.msk [vmem:[#allocation3 + $0x30] sm:$0xff] %vm1664, %v1581
      %1672 = vst.msk [vmem:[#allocation3 + $0x38] sm:$0xff] %vm1664, %v1583
      %1673 = vst.msk [vmem:[#allocation3 + $0x40] sm:$0xff] %vm1664, %v1585
      %1674 = vst.msk [vmem:[#allocation3 + $0x48] sm:$0xff] %vm1664, %v1587
      %1675 = vst.msk [vmem:[#allocation3 + $0x50] sm:$0xff] %vm1664, %v1589
      %1676 = vst.msk [vmem:[#allocation3 + $0x58] sm:$0xff] %vm1664, %v1591
      %1677 = vst.msk [vmem:[#allocation3 + $0x60] sm:$0xff] %vm1664, %v1593
      %1678 = vst.msk [vmem:[#allocation3 + $0x68] sm:$0xff] %vm1664, %v1595
      %1679 = vst.msk [vmem:[#allocation3 + $0x70] sm:$0xff] %vm1664, %v1597
      %1680 = vst.msk [vmem:[#allocation3 + $0x78] sm:$0xff] %vm1664, %v1599
      %1681 = vst.msk [vmem:[#allocation3 + $0x80] sm:$0xff] %vm1664, %v1601
      %1682 = vst.msk [vmem:[#allocation3 + $0x88] sm:$0xff] %vm1664, %v1603
      %1683 = vst.msk [vmem:[#allocation3 + $0x90] sm:$0xff] %vm1664, %v1605
      %1684 = vst.msk [vmem:[#allocation3 + $0x98] sm:$0xff] %vm1664, %v1607
      %1685 = vst.msk [vmem:[#allocation3 + $0xa0] sm:$0xff] %vm1664, %v1609
      %1686 = vst.msk [vmem:[#allocation3 + $0xa8] sm:$0xff] %vm1664, %v1611
      %1687 = vst.msk [vmem:[#allocation3 + $0xb0] sm:$0xff] %vm1664, %v1613
      %1688 = vst.msk [vmem:[#allocation3 + $0xb8] sm:$0xff] %vm1664, %v1615
      %1689 = vst.msk [vmem:[#allocation3 + $0xc0] sm:$0xff] %vm1664, %v1617
      %1690 = vst.msk [vmem:[#allocation3 + $0xc8] sm:$0xff] %vm1664, %v1619
      %1691 = vst.msk [vmem:[#allocation3 + $0xd0] sm:$0xff] %vm1664, %v1621
      %1692 = vst.msk [vmem:[#allocation3 + $0xd8] sm:$0xff] %vm1664, %v1623
      %1693 = vst.msk [vmem:[#allocation3 + $0xe0] sm:$0xff] %vm1664, %v1625
      %1694 = vst.msk [vmem:[#allocation3 + $0xe8] sm:$0xff] %vm1664, %v1627
      %1695 = vst.msk [vmem:[#allocation3 + $0xf0] sm:$0xff] %vm1664, %v1629
      %1696 = vst.msk [vmem:[#allocation3 + $0xf8] sm:$0xff] %vm1664, %v1631
      %v1697 = vld [vmem:[%s391 + $0x1] sm:$0xff]
      %v1698 = vld [vmem:[%s391 + $0x9] sm:$0xff]
      %v1699 = vld [vmem:[%s391 + $0x19] sm:$0xff]
      %v1700 = vld [vmem:[%s391 + $0x21] sm:$0xff]
      %v1701 = vld [vmem:[%s391 + $0x31] sm:$0xff]
      %v1702 = vld [vmem:[%s391 + $0x39] sm:$0xff]
      %v1703 = vld [vmem:[%s391 + $0x49] sm:$0xff]
      %v1704 = vld [vmem:[%s391 + $0x51] sm:$0xff]
      %v1705 = vld [vmem:[%s391 + $0x61] sm:$0xff]
      %v1706 = vld [vmem:[%s391 + $0x69] sm:$0xff]
      %v1707 = vld [vmem:[%s391 + $0x79] sm:$0xff]
      %v1708 = vld [vmem:[%s391 + $0x81] sm:$0xff]
      %v1709 = vld [vmem:[%s391 + $0x91] sm:$0xff]
      %v1710 = vld [vmem:[%s391 + $0x99] sm:$0xff]
      %v1711 = vld [vmem:[%s391 + $0xa9] sm:$0xff]
      %v1712 = vld [vmem:[%s391 + $0xb1] sm:$0xff]
      %v1713 = vld [vmem:[%s391 + $0xc1] sm:$0xff]
      %v1714 = vld [vmem:[%s391 + $0xc9] sm:$0xff]
      %v1715 = vld [vmem:[%s391 + $0xd9] sm:$0xff]
      %v1716 = vld [vmem:[%s391 + $0xe1] sm:$0xff]
      %v1717 = vld [vmem:[%s391 + $0xf1] sm:$0xff]
      %v1718 = vld [vmem:[%s391 + $0xf9] sm:$0xff]
      %v1719 = vld [vmem:[%s391 + $0x109] sm:$0xff]
      %v1720 = vld [vmem:[%s391 + $0x111] sm:$0xff]
      %v1721 = vld [vmem:[%s391 + $0x121] sm:$0xff]
      %v1722 = vld [vmem:[%s391 + $0x129] sm:$0xff]
      %v1723 = vld [vmem:[%s391 + $0x139] sm:$0xff]
      %v1724 = vld [vmem:[%s391 + $0x141] sm:$0xff]
      %v1725 = vld [vmem:[%s391 + $0x151] sm:$0xff]
      %v1726 = vld [vmem:[%s391 + $0x159] sm:$0xff]
      %v1727 = vld [vmem:[%s391 + $0x169] sm:$0xff]
      %v1728 = vld [vmem:[%s391 + $0x171] sm:$0xff]
      %1761 = vrot.lane.b32.xlu0 %v1697, 28
      %v1762 = vpop.permute.xlu0 %1761
      %1763 = vrot.lane.b32.xlu0 %v1698, 28
      %v1764 = vpop.permute.xlu0 %1763
      %1765 = vrot.lane.b32.xlu0 %v1699, 28
      %v1766 = vpop.permute.xlu0 %1765
      %1767 = vrot.lane.b32.xlu0 %v1700, 28
      %v1768 = vpop.permute.xlu0 %1767
      %1769 = vrot.lane.b32.xlu0 %v1701, 28
      %v1770 = vpop.permute.xlu0 %1769
      %1771 = vrot.lane.b32.xlu0 %v1702, 28
      %v1772 = vpop.permute.xlu0 %1771
      %1773 = vrot.lane.b32.xlu0 %v1703, 28
      %v1774 = vpop.permute.xlu0 %1773
      %1775 = vrot.lane.b32.xlu0 %v1704, 28
      %v1776 = vpop.permute.xlu0 %1775
      %1777 = vrot.lane.b32.xlu0 %v1705, 28
      %v1778 = vpop.permute.xlu0 %1777
      %1779 = vrot.lane.b32.xlu0 %v1706, 28
      %v1780 = vpop.permute.xlu0 %1779
      %1781 = vrot.lane.b32.xlu0 %v1707, 28
      %v1782 = vpop.permute.xlu0 %1781
      %1783 = vrot.lane.b32.xlu0 %v1708, 28
      %v1784 = vpop.permute.xlu0 %1783
      %1785 = vrot.lane.b32.xlu0 %v1709, 28
      %v1786 = vpop.permute.xlu0 %1785
      %1787 = vrot.lane.b32.xlu0 %v1710, 28
      %v1788 = vpop.permute.xlu0 %1787
      %1789 = vrot.lane.b32.xlu0 %v1711, 28
      %v1790 = vpop.permute.xlu0 %1789
      %1791 = vrot.lane.b32.xlu0 %v1712, 28
      %v1792 = vpop.permute.xlu0 %1791
      %1793 = vrot.lane.b32.xlu0 %v1713, 28
      %v1794 = vpop.permute.xlu0 %1793
      %1795 = vrot.lane.b32.xlu0 %v1714, 28
      %v1796 = vpop.permute.xlu0 %1795
      %1797 = vrot.lane.b32.xlu0 %v1715, 28
      %v1798 = vpop.permute.xlu0 %1797
      %1799 = vrot.lane.b32.xlu0 %v1716, 28
      %v1800 = vpop.permute.xlu0 %1799
      %1801 = vrot.lane.b32.xlu0 %v1717, 28
      %v1802 = vpop.permute.xlu0 %1801
      %1803 = vrot.lane.b32.xlu0 %v1718, 28
      %v1804 = vpop.permute.xlu0 %1803
      %1805 = vrot.lane.b32.xlu0 %v1719, 28
      %v1806 = vpop.permute.xlu0 %1805
      %1807 = vrot.lane.b32.xlu0 %v1720, 28
      %v1808 = vpop.permute.xlu0 %1807
      %1809 = vrot.lane.b32.xlu0 %v1721, 28
      %v1810 = vpop.permute.xlu0 %1809
      %1811 = vrot.lane.b32.xlu0 %v1722, 28
      %v1812 = vpop.permute.xlu0 %1811
      %1813 = vrot.lane.b32.xlu0 %v1723, 28
      %v1814 = vpop.permute.xlu0 %1813
      %1815 = vrot.lane.b32.xlu0 %v1724, 28
      %v1816 = vpop.permute.xlu0 %1815
      %1817 = vrot.lane.b32.xlu0 %v1725, 28
      %v1818 = vpop.permute.xlu0 %1817
      %1819 = vrot.lane.b32.xlu0 %v1726, 28
      %v1820 = vpop.permute.xlu0 %1819
      %1821 = vrot.lane.b32.xlu0 %v1727, 28
      %v1822 = vpop.permute.xlu0 %1821
      %1823 = vrot.lane.b32.xlu0 %v1728, 28
      %v1824 = vpop.permute.xlu0 %1823
      %vm1857 = vcmask 261344
      %1858 = vst.msk [vmem:[#allocation3] sm:$0xff] %vm1857, %v1762
      %1859 = vst.msk [vmem:[#allocation3 + $0x8] sm:$0xff] %vm1857, %v1764
      %1860 = vst.msk [vmem:[#allocation3 + $0x10] sm:$0xff] %vm1857, %v1766
      %1861 = vst.msk [vmem:[#allocation3 + $0x18] sm:$0xff] %vm1857, %v1768
      %1862 = vst.msk [vmem:[#allocation3 + $0x20] sm:$0xff] %vm1857, %v1770
      %1863 = vst.msk [vmem:[#allocation3 + $0x28] sm:$0xff] %vm1857, %v1772
      %1864 = vst.msk [vmem:[#allocation3 + $0x30] sm:$0xff] %vm1857, %v1774
      %1865 = vst.msk [vmem:[#allocation3 + $0x38] sm:$0xff] %vm1857, %v1776
      %1866 = vst.msk [vmem:[#allocation3 + $0x40] sm:$0xff] %vm1857, %v1778
      %1867 = vst.msk [vmem:[#allocation3 + $0x48] sm:$0xff] %vm1857, %v1780
      %1868 = vst.msk [vmem:[#allocation3 + $0x50] sm:$0xff] %vm1857, %v1782
      %1869 = vst.msk [vmem:[#allocation3 + $0x58] sm:$0xff] %vm1857, %v1784
      %1870 = vst.msk [vmem:[#allocation3 + $0x60] sm:$0xff] %vm1857, %v1786
      %1871 = vst.msk [vmem:[#allocation3 + $0x68] sm:$0xff] %vm1857, %v1788
      %1872 = vst.msk [vmem:[#allocation3 + $0x70] sm:$0xff] %vm1857, %v1790
      %1873 = vst.msk [vmem:[#allocation3 + $0x78] sm:$0xff] %vm1857, %v1792
      %1874 = vst.msk [vmem:[#allocation3 + $0x80] sm:$0xff] %vm1857, %v1794
      %1875 = vst.msk [vmem:[#allocation3 + $0x88] sm:$0xff] %vm1857, %v1796
      %1876 = vst.msk [vmem:[#allocation3 + $0x90] sm:$0xff] %vm1857, %v1798
      %1877 = vst.msk [vmem:[#allocation3 + $0x98] sm:$0xff] %vm1857, %v1800
      %1878 = vst.msk [vmem:[#allocation3 + $0xa0] sm:$0xff] %vm1857, %v1802
      %1879 = vst.msk [vmem:[#allocation3 + $0xa8] sm:$0xff] %vm1857, %v1804
      %1880 = vst.msk [vmem:[#allocation3 + $0xb0] sm:$0xff] %vm1857, %v1806
      %1881 = vst.msk [vmem:[#allocation3 + $0xb8] sm:$0xff] %vm1857, %v1808
      %1882 = vst.msk [vmem:[#allocation3 + $0xc0] sm:$0xff] %vm1857, %v1810
      %1883 = vst.msk [vmem:[#allocation3 + $0xc8] sm:$0xff] %vm1857, %v1812
      %1884 = vst.msk [vmem:[#allocation3 + $0xd0] sm:$0xff] %vm1857, %v1814
      %1885 = vst.msk [vmem:[#allocation3 + $0xd8] sm:$0xff] %vm1857, %v1816
      %1886 = vst.msk [vmem:[#allocation3 + $0xe0] sm:$0xff] %vm1857, %v1818
      %1887 = vst.msk [vmem:[#allocation3 + $0xe8] sm:$0xff] %vm1857, %v1820
      %1888 = vst.msk [vmem:[#allocation3 + $0xf0] sm:$0xff] %vm1857, %v1822
      %1889 = vst.msk [vmem:[#allocation3 + $0xf8] sm:$0xff] %vm1857, %v1824
      %v1890 = vld [vmem:[%s391 + $0x2] sm:$0xff]
      %v1891 = vld [vmem:[%s391 + $0xa] sm:$0xff]
      %v1892 = vld [vmem:[%s391 + $0x1a] sm:$0xff]
      %v1893 = vld [vmem:[%s391 + $0x22] sm:$0xff]
      %v1894 = vld [vmem:[%s391 + $0x32] sm:$0xff]
      %v1895 = vld [vmem:[%s391 + $0x3a] sm:$0xff]
      %v1896 = vld [vmem:[%s391 + $0x4a] sm:$0xff]
      %v1897 = vld [vmem:[%s391 + $0x52] sm:$0xff]
      %v1898 = vld [vmem:[%s391 + $0x62] sm:$0xff]
      %v1899 = vld [vmem:[%s391 + $0x6a] sm:$0xff]
      %v1900 = vld [vmem:[%s391 + $0x7a] sm:$0xff]
      %v1901 = vld [vmem:[%s391 + $0x82] sm:$0xff]
      %v1902 = vld [vmem:[%s391 + $0x92] sm:$0xff]
      %v1903 = vld [vmem:[%s391 + $0x9a] sm:$0xff]
      %v1904 = vld [vmem:[%s391 + $0xaa] sm:$0xff]
      %v1905 = vld [vmem:[%s391 + $0xb2] sm:$0xff]
      %v1906 = vld [vmem:[%s391 + $0xc2] sm:$0xff]
      %v1907 = vld [vmem:[%s391 + $0xca] sm:$0xff]
      %v1908 = vld [vmem:[%s391 + $0xda] sm:$0xff]
      %v1909 = vld [vmem:[%s391 + $0xe2] sm:$0xff]
      %v1910 = vld [vmem:[%s391 + $0xf2] sm:$0xff]
      %v1911 = vld [vmem:[%s391 + $0xfa] sm:$0xff]
      %v1912 = vld [vmem:[%s391 + $0x10a] sm:$0xff]
      %v1913 = vld [vmem:[%s391 + $0x112] sm:$0xff]
      %v1914 = vld [vmem:[%s391 + $0x122] sm:$0xff]
      %v1915 = vld [vmem:[%s391 + $0x12a] sm:$0xff]
      %v1916 = vld [vmem:[%s391 + $0x13a] sm:$0xff]
      %v1917 = vld [vmem:[%s391 + $0x142] sm:$0xff]
      %v1918 = vld [vmem:[%s391 + $0x152] sm:$0xff]
      %v1919 = vld [vmem:[%s391 + $0x15a] sm:$0xff]
      %v1920 = vld [vmem:[%s391 + $0x16a] sm:$0xff]
      %v1921 = vld [vmem:[%s391 + $0x172] sm:$0xff]
      %1954 = vrot.lane.b32.xlu0 %v1890, 32
      %v1955 = vpop.permute.xlu0 %1954
      %1956 = vrot.lane.b32.xlu0 %v1891, 32
      %v1957 = vpop.permute.xlu0 %1956
      %1958 = vrot.lane.b32.xlu0 %v1892, 32
      %v1959 = vpop.permute.xlu0 %1958
      %1960 = vrot.lane.b32.xlu0 %v1893, 32
      %v1961 = vpop.permute.xlu0 %1960
      %1962 = vrot.lane.b32.xlu0 %v1894, 32
      %v1963 = vpop.permute.xlu0 %1962
      %1964 = vrot.lane.b32.xlu0 %v1895, 32
      %v1965 = vpop.permute.xlu0 %1964
      %1966 = vrot.lane.b32.xlu0 %v1896, 32
      %v1967 = vpop.permute.xlu0 %1966
      %1968 = vrot.lane.b32.xlu0 %v1897, 32
      %v1969 = vpop.permute.xlu0 %1968
      %1970 = vrot.lane.b32.xlu0 %v1898, 32
      %v1971 = vpop.permute.xlu0 %1970
      %1972 = vrot.lane.b32.xlu0 %v1899, 32
      %v1973 = vpop.permute.xlu0 %1972
      %1974 = vrot.lane.b32.xlu0 %v1900, 32
      %v1975 = vpop.permute.xlu0 %1974
      %1976 = vrot.lane.b32.xlu0 %v1901, 32
      %v1977 = vpop.permute.xlu0 %1976
      %1978 = vrot.lane.b32.xlu0 %v1902, 32
      %v1979 = vpop.permute.xlu0 %1978
      %1980 = vrot.lane.b32.xlu0 %v1903, 32
      %v1981 = vpop.permute.xlu0 %1980
      %1982 = vrot.lane.b32.xlu0 %v1904, 32
      %v1983 = vpop.permute.xlu0 %1982
      %1984 = vrot.lane.b32.xlu0 %v1905, 32
      %v1985 = vpop.permute.xlu0 %1984
      %1986 = vrot.lane.b32.xlu0 %v1906, 32
      %v1987 = vpop.permute.xlu0 %1986
      %1988 = vrot.lane.b32.xlu0 %v1907, 32
      %v1989 = vpop.permute.xlu0 %1988
      %1990 = vrot.lane.b32.xlu0 %v1908, 32
      %v1991 = vpop.permute.xlu0 %1990
      %1992 = vrot.lane.b32.xlu0 %v1909, 32
      %v1993 = vpop.permute.xlu0 %1992
      %1994 = vrot.lane.b32.xlu0 %v1910, 32
      %v1995 = vpop.permute.xlu0 %1994
      %1996 = vrot.lane.b32.xlu0 %v1911, 32
      %v1997 = vpop.permute.xlu0 %1996
      %1998 = vrot.lane.b32.xlu0 %v1912, 32
      %v1999 = vpop.permute.xlu0 %1998
      %2000 = vrot.lane.b32.xlu0 %v1913, 32
      %v2001 = vpop.permute.xlu0 %2000
      %2002 = vrot.lane.b32.xlu0 %v1914, 32
      %v2003 = vpop.permute.xlu0 %2002
      %2004 = vrot.lane.b32.xlu0 %v1915, 32
      %v2005 = vpop.permute.xlu0 %2004
      %2006 = vrot.lane.b32.xlu0 %v1916, 32
      %v2007 = vpop.permute.xlu0 %2006
      %2008 = vrot.lane.b32.xlu0 %v1917, 32
      %v2009 = vpop.permute.xlu0 %2008
      %2010 = vrot.lane.b32.xlu0 %v1918, 32
      %v2011 = vpop.permute.xlu0 %2010
      %2012 = vrot.lane.b32.xlu0 %v1919, 32
      %v2013 = vpop.permute.xlu0 %2012
      %2014 = vrot.lane.b32.xlu0 %v1920, 32
      %v2015 = vpop.permute.xlu0 %2014
      %2016 = vrot.lane.b32.xlu0 %v1921, 32
      %v2017 = vpop.permute.xlu0 %2016
      %vm2050 = vcmask 294144
      %2051 = vst.msk [vmem:[#allocation3] sm:$0xff] %vm2050, %v1955
      %2052 = vst.msk [vmem:[#allocation3 + $0x8] sm:$0xff] %vm2050, %v1957
      %2053 = vst.msk [vmem:[#allocation3 + $0x10] sm:$0xff] %vm2050, %v1959
      %2054 = vst.msk [vmem:[#allocation3 + $0x18] sm:$0xff] %vm2050, %v1961
      %2055 = vst.msk [vmem:[#allocation3 + $0x20] sm:$0xff] %vm2050, %v1963
      %2056 = vst.msk [vmem:[#allocation3 + $0x28] sm:$0xff] %vm2050, %v1965
      %2057 = vst.msk [vmem:[#allocation3 + $0x30] sm:$0xff] %vm2050, %v1967
      %2058 = vst.msk [vmem:[#allocation3 + $0x38] sm:$0xff] %vm2050, %v1969
      %2059 = vst.msk [vmem:[#allocation3 + $0x40] sm:$0xff] %vm2050, %v1971
      %2060 = vst.msk [vmem:[#allocation3 + $0x48] sm:$0xff] %vm2050, %v1973
      %2061 = vst.msk [vmem:[#allocation3 + $0x50] sm:$0xff] %vm2050, %v1975
      %2062 = vst.msk [vmem:[#allocation3 + $0x58] sm:$0xff] %vm2050, %v1977
      %2063 = vst.msk [vmem:[#allocation3 + $0x60] sm:$0xff] %vm2050, %v1979
      %2064 = vst.msk [vmem:[#allocation3 + $0x68] sm:$0xff] %vm2050, %v1981
      %2065 = vst.msk [vmem:[#allocation3 + $0x70] sm:$0xff] %vm2050, %v1983
      %2066 = vst.msk [vmem:[#allocation3 + $0x78] sm:$0xff] %vm2050, %v1985
      %2067 = vst.msk [vmem:[#allocation3 + $0x80] sm:$0xff] %vm2050, %v1987
      %2068 = vst.msk [vmem:[#allocation3 + $0x88] sm:$0xff] %vm2050, %v1989
      %2069 = vst.msk [vmem:[#allocation3 + $0x90] sm:$0xff] %vm2050, %v1991
      %2070 = vst.msk [vmem:[#allocation3 + $0x98] sm:$0xff] %vm2050, %v1993
      %2071 = vst.msk [vmem:[#allocation3 + $0xa0] sm:$0xff] %vm2050, %v1995
      %2072 = vst.msk [vmem:[#allocation3 + $0xa8] sm:$0xff] %vm2050, %v1997
      %2073 = vst.msk [vmem:[#allocation3 + $0xb0] sm:$0xff] %vm2050, %v1999
      %2074 = vst.msk [vmem:[#allocation3 + $0xb8] sm:$0xff] %vm2050, %v2001
      %2075 = vst.msk [vmem:[#allocation3 + $0xc0] sm:$0xff] %vm2050, %v2003
      %2076 = vst.msk [vmem:[#allocation3 + $0xc8] sm:$0xff] %vm2050, %v2005
      %2077 = vst.msk [vmem:[#allocation3 + $0xd0] sm:$0xff] %vm2050, %v2007
      %2078 = vst.msk [vmem:[#allocation3 + $0xd8] sm:$0xff] %vm2050, %v2009
      %2079 = vst.msk [vmem:[#allocation3 + $0xe0] sm:$0xff] %vm2050, %v2011
      %2080 = vst.msk [vmem:[#allocation3 + $0xe8] sm:$0xff] %vm2050, %v2013
      %2081 = vst.msk [vmem:[#allocation3 + $0xf0] sm:$0xff] %vm2050, %v2015
      %2082 = vst.msk [vmem:[#allocation3 + $0xf8] sm:$0xff] %vm2050, %v2017
      %v2083 = vld [vmem:[#allocation3] sm:$0xff]
      %v2084 = vld [vmem:[#allocation3 + $0x8] sm:$0xff]
      %v2085 = vld [vmem:[#allocation3 + $0x10] sm:$0xff]
      %v2086 = vld [vmem:[#allocation3 + $0x18] sm:$0xff]
      %v2087 = vld [vmem:[#allocation3 + $0x20] sm:$0xff]
      %v2088 = vld [vmem:[#allocation3 + $0x28] sm:$0xff]
      %v2089 = vld [vmem:[#allocation3 + $0x30] sm:$0xff]
      %v2090 = vld [vmem:[#allocation3 + $0x38] sm:$0xff]
      %v2091 = vld [vmem:[#allocation3 + $0x40] sm:$0xff]
      %v2092 = vld [vmem:[#allocation3 + $0x48] sm:$0xff]
      %v2093 = vld [vmem:[#allocation3 + $0x50] sm:$0xff]
      %v2094 = vld [vmem:[#allocation3 + $0x58] sm:$0xff]
      %v2095 = vld [vmem:[#allocation3 + $0x60] sm:$0xff]
      %v2096 = vld [vmem:[#allocation3 + $0x68] sm:$0xff]
      %v2097 = vld [vmem:[#allocation3 + $0x70] sm:$0xff]
      %v2098 = vld [vmem:[#allocation3 + $0x78] sm:$0xff]
      %v2099 = vld [vmem:[#allocation3 + $0x80] sm:$0xff]
      %v2100 = vld [vmem:[#allocation3 + $0x88] sm:$0xff]
      %v2101 = vld [vmem:[#allocation3 + $0x90] sm:$0xff]
      %v2102 = vld [vmem:[#allocation3 + $0x98] sm:$0xff]
      %v2103 = vld [vmem:[#allocation3 + $0xa0] sm:$0xff]
      %v2104 = vld [vmem:[#allocation3 + $0xa8] sm:$0xff]
      %v2105 = vld [vmem:[#allocation3 + $0xb0] sm:$0xff]
      %v2106 = vld [vmem:[#allocation3 + $0xb8] sm:$0xff]
      %v2107 = vld [vmem:[#allocation3 + $0xc0] sm:$0xff]
      %v2108 = vld [vmem:[#allocation3 + $0xc8] sm:$0xff]
      %v2109 = vld [vmem:[#allocation3 + $0xd0] sm:$0xff]
      %v2110 = vld [vmem:[#allocation3 + $0xd8] sm:$0xff]
      %v2111 = vld [vmem:[#allocation3 + $0xe0] sm:$0xff]
      %v2112 = vld [vmem:[#allocation3 + $0xe8] sm:$0xff]
      %v2113 = vld [vmem:[#allocation3 + $0xf0] sm:$0xff]
      %v2114 = vld [vmem:[#allocation3 + $0xf8] sm:$0xff]
      %v2115 = vld [vmem:[%s2] sm:$0xff]
      %v2116 = vld [vmem:[%s2 + $0x8] sm:$0xff]
      %v2117 = vld [vmem:[%s2 + $0x10] sm:$0xff]
      %v2118 = vld [vmem:[%s2 + $0x18] sm:$0xff]
      %v2119 = vld [vmem:[%s2 + $0x20] sm:$0xf]
      %vm2120 = vcmask 293888
      %v2122 = vsel %vm2120, %v2083, 0
      %v2125 = vsel %vm2120, %v2084, 0
      %v2128 = vsel %vm2120, %v2085, 0
      %v2131 = vsel %vm2120, %v2086, 0
      %v2134 = vsel %vm2120, %v2087, 0
      %v2137 = vsel %vm2120, %v2088, 0
      %v2140 = vsel %vm2120, %v2089, 0
      %v2143 = vsel %vm2120, %v2090, 0
      %v2146 = vsel %vm2120, %v2091, 0
      %v2149 = vsel %vm2120, %v2092, 0
      %v2152 = vsel %vm2120, %v2093, 0
      %v2155 = vsel %vm2120, %v2094, 0
      %v2158 = vsel %vm2120, %v2095, 0
      %v2161 = vsel %vm2120, %v2096, 0
      %v2164 = vsel %vm2120, %v2097, 0
      %v2167 = vsel %vm2120, %v2098, 0
      %v2170 = vsel %vm2120, %v2099, 0
      %v2173 = vsel %vm2120, %v2100, 0
      %v2176 = vsel %vm2120, %v2101, 0
      %v2179 = vsel %vm2120, %v2102, 0
      %v2182 = vsel %vm2120, %v2103, 0
      %v2185 = vsel %vm2120, %v2104, 0
      %v2188 = vsel %vm2120, %v2105, 0
      %v2191 = vsel %vm2120, %v2106, 0
      %v2194 = vsel %vm2120, %v2107, 0
      %v2197 = vsel %vm2120, %v2108, 0
      %v2200 = vsel %vm2120, %v2109, 0
      %v2203 = vsel %vm2120, %v2110, 0
      %v2206 = vsel %vm2120, %v2111, 0
      %v2209 = vsel %vm2120, %v2112, 0
      %v2212 = vsel %vm2120, %v2113, 0
      %v2215 = vsel %vm2120, %v2114, 0
      %v2218 = vsel %vm250, %v2119, 0
      %2220 = vmatprep.subr.mxu0 0.0
      %2221 = vmatpush1.msra.mxu0 %v2115
      %2222 = vmatprep.subr.mxu0 0.0
      %2223 = vmatpush1.msra.mxu0 %v2116
      %2224 = vmatprep.subr.mxu0 0.0
      %2225 = vmatpush1.msra.mxu0 %v2117
      %2226 = vmatprep.subr.mxu0 0.0
      %2227 = vmatpush1.msra.mxu0 %v2118
      %2228 = vmatprep.subr.mxu0 0.0
      %2229 = vmatpush1.msra.mxu0 %v2218
      %2230 = vmatprep.subr.mxu0 0.0
      %2231 = vmatpush1.msra.mxu0 0.0
      %2232 = vmatprep.subr.mxu0 0.0
      %2233 = vmatpush1.msra.mxu0 0.0
      %2234 = vmatprep.subr.mxu0 0.0
      %2235 = vmatpush1.msra.mxu0 0.0
      %2236 = vmatprep.subr.mxu0 0.0
      %2237 = vmatpush1.msra.mxu0 0.0
      %2238 = vmatprep.subr.mxu0 0.0
      %2239 = vmatpush1.msra.mxu0 0.0
      %2240 = vmatprep.subr.mxu0 0.0
      %2241 = vmatpush1.msra.mxu0 0.0
      %2242 = vmatprep.subr.mxu0 0.0
      %2243 = vmatpush1.msra.mxu0 0.0
      %2244 = vmatprep.subr.mxu0 0.0
      %2245 = vmatpush1.msra.mxu0 0.0
      %2246 = vmatprep.subr.mxu0 0.0
      %2247 = vmatpush1.msra.mxu0 0.0
      %2248 = vmatprep.subr.mxu0 0.0
      %2249 = vmatpush1.msra.mxu0 0.0
      %2250 = vmatprep.subr.mxu0 0.0
      %2251 = vmatpush1.msra.mxu0 0.0
      %2252 = vmatprep.subr.mxu0 0.0
      %2253 = vmatpush1.msra.mxu0 0.0
      %2254 = vmatprep.subr.mxu0 0.0
      %2255 = vmatpush1.msra.mxu0 0.0
      %2256 = vmatprep.subr.mxu0 0.0
      %2257 = vmatpush1.msra.mxu0 0.0
      %2258 = vmatprep.subr.mxu0 0.0
      %2259 = vmatpush1.msra.mxu0 0.0
      %2260 = vmatprep.subr.mxu0 0.0
      %2261 = vmatpush1.msra.mxu0 0.0
      %2262 = vmatprep.subr.mxu0 0.0
      %2263 = vmatpush1.msra.mxu0 0.0
      %2264 = vmatprep.subr.mxu0 0.0
      %2265 = vmatpush1.msra.mxu0 0.0
      %2266 = vmatprep.subr.mxu0 0.0
      %2267 = vmatpush1.msra.mxu0 0.0
      %2268 = vmatprep.subr.mxu0 0.0
      %2269 = vmatpush1.msra.mxu0 0.0
      %2270 = vmatprep.subr.mxu0 0.0
      %2271 = vmatpush1.msra.mxu0 0.0
      %2272 = vmatprep.subr.mxu0 0.0
      %2273 = vmatpush1.msra.mxu0 0.0
      %2274 = vmatprep.subr.mxu0 0.0
      %2275 = vmatpush1.msra.mxu0 0.0
      %2276 = vmatprep.subr.mxu0 0.0
      %2277 = vmatpush1.msra.mxu0 0.0
      %2278 = vmatprep.subr.mxu0 0.0
      %2279 = vmatpush1.msra.mxu0 0.0
      %2280 = vmatprep.subr.mxu0 0.0
      %2281 = vmatpush1.msra.mxu0 0.0
      %2282 = vmatprep.subr.mxu0 0.0
      %2283 = vmatpush1.msra.mxu0 0.0
      %2284 = vmatprep.mubr.f32.mxu0 0.0
      %2285 = vmatmul.mubr.f32.gmra.mrb[0].mxu0 %v2122
      %v2286 = vpop.f32.mrb[0].mxu0
      %v2287 = vadd.f32 0.0, %v2286
      %v2288 = vpop.f32.mrb[0].mxu0
      %2289 = vmatprep.mubr.f32.mxu0 0.0
      %2290 = vmatmul.mubr.f32.gmra.mrb[0].mxu0 %v2125
      %v2291 = vpop.f32.mrb[0].mxu0
      %v2292 = vadd.f32 0.0, %v2291
      %v2293 = vpop.f32.mrb[0].mxu0
      %2294 = vmatprep.mubr.f32.mxu0 0.0
      %2295 = vmatmul.mubr.f32.gmra.mrb[0].mxu0 %v2128
      %v2296 = vpop.f32.mrb[0].mxu0
      %v2297 = vadd.f32 0.0, %v2296
      %v2298 = vpop.f32.mrb[0].mxu0
      %2299 = vmatprep.mubr.f32.mxu0 0.0
      %2300 = vmatmul.mubr.f32.gmra.mrb[0].mxu0 %v2131
      %v2301 = vpop.f32.mrb[0].mxu0
      %v2302 = vadd.f32 0.0, %v2301
      %v2303 = vpop.f32.mrb[0].mxu0
      %2304 = vmatprep.mubr.f32.mxu0 0.0
      %2305 = vmatmul.mubr.f32.gmra.mrb[0].mxu0 %v2134
      %v2306 = vpop.f32.mrb[0].mxu0
      %v2307 = vadd.f32 0.0, %v2306
      %v2308 = vpop.f32.mrb[0].mxu0
      %2309 = vmatprep.mubr.f32.mxu0 0.0
      %2310 = vmatmul.mubr.f32.gmra.mrb[0].mxu0 %v2137
      %v2311 = vpop.f32.mrb[0].mxu0
      %v2312 = vadd.f32 0.0, %v2311
      %v2313 = vpop.f32.mrb[0].mxu0
      %2314 = vmatprep.mubr.f32.mxu0 0.0
      %2315 = vmatmul.mubr.f32.gmra.mrb[0].mxu0 %v2140
      %v2316 = vpop.f32.mrb[0].mxu0
      %v2317 = vadd.f32 0.0, %v2316
      %v2318 = vpop.f32.mrb[0].mxu0
      %2319 = vmatprep.mubr.f32.mxu0 0.0
      %2320 = vmatmul.mubr.f32.gmra.mrb[0].mxu0 %v2143
      %v2321 = vpop.f32.mrb[0].mxu0
      %v2322 = vadd.f32 0.0, %v2321
      %v2323 = vpop.f32.mrb[0].mxu0
      %2324 = vmatprep.mubr.f32.mxu0 0.0
      %2325 = vmatmul.mubr.f32.gmra.mrb[0].mxu0 %v2146
      %v2326 = vpop.f32.mrb[0].mxu0
      %v2327 = vadd.f32 0.0, %v2326
      %v2328 = vpop.f32.mrb[0].mxu0
      %2329 = vmatprep.mubr.f32.mxu0 0.0
      %2330 = vmatmul.mubr.f32.gmra.mrb[0].mxu0 %v2149
      %v2331 = vpop.f32.mrb[0].mxu0
      %v2332 = vadd.f32 0.0, %v2331
      %v2333 = vpop.f32.mrb[0].mxu0
      %2334 = vmatprep.mubr.f32.mxu0 0.0
      %2335 = vmatmul.mubr.f32.gmra.mrb[0].mxu0 %v2152
      %v2336 = vpop.f32.mrb[0].mxu0
      %v2337 = vadd.f32 0.0, %v2336
      %v2338 = vpop.f32.mrb[0].mxu0
      %2339 = vmatprep.mubr.f32.mxu0 0.0
      %2340 = vmatmul.mubr.f32.gmra.mrb[0].mxu0 %v2155
      %v2341 = vpop.f32.mrb[0].mxu0
      %v2342 = vadd.f32 0.0, %v2341
      %v2343 = vpop.f32.mrb[0].mxu0
      %2344 = vmatprep.mubr.f32.mxu0 0.0
      %2345 = vmatmul.mubr.f32.gmra.mrb[0].mxu0 %v2158
      %v2346 = vpop.f32.mrb[0].mxu0
      %v2347 = vadd.f32 0.0, %v2346
      %v2348 = vpop.f32.mrb[0].mxu0
      %2349 = vmatprep.mubr.f32.mxu0 0.0
      %2350 = vmatmul.mubr.f32.gmra.mrb[0].mxu0 %v2161
      %v2351 = vpop.f32.mrb[0].mxu0
      %v2352 = vadd.f32 0.0, %v2351
      %v2353 = vpop.f32.mrb[0].mxu0
      %2354 = vmatprep.mubr.f32.mxu0 0.0
      %2355 = vmatmul.mubr.f32.gmra.mrb[0].mxu0 %v2164
      %v2356 = vpop.f32.mrb[0].mxu0
      %v2357 = vadd.f32 0.0, %v2356
      %v2358 = vpop.f32.mrb[0].mxu0
      %2359 = vmatprep.mubr.f32.mxu0 0.0
      %2360 = vmatmul.mubr.f32.gmra.mrb[0].mxu0 %v2167
      %v2361 = vpop.f32.mrb[0].mxu0
      %v2362 = vadd.f32 0.0, %v2361
      %v2363 = vpop.f32.mrb[0].mxu0
      %2364 = vmatprep.mubr.f32.mxu0 0.0
      %2365 = vmatmul.mubr.f32.gmra.mrb[0].mxu0 %v2170
      %v2366 = vpop.f32.mrb[0].mxu0
      %v2367 = vadd.f32 0.0, %v2366
      %v2368 = vpop.f32.mrb[0].mxu0
      %2369 = vmatprep.mubr.f32.mxu0 0.0
      %2370 = vmatmul.mubr.f32.gmra.mrb[0].mxu0 %v2173
      %v2371 = vpop.f32.mrb[0].mxu0
      %v2372 = vadd.f32 0.0, %v2371
      %v2373 = vpop.f32.mrb[0].mxu0
      %2374 = vmatprep.mubr.f32.mxu0 0.0
      %2375 = vmatmul.mubr.f32.gmra.mrb[0].mxu0 %v2176
      %v2376 = vpop.f32.mrb[0].mxu0
      %v2377 = vadd.f32 0.0, %v2376
      %v2378 = vpop.f32.mrb[0].mxu0
      %2379 = vmatprep.mubr.f32.mxu0 0.0
      %2380 = vmatmul.mubr.f32.gmra.mrb[0].mxu0 %v2179
      %v2381 = vpop.f32.mrb[0].mxu0
      %v2382 = vadd.f32 0.0, %v2381
      %v2383 = vpop.f32.mrb[0].mxu0
      %2384 = vmatprep.mubr.f32.mxu0 0.0
      %2385 = vmatmul.mubr.f32.gmra.mrb[0].mxu0 %v2182
      %v2386 = vpop.f32.mrb[0].mxu0
      %v2387 = vadd.f32 0.0, %v2386
      %v2388 = vpop.f32.mrb[0].mxu0
      %2389 = vmatprep.mubr.f32.mxu0 0.0
      %2390 = vmatmul.mubr.f32.gmra.mrb[0].mxu0 %v2185
      %v2391 = vpop.f32.mrb[0].mxu0
      %v2392 = vadd.f32 0.0, %v2391
      %v2393 = vpop.f32.mrb[0].mxu0
      %2394 = vmatprep.mubr.f32.mxu0 0.0
      %2395 = vmatmul.mubr.f32.gmra.mrb[0].mxu0 %v2188
      %v2396 = vpop.f32.mrb[0].mxu0
      %v2397 = vadd.f32 0.0, %v2396
      %v2398 = vpop.f32.mrb[0].mxu0
      %2399 = vmatprep.mubr.f32.mxu0 0.0
      %2400 = vmatmul.mubr.f32.gmra.mrb[0].mxu0 %v2191
      %v2401 = vpop.f32.mrb[0].mxu0
      %v2402 = vadd.f32 0.0, %v2401
      %v2403 = vpop.f32.mrb[0].mxu0
      %2404 = vmatprep.mubr.f32.mxu0 0.0
      %2405 = vmatmul.mubr.f32.gmra.mrb[0].mxu0 %v2194
      %v2406 = vpop.f32.mrb[0].mxu0
      %v2407 = vadd.f32 0.0, %v2406
      %v2408 = vpop.f32.mrb[0].mxu0
      %2409 = vmatprep.mubr.f32.mxu0 0.0
      %2410 = vmatmul.mubr.f32.gmra.mrb[0].mxu0 %v2197
      %v2411 = vpop.f32.mrb[0].mxu0
      %v2412 = vadd.f32 0.0, %v2411
      %v2413 = vpop.f32.mrb[0].mxu0
      %2414 = vmatprep.mubr.f32.mxu0 0.0
      %2415 = vmatmul.mubr.f32.gmra.mrb[0].mxu0 %v2200
      %v2416 = vpop.f32.mrb[0].mxu0
      %v2417 = vadd.f32 0.0, %v2416
      %v2418 = vpop.f32.mrb[0].mxu0
      %2419 = vmatprep.mubr.f32.mxu0 0.0
      %2420 = vmatmul.mubr.f32.gmra.mrb[0].mxu0 %v2203
      %v2421 = vpop.f32.mrb[0].mxu0
      %v2422 = vadd.f32 0.0, %v2421
      %v2423 = vpop.f32.mrb[0].mxu0
      %2424 = vmatprep.mubr.f32.mxu0 0.0
      %2425 = vmatmul.mubr.f32.gmra.mrb[0].mxu0 %v2206
      %v2426 = vpop.f32.mrb[0].mxu0
      %v2427 = vadd.f32 0.0, %v2426
      %v2428 = vpop.f32.mrb[0].mxu0
      %2429 = vmatprep.mubr.f32.mxu0 0.0
      %2430 = vmatmul.mubr.f32.gmra.mrb[0].mxu0 %v2209
      %v2431 = vpop.f32.mrb[0].mxu0
      %v2432 = vadd.f32 0.0, %v2431
      %v2433 = vpop.f32.mrb[0].mxu0
      %2434 = vmatprep.mubr.f32.mxu0 0.0
      %2435 = vmatmul.mubr.f32.gmra.mrb[0].mxu0 %v2212
      %v2436 = vpop.f32.mrb[0].mxu0
      %v2437 = vadd.f32 0.0, %v2436
      %v2438 = vpop.f32.mrb[0].mxu0
      %2439 = vmatprep.mubr.f32.mxu0 0.0
      %2440 = vmatmul.mubr.f32.gmra.mrb[0].mxu0 %v2215
      %v2441 = vpop.f32.mrb[0].mxu0
      %v2442 = vadd.f32 0.0, %v2441
      %v2443 = vpop.f32.mrb[0].mxu0
      %2444 = vdwg.mxu0
      %vm2445 = vcmp.ge.f32.partialorder %v2287, 0.0
      %vm2446 = vcmp.ge.f32.partialorder %v2292, 0.0
      %vm2447 = vcmp.ge.f32.partialorder %v2297, 0.0
      %vm2448 = vcmp.ge.f32.partialorder %v2302, 0.0
      %vm2449 = vcmp.ge.f32.partialorder %v2307, 0.0
      %vm2450 = vcmp.ge.f32.partialorder %v2312, 0.0
      %vm2451 = vcmp.ge.f32.partialorder %v2317, 0.0
      %vm2452 = vcmp.ge.f32.partialorder %v2322, 0.0
      %vm2453 = vcmp.ge.f32.partialorder %v2327, 0.0
      %vm2454 = vcmp.ge.f32.partialorder %v2332, 0.0
      %vm2455 = vcmp.ge.f32.partialorder %v2337, 0.0
      %vm2456 = vcmp.ge.f32.partialorder %v2342, 0.0
      %vm2457 = vcmp.ge.f32.partialorder %v2347, 0.0
      %vm2458 = vcmp.ge.f32.partialorder %v2352, 0.0
      %vm2459 = vcmp.ge.f32.partialorder %v2357, 0.0
      %vm2460 = vcmp.ge.f32.partialorder %v2362, 0.0
      %vm2461 = vcmp.ge.f32.partialorder %v2367, 0.0
      %vm2462 = vcmp.ge.f32.partialorder %v2372, 0.0
      %vm2463 = vcmp.ge.f32.partialorder %v2377, 0.0
      %vm2464 = vcmp.ge.f32.partialorder %v2382, 0.0
      %vm2465 = vcmp.ge.f32.partialorder %v2387, 0.0
      %vm2466 = vcmp.ge.f32.partialorder %v2392, 0.0
      %vm2467 = vcmp.ge.f32.partialorder %v2397, 0.0
      %vm2468 = vcmp.ge.f32.partialorder %v2402, 0.0
      %vm2469 = vcmp.ge.f32.partialorder %v2407, 0.0
      %vm2470 = vcmp.ge.f32.partialorder %v2412, 0.0
      %vm2471 = vcmp.ge.f32.partialorder %v2417, 0.0
      %vm2472 = vcmp.ge.f32.partialorder %v2422, 0.0
      %vm2473 = vcmp.ge.f32.partialorder %v2427, 0.0
      %vm2474 = vcmp.ge.f32.partialorder %v2432, 0.0
      %vm2475 = vcmp.ge.f32.partialorder %v2437, 0.0
      %vm2476 = vcmp.ge.f32.partialorder %v2442, 0.0
      %v2477 = vmul.f32 %v2287, 0.1
      %v2478 = vmul.f32 %v2292, 0.1
      %v2479 = vmul.f32 %v2297, 0.1
      %v2480 = vmul.f32 %v2302, 0.1
      %v2481 = vmul.f32 %v2307, 0.1
      %v2482 = vmul.f32 %v2312, 0.1
      %v2483 = vmul.f32 %v2317, 0.1
      %v2484 = vmul.f32 %v2322, 0.1
      %v2485 = vmul.f32 %v2327, 0.1
      %v2486 = vmul.f32 %v2332, 0.1
      %v2487 = vmul.f32 %v2337, 0.1
      %v2488 = vmul.f32 %v2342, 0.1
      %v2489 = vmul.f32 %v2347, 0.1
      %v2490 = vmul.f32 %v2352, 0.1
      %v2491 = vmul.f32 %v2357, 0.1
      %v2492 = vmul.f32 %v2362, 0.1
      %v2493 = vmul.f32 %v2367, 0.1
      %v2494 = vmul.f32 %v2372, 0.1
      %v2495 = vmul.f32 %v2377, 0.1
      %v2496 = vmul.f32 %v2382, 0.1
      %v2497 = vmul.f32 %v2387, 0.1
      %v2498 = vmul.f32 %v2392, 0.1
      %v2499 = vmul.f32 %v2397, 0.1
      %v2500 = vmul.f32 %v2402, 0.1
      %v2501 = vmul.f32 %v2407, 0.1
      %v2502 = vmul.f32 %v2412, 0.1
      %v2503 = vmul.f32 %v2417, 0.1
      %v2504 = vmul.f32 %v2422, 0.1
      %v2505 = vmul.f32 %v2427, 0.1
      %v2506 = vmul.f32 %v2432, 0.1
      %v2507 = vmul.f32 %v2437, 0.1
      %v2508 = vmul.f32 %v2442, 0.1
      %v2509 = vsel %vm2445, %v2287, %v2477
      %v2510 = vsel %vm2446, %v2292, %v2478
      %v2511 = vsel %vm2447, %v2297, %v2479
      %v2512 = vsel %vm2448, %v2302, %v2480
      %v2513 = vsel %vm2449, %v2307, %v2481
      %v2514 = vsel %vm2450, %v2312, %v2482
      %v2515 = vsel %vm2451, %v2317, %v2483
      %v2516 = vsel %vm2452, %v2322, %v2484
      %v2517 = vsel %vm2453, %v2327, %v2485
      %v2518 = vsel %vm2454, %v2332, %v2486
      %v2519 = vsel %vm2455, %v2337, %v2487
      %v2520 = vsel %vm2456, %v2342, %v2488
      %v2521 = vsel %vm2457, %v2347, %v2489
      %v2522 = vsel %vm2458, %v2352, %v2490
      %v2523 = vsel %vm2459, %v2357, %v2491
      %v2524 = vsel %vm2460, %v2362, %v2492
      %v2525 = vsel %vm2461, %v2367, %v2493
      %v2526 = vsel %vm2462, %v2372, %v2494
      %v2527 = vsel %vm2463, %v2377, %v2495
      %v2528 = vsel %vm2464, %v2382, %v2496
      %v2529 = vsel %vm2465, %v2387, %v2497
      %v2530 = vsel %vm2466, %v2392, %v2498
      %v2531 = vsel %vm2467, %v2397, %v2499
      %v2532 = vsel %vm2468, %v2402, %v2500
      %v2533 = vsel %vm2469, %v2407, %v2501
      %v2534 = vsel %vm2470, %v2412, %v2502
      %v2535 = vsel %vm2471, %v2417, %v2503
      %v2536 = vsel %vm2472, %v2422, %v2504
      %v2537 = vsel %vm2473, %v2427, %v2505
      %v2538 = vsel %vm2474, %v2432, %v2506
      %v2539 = vsel %vm2475, %v2437, %v2507
      %v2540 = vsel %vm2476, %v2442, %v2508
      %s2541 = scalar_lea.vmem [#allocation4], 24
      %2542 = vst [vmem:[%s2541 + $0x1] sm:$0xff] %v2509
      %2543 = vst [vmem:[%s2541 + $0x9] sm:$0xff] %v2510
      %2544 = vst [vmem:[%s2541 + $0x19] sm:$0xff] %v2511
      %2545 = vst [vmem:[%s2541 + $0x21] sm:$0xff] %v2512
      %2546 = vst [vmem:[%s2541 + $0x31] sm:$0xff] %v2513
      %2547 = vst [vmem:[%s2541 + $0x39] sm:$0xff] %v2514
      %2548 = vst [vmem:[%s2541 + $0x49] sm:$0xff] %v2515
      %2549 = vst [vmem:[%s2541 + $0x51] sm:$0xff] %v2516
      %2550 = vst [vmem:[%s2541 + $0x61] sm:$0xff] %v2517
      %2551 = vst [vmem:[%s2541 + $0x69] sm:$0xff] %v2518
      %2552 = vst [vmem:[%s2541 + $0x79] sm:$0xff] %v2519
      %2553 = vst [vmem:[%s2541 + $0x81] sm:$0xff] %v2520
      %2554 = vst [vmem:[%s2541 + $0x91] sm:$0xff] %v2521
      %2555 = vst [vmem:[%s2541 + $0x99] sm:$0xff] %v2522
      %2556 = vst [vmem:[%s2541 + $0xa9] sm:$0xff] %v2523
      %2557 = vst [vmem:[%s2541 + $0xb1] sm:$0xff] %v2524
      %2558 = vst [vmem:[%s2541 + $0xc1] sm:$0xff] %v2525
      %2559 = vst [vmem:[%s2541 + $0xc9] sm:$0xff] %v2526
      %2560 = vst [vmem:[%s2541 + $0xd9] sm:$0xff] %v2527
      %2561 = vst [vmem:[%s2541 + $0xe1] sm:$0xff] %v2528
      %2562 = vst [vmem:[%s2541 + $0xf1] sm:$0xff] %v2529
      %2563 = vst [vmem:[%s2541 + $0xf9] sm:$0xff] %v2530
      %2564 = vst [vmem:[%s2541 + $0x109] sm:$0xff] %v2531
      %2565 = vst [vmem:[%s2541 + $0x111] sm:$0xff] %v2532
      %2566 = vst [vmem:[%s2541 + $0x121] sm:$0xff] %v2533
      %2567 = vst [vmem:[%s2541 + $0x129] sm:$0xff] %v2534
      %2568 = vst [vmem:[%s2541 + $0x139] sm:$0xff] %v2535
      %2569 = vst [vmem:[%s2541 + $0x141] sm:$0xff] %v2536
      %2570 = vst [vmem:[%s2541 + $0x151] sm:$0xff] %v2537
      %2571 = vst [vmem:[%s2541 + $0x159] sm:$0xff] %v2538
      %2572 = vst [vmem:[%s2541 + $0x169] sm:$0xff] %v2539
      %2573 = vst [vmem:[%s2541 + $0x171] sm:$0xff] %v2540
      %s2574 = scalar_lea.vmem [#allocation4], 48
      %v2575 = vld [vmem:[%s2574 + $0x1] sm:$0xff]
      %v2576 = vld [vmem:[%s2574 + $0x9] sm:$0xff]
      %2577 = vst [vmem:[#allocation4 + $0x1] sm:$0xff] %v2575
      %2578 = vst [vmem:[#allocation4 + $0x9] sm:$0xff] %v2576
      %s2579 = scalar_lea.vmem [#allocation4], 360
      %v2580 = vld [vmem:[%s2579 + $0x1] sm:$0xff]
      %v2581 = vld [vmem:[%s2579 + $0x9] sm:$0xff]
      %s2582 = scalar_lea.vmem [#allocation4], 408
      %2583 = vst [vmem:[%s2582 + $0x1] sm:$0xff] %v2580
      %2584 = vst [vmem:[%s2582 + $0x9] sm:$0xff] %v2581
      %v2585 = vld [vmem:[#allocation4 + $0x2] sm:$0x1]
      %v2586 = vld [vmem:[#allocation4 + $0x1a] sm:$0x1]
      %v2587 = vld [vmem:[#allocation4 + $0x32] sm:$0x1]
      %v2588 = vld [vmem:[#allocation4 + $0x4a] sm:$0x1]
      %v2589 = vld [vmem:[#allocation4 + $0x62] sm:$0x1]
      %v2590 = vld [vmem:[#allocation4 + $0x7a] sm:$0x1]
      %v2591 = vld [vmem:[#allocation4 + $0x92] sm:$0x1]
      %v2592 = vld [vmem:[#allocation4 + $0xaa] sm:$0x1]
      %v2593 = vld [vmem:[#allocation4 + $0xc2] sm:$0x1]
      %v2594 = vld [vmem:[#allocation4 + $0xda] sm:$0x1]
      %v2595 = vld [vmem:[#allocation4 + $0xf2] sm:$0x1]
      %v2596 = vld [vmem:[#allocation4 + $0x10a] sm:$0x1]
      %v2597 = vld [vmem:[#allocation4 + $0x122] sm:$0x1]
      %v2598 = vld [vmem:[#allocation4 + $0x13a] sm:$0x1]
      %v2599 = vld [vmem:[#allocation4 + $0x152] sm:$0x1]
      %v2600 = vld [vmem:[#allocation4 + $0x16a] sm:$0x1]
      %v2601 = vld [vmem:[#allocation4 + $0x182] sm:$0x1]
      %v2602 = vld [vmem:[#allocation4 + $0x19a] sm:$0x1]
      %2603 = vst [vmem:[#allocation4] sm:$0x1] %v2585
      %2604 = vst [vmem:[#allocation4 + $0x18] sm:$0x1] %v2586
      %2605 = vst [vmem:[#allocation4 + $0x30] sm:$0x1] %v2587
      %2606 = vst [vmem:[#allocation4 + $0x48] sm:$0x1] %v2588
      %2607 = vst [vmem:[#allocation4 + $0x60] sm:$0x1] %v2589
      %2608 = vst [vmem:[#allocation4 + $0x78] sm:$0x1] %v2590
      %2609 = vst [vmem:[#allocation4 + $0x90] sm:$0x1] %v2591
      %2610 = vst [vmem:[#allocation4 + $0xa8] sm:$0x1] %v2592
      %2611 = vst [vmem:[#allocation4 + $0xc0] sm:$0x1] %v2593
      %2612 = vst [vmem:[#allocation4 + $0xd8] sm:$0x1] %v2594
      %2613 = vst [vmem:[#allocation4 + $0xf0] sm:$0x1] %v2595
      %2614 = vst [vmem:[#allocation4 + $0x108] sm:$0x1] %v2596
      %2615 = vst [vmem:[#allocation4 + $0x120] sm:$0x1] %v2597
      %2616 = vst [vmem:[#allocation4 + $0x138] sm:$0x1] %v2598
      %2617 = vst [vmem:[#allocation4 + $0x150] sm:$0x1] %v2599
      %2618 = vst [vmem:[#allocation4 + $0x168] sm:$0x1] %v2600
      %2619 = vst [vmem:[#allocation4 + $0x180] sm:$0x1] %v2601
      %2620 = vst [vmem:[#allocation4 + $0x198] sm:$0x1] %v2602
      %v2621 = vld [vmem:[#allocation4 + $0xf] sm:$0x1]
      %v2622 = vld [vmem:[#allocation4 + $0x27] sm:$0x1]
      %v2623 = vld [vmem:[#allocation4 + $0x3f] sm:$0x1]
      %v2624 = vld [vmem:[#allocation4 + $0x57] sm:$0x1]
      %v2625 = vld [vmem:[#allocation4 + $0x6f] sm:$0x1]
      %v2626 = vld [vmem:[#allocation4 + $0x87] sm:$0x1]
      %v2627 = vld [vmem:[#allocation4 + $0x9f] sm:$0x1]
      %v2628 = vld [vmem:[#allocation4 + $0xb7] sm:$0x1]
      %v2629 = vld [vmem:[#allocation4 + $0xcf] sm:$0x1]
      %v2630 = vld [vmem:[#allocation4 + $0xe7] sm:$0x1]
      %v2631 = vld [vmem:[#allocation4 + $0xff] sm:$0x1]
      %v2632 = vld [vmem:[#allocation4 + $0x117] sm:$0x1]
      %v2633 = vld [vmem:[#allocation4 + $0x12f] sm:$0x1]
      %v2634 = vld [vmem:[#allocation4 + $0x147] sm:$0x1]
      %v2635 = vld [vmem:[#allocation4 + $0x15f] sm:$0x1]
      %v2636 = vld [vmem:[#allocation4 + $0x177] sm:$0x1]
      %v2637 = vld [vmem:[#allocation4 + $0x18f] sm:$0x1]
      %v2638 = vld [vmem:[#allocation4 + $0x1a7] sm:$0x1]
      %2639 = vst [vmem:[#allocation4 + $0x11] sm:$0x1] %v2621
      %2640 = vst [vmem:[#allocation4 + $0x29] sm:$0x1] %v2622
      %2641 = vst [vmem:[#allocation4 + $0x41] sm:$0x1] %v2623
      %2642 = vst [vmem:[#allocation4 + $0x59] sm:$0x1] %v2624
      %2643 = vst [vmem:[#allocation4 + $0x71] sm:$0x1] %v2625
      %2644 = vst [vmem:[#allocation4 + $0x89] sm:$0x1] %v2626
      %2645 = vst [vmem:[#allocation4 + $0xa1] sm:$0x1] %v2627
      %2646 = vst [vmem:[#allocation4 + $0xb9] sm:$0x1] %v2628
      %2647 = vst [vmem:[#allocation4 + $0xd1] sm:$0x1] %v2629
      %2648 = vst [vmem:[#allocation4 + $0xe9] sm:$0x1] %v2630
      %2649 = vst [vmem:[#allocation4 + $0x101] sm:$0x1] %v2631
      %2650 = vst [vmem:[#allocation4 + $0x119] sm:$0x1] %v2632
      %2651 = vst [vmem:[#allocation4 + $0x131] sm:$0x1] %v2633
      %2652 = vst [vmem:[#allocation4 + $0x149] sm:$0x1] %v2634
      %2653 = vst [vmem:[#allocation4 + $0x161] sm:$0x1] %v2635
      %2654 = vst [vmem:[#allocation4 + $0x179] sm:$0x1] %v2636
      %2655 = vst [vmem:[#allocation4 + $0x191] sm:$0x1] %v2637
      %2656 = vst [vmem:[#allocation4 + $0x1a9] sm:$0x1] %v2638
      %v2657 = vld [vmem:[#allocation4] sm:$0xff]
      %v2658 = vld [vmem:[#allocation4 + $0x8] sm:$0xff]
      %v2659 = vld [vmem:[#allocation4 + $0x18] sm:$0xff]
      %v2660 = vld [vmem:[#allocation4 + $0x20] sm:$0xff]
      %v2661 = vld [vmem:[#allocation4 + $0x30] sm:$0xff]
      %v2662 = vld [vmem:[#allocation4 + $0x38] sm:$0xff]
      %v2663 = vld [vmem:[#allocation4 + $0x48] sm:$0xff]
      %v2664 = vld [vmem:[#allocation4 + $0x50] sm:$0xff]
      %v2665 = vld [vmem:[#allocation4 + $0x60] sm:$0xff]
      %v2666 = vld [vmem:[#allocation4 + $0x68] sm:$0xff]
      %v2667 = vld [vmem:[#allocation4 + $0x78] sm:$0xff]
      %v2668 = vld [vmem:[#allocation4 + $0x80] sm:$0xff]
      %v2669 = vld [vmem:[#allocation4 + $0x90] sm:$0xff]
      %v2670 = vld [vmem:[#allocation4 + $0x98] sm:$0xff]
      %v2671 = vld [vmem:[#allocation4 + $0xa8] sm:$0xff]
      %v2672 = vld [vmem:[#allocation4 + $0xb0] sm:$0xff]
      %v2673 = vld [vmem:[#allocation4 + $0xc0] sm:$0xff]
      %v2674 = vld [vmem:[#allocation4 + $0xc8] sm:$0xff]
      %v2675 = vld [vmem:[#allocation4 + $0xd8] sm:$0xff]
      %v2676 = vld [vmem:[#allocation4 + $0xe0] sm:$0xff]
      %v2677 = vld [vmem:[#allocation4 + $0xf0] sm:$0xff]
      %v2678 = vld [vmem:[#allocation4 + $0xf8] sm:$0xff]
      %v2679 = vld [vmem:[#allocation4 + $0x108] sm:$0xff]
      %v2680 = vld [vmem:[#allocation4 + $0x110] sm:$0xff]
      %v2681 = vld [vmem:[#allocation4 + $0x120] sm:$0xff]
      %v2682 = vld [vmem:[#allocation4 + $0x128] sm:$0xff]
      %v2683 = vld [vmem:[#allocation4 + $0x138] sm:$0xff]
      %v2684 = vld [vmem:[#allocation4 + $0x140] sm:$0xff]
      %v2685 = vld [vmem:[#allocation4 + $0x150] sm:$0xff]
      %v2686 = vld [vmem:[#allocation4 + $0x158] sm:$0xff]
      %v2687 = vld [vmem:[#allocation4 + $0x168] sm:$0xff]
      %v2688 = vld [vmem:[#allocation4 + $0x170] sm:$0xff]
      %v2689 = vld [vmem:[#allocation4 + $0x1] sm:$0xff]
      %v2690 = vld [vmem:[#allocation4 + $0x9] sm:$0xff]
      %v2691 = vld [vmem:[#allocation4 + $0x19] sm:$0xff]
      %v2692 = vld [vmem:[#allocation4 + $0x21] sm:$0xff]
      %v2693 = vld [vmem:[#allocation4 + $0x31] sm:$0xff]
      %v2694 = vld [vmem:[#allocation4 + $0x39] sm:$0xff]
      %v2695 = vld [vmem:[#allocation4 + $0x49] sm:$0xff]
      %v2696 = vld [vmem:[#allocation4 + $0x51] sm:$0xff]
      %v2697 = vld [vmem:[#allocation4 + $0x61] sm:$0xff]
      %v2698 = vld [vmem:[#allocation4 + $0x69] sm:$0xff]
      %v2699 = vld [vmem:[#allocation4 + $0x79] sm:$0xff]
      %v2700 = vld [vmem:[#allocation4 + $0x81] sm:$0xff]
      %v2701 = vld [vmem:[#allocation4 + $0x91] sm:$0xff]
      %v2702 = vld [vmem:[#allocation4 + $0x99] sm:$0xff]
      %v2703 = vld [vmem:[#allocation4 + $0xa9] sm:$0xff]
      %v2704 = vld [vmem:[#allocation4 + $0xb1] sm:$0xff]
      %v2705 = vld [vmem:[#allocation4 + $0xc1] sm:$0xff]
      %v2706 = vld [vmem:[#allocation4 + $0xc9] sm:$0xff]
      %v2707 = vld [vmem:[#allocation4 + $0xd9] sm:$0xff]
      %v2708 = vld [vmem:[#allocation4 + $0xe1] sm:$0xff]
      %v2709 = vld [vmem:[#allocation4 + $0xf1] sm:$0xff]
      %v2710 = vld [vmem:[#allocation4 + $0xf9] sm:$0xff]
      %v2711 = vld [vmem:[#allocation4 + $0x109] sm:$0xff]
      %v2712 = vld [vmem:[#allocation4 + $0x111] sm:$0xff]
      %v2713 = vld [vmem:[#allocation4 + $0x121] sm:$0xff]
      %v2714 = vld [vmem:[#allocation4 + $0x129] sm:$0xff]
      %v2715 = vld [vmem:[#allocation4 + $0x139] sm:$0xff]
      %v2716 = vld [vmem:[#allocation4 + $0x141] sm:$0xff]
      %v2717 = vld [vmem:[#allocation4 + $0x151] sm:$0xff]
      %v2718 = vld [vmem:[#allocation4 + $0x159] sm:$0xff]
      %v2719 = vld [vmem:[#allocation4 + $0x169] sm:$0xff]
      %v2720 = vld [vmem:[#allocation4 + $0x171] sm:$0xff]
      %v2721 = vpack.c.bf16 %v2658, %v2657
      %v2722 = vpack.c.bf16 %v2690, %v2689
      %v2723 = vpack.c.bf16 %v2660, %v2659
      %v2724 = vpack.c.bf16 %v2692, %v2691
      %v2725 = vpack.c.bf16 %v2662, %v2661
      %v2726 = vpack.c.bf16 %v2694, %v2693
      %v2727 = vpack.c.bf16 %v2664, %v2663
      %v2728 = vpack.c.bf16 %v2696, %v2695
      %v2729 = vpack.c.bf16 %v2666, %v2665
      %v2730 = vpack.c.bf16 %v2698, %v2697
      %v2731 = vpack.c.bf16 %v2668, %v2667
      %v2732 = vpack.c.bf16 %v2700, %v2699
      %v2733 = vpack.c.bf16 %v2670, %v2669
      %v2734 = vpack.c.bf16 %v2702, %v2701
      %v2735 = vpack.c.bf16 %v2672, %v2671
      %v2736 = vpack.c.bf16 %v2704, %v2703
      %v2737 = vpack.c.bf16 %v2674, %v2673
      %v2738 = vpack.c.bf16 %v2706, %v2705
      %v2739 = vpack.c.bf16 %v2676, %v2675
      %v2740 = vpack.c.bf16 %v2708, %v2707
      %v2741 = vpack.c.bf16 %v2678, %v2677
      %v2742 = vpack.c.bf16 %v2710, %v2709
      %v2743 = vpack.c.bf16 %v2680, %v2679
      %v2744 = vpack.c.bf16 %v2712, %v2711
      %v2745 = vpack.c.bf16 %v2682, %v2681
      %v2746 = vpack.c.bf16 %v2714, %v2713
      %v2747 = vpack.c.bf16 %v2684, %v2683
      %v2748 = vpack.c.bf16 %v2716, %v2715
      %v2749 = vpack.c.bf16 %v2686, %v2685
      %v2750 = vpack.c.bf16 %v2718, %v2717
      %v2751 = vpack.c.bf16 %v2688, %v2687
      %v2752 = vpack.c.bf16 %v2720, %v2719
      %v2753 = vld [vmem:[%s3] sm:$0xf]
      %v2754 = vld [vmem:[%s3 + $0x4] sm:$0xf]
      %v2755 = vld [vmem:[%s3 + $0x8] sm:$0xf]
      %v2756 = vld [vmem:[%s3 + $0xc] sm:$0xf]
      %v2757 = vld [vmem:[%s3 + $0x10] sm:$0xf]
      %v2758 = vld [vmem:[%s3 + $0x14] sm:$0xf]
      %v2759 = vld [vmem:[%s3 + $0x18] sm:$0xf]
      %v2760 = vld [vmem:[%s3 + $0x1c] sm:$0xf]
      %v2761 = vld [vmem:[%s3 + $0x20] sm:$0xf]
      %v2762 = vld [vmem:[%s3 + $0x24] sm:$0xf]
      %v2763 = vld [vmem:[%s3 + $0x28] sm:$0xf]
      %v2764 = vld [vmem:[%s3 + $0x2c] sm:$0xf]
      %v2765 = vld [vmem:[%s3 + $0x30] sm:$0xf]
      %v2766 = vld [vmem:[%s3 + $0x34] sm:$0xf]
      %v2767 = vld [vmem:[%s3 + $0x38] sm:$0xf]
      %v2768 = vld [vmem:[%s3 + $0x3c] sm:$0xf]
      %v2769 = vld [vmem:[%s3 + $0x40] sm:$0xf]
      %v2770 = vld [vmem:[%s3 + $0x44] sm:$0xf]
      %v2771 = vld [vmem:[%s3 + $0x48] sm:$0xf]
      %v2772 = vld [vmem:[%s3 + $0x4c] sm:$0xf]
      %v2773 = vld [vmem:[%s3 + $0x50] sm:$0xf]
      %v2774 = vld [vmem:[%s3 + $0x54] sm:$0xf]
      %v2775 = vld [vmem:[%s3 + $0x58] sm:$0xf]
      %v2776 = vld [vmem:[%s3 + $0x5c] sm:$0xf]
      %v2777 = vld [vmem:[%s3 + $0x60] sm:$0xf]
      %v2778 = vld [vmem:[%s3 + $0x64] sm:$0xf]
      %v2779 = vld [vmem:[%s3 + $0x68] sm:$0xf]
      %v2780 = vld [vmem:[%s3 + $0x6c] sm:$0xf]
      %v2781 = vld [vmem:[%s3 + $0x70] sm:$0xf]
      %v2782 = vld [vmem:[%s3 + $0x74] sm:$0xf]
      %v2783 = vld [vmem:[%s3 + $0x78] sm:$0xf]
      %v2784 = vld [vmem:[%s3 + $0x7c] sm:$0xf]
      %v2817 = vunpack.c.l.b16 %v2753
      %v2818 = vunpack.c.l.b16 %v2754
      %v2819 = vunpack.c.l.b16 %v2755
      %v2820 = vunpack.c.l.b16 %v2756
      %v2821 = vunpack.c.l.b16 %v2757
      %v2822 = vunpack.c.l.b16 %v2758
      %v2823 = vunpack.c.l.b16 %v2759
      %v2824 = vunpack.c.l.b16 %v2760
      %v2825 = vunpack.c.l.b16 %v2761
      %v2826 = vunpack.c.l.b16 %v2762
      %v2827 = vunpack.c.l.b16 %v2763
      %v2828 = vunpack.c.l.b16 %v2764
      %v2829 = vunpack.c.l.b16 %v2765
      %v2830 = vunpack.c.l.b16 %v2766
      %v2831 = vunpack.c.l.b16 %v2767
      %v2832 = vunpack.c.l.b16 %v2768
      %v2833 = vunpack.c.l.b16 %v2769
      %v2834 = vunpack.c.l.b16 %v2770
      %v2835 = vunpack.c.l.b16 %v2771
      %v2836 = vunpack.c.l.b16 %v2772
      %v2837 = vunpack.c.l.b16 %v2773
      %v2838 = vunpack.c.l.b16 %v2774
      %v2839 = vunpack.c.l.b16 %v2775
      %v2840 = vunpack.c.l.b16 %v2776
      %v2841 = vunpack.c.l.b16 %v2777
      %v2842 = vunpack.c.l.b16 %v2778
      %v2843 = vunpack.c.l.b16 %v2779
      %v2844 = vunpack.c.l.b16 %v2780
      %v2845 = vunpack.c.l.b16 %v2781
      %v2846 = vunpack.c.l.b16 %v2782
      %v2847 = vunpack.c.l.b16 %v2783
      %v2848 = vunpack.c.l.b16 %v2784
      %v2849 = vpack.c.b16 %v2818, %v2817
      %v2850 = vpack.c.b16 %v2820, %v2819
      %v2851 = vpack.c.b16 %v2822, %v2821
      %v2852 = vpack.c.b16 %v2824, %v2823
      %v2853 = vpack.c.b16 %v2826, %v2825
      %v2854 = vpack.c.b16 %v2828, %v2827
      %v2855 = vpack.c.b16 %v2830, %v2829
      %v2856 = vpack.c.b16 %v2832, %v2831
      %v2857 = vpack.c.b16 %v2834, %v2833
      %v2858 = vpack.c.b16 %v2836, %v2835
      %v2859 = vpack.c.b16 %v2838, %v2837
      %v2860 = vpack.c.b16 %v2840, %v2839
      %v2861 = vpack.c.b16 %v2842, %v2841
      %v2862 = vpack.c.b16 %v2844, %v2843
      %v2863 = vpack.c.b16 %v2846, %v2845
      %v2864 = vpack.c.b16 %v2848, %v2847
      %2881 = vmatprep.subr.bf16.mxu0 0
      %2882 = vmatpush1.bf16.msra.mxu0 %v2849
      %2883 = vmatprep.subr.bf16.mxu0 0
      %2884 = vmatpush1.bf16.msra.mxu0 %v2850
      %2885 = vmatprep.subr.bf16.mxu0 0
      %2886 = vmatpush1.bf16.msra.mxu0 %v2851
      %2887 = vmatprep.subr.bf16.mxu0 0
      %2888 = vmatpush1.bf16.msra.mxu0 %v2852
      %2889 = vmatprep.subr.bf16.mxu0 0
      %2890 = vmatpush1.bf16.msra.mxu0 %v2853
      %2891 = vmatprep.subr.bf16.mxu0 0
      %2892 = vmatpush1.bf16.msra.mxu0 %v2854
      %2893 = vmatprep.subr.bf16.mxu0 0
      %2894 = vmatpush1.bf16.msra.mxu0 %v2855
      %2895 = vmatprep.subr.bf16.mxu0 0
      %2896 = vmatpush1.bf16.msra.mxu0 %v2856
      %2897 = vmatprep.subr.bf16.mxu0 0
      %2898 = vmatpush1.bf16.msra.mxu0 %v2857
      %2899 = vmatprep.subr.bf16.mxu0 0
      %2900 = vmatpush1.bf16.msra.mxu0 %v2858
      %2901 = vmatprep.subr.bf16.mxu0 0
      %2902 = vmatpush1.bf16.msra.mxu0 %v2859
      %2903 = vmatprep.subr.bf16.mxu0 0
      %2904 = vmatpush1.bf16.msra.mxu0 %v2860
      %2905 = vmatprep.subr.bf16.mxu0 0
      %2906 = vmatpush1.bf16.msra.mxu0 %v2861
      %2907 = vmatprep.subr.bf16.mxu0 0
      %2908 = vmatpush1.bf16.msra.mxu0 %v2862
      %2909 = vmatprep.subr.bf16.mxu0 0
      %2910 = vmatpush1.bf16.msra.mxu0 %v2863
      %2911 = vmatprep.subr.bf16.mxu0 0
      %2912 = vmatpush1.bf16.msra.mxu0 %v2864
      %2913 = vmatprep.mubr.bf16.mxu0 %v2722
      %2914 = vmatmul.mubr.bf16.gmra.mrb[0].mxu0 %v2721
      %v2915 = vpop.f32.mrb[0].mxu0
      %v2916 = vadd.f32 0.0, %v2915
      %v2917 = vpop.f32.mrb[0].mxu0
      %v2918 = vpop.f32.mrb[0].mxu0
      %v2919 = vadd.f32 0.0, %v2918
      %v2920 = vpop.f32.mrb[0].mxu0
      %2921 = vmatprep.mubr.bf16.mxu0 %v2724
      %2922 = vmatmul.mubr.bf16.gmra.mrb[0].mxu0 %v2723
      %v2923 = vpop.f32.mrb[0].mxu0
      %v2924 = vadd.f32 0.0, %v2923
      %v2925 = vpop.f32.mrb[0].mxu0
      %v2926 = vpop.f32.mrb[0].mxu0
      %v2927 = vadd.f32 0.0, %v2926
      %v2928 = vpop.f32.mrb[0].mxu0
      %2929 = vmatprep.mubr.bf16.mxu0 %v2726
      %2930 = vmatmul.mubr.bf16.gmra.mrb[0].mxu0 %v2725
      %v2931 = vpop.f32.mrb[0].mxu0
      %v2932 = vadd.f32 0.0, %v2931
      %v2933 = vpop.f32.mrb[0].mxu0
      %v2934 = vpop.f32.mrb[0].mxu0
      %v2935 = vadd.f32 0.0, %v2934
      %v2936 = vpop.f32.mrb[0].mxu0
      %2937 = vmatprep.mubr.bf16.mxu0 %v2728
      %2938 = vmatmul.mubr.bf16.gmra.mrb[0].mxu0 %v2727
      %v2939 = vpop.f32.mrb[0].mxu0
      %v2940 = vadd.f32 0.0, %v2939
      %v2941 = vpop.f32.mrb[0].mxu0
      %v2942 = vpop.f32.mrb[0].mxu0
      %v2943 = vadd.f32 0.0, %v2942
      %v2944 = vpop.f32.mrb[0].mxu0
      %2945 = vmatprep.mubr.bf16.mxu0 %v2730
      %2946 = vmatmul.mubr.bf16.gmra.mrb[0].mxu0 %v2729
      %v2947 = vpop.f32.mrb[0].mxu0
      %v2948 = vadd.f32 0.0, %v2947
      %v2949 = vpop.f32.mrb[0].mxu0
      %v2950 = vpop.f32.mrb[0].mxu0
      %v2951 = vadd.f32 0.0, %v2950
      %v2952 = vpop.f32.mrb[0].mxu0
      %2953 = vmatprep.mubr.bf16.mxu0 %v2732
      %2954 = vmatmul.mubr.bf16.gmra.mrb[0].mxu0 %v2731
      %v2955 = vpop.f32.mrb[0].mxu0
      %v2956 = vadd.f32 0.0, %v2955
      %v2957 = vpop.f32.mrb[0].mxu0
      %v2958 = vpop.f32.mrb[0].mxu0
      %v2959 = vadd.f32 0.0, %v2958
      %v2960 = vpop.f32.mrb[0].mxu0
      %2961 = vmatprep.mubr.bf16.mxu0 %v2734
      %2962 = vmatmul.mubr.bf16.gmra.mrb[0].mxu0 %v2733
      %v2963 = vpop.f32.mrb[0].mxu0
      %v2964 = vadd.f32 0.0, %v2963
      %v2965 = vpop.f32.mrb[0].mxu0
      %v2966 = vpop.f32.mrb[0].mxu0
      %v2967 = vadd.f32 0.0, %v2966
      %v2968 = vpop.f32.mrb[0].mxu0
      %2969 = vmatprep.mubr.bf16.mxu0 %v2736
      %2970 = vmatmul.mubr.bf16.gmra.mrb[0].mxu0 %v2735
      %v2971 = vpop.f32.mrb[0].mxu0
      %v2972 = vadd.f32 0.0, %v2971
      %v2973 = vpop.f32.mrb[0].mxu0
      %v2974 = vpop.f32.mrb[0].mxu0
      %v2975 = vadd.f32 0.0, %v2974
      %v2976 = vpop.f32.mrb[0].mxu0
      %2977 = vmatprep.mubr.bf16.mxu0 %v2738
      %2978 = vmatmul.mubr.bf16.gmra.mrb[0].mxu0 %v2737
      %v2979 = vpop.f32.mrb[0].mxu0
      %v2980 = vadd.f32 0.0, %v2979
      %v2981 = vpop.f32.mrb[0].mxu0
      %v2982 = vpop.f32.mrb[0].mxu0
      %v2983 = vadd.f32 0.0, %v2982
      %v2984 = vpop.f32.mrb[0].mxu0
      %2985 = vmatprep.mubr.bf16.mxu0 %v2740
      %2986 = vmatmul.mubr.bf16.gmra.mrb[0].mxu0 %v2739
      %v2987 = vpop.f32.mrb[0].mxu0
      %v2988 = vadd.f32 0.0, %v2987
      %v2989 = vpop.f32.mrb[0].mxu0
      %v2990 = vpop.f32.mrb[0].mxu0
      %v2991 = vadd.f32 0.0, %v2990
      %v2992 = vpop.f32.mrb[0].mxu0
      %2993 = vmatprep.mubr.bf16.mxu0 %v2742
      %2994 = vmatmul.mubr.bf16.gmra.mrb[0].mxu0 %v2741
      %v2995 = vpop.f32.mrb[0].mxu0
      %v2996 = vadd.f32 0.0, %v2995
      %v2997 = vpop.f32.mrb[0].mxu0
      %v2998 = vpop.f32.mrb[0].mxu0
      %v2999 = vadd.f32 0.0, %v2998
      %v3000 = vpop.f32.mrb[0].mxu0
      %3001 = vmatprep.mubr.bf16.mxu0 %v2744
      %3002 = vmatmul.mubr.bf16.gmra.mrb[0].mxu0 %v2743
      %v3003 = vpop.f32.mrb[0].mxu0
      %v3004 = vadd.f32 0.0, %v3003
      %v3005 = vpop.f32.mrb[0].mxu0
      %v3006 = vpop.f32.mrb[0].mxu0
      %v3007 = vadd.f32 0.0, %v3006
      %v3008 = vpop.f32.mrb[0].mxu0
      %3009 = vmatprep.mubr.bf16.mxu0 %v2746
      %3010 = vmatmul.mubr.bf16.gmra.mrb[0].mxu0 %v2745
      %v3011 = vpop.f32.mrb[0].mxu0
      %v3012 = vadd.f32 0.0, %v3011
      %v3013 = vpop.f32.mrb[0].mxu0
      %v3014 = vpop.f32.mrb[0].mxu0
      %v3015 = vadd.f32 0.0, %v3014
      %v3016 = vpop.f32.mrb[0].mxu0
      %3017 = vmatprep.mubr.bf16.mxu0 %v2748
      %3018 = vmatmul.mubr.bf16.gmra.mrb[0].mxu0 %v2747
      %v3019 = vpop.f32.mrb[0].mxu0
      %v3020 = vadd.f32 0.0, %v3019
      %v3021 = vpop.f32.mrb[0].mxu0
      %v3022 = vpop.f32.mrb[0].mxu0
      %v3023 = vadd.f32 0.0, %v3022
      %v3024 = vpop.f32.mrb[0].mxu0
      %3025 = vmatprep.mubr.bf16.mxu0 %v2750
      %3026 = vmatmul.mubr.bf16.gmra.mrb[0].mxu0 %v2749
      %v3027 = vpop.f32.mrb[0].mxu0
      %v3028 = vadd.f32 0.0, %v3027
      %v3029 = vpop.f32.mrb[0].mxu0
      %v3030 = vpop.f32.mrb[0].mxu0
      %v3031 = vadd.f32 0.0, %v3030
      %v3032 = vpop.f32.mrb[0].mxu0
      %3033 = vmatprep.mubr.bf16.mxu0 %v2752
      %3034 = vmatmul.mubr.bf16.gmra.mrb[0].mxu0 %v2751
      %v3035 = vpop.f32.mrb[0].mxu0
      %v3036 = vadd.f32 0.0, %v3035
      %v3037 = vpop.f32.mrb[0].mxu0
      %v3038 = vpop.f32.mrb[0].mxu0
      %v3039 = vadd.f32 0.0, %v3038
      %v3040 = vpop.f32.mrb[0].mxu0
      %3041 = vdwg.mxu0
      %vm3042 = vcmask 523264
      %3043 = vst.msk [vmem:[#allocation6] sm:$0xff] %vm3042, %v2916
      %3044 = vst.msk [vmem:[#allocation6 + $0x8] sm:$0xff] %vm3042, %v2919
      %3045 = vst.msk [vmem:[#allocation6 + $0x10] sm:$0xff] %vm3042, %v2924
      %3046 = vst.msk [vmem:[#allocation6 + $0x18] sm:$0xff] %vm3042, %v2927
      %3047 = vst.msk [vmem:[#allocation6 + $0x20] sm:$0xff] %vm3042, %v2932
      %3048 = vst.msk [vmem:[#allocation6 + $0x28] sm:$0xff] %vm3042, %v2935
      %3049 = vst.msk [vmem:[#allocation6 + $0x30] sm:$0xff] %vm3042, %v2940
      %3050 = vst.msk [vmem:[#allocation6 + $0x38] sm:$0xff] %vm3042, %v2943
      %3051 = vst.msk [vmem:[#allocation6 + $0x40] sm:$0xff] %vm3042, %v2948
      %3052 = vst.msk [vmem:[#allocation6 + $0x48] sm:$0xff] %vm3042, %v2951
      %3053 = vst.msk [vmem:[#allocation6 + $0x50] sm:$0xff] %vm3042, %v2956
      %3054 = vst.msk [vmem:[#allocation6 + $0x58] sm:$0xff] %vm3042, %v2959
      %3055 = vst.msk [vmem:[#allocation6 + $0x60] sm:$0xff] %vm3042, %v2964
      %3056 = vst.msk [vmem:[#allocation6 + $0x68] sm:$0xff] %vm3042, %v2967
      %3057 = vst.msk [vmem:[#allocation6 + $0x70] sm:$0xff] %vm3042, %v2972
      %3058 = vst.msk [vmem:[#allocation6 + $0x78] sm:$0xff] %vm3042, %v2975
      %3059 = vst.msk [vmem:[#allocation6 + $0x80] sm:$0xff] %vm3042, %v2980
      %3060 = vst.msk [vmem:[#allocation6 + $0x88] sm:$0xff] %vm3042, %v2983
      %3061 = vst.msk [vmem:[#allocation6 + $0x90] sm:$0xff] %vm3042, %v2988
      %3062 = vst.msk [vmem:[#allocation6 + $0x98] sm:$0xff] %vm3042, %v2991
      %3063 = vst.msk [vmem:[#allocation6 + $0xa0] sm:$0xff] %vm3042, %v2996
      %3064 = vst.msk [vmem:[#allocation6 + $0xa8] sm:$0xff] %vm3042, %v2999
      %3065 = vst.msk [vmem:[#allocation6 + $0xb0] sm:$0xff] %vm3042, %v3004
      %3066 = vst.msk [vmem:[#allocation6 + $0xb8] sm:$0xff] %vm3042, %v3007
      %3067 = vst.msk [vmem:[#allocation6 + $0xc0] sm:$0xff] %vm3042, %v3012
      %3068 = vst.msk [vmem:[#allocation6 + $0xc8] sm:$0xff] %vm3042, %v3015
      %3069 = vst.msk [vmem:[#allocation6 + $0xd0] sm:$0xff] %vm3042, %v3020
      %3070 = vst.msk [vmem:[#allocation6 + $0xd8] sm:$0xff] %vm3042, %v3023
      %3071 = vst.msk [vmem:[#allocation6 + $0xe0] sm:$0xff] %vm3042, %v3028
      %3072 = vst.msk [vmem:[#allocation6 + $0xe8] sm:$0xff] %vm3042, %v3031
      %3073 = vst.msk [vmem:[#allocation6 + $0xf0] sm:$0xff] %vm3042, %v3036
      %3074 = vst.msk [vmem:[#allocation6 + $0xf8] sm:$0xff] %vm3042, %v3039
      %v3075 = vld [vmem:[#allocation4 + $0x2] sm:$0xff]
      %v3076 = vld [vmem:[#allocation4 + $0xa] sm:$0xff]
      %v3077 = vld [vmem:[#allocation4 + $0x1a] sm:$0xff]
      %v3078 = vld [vmem:[#allocation4 + $0x22] sm:$0xff]
      %v3079 = vld [vmem:[#allocation4 + $0x32] sm:$0xff]
      %v3080 = vld [vmem:[#allocation4 + $0x3a] sm:$0xff]
      %v3081 = vld [vmem:[#allocation4 + $0x4a] sm:$0xff]
      %v3082 = vld [vmem:[#allocation4 + $0x52] sm:$0xff]
      %v3083 = vld [vmem:[#allocation4 + $0x62] sm:$0xff]
      %v3084 = vld [vmem:[#allocation4 + $0x6a] sm:$0xff]
      %v3085 = vld [vmem:[#allocation4 + $0x7a] sm:$0xff]
      %v3086 = vld [vmem:[#allocation4 + $0x82] sm:$0xff]
      %v3087 = vld [vmem:[#allocation4 + $0x92] sm:$0xff]
      %v3088 = vld [vmem:[#allocation4 + $0x9a] sm:$0xff]
      %v3089 = vld [vmem:[#allocation4 + $0xaa] sm:$0xff]
      %v3090 = vld [vmem:[#allocation4 + $0xb2] sm:$0xff]
      %v3091 = vld [vmem:[#allocation4 + $0xc2] sm:$0xff]
      %v3092 = vld [vmem:[#allocation4 + $0xca] sm:$0xff]
      %v3093 = vld [vmem:[#allocation4 + $0xda] sm:$0xff]
      %v3094 = vld [vmem:[#allocation4 + $0xe2] sm:$0xff]
      %v3095 = vld [vmem:[#allocation4 + $0xf2] sm:$0xff]
      %v3096 = vld [vmem:[#allocation4 + $0xfa] sm:$0xff]
      %v3097 = vld [vmem:[#allocation4 + $0x10a] sm:$0xff]
      %v3098 = vld [vmem:[#allocation4 + $0x112] sm:$0xff]
      %v3099 = vld [vmem:[#allocation4 + $0x122] sm:$0xff]
      %v3100 = vld [vmem:[#allocation4 + $0x12a] sm:$0xff]
      %v3101 = vld [vmem:[#allocation4 + $0x13a] sm:$0xff]
      %v3102 = vld [vmem:[#allocation4 + $0x142] sm:$0xff]
      %v3103 = vld [vmem:[#allocation4 + $0x152] sm:$0xff]
      %v3104 = vld [vmem:[#allocation4 + $0x15a] sm:$0xff]
      %v3105 = vld [vmem:[#allocation4 + $0x16a] sm:$0xff]
      %v3106 = vld [vmem:[#allocation4 + $0x172] sm:$0xff]
      %v3107 = vld [vmem:[%s2541] sm:$0xff]
      %v3108 = vld [vmem:[%s2541 + $0x8] sm:$0xff]
      %v3109 = vld [vmem:[%s2541 + $0x18] sm:$0xff]
      %v3110 = vld [vmem:[%s2541 + $0x20] sm:$0xff]
      %v3111 = vld [vmem:[%s2541 + $0x30] sm:$0xff]
      %v3112 = vld [vmem:[%s2541 + $0x38] sm:$0xff]
      %v3113 = vld [vmem:[%s2541 + $0x48] sm:$0xff]
      %v3114 = vld [vmem:[%s2541 + $0x50] sm:$0xff]
      %v3115 = vld [vmem:[%s2541 + $0x60] sm:$0xff]
      %v3116 = vld [vmem:[%s2541 + $0x68] sm:$0xff]
      %v3117 = vld [vmem:[%s2541 + $0x78] sm:$0xff]
      %v3118 = vld [vmem:[%s2541 + $0x80] sm:$0xff]
      %v3119 = vld [vmem:[%s2541 + $0x90] sm:$0xff]
      %v3120 = vld [vmem:[%s2541 + $0x98] sm:$0xff]
      %v3121 = vld [vmem:[%s2541 + $0xa8] sm:$0xff]
      %v3122 = vld [vmem:[%s2541 + $0xb0] sm:$0xff]
      %v3123 = vld [vmem:[%s2541 + $0xc0] sm:$0xff]
      %v3124 = vld [vmem:[%s2541 + $0xc8] sm:$0xff]
      %v3125 = vld [vmem:[%s2541 + $0xd8] sm:$0xff]
      %v3126 = vld [vmem:[%s2541 + $0xe0] sm:$0xff]
      %v3127 = vld [vmem:[%s2541 + $0xf0] sm:$0xff]
      %v3128 = vld [vmem:[%s2541 + $0xf8] sm:$0xff]
      %v3129 = vld [vmem:[%s2541 + $0x108] sm:$0xff]
      %v3130 = vld [vmem:[%s2541 + $0x110] sm:$0xff]
      %v3131 = vld [vmem:[%s2541 + $0x120] sm:$0xff]
      %v3132 = vld [vmem:[%s2541 + $0x128] sm:$0xff]
      %v3133 = vld [vmem:[%s2541 + $0x138] sm:$0xff]
      %v3134 = vld [vmem:[%s2541 + $0x140] sm:$0xff]
      %v3135 = vld [vmem:[%s2541 + $0x150] sm:$0xff]
      %v3136 = vld [vmem:[%s2541 + $0x158] sm:$0xff]
      %v3137 = vld [vmem:[%s2541 + $0x168] sm:$0xff]
      %v3138 = vld [vmem:[%s2541 + $0x170] sm:$0xff]
      %v3139 = vpack.c.bf16 %v3076, %v3075
      %v3140 = vpack.c.bf16 %v3108, %v3107
      %v3141 = vpack.c.bf16 %v3078, %v3077
      %v3142 = vpack.c.bf16 %v3110, %v3109
      %v3143 = vpack.c.bf16 %v3080, %v3079
      %v3144 = vpack.c.bf16 %v3112, %v3111
      %v3145 = vpack.c.bf16 %v3082, %v3081
      %v3146 = vpack.c.bf16 %v3114, %v3113
      %v3147 = vpack.c.bf16 %v3084, %v3083
      %v3148 = vpack.c.bf16 %v3116, %v3115
      %v3149 = vpack.c.bf16 %v3086, %v3085
      %v3150 = vpack.c.bf16 %v3118, %v3117
      %v3151 = vpack.c.bf16 %v3088, %v3087
      %v3152 = vpack.c.bf16 %v3120, %v3119
      %v3153 = vpack.c.bf16 %v3090, %v3089
      %v3154 = vpack.c.bf16 %v3122, %v3121
      %v3155 = vpack.c.bf16 %v3092, %v3091
      %v3156 = vpack.c.bf16 %v3124, %v3123
      %v3157 = vpack.c.bf16 %v3094, %v3093
      %v3158 = vpack.c.bf16 %v3126, %v3125
      %v3159 = vpack.c.bf16 %v3096, %v3095
      %v3160 = vpack.c.bf16 %v3128, %v3127
      %v3161 = vpack.c.bf16 %v3098, %v3097
      %v3162 = vpack.c.bf16 %v3130, %v3129
      %v3163 = vpack.c.bf16 %v3100, %v3099
      %v3164 = vpack.c.bf16 %v3132, %v3131
      %v3165 = vpack.c.bf16 %v3102, %v3101
      %v3166 = vpack.c.bf16 %v3134, %v3133
      %v3167 = vpack.c.bf16 %v3104, %v3103
      %v3168 = vpack.c.bf16 %v3136, %v3135
      %v3169 = vpack.c.bf16 %v3106, %v3105
      %v3170 = vpack.c.bf16 %v3138, %v3137
      %v3171 = vld [vmem:[%s3 + $0x80] sm:$0xf]
      %v3172 = vld [vmem:[%s3 + $0x84] sm:$0xf]
      %v3173 = vld [vmem:[%s3 + $0x88] sm:$0xf]
      %v3174 = vld [vmem:[%s3 + $0x8c] sm:$0xf]
      %v3175 = vld [vmem:[%s3 + $0x90] sm:$0xf]
      %v3176 = vld [vmem:[%s3 + $0x94] sm:$0xf]
      %v3177 = vld [vmem:[%s3 + $0x98] sm:$0xf]
      %v3178 = vld [vmem:[%s3 + $0x9c] sm:$0xf]
      %v3179 = vld [vmem:[%s3 + $0xa0] sm:$0xf]
      %v3180 = vld [vmem:[%s3 + $0xa4] sm:$0xf]
      %v3181 = vld [vmem:[%s3 + $0xa8] sm:$0xf]
      %v3182 = vld [vmem:[%s3 + $0xac] sm:$0xf]
      %v3183 = vld [vmem:[%s3 + $0xb0] sm:$0xf]
      %v3184 = vld [vmem:[%s3 + $0xb4] sm:$0xf]
      %v3185 = vld [vmem:[%s3 + $0xb8] sm:$0xf]
      %v3186 = vld [vmem:[%s3 + $0xbc] sm:$0xf]
      %v3187 = vld [vmem:[%s3 + $0xc0] sm:$0xf]
      %v3188 = vld [vmem:[%s3 + $0xc4] sm:$0xf]
      %v3189 = vld [vmem:[%s3 + $0xc8] sm:$0xf]
      %v3190 = vld [vmem:[%s3 + $0xcc] sm:$0xf]
      %v3191 = vld [vmem:[%s3 + $0xd0] sm:$0xf]
      %v3192 = vld [vmem:[%s3 + $0xd4] sm:$0xf]
      %v3193 = vld [vmem:[%s3 + $0xd8] sm:$0xf]
      %v3194 = vld [vmem:[%s3 + $0xdc] sm:$0xf]
      %v3195 = vld [vmem:[%s3 + $0xe0] sm:$0xf]
      %v3196 = vld [vmem:[%s3 + $0xe4] sm:$0xf]
      %v3197 = vld [vmem:[%s3 + $0xe8] sm:$0xf]
      %v3198 = vld [vmem:[%s3 + $0xec] sm:$0xf]
      %v3199 = vld [vmem:[%s3 + $0xf0] sm:$0xf]
      %v3200 = vld [vmem:[%s3 + $0xf4] sm:$0xf]
      %v3201 = vld [vmem:[%s3 + $0xf8] sm:$0xf]
      %v3202 = vld [vmem:[%s3 + $0xfc] sm:$0xf]
      %v3235 = vunpack.c.l.b16 %v3171
      %v3236 = vunpack.c.l.b16 %v3172
      %v3237 = vunpack.c.l.b16 %v3173
      %v3238 = vunpack.c.l.b16 %v3174
      %v3239 = vunpack.c.l.b16 %v3175
      %v3240 = vunpack.c.l.b16 %v3176
      %v3241 = vunpack.c.l.b16 %v3177
      %v3242 = vunpack.c.l.b16 %v3178
      %v3243 = vunpack.c.l.b16 %v3179
      %v3244 = vunpack.c.l.b16 %v3180
      %v3245 = vunpack.c.l.b16 %v3181
      %v3246 = vunpack.c.l.b16 %v3182
      %v3247 = vunpack.c.l.b16 %v3183
      %v3248 = vunpack.c.l.b16 %v3184
      %v3249 = vunpack.c.l.b16 %v3185
      %v3250 = vunpack.c.l.b16 %v3186
      %v3251 = vunpack.c.l.b16 %v3187
      %v3252 = vunpack.c.l.b16 %v3188
      %v3253 = vunpack.c.l.b16 %v3189
      %v3254 = vunpack.c.l.b16 %v3190
      %v3255 = vunpack.c.l.b16 %v3191
      %v3256 = vunpack.c.l.b16 %v3192
      %v3257 = vunpack.c.l.b16 %v3193
      %v3258 = vunpack.c.l.b16 %v3194
      %v3259 = vunpack.c.l.b16 %v3195
      %v3260 = vunpack.c.l.b16 %v3196
      %v3261 = vunpack.c.l.b16 %v3197
      %v3262 = vunpack.c.l.b16 %v3198
      %v3263 = vunpack.c.l.b16 %v3199
      %v3264 = vunpack.c.l.b16 %v3200
      %v3265 = vunpack.c.l.b16 %v3201
      %v3266 = vunpack.c.l.b16 %v3202
      %v3267 = vpack.c.b16 %v3236, %v3235
      %v3268 = vpack.c.b16 %v3238, %v3237
      %v3269 = vpack.c.b16 %v3240, %v3239
      %v3270 = vpack.c.b16 %v3242, %v3241
      %v3271 = vpack.c.b16 %v3244, %v3243
      %v3272 = vpack.c.b16 %v3246, %v3245
      %v3273 = vpack.c.b16 %v3248, %v3247
      %v3274 = vpack.c.b16 %v3250, %v3249
      %v3275 = vpack.c.b16 %v3252, %v3251
      %v3276 = vpack.c.b16 %v3254, %v3253
      %v3277 = vpack.c.b16 %v3256, %v3255
      %v3278 = vpack.c.b16 %v3258, %v3257
      %v3279 = vpack.c.b16 %v3260, %v3259
      %v3280 = vpack.c.b16 %v3262, %v3261
      %v3281 = vpack.c.b16 %v3264, %v3263
      %v3282 = vpack.c.b16 %v3266, %v3265
      %3299 = vmatprep.subr.bf16.mxu0 0
      %3300 = vmatpush1.bf16.msra.mxu0 %v3267
      %3301 = vmatprep.subr.bf16.mxu0 0
      %3302 = vmatpush1.bf16.msra.mxu0 %v3268
      %3303 = vmatprep.subr.bf16.mxu0 0
      %3304 = vmatpush1.bf16.msra.mxu0 %v3269
      %3305 = vmatprep.subr.bf16.mxu0 0
      %3306 = vmatpush1.bf16.msra.mxu0 %v3270
      %3307 = vmatprep.subr.bf16.mxu0 0
      %3308 = vmatpush1.bf16.msra.mxu0 %v3271
      %3309 = vmatprep.subr.bf16.mxu0 0
      %3310 = vmatpush1.bf16.msra.mxu0 %v3272
      %3311 = vmatprep.subr.bf16.mxu0 0
      %3312 = vmatpush1.bf16.msra.mxu0 %v3273
      %3313 = vmatprep.subr.bf16.mxu0 0
      %3314 = vmatpush1.bf16.msra.mxu0 %v3274
      %3315 = vmatprep.subr.bf16.mxu0 0
      %3316 = vmatpush1.bf16.msra.mxu0 %v3275
      %3317 = vmatprep.subr.bf16.mxu0 0
      %3318 = vmatpush1.bf16.msra.mxu0 %v3276
      %3319 = vmatprep.subr.bf16.mxu0 0
      %3320 = vmatpush1.bf16.msra.mxu0 %v3277
      %3321 = vmatprep.subr.bf16.mxu0 0
      %3322 = vmatpush1.bf16.msra.mxu0 %v3278
      %3323 = vmatprep.subr.bf16.mxu0 0
      %3324 = vmatpush1.bf16.msra.mxu0 %v3279
      %3325 = vmatprep.subr.bf16.mxu0 0
      %3326 = vmatpush1.bf16.msra.mxu0 %v3280
      %3327 = vmatprep.subr.bf16.mxu0 0
      %3328 = vmatpush1.bf16.msra.mxu0 %v3281
      %3329 = vmatprep.subr.bf16.mxu0 0
      %3330 = vmatpush1.bf16.msra.mxu0 %v3282
      %3331 = vmatprep.mubr.bf16.mxu0 %v3140
      %3332 = vmatmul.mubr.bf16.gmra.mrb[0].mxu0 %v3139
      %v3333 = vpop.f32.mrb[0].mxu0
      %v3334 = vadd.f32 0.0, %v3333
      %v3335 = vpop.f32.mrb[0].mxu0
      %v3336 = vpop.f32.mrb[0].mxu0
      %v3337 = vadd.f32 0.0, %v3336
      %v3338 = vpop.f32.mrb[0].mxu0
      %3339 = vmatprep.mubr.bf16.mxu0 %v3142
      %3340 = vmatmul.mubr.bf16.gmra.mrb[0].mxu0 %v3141
      %v3341 = vpop.f32.mrb[0].mxu0
      %v3342 = vadd.f32 0.0, %v3341
      %v3343 = vpop.f32.mrb[0].mxu0
      %v3344 = vpop.f32.mrb[0].mxu0
      %v3345 = vadd.f32 0.0, %v3344
      %v3346 = vpop.f32.mrb[0].mxu0
      %3347 = vmatprep.mubr.bf16.mxu0 %v3144
      %3348 = vmatmul.mubr.bf16.gmra.mrb[0].mxu0 %v3143
      %v3349 = vpop.f32.mrb[0].mxu0
      %v3350 = vadd.f32 0.0, %v3349
      %v3351 = vpop.f32.mrb[0].mxu0
      %v3352 = vpop.f32.mrb[0].mxu0
      %v3353 = vadd.f32 0.0, %v3352
      %v3354 = vpop.f32.mrb[0].mxu0
      %3355 = vmatprep.mubr.bf16.mxu0 %v3146
      %3356 = vmatmul.mubr.bf16.gmra.mrb[0].mxu0 %v3145
      %v3357 = vpop.f32.mrb[0].mxu0
      %v3358 = vadd.f32 0.0, %v3357
      %v3359 = vpop.f32.mrb[0].mxu0
      %v3360 = vpop.f32.mrb[0].mxu0
      %v3361 = vadd.f32 0.0, %v3360
      %v3362 = vpop.f32.mrb[0].mxu0
      %3363 = vmatprep.mubr.bf16.mxu0 %v3148
      %3364 = vmatmul.mubr.bf16.gmra.mrb[0].mxu0 %v3147
      %v3365 = vpop.f32.mrb[0].mxu0
      %v3366 = vadd.f32 0.0, %v3365
      %v3367 = vpop.f32.mrb[0].mxu0
      %v3368 = vpop.f32.mrb[0].mxu0
      %v3369 = vadd.f32 0.0, %v3368
      %v3370 = vpop.f32.mrb[0].mxu0
      %3371 = vmatprep.mubr.bf16.mxu0 %v3150
      %3372 = vmatmul.mubr.bf16.gmra.mrb[0].mxu0 %v3149
      %v3373 = vpop.f32.mrb[0].mxu0
      %v3374 = vadd.f32 0.0, %v3373
      %v3375 = vpop.f32.mrb[0].mxu0
      %v3376 = vpop.f32.mrb[0].mxu0
      %v3377 = vadd.f32 0.0, %v3376
      %v3378 = vpop.f32.mrb[0].mxu0
      %3379 = vmatprep.mubr.bf16.mxu0 %v3152
      %3380 = vmatmul.mubr.bf16.gmra.mrb[0].mxu0 %v3151
      %v3381 = vpop.f32.mrb[0].mxu0
      %v3382 = vadd.f32 0.0, %v3381
      %v3383 = vpop.f32.mrb[0].mxu0
      %v3384 = vpop.f32.mrb[0].mxu0
      %v3385 = vadd.f32 0.0, %v3384
      %v3386 = vpop.f32.mrb[0].mxu0
      %3387 = vmatprep.mubr.bf16.mxu0 %v3154
      %3388 = vmatmul.mubr.bf16.gmra.mrb[0].mxu0 %v3153
      %v3389 = vpop.f32.mrb[0].mxu0
      %v3390 = vadd.f32 0.0, %v3389
      %v3391 = vpop.f32.mrb[0].mxu0
      %v3392 = vpop.f32.mrb[0].mxu0
      %v3393 = vadd.f32 0.0, %v3392
      %v3394 = vpop.f32.mrb[0].mxu0
      %3395 = vmatprep.mubr.bf16.mxu0 %v3156
      %3396 = vmatmul.mubr.bf16.gmra.mrb[0].mxu0 %v3155
      %v3397 = vpop.f32.mrb[0].mxu0
      %v3398 = vadd.f32 0.0, %v3397
      %v3399 = vpop.f32.mrb[0].mxu0
      %v3400 = vpop.f32.mrb[0].mxu0
      %v3401 = vadd.f32 0.0, %v3400
      %v3402 = vpop.f32.mrb[0].mxu0
      %3403 = vmatprep.mubr.bf16.mxu0 %v3158
      %3404 = vmatmul.mubr.bf16.gmra.mrb[0].mxu0 %v3157
      %v3405 = vpop.f32.mrb[0].mxu0
      %v3406 = vadd.f32 0.0, %v3405
      %v3407 = vpop.f32.mrb[0].mxu0
      %v3408 = vpop.f32.mrb[0].mxu0
      %v3409 = vadd.f32 0.0, %v3408
      %v3410 = vpop.f32.mrb[0].mxu0
      %3411 = vmatprep.mubr.bf16.mxu0 %v3160
      %3412 = vmatmul.mubr.bf16.gmra.mrb[0].mxu0 %v3159
      %v3413 = vpop.f32.mrb[0].mxu0
      %v3414 = vadd.f32 0.0, %v3413
      %v3415 = vpop.f32.mrb[0].mxu0
      %v3416 = vpop.f32.mrb[0].mxu0
      %v3417 = vadd.f32 0.0, %v3416
      %v3418 = vpop.f32.mrb[0].mxu0
      %3419 = vmatprep.mubr.bf16.mxu0 %v3162
      %3420 = vmatmul.mubr.bf16.gmra.mrb[0].mxu0 %v3161
      %v3421 = vpop.f32.mrb[0].mxu0
      %v3422 = vadd.f32 0.0, %v3421
      %v3423 = vpop.f32.mrb[0].mxu0
      %v3424 = vpop.f32.mrb[0].mxu0
      %v3425 = vadd.f32 0.0, %v3424
      %v3426 = vpop.f32.mrb[0].mxu0
      %3427 = vmatprep.mubr.bf16.mxu0 %v3164
      %3428 = vmatmul.mubr.bf16.gmra.mrb[0].mxu0 %v3163
      %v3429 = vpop.f32.mrb[0].mxu0
      %v3430 = vadd.f32 0.0, %v3429
      %v3431 = vpop.f32.mrb[0].mxu0
      %v3432 = vpop.f32.mrb[0].mxu0
      %v3433 = vadd.f32 0.0, %v3432
      %v3434 = vpop.f32.mrb[0].mxu0
      %3435 = vmatprep.mubr.bf16.mxu0 %v3166
      %3436 = vmatmul.mubr.bf16.gmra.mrb[0].mxu0 %v3165
      %v3437 = vpop.f32.mrb[0].mxu0
      %v3438 = vadd.f32 0.0, %v3437
      %v3439 = vpop.f32.mrb[0].mxu0
      %v3440 = vpop.f32.mrb[0].mxu0
      %v3441 = vadd.f32 0.0, %v3440
      %v3442 = vpop.f32.mrb[0].mxu0
      %3443 = vmatprep.mubr.bf16.mxu0 %v3168
      %3444 = vmatmul.mubr.bf16.gmra.mrb[0].mxu0 %v3167
      %v3445 = vpop.f32.mrb[0].mxu0
      %v3446 = vadd.f32 0.0, %v3445
      %v3447 = vpop.f32.mrb[0].mxu0
      %v3448 = vpop.f32.mrb[0].mxu0
      %v3449 = vadd.f32 0.0, %v3448
      %v3450 = vpop.f32.mrb[0].mxu0
      %3451 = vmatprep.mubr.bf16.mxu0 %v3170
      %3452 = vmatmul.mubr.bf16.gmra.mrb[0].mxu0 %v3169
      %v3453 = vpop.f32.mrb[0].mxu0
      %v3454 = vadd.f32 0.0, %v3453
      %v3455 = vpop.f32.mrb[0].mxu0
      %v3456 = vpop.f32.mrb[0].mxu0
      %v3457 = vadd.f32 0.0, %v3456
      %v3458 = vpop.f32.mrb[0].mxu0
      %3459 = vdwg.mxu0
      %v3460 = vld [vmem:[#allocation6] sm:$0xff]
      %v3461 = vld [vmem:[#allocation6 + $0x8] sm:$0xff]
      %v3462 = vld [vmem:[#allocation6 + $0x10] sm:$0xff]
      %v3463 = vld [vmem:[#allocation6 + $0x18] sm:$0xff]
      %v3464 = vld [vmem:[#allocation6 + $0x20] sm:$0xff]
      %v3465 = vld [vmem:[#allocation6 + $0x28] sm:$0xff]
      %v3466 = vld [vmem:[#allocation6 + $0x30] sm:$0xff]
      %v3467 = vld [vmem:[#allocation6 + $0x38] sm:$0xff]
      %v3468 = vld [vmem:[#allocation6 + $0x40] sm:$0xff]
      %v3469 = vld [vmem:[#allocation6 + $0x48] sm:$0xff]
      %v3470 = vld [vmem:[#allocation6 + $0x50] sm:$0xff]
      %v3471 = vld [vmem:[#allocation6 + $0x58] sm:$0xff]
      %v3472 = vld [vmem:[#allocation6 + $0x60] sm:$0xff]
      %v3473 = vld [vmem:[#allocation6 + $0x68] sm:$0xff]
      %v3474 = vld [vmem:[#allocation6 + $0x70] sm:$0xff]
      %v3475 = vld [vmem:[#allocation6 + $0x78] sm:$0xff]
      %v3476 = vld [vmem:[#allocation6 + $0x80] sm:$0xff]
      %v3477 = vld [vmem:[#allocation6 + $0x88] sm:$0xff]
      %v3478 = vld [vmem:[#allocation6 + $0x90] sm:$0xff]
      %v3479 = vld [vmem:[#allocation6 + $0x98] sm:$0xff]
      %v3480 = vld [vmem:[#allocation6 + $0xa0] sm:$0xff]
      %v3481 = vld [vmem:[#allocation6 + $0xa8] sm:$0xff]
      %v3482 = vld [vmem:[#allocation6 + $0xb0] sm:$0xff]
      %v3483 = vld [vmem:[#allocation6 + $0xb8] sm:$0xff]
      %v3484 = vld [vmem:[#allocation6 + $0xc0] sm:$0xff]
      %v3485 = vld [vmem:[#allocation6 + $0xc8] sm:$0xff]
      %v3486 = vld [vmem:[#allocation6 + $0xd0] sm:$0xff]
      %v3487 = vld [vmem:[#allocation6 + $0xd8] sm:$0xff]
      %v3488 = vld [vmem:[#allocation6 + $0xe0] sm:$0xff]
      %v3489 = vld [vmem:[#allocation6 + $0xe8] sm:$0xff]
      %v3490 = vld [vmem:[#allocation6 + $0xf0] sm:$0xff]
      %v3491 = vld [vmem:[#allocation6 + $0xf8] sm:$0xff]
      %v3492 = vadd.f32 %v3460, %v3334
      %v3493 = vadd.f32 %v3461, %v3337
      %v3494 = vadd.f32 %v3462, %v3342
      %v3495 = vadd.f32 %v3463, %v3345
      %v3496 = vadd.f32 %v3464, %v3350
      %v3497 = vadd.f32 %v3465, %v3353
      %v3498 = vadd.f32 %v3466, %v3358
      %v3499 = vadd.f32 %v3467, %v3361
      %v3500 = vadd.f32 %v3468, %v3366
      %v3501 = vadd.f32 %v3469, %v3369
      %v3502 = vadd.f32 %v3470, %v3374
      %v3503 = vadd.f32 %v3471, %v3377
      %v3504 = vadd.f32 %v3472, %v3382
      %v3505 = vadd.f32 %v3473, %v3385
      %v3506 = vadd.f32 %v3474, %v3390
      %v3507 = vadd.f32 %v3475, %v3393
      %v3508 = vadd.f32 %v3476, %v3398
      %v3509 = vadd.f32 %v3477, %v3401
      %v3510 = vadd.f32 %v3478, %v3406
      %v3511 = vadd.f32 %v3479, %v3409
      %v3512 = vadd.f32 %v3480, %v3414
      %v3513 = vadd.f32 %v3481, %v3417
      %v3514 = vadd.f32 %v3482, %v3422
      %v3515 = vadd.f32 %v3483, %v3425
      %v3516 = vadd.f32 %v3484, %v3430
      %v3517 = vadd.f32 %v3485, %v3433
      %v3518 = vadd.f32 %v3486, %v3438
      %v3519 = vadd.f32 %v3487, %v3441
      %v3520 = vadd.f32 %v3488, %v3446
      %v3521 = vadd.f32 %v3489, %v3449
      %v3522 = vadd.f32 %v3490, %v3454
      %v3523 = vadd.f32 %v3491, %v3457
      %3524 = vst.msk [vmem:[#allocation6] sm:$0xff] %vm3042, %v3492
      %3525 = vst.msk [vmem:[#allocation6 + $0x8] sm:$0xff] %vm3042, %v3493
      %3526 = vst.msk [vmem:[#allocation6 + $0x10] sm:$0xff] %vm3042, %v3494
      %3527 = vst.msk [vmem:[#allocation6 + $0x18] sm:$0xff] %vm3042, %v3495
      %3528 = vst.msk [vmem:[#allocation6 + $0x20] sm:$0xff] %vm3042, %v3496
      %3529 = vst.msk [vmem:[#allocation6 + $0x28] sm:$0xff] %vm3042, %v3497
      %3530 = vst.msk [vmem:[#allocation6 + $0x30] sm:$0xff] %vm3042, %v3498
      %3531 = vst.msk [vmem:[#allocation6 + $0x38] sm:$0xff] %vm3042, %v3499
      %3532 = vst.msk [vmem:[#allocation6 + $0x40] sm:$0xff] %vm3042, %v3500
      %3533 = vst.msk [vmem:[#allocation6 + $0x48] sm:$0xff] %vm3042, %v3501
      %3534 = vst.msk [vmem:[#allocation6 + $0x50] sm:$0xff] %vm3042, %v3502
      %3535 = vst.msk [vmem:[#allocation6 + $0x58] sm:$0xff] %vm3042, %v3503
      %3536 = vst.msk [vmem:[#allocation6 + $0x60] sm:$0xff] %vm3042, %v3504
      %3537 = vst.msk [vmem:[#allocation6 + $0x68] sm:$0xff] %vm3042, %v3505
      %3538 = vst.msk [vmem:[#allocation6 + $0x70] sm:$0xff] %vm3042, %v3506
      %3539 = vst.msk [vmem:[#allocation6 + $0x78] sm:$0xff] %vm3042, %v3507
      %3540 = vst.msk [vmem:[#allocation6 + $0x80] sm:$0xff] %vm3042, %v3508
      %3541 = vst.msk [vmem:[#allocation6 + $0x88] sm:$0xff] %vm3042, %v3509
      %3542 = vst.msk [vmem:[#allocation6 + $0x90] sm:$0xff] %vm3042, %v3510
      %3543 = vst.msk [vmem:[#allocation6 + $0x98] sm:$0xff] %vm3042, %v3511
      %3544 = vst.msk [vmem:[#allocation6 + $0xa0] sm:$0xff] %vm3042, %v3512
      %3545 = vst.msk [vmem:[#allocation6 + $0xa8] sm:$0xff] %vm3042, %v3513
      %3546 = vst.msk [vmem:[#allocation6 + $0xb0] sm:$0xff] %vm3042, %v3514
      %3547 = vst.msk [vmem:[#allocation6 + $0xb8] sm:$0xff] %vm3042, %v3515
      %3548 = vst.msk [vmem:[#allocation6 + $0xc0] sm:$0xff] %vm3042, %v3516
      %3549 = vst.msk [vmem:[#allocation6 + $0xc8] sm:$0xff] %vm3042, %v3517
      %3550 = vst.msk [vmem:[#allocation6 + $0xd0] sm:$0xff] %vm3042, %v3518
      %3551 = vst.msk [vmem:[#allocation6 + $0xd8] sm:$0xff] %vm3042, %v3519
      %3552 = vst.msk [vmem:[#allocation6 + $0xe0] sm:$0xff] %vm3042, %v3520
      %3553 = vst.msk [vmem:[#allocation6 + $0xe8] sm:$0xff] %vm3042, %v3521
      %3554 = vst.msk [vmem:[#allocation6 + $0xf0] sm:$0xff] %vm3042, %v3522
      %3555 = vst.msk [vmem:[#allocation6 + $0xf8] sm:$0xff] %vm3042, %v3523
      %v3556 = vld [vmem:[%s2541 + $0x1] sm:$0xff]
      %v3557 = vld [vmem:[%s2541 + $0x9] sm:$0xff]
      %v3558 = vld [vmem:[%s2541 + $0x19] sm:$0xff]
      %v3559 = vld [vmem:[%s2541 + $0x21] sm:$0xff]
      %v3560 = vld [vmem:[%s2541 + $0x31] sm:$0xff]
      %v3561 = vld [vmem:[%s2541 + $0x39] sm:$0xff]
      %v3562 = vld [vmem:[%s2541 + $0x49] sm:$0xff]
      %v3563 = vld [vmem:[%s2541 + $0x51] sm:$0xff]
      %v3564 = vld [vmem:[%s2541 + $0x61] sm:$0xff]
      %v3565 = vld [vmem:[%s2541 + $0x69] sm:$0xff]
      %v3566 = vld [vmem:[%s2541 + $0x79] sm:$0xff]
      %v3567 = vld [vmem:[%s2541 + $0x81] sm:$0xff]
      %v3568 = vld [vmem:[%s2541 + $0x91] sm:$0xff]
      %v3569 = vld [vmem:[%s2541 + $0x99] sm:$0xff]
      %v3570 = vld [vmem:[%s2541 + $0xa9] sm:$0xff]
      %v3571 = vld [vmem:[%s2541 + $0xb1] sm:$0xff]
      %v3572 = vld [vmem:[%s2541 + $0xc1] sm:$0xff]
      %v3573 = vld [vmem:[%s2541 + $0xc9] sm:$0xff]
      %v3574 = vld [vmem:[%s2541 + $0xd9] sm:$0xff]
      %v3575 = vld [vmem:[%s2541 + $0xe1] sm:$0xff]
      %v3576 = vld [vmem:[%s2541 + $0xf1] sm:$0xff]
      %v3577 = vld [vmem:[%s2541 + $0xf9] sm:$0xff]
      %v3578 = vld [vmem:[%s2541 + $0x109] sm:$0xff]
      %v3579 = vld [vmem:[%s2541 + $0x111] sm:$0xff]
      %v3580 = vld [vmem:[%s2541 + $0x121] sm:$0xff]
      %v3581 = vld [vmem:[%s2541 + $0x129] sm:$0xff]
      %v3582 = vld [vmem:[%s2541 + $0x139] sm:$0xff]
      %v3583 = vld [vmem:[%s2541 + $0x141] sm:$0xff]
      %v3584 = vld [vmem:[%s2541 + $0x151] sm:$0xff]
      %v3585 = vld [vmem:[%s2541 + $0x159] sm:$0xff]
      %v3586 = vld [vmem:[%s2541 + $0x169] sm:$0xff]
      %v3587 = vld [vmem:[%s2541 + $0x171] sm:$0xff]
      %v3588 = vld [vmem:[%s2541 + $0x2] sm:$0xff]
      %v3589 = vld [vmem:[%s2541 + $0xa] sm:$0xff]
      %v3590 = vld [vmem:[%s2541 + $0x1a] sm:$0xff]
      %v3591 = vld [vmem:[%s2541 + $0x22] sm:$0xff]
      %v3592 = vld [vmem:[%s2541 + $0x32] sm:$0xff]
      %v3593 = vld [vmem:[%s2541 + $0x3a] sm:$0xff]
      %v3594 = vld [vmem:[%s2541 + $0x4a] sm:$0xff]
      %v3595 = vld [vmem:[%s2541 + $0x52] sm:$0xff]
      %v3596 = vld [vmem:[%s2541 + $0x62] sm:$0xff]
      %v3597 = vld [vmem:[%s2541 + $0x6a] sm:$0xff]
      %v3598 = vld [vmem:[%s2541 + $0x7a] sm:$0xff]
      %v3599 = vld [vmem:[%s2541 + $0x82] sm:$0xff]
      %v3600 = vld [vmem:[%s2541 + $0x92] sm:$0xff]
      %v3601 = vld [vmem:[%s2541 + $0x9a] sm:$0xff]
      %v3602 = vld [vmem:[%s2541 + $0xaa] sm:$0xff]
      %v3603 = vld [vmem:[%s2541 + $0xb2] sm:$0xff]
      %v3604 = vld [vmem:[%s2541 + $0xc2] sm:$0xff]
      %v3605 = vld [vmem:[%s2541 + $0xca] sm:$0xff]
      %v3606 = vld [vmem:[%s2541 + $0xda] sm:$0xff]
      %v3607 = vld [vmem:[%s2541 + $0xe2] sm:$0xff]
      %v3608 = vld [vmem:[%s2541 + $0xf2] sm:$0xff]
      %v3609 = vld [vmem:[%s2541 + $0xfa] sm:$0xff]
      %v3610 = vld [vmem:[%s2541 + $0x10a] sm:$0xff]
      %v3611 = vld [vmem:[%s2541 + $0x112] sm:$0xff]
      %v3612 = vld [vmem:[%s2541 + $0x122] sm:$0xff]
      %v3613 = vld [vmem:[%s2541 + $0x12a] sm:$0xff]
      %v3614 = vld [vmem:[%s2541 + $0x13a] sm:$0xff]
      %v3615 = vld [vmem:[%s2541 + $0x142] sm:$0xff]
      %v3616 = vld [vmem:[%s2541 + $0x152] sm:$0xff]
      %v3617 = vld [vmem:[%s2541 + $0x15a] sm:$0xff]
      %v3618 = vld [vmem:[%s2541 + $0x16a] sm:$0xff]
      %v3619 = vld [vmem:[%s2541 + $0x172] sm:$0xff]
      %v3620 = vpack.c.bf16 %v3557, %v3556
      %v3621 = vpack.c.bf16 %v3589, %v3588
      %v3622 = vpack.c.bf16 %v3559, %v3558
      %v3623 = vpack.c.bf16 %v3591, %v3590
      %v3624 = vpack.c.bf16 %v3561, %v3560
      %v3625 = vpack.c.bf16 %v3593, %v3592
      %v3626 = vpack.c.bf16 %v3563, %v3562
      %v3627 = vpack.c.bf16 %v3595, %v3594
      %v3628 = vpack.c.bf16 %v3565, %v3564
      %v3629 = vpack.c.bf16 %v3597, %v3596
      %v3630 = vpack.c.bf16 %v3567, %v3566
      %v3631 = vpack.c.bf16 %v3599, %v3598
      %v3632 = vpack.c.bf16 %v3569, %v3568
      %v3633 = vpack.c.bf16 %v3601, %v3600
      %v3634 = vpack.c.bf16 %v3571, %v3570
      %v3635 = vpack.c.bf16 %v3603, %v3602
      %v3636 = vpack.c.bf16 %v3573, %v3572
      %v3637 = vpack.c.bf16 %v3605, %v3604
      %v3638 = vpack.c.bf16 %v3575, %v3574
      %v3639 = vpack.c.bf16 %v3607, %v3606
      %v3640 = vpack.c.bf16 %v3577, %v3576
      %v3641 = vpack.c.bf16 %v3609, %v3608
      %v3642 = vpack.c.bf16 %v3579, %v3578
      %v3643 = vpack.c.bf16 %v3611, %v3610
      %v3644 = vpack.c.bf16 %v3581, %v3580
      %v3645 = vpack.c.bf16 %v3613, %v3612
      %v3646 = vpack.c.bf16 %v3583, %v3582
      %v3647 = vpack.c.bf16 %v3615, %v3614
      %v3648 = vpack.c.bf16 %v3585, %v3584
      %v3649 = vpack.c.bf16 %v3617, %v3616
      %v3650 = vpack.c.bf16 %v3587, %v3586
      %v3651 = vpack.c.bf16 %v3619, %v3618
      %v3652 = vld [vmem:[%s3 + $0x100] sm:$0xf]
      %v3653 = vld [vmem:[%s3 + $0x104] sm:$0xf]
      %v3654 = vld [vmem:[%s3 + $0x108] sm:$0xf]
      %v3655 = vld [vmem:[%s3 + $0x10c] sm:$0xf]
      %v3656 = vld [vmem:[%s3 + $0x110] sm:$0xf]
      %v3657 = vld [vmem:[%s3 + $0x114] sm:$0xf]
      %v3658 = vld [vmem:[%s3 + $0x118] sm:$0xf]
      %v3659 = vld [vmem:[%s3 + $0x11c] sm:$0xf]
      %v3660 = vld [vmem:[%s3 + $0x120] sm:$0xf]
      %v3661 = vld [vmem:[%s3 + $0x124] sm:$0xf]
      %v3662 = vld [vmem:[%s3 + $0x128] sm:$0xf]
      %v3663 = vld [vmem:[%s3 + $0x12c] sm:$0xf]
      %v3664 = vld [vmem:[%s3 + $0x130] sm:$0xf]
      %v3665 = vld [vmem:[%s3 + $0x134] sm:$0xf]
      %v3666 = vld [vmem:[%s3 + $0x138] sm:$0xf]
      %v3667 = vld [vmem:[%s3 + $0x13c] sm:$0xf]
      %v3668 = vld [vmem:[%s3 + $0x140] sm:$0xf]
      %v3669 = vld [vmem:[%s3 + $0x144] sm:$0xf]
      %v3670 = vld [vmem:[%s3 + $0x148] sm:$0xf]
      %v3671 = vld [vmem:[%s3 + $0x14c] sm:$0xf]
      %v3672 = vld [vmem:[%s3 + $0x150] sm:$0xf]
      %v3673 = vld [vmem:[%s3 + $0x154] sm:$0xf]
      %v3674 = vld [vmem:[%s3 + $0x158] sm:$0xf]
      %v3675 = vld [vmem:[%s3 + $0x15c] sm:$0xf]
      %v3676 = vld [vmem:[%s3 + $0x160] sm:$0xf]
      %v3677 = vld [vmem:[%s3 + $0x164] sm:$0xf]
      %v3678 = vld [vmem:[%s3 + $0x168] sm:$0xf]
      %v3679 = vld [vmem:[%s3 + $0x16c] sm:$0xf]
      %v3680 = vld [vmem:[%s3 + $0x170] sm:$0xf]
      %v3681 = vld [vmem:[%s3 + $0x174] sm:$0xf]
      %v3682 = vld [vmem:[%s3 + $0x178] sm:$0xf]
      %v3683 = vld [vmem:[%s3 + $0x17c] sm:$0xf]
      %v3716 = vunpack.c.l.b16 %v3652
      %v3717 = vunpack.c.l.b16 %v3653
      %v3718 = vunpack.c.l.b16 %v3654
      %v3719 = vunpack.c.l.b16 %v3655
      %v3720 = vunpack.c.l.b16 %v3656
      %v3721 = vunpack.c.l.b16 %v3657
      %v3722 = vunpack.c.l.b16 %v3658
      %v3723 = vunpack.c.l.b16 %v3659
      %v3724 = vunpack.c.l.b16 %v3660
      %v3725 = vunpack.c.l.b16 %v3661
      %v3726 = vunpack.c.l.b16 %v3662
      %v3727 = vunpack.c.l.b16 %v3663
      %v3728 = vunpack.c.l.b16 %v3664
      %v3729 = vunpack.c.l.b16 %v3665
      %v3730 = vunpack.c.l.b16 %v3666
      %v3731 = vunpack.c.l.b16 %v3667
      %v3732 = vunpack.c.l.b16 %v3668
      %v3733 = vunpack.c.l.b16 %v3669
      %v3734 = vunpack.c.l.b16 %v3670
      %v3735 = vunpack.c.l.b16 %v3671
      %v3736 = vunpack.c.l.b16 %v3672
      %v3737 = vunpack.c.l.b16 %v3673
      %v3738 = vunpack.c.l.b16 %v3674
      %v3739 = vunpack.c.l.b16 %v3675
      %v3740 = vunpack.c.l.b16 %v3676
      %v3741 = vunpack.c.l.b16 %v3677
      %v3742 = vunpack.c.l.b16 %v3678
      %v3743 = vunpack.c.l.b16 %v3679
      %v3744 = vunpack.c.l.b16 %v3680
      %v3745 = vunpack.c.l.b16 %v3681
      %v3746 = vunpack.c.l.b16 %v3682
      %v3747 = vunpack.c.l.b16 %v3683
      %v3748 = vpack.c.b16 %v3717, %v3716
      %v3749 = vpack.c.b16 %v3719, %v3718
      %v3750 = vpack.c.b16 %v3721, %v3720
      %v3751 = vpack.c.b16 %v3723, %v3722
      %v3752 = vpack.c.b16 %v3725, %v3724
      %v3753 = vpack.c.b16 %v3727, %v3726
      %v3754 = vpack.c.b16 %v3729, %v3728
      %v3755 = vpack.c.b16 %v3731, %v3730
      %v3756 = vpack.c.b16 %v3733, %v3732
      %v3757 = vpack.c.b16 %v3735, %v3734
      %v3758 = vpack.c.b16 %v3737, %v3736
      %v3759 = vpack.c.b16 %v3739, %v3738
      %v3760 = vpack.c.b16 %v3741, %v3740
      %v3761 = vpack.c.b16 %v3743, %v3742
      %v3762 = vpack.c.b16 %v3745, %v3744
      %v3763 = vpack.c.b16 %v3747, %v3746
      %3780 = vmatprep.subr.bf16.mxu0 0
      %3781 = vmatpush1.bf16.msra.mxu0 %v3748
      %3782 = vmatprep.subr.bf16.mxu0 0
      %3783 = vmatpush1.bf16.msra.mxu0 %v3749
      %3784 = vmatprep.subr.bf16.mxu0 0
      %3785 = vmatpush1.bf16.msra.mxu0 %v3750
      %3786 = vmatprep.subr.bf16.mxu0 0
      %3787 = vmatpush1.bf16.msra.mxu0 %v3751
      %3788 = vmatprep.subr.bf16.mxu0 0
      %3789 = vmatpush1.bf16.msra.mxu0 %v3752
      %3790 = vmatprep.subr.bf16.mxu0 0
      %3791 = vmatpush1.bf16.msra.mxu0 %v3753
      %3792 = vmatprep.subr.bf16.mxu0 0
      %3793 = vmatpush1.bf16.msra.mxu0 %v3754
      %3794 = vmatprep.subr.bf16.mxu0 0
      %3795 = vmatpush1.bf16.msra.mxu0 %v3755
      %3796 = vmatprep.subr.bf16.mxu0 0
      %3797 = vmatpush1.bf16.msra.mxu0 %v3756
      %3798 = vmatprep.subr.bf16.mxu0 0
      %3799 = vmatpush1.bf16.msra.mxu0 %v3757
      %3800 = vmatprep.subr.bf16.mxu0 0
      %3801 = vmatpush1.bf16.msra.mxu0 %v3758
      %3802 = vmatprep.subr.bf16.mxu0 0
      %3803 = vmatpush1.bf16.msra.mxu0 %v3759
      %3804 = vmatprep.subr.bf16.mxu0 0
      %3805 = vmatpush1.bf16.msra.mxu0 %v3760
      %3806 = vmatprep.subr.bf16.mxu0 0
      %3807 = vmatpush1.bf16.msra.mxu0 %v3761
      %3808 = vmatprep.subr.bf16.mxu0 0
      %3809 = vmatpush1.bf16.msra.mxu0 %v3762
      %3810 = vmatprep.subr.bf16.mxu0 0
      %3811 = vmatpush1.bf16.msra.mxu0 %v3763
      %3812 = vmatprep.mubr.bf16.mxu0 %v3621
      %3813 = vmatmul.mubr.bf16.gmra.mrb[0].mxu0 %v3620
      %v3814 = vpop.f32.mrb[0].mxu0
      %v3815 = vadd.f32 0.0, %v3814
      %v3816 = vpop.f32.mrb[0].mxu0
      %v3817 = vpop.f32.mrb[0].mxu0
      %v3818 = vadd.f32 0.0, %v3817
      %v3819 = vpop.f32.mrb[0].mxu0
      %3820 = vmatprep.mubr.bf16.mxu0 %v3623
      %3821 = vmatmul.mubr.bf16.gmra.mrb[0].mxu0 %v3622
      %v3822 = vpop.f32.mrb[0].mxu0
      %v3823 = vadd.f32 0.0, %v3822
      %v3824 = vpop.f32.mrb[0].mxu0
      %v3825 = vpop.f32.mrb[0].mxu0
      %v3826 = vadd.f32 0.0, %v3825
      %v3827 = vpop.f32.mrb[0].mxu0
      %3828 = vmatprep.mubr.bf16.mxu0 %v3625
      %3829 = vmatmul.mubr.bf16.gmra.mrb[0].mxu0 %v3624
      %v3830 = vpop.f32.mrb[0].mxu0
      %v3831 = vadd.f32 0.0, %v3830
      %v3832 = vpop.f32.mrb[0].mxu0
      %v3833 = vpop.f32.mrb[0].mxu0
      %v3834 = vadd.f32 0.0, %v3833
      %v3835 = vpop.f32.mrb[0].mxu0
      %3836 = vmatprep.mubr.bf16.mxu0 %v3627
      %3837 = vmatmul.mubr.bf16.gmra.mrb[0].mxu0 %v3626
      %v3838 = vpop.f32.mrb[0].mxu0
      %v3839 = vadd.f32 0.0, %v3838
      %v3840 = vpop.f32.mrb[0].mxu0
      %v3841 = vpop.f32.mrb[0].mxu0
      %v3842 = vadd.f32 0.0, %v3841
      %v3843 = vpop.f32.mrb[0].mxu0
      %3844 = vmatprep.mubr.bf16.mxu0 %v3629
      %3845 = vmatmul.mubr.bf16.gmra.mrb[0].mxu0 %v3628
      %v3846 = vpop.f32.mrb[0].mxu0
      %v3847 = vadd.f32 0.0, %v3846
      %v3848 = vpop.f32.mrb[0].mxu0
      %v3849 = vpop.f32.mrb[0].mxu0
      %v3850 = vadd.f32 0.0, %v3849
      %v3851 = vpop.f32.mrb[0].mxu0
      %3852 = vmatprep.mubr.bf16.mxu0 %v3631
      %3853 = vmatmul.mubr.bf16.gmra.mrb[0].mxu0 %v3630
      %v3854 = vpop.f32.mrb[0].mxu0
      %v3855 = vadd.f32 0.0, %v3854
      %v3856 = vpop.f32.mrb[0].mxu0
      %v3857 = vpop.f32.mrb[0].mxu0
      %v3858 = vadd.f32 0.0, %v3857
      %v3859 = vpop.f32.mrb[0].mxu0
      %3860 = vmatprep.mubr.bf16.mxu0 %v3633
      %3861 = vmatmul.mubr.bf16.gmra.mrb[0].mxu0 %v3632
      %v3862 = vpop.f32.mrb[0].mxu0
      %v3863 = vadd.f32 0.0, %v3862
      %v3864 = vpop.f32.mrb[0].mxu0
      %v3865 = vpop.f32.mrb[0].mxu0
      %v3866 = vadd.f32 0.0, %v3865
      %v3867 = vpop.f32.mrb[0].mxu0
      %3868 = vmatprep.mubr.bf16.mxu0 %v3635
      %3869 = vmatmul.mubr.bf16.gmra.mrb[0].mxu0 %v3634
      %v3870 = vpop.f32.mrb[0].mxu0
      %v3871 = vadd.f32 0.0, %v3870
      %v3872 = vpop.f32.mrb[0].mxu0
      %v3873 = vpop.f32.mrb[0].mxu0
      %v3874 = vadd.f32 0.0, %v3873
      %v3875 = vpop.f32.mrb[0].mxu0
      %3876 = vmatprep.mubr.bf16.mxu0 %v3637
      %3877 = vmatmul.mubr.bf16.gmra.mrb[0].mxu0 %v3636
      %v3878 = vpop.f32.mrb[0].mxu0
      %v3879 = vadd.f32 0.0, %v3878
      %v3880 = vpop.f32.mrb[0].mxu0
      %v3881 = vpop.f32.mrb[0].mxu0
      %v3882 = vadd.f32 0.0, %v3881
      %v3883 = vpop.f32.mrb[0].mxu0
      %3884 = vmatprep.mubr.bf16.mxu0 %v3639
      %3885 = vmatmul.mubr.bf16.gmra.mrb[0].mxu0 %v3638
      %v3886 = vpop.f32.mrb[0].mxu0
      %v3887 = vadd.f32 0.0, %v3886
      %v3888 = vpop.f32.mrb[0].mxu0
      %v3889 = vpop.f32.mrb[0].mxu0
      %v3890 = vadd.f32 0.0, %v3889
      %v3891 = vpop.f32.mrb[0].mxu0
      %3892 = vmatprep.mubr.bf16.mxu0 %v3641
      %3893 = vmatmul.mubr.bf16.gmra.mrb[0].mxu0 %v3640
      %v3894 = vpop.f32.mrb[0].mxu0
      %v3895 = vadd.f32 0.0, %v3894
      %v3896 = vpop.f32.mrb[0].mxu0
      %v3897 = vpop.f32.mrb[0].mxu0
      %v3898 = vadd.f32 0.0, %v3897
      %v3899 = vpop.f32.mrb[0].mxu0
      %3900 = vmatprep.mubr.bf16.mxu0 %v3643
      %3901 = vmatmul.mubr.bf16.gmra.mrb[0].mxu0 %v3642
      %v3902 = vpop.f32.mrb[0].mxu0
      %v3903 = vadd.f32 0.0, %v3902
      %v3904 = vpop.f32.mrb[0].mxu0
      %v3905 = vpop.f32.mrb[0].mxu0
      %v3906 = vadd.f32 0.0, %v3905
      %v3907 = vpop.f32.mrb[0].mxu0
      %3908 = vmatprep.mubr.bf16.mxu0 %v3645
      %3909 = vmatmul.mubr.bf16.gmra.mrb[0].mxu0 %v3644
      %v3910 = vpop.f32.mrb[0].mxu0
      %v3911 = vadd.f32 0.0, %v3910
      %v3912 = vpop.f32.mrb[0].mxu0
      %v3913 = vpop.f32.mrb[0].mxu0
      %v3914 = vadd.f32 0.0, %v3913
      %v3915 = vpop.f32.mrb[0].mxu0
      %3916 = vmatprep.mubr.bf16.mxu0 %v3647
      %3917 = vmatmul.mubr.bf16.gmra.mrb[0].mxu0 %v3646
      %v3918 = vpop.f32.mrb[0].mxu0
      %v3919 = vadd.f32 0.0, %v3918
      %v3920 = vpop.f32.mrb[0].mxu0
      %v3921 = vpop.f32.mrb[0].mxu0
      %v3922 = vadd.f32 0.0, %v3921
      %v3923 = vpop.f32.mrb[0].mxu0
      %3924 = vmatprep.mubr.bf16.mxu0 %v3649
      %3925 = vmatmul.mubr.bf16.gmra.mrb[0].mxu0 %v3648
      %v3926 = vpop.f32.mrb[0].mxu0
      %v3927 = vadd.f32 0.0, %v3926
      %v3928 = vpop.f32.mrb[0].mxu0
      %v3929 = vpop.f32.mrb[0].mxu0
      %v3930 = vadd.f32 0.0, %v3929
      %v3931 = vpop.f32.mrb[0].mxu0
      %3932 = vmatprep.mubr.bf16.mxu0 %v3651
      %3933 = vmatmul.mubr.bf16.gmra.mrb[0].mxu0 %v3650
      %v3934 = vpop.f32.mrb[0].mxu0
      %v3935 = vadd.f32 0.0, %v3934
      %v3936 = vpop.f32.mrb[0].mxu0
      %v3937 = vpop.f32.mrb[0].mxu0
      %v3938 = vadd.f32 0.0, %v3937
      %v3939 = vpop.f32.mrb[0].mxu0
      %3940 = vdwg.mxu0
      %v3941 = vld [vmem:[#allocation6] sm:$0xff]
      %v3942 = vld [vmem:[#allocation6 + $0x8] sm:$0xff]
      %v3943 = vld [vmem:[#allocation6 + $0x10] sm:$0xff]
      %v3944 = vld [vmem:[#allocation6 + $0x18] sm:$0xff]
      %v3945 = vld [vmem:[#allocation6 + $0x20] sm:$0xff]
      %v3946 = vld [vmem:[#allocation6 + $0x28] sm:$0xff]
      %v3947 = vld [vmem:[#allocation6 + $0x30] sm:$0xff]
      %v3948 = vld [vmem:[#allocation6 + $0x38] sm:$0xff]
      %v3949 = vld [vmem:[#allocation6 + $0x40] sm:$0xff]
      %v3950 = vld [vmem:[#allocation6 + $0x48] sm:$0xff]
      %v3951 = vld [vmem:[#allocation6 + $0x50] sm:$0xff]
      %v3952 = vld [vmem:[#allocation6 + $0x58] sm:$0xff]
      %v3953 = vld [vmem:[#allocation6 + $0x60] sm:$0xff]
      %v3954 = vld [vmem:[#allocation6 + $0x68] sm:$0xff]
      %v3955 = vld [vmem:[#allocation6 + $0x70] sm:$0xff]
      %v3956 = vld [vmem:[#allocation6 + $0x78] sm:$0xff]
      %v3957 = vld [vmem:[#allocation6 + $0x80] sm:$0xff]
      %v3958 = vld [vmem:[#allocation6 + $0x88] sm:$0xff]
      %v3959 = vld [vmem:[#allocation6 + $0x90] sm:$0xff]
      %v3960 = vld [vmem:[#allocation6 + $0x98] sm:$0xff]
      %v3961 = vld [vmem:[#allocation6 + $0xa0] sm:$0xff]
      %v3962 = vld [vmem:[#allocation6 + $0xa8] sm:$0xff]
      %v3963 = vld [vmem:[#allocation6 + $0xb0] sm:$0xff]
      %v3964 = vld [vmem:[#allocation6 + $0xb8] sm:$0xff]
      %v3965 = vld [vmem:[#allocation6 + $0xc0] sm:$0xff]
      %v3966 = vld [vmem:[#allocation6 + $0xc8] sm:$0xff]
      %v3967 = vld [vmem:[#allocation6 + $0xd0] sm:$0xff]
      %v3968 = vld [vmem:[#allocation6 + $0xd8] sm:$0xff]
      %v3969 = vld [vmem:[#allocation6 + $0xe0] sm:$0xff]
      %v3970 = vld [vmem:[#allocation6 + $0xe8] sm:$0xff]
      %v3971 = vld [vmem:[#allocation6 + $0xf0] sm:$0xff]
      %v3972 = vld [vmem:[#allocation6 + $0xf8] sm:$0xff]
      %v3973 = vadd.f32 %v3941, %v3815
      %v3974 = vadd.f32 %v3942, %v3818
      %v3975 = vadd.f32 %v3943, %v3823
      %v3976 = vadd.f32 %v3944, %v3826
      %v3977 = vadd.f32 %v3945, %v3831
      %v3978 = vadd.f32 %v3946, %v3834
      %v3979 = vadd.f32 %v3947, %v3839
      %v3980 = vadd.f32 %v3948, %v3842
      %v3981 = vadd.f32 %v3949, %v3847
      %v3982 = vadd.f32 %v3950, %v3850
      %v3983 = vadd.f32 %v3951, %v3855
      %v3984 = vadd.f32 %v3952, %v3858
      %v3985 = vadd.f32 %v3953, %v3863
      %v3986 = vadd.f32 %v3954, %v3866
      %v3987 = vadd.f32 %v3955, %v3871
      %v3988 = vadd.f32 %v3956, %v3874
      %v3989 = vadd.f32 %v3957, %v3879
      %v3990 = vadd.f32 %v3958, %v3882
      %v3991 = vadd.f32 %v3959, %v3887
      %v3992 = vadd.f32 %v3960, %v3890
      %v3993 = vadd.f32 %v3961, %v3895
      %v3994 = vadd.f32 %v3962, %v3898
      %v3995 = vadd.f32 %v3963, %v3903
      %v3996 = vadd.f32 %v3964, %v3906
      %v3997 = vadd.f32 %v3965, %v3911
      %v3998 = vadd.f32 %v3966, %v3914
      %v3999 = vadd.f32 %v3967, %v3919
      %v4000 = vadd.f32 %v3968, %v3922
      %v4001 = vadd.f32 %v3969, %v3927
      %v4002 = vadd.f32 %v3970, %v3930
      %v4003 = vadd.f32 %v3971, %v3935
      %v4004 = vadd.f32 %v3972, %v3938
      %4005 = vst.msk [vmem:[#allocation6] sm:$0xff] %vm3042, %v3973
      %4006 = vst.msk [vmem:[#allocation6 + $0x8] sm:$0xff] %vm3042, %v3974
      %4007 = vst.msk [vmem:[#allocation6 + $0x10] sm:$0xff] %vm3042, %v3975
      %4008 = vst.msk [vmem:[#allocation6 + $0x18] sm:$0xff] %vm3042, %v3976
      %4009 = vst.msk [vmem:[#allocation6 + $0x20] sm:$0xff] %vm3042, %v3977
      %4010 = vst.msk [vmem:[#allocation6 + $0x28] sm:$0xff] %vm3042, %v3978
      %4011 = vst.msk [vmem:[#allocation6 + $0x30] sm:$0xff] %vm3042, %v3979
      %4012 = vst.msk [vmem:[#allocation6 + $0x38] sm:$0xff] %vm3042, %v3980
      %4013 = vst.msk [vmem:[#allocation6 + $0x40] sm:$0xff] %vm3042, %v3981
      %4014 = vst.msk [vmem:[#allocation6 + $0x48] sm:$0xff] %vm3042, %v3982
      %4015 = vst.msk [vmem:[#allocation6 + $0x50] sm:$0xff] %vm3042, %v3983
      %4016 = vst.msk [vmem:[#allocation6 + $0x58] sm:$0xff] %vm3042, %v3984
      %4017 = vst.msk [vmem:[#allocation6 + $0x60] sm:$0xff] %vm3042, %v3985
      %4018 = vst.msk [vmem:[#allocation6 + $0x68] sm:$0xff] %vm3042, %v3986
      %4019 = vst.msk [vmem:[#allocation6 + $0x70] sm:$0xff] %vm3042, %v3987
      %4020 = vst.msk [vmem:[#allocation6 + $0x78] sm:$0xff] %vm3042, %v3988
      %4021 = vst.msk [vmem:[#allocation6 + $0x80] sm:$0xff] %vm3042, %v3989
      %4022 = vst.msk [vmem:[#allocation6 + $0x88] sm:$0xff] %vm3042, %v3990
      %4023 = vst.msk [vmem:[#allocation6 + $0x90] sm:$0xff] %vm3042, %v3991
      %4024 = vst.msk [vmem:[#allocation6 + $0x98] sm:$0xff] %vm3042, %v3992
      %4025 = vst.msk [vmem:[#allocation6 + $0xa0] sm:$0xff] %vm3042, %v3993
      %4026 = vst.msk [vmem:[#allocation6 + $0xa8] sm:$0xff] %vm3042, %v3994
      %4027 = vst.msk [vmem:[#allocation6 + $0xb0] sm:$0xff] %vm3042, %v3995
      %4028 = vst.msk [vmem:[#allocation6 + $0xb8] sm:$0xff] %vm3042, %v3996
      %4029 = vst.msk [vmem:[#allocation6 + $0xc0] sm:$0xff] %vm3042, %v3997
      %4030 = vst.msk [vmem:[#allocation6 + $0xc8] sm:$0xff] %vm3042, %v3998
      %4031 = vst.msk [vmem:[#allocation6 + $0xd0] sm:$0xff] %vm3042, %v3999
      %4032 = vst.msk [vmem:[#allocation6 + $0xd8] sm:$0xff] %vm3042, %v4000
      %4033 = vst.msk [vmem:[#allocation6 + $0xe0] sm:$0xff] %vm3042, %v4001
      %4034 = vst.msk [vmem:[#allocation6 + $0xe8] sm:$0xff] %vm3042, %v4002
      %4035 = vst.msk [vmem:[#allocation6 + $0xf0] sm:$0xff] %vm3042, %v4003
      %4036 = vst.msk [vmem:[#allocation6 + $0xf8] sm:$0xff] %vm3042, %v4004
      %v4037 = vld [vmem:[%s2574] sm:$0xff]
      %v4038 = vld [vmem:[%s2574 + $0x8] sm:$0xff]
      %v4039 = vld [vmem:[%s2574 + $0x18] sm:$0xff]
      %v4040 = vld [vmem:[%s2574 + $0x20] sm:$0xff]
      %v4041 = vld [vmem:[%s2574 + $0x30] sm:$0xff]
      %v4042 = vld [vmem:[%s2574 + $0x38] sm:$0xff]
      %v4043 = vld [vmem:[%s2574 + $0x48] sm:$0xff]
      %v4044 = vld [vmem:[%s2574 + $0x50] sm:$0xff]
      %v4045 = vld [vmem:[%s2574 + $0x60] sm:$0xff]
      %v4046 = vld [vmem:[%s2574 + $0x68] sm:$0xff]
      %v4047 = vld [vmem:[%s2574 + $0x78] sm:$0xff]
      %v4048 = vld [vmem:[%s2574 + $0x80] sm:$0xff]
      %v4049 = vld [vmem:[%s2574 + $0x90] sm:$0xff]
      %v4050 = vld [vmem:[%s2574 + $0x98] sm:$0xff]
      %v4051 = vld [vmem:[%s2574 + $0xa8] sm:$0xff]
      %v4052 = vld [vmem:[%s2574 + $0xb0] sm:$0xff]
      %v4053 = vld [vmem:[%s2574 + $0xc0] sm:$0xff]
      %v4054 = vld [vmem:[%s2574 + $0xc8] sm:$0xff]
      %v4055 = vld [vmem:[%s2574 + $0xd8] sm:$0xff]
      %v4056 = vld [vmem:[%s2574 + $0xe0] sm:$0xff]
      %v4057 = vld [vmem:[%s2574 + $0xf0] sm:$0xff]
      %v4058 = vld [vmem:[%s2574 + $0xf8] sm:$0xff]
      %v4059 = vld [vmem:[%s2574 + $0x108] sm:$0xff]
      %v4060 = vld [vmem:[%s2574 + $0x110] sm:$0xff]
      %v4061 = vld [vmem:[%s2574 + $0x120] sm:$0xff]
      %v4062 = vld [vmem:[%s2574 + $0x128] sm:$0xff]
      %v4063 = vld [vmem:[%s2574 + $0x138] sm:$0xff]
      %v4064 = vld [vmem:[%s2574 + $0x140] sm:$0xff]
      %v4065 = vld [vmem:[%s2574 + $0x150] sm:$0xff]
      %v4066 = vld [vmem:[%s2574 + $0x158] sm:$0xff]
      %v4067 = vld [vmem:[%s2574 + $0x168] sm:$0xff]
      %v4068 = vld [vmem:[%s2574 + $0x170] sm:$0xff]
      %v4069 = vld [vmem:[%s2574 + $0x1] sm:$0xff]
      %v4070 = vld [vmem:[%s2574 + $0x9] sm:$0xff]
      %v4071 = vld [vmem:[%s2574 + $0x19] sm:$0xff]
      %v4072 = vld [vmem:[%s2574 + $0x21] sm:$0xff]
      %v4073 = vld [vmem:[%s2574 + $0x31] sm:$0xff]
      %v4074 = vld [vmem:[%s2574 + $0x39] sm:$0xff]
      %v4075 = vld [vmem:[%s2574 + $0x49] sm:$0xff]
      %v4076 = vld [vmem:[%s2574 + $0x51] sm:$0xff]
      %v4077 = vld [vmem:[%s2574 + $0x61] sm:$0xff]
      %v4078 = vld [vmem:[%s2574 + $0x69] sm:$0xff]
      %v4079 = vld [vmem:[%s2574 + $0x79] sm:$0xff]
      %v4080 = vld [vmem:[%s2574 + $0x81] sm:$0xff]
      %v4081 = vld [vmem:[%s2574 + $0x91] sm:$0xff]
      %v4082 = vld [vmem:[%s2574 + $0x99] sm:$0xff]
      %v4083 = vld [vmem:[%s2574 + $0xa9] sm:$0xff]
      %v4084 = vld [vmem:[%s2574 + $0xb1] sm:$0xff]
      %v4085 = vld [vmem:[%s2574 + $0xc1] sm:$0xff]
      %v4086 = vld [vmem:[%s2574 + $0xc9] sm:$0xff]
      %v4087 = vld [vmem:[%s2574 + $0xd9] sm:$0xff]
      %v4088 = vld [vmem:[%s2574 + $0xe1] sm:$0xff]
      %v4089 = vld [vmem:[%s2574 + $0xf1] sm:$0xff]
      %v4090 = vld [vmem:[%s2574 + $0xf9] sm:$0xff]
      %v4091 = vld [vmem:[%s2574 + $0x109] sm:$0xff]
      %v4092 = vld [vmem:[%s2574 + $0x111] sm:$0xff]
      %v4093 = vld [vmem:[%s2574 + $0x121] sm:$0xff]
      %v4094 = vld [vmem:[%s2574 + $0x129] sm:$0xff]
      %v4095 = vld [vmem:[%s2574 + $0x139] sm:$0xff]
      %v4096 = vld [vmem:[%s2574 + $0x141] sm:$0xff]
      %v4097 = vld [vmem:[%s2574 + $0x151] sm:$0xff]
      %v4098 = vld [vmem:[%s2574 + $0x159] sm:$0xff]
      %v4099 = vld [vmem:[%s2574 + $0x169] sm:$0xff]
      %v4100 = vld [vmem:[%s2574 + $0x171] sm:$0xff]
      %v4101 = vpack.c.bf16 %v4038, %v4037
      %v4102 = vpack.c.bf16 %v4070, %v4069
      %v4103 = vpack.c.bf16 %v4040, %v4039
      %v4104 = vpack.c.bf16 %v4072, %v4071
      %v4105 = vpack.c.bf16 %v4042, %v4041
      %v4106 = vpack.c.bf16 %v4074, %v4073
      %v4107 = vpack.c.bf16 %v4044, %v4043
      %v4108 = vpack.c.bf16 %v4076, %v4075
      %v4109 = vpack.c.bf16 %v4046, %v4045
      %v4110 = vpack.c.bf16 %v4078, %v4077
      %v4111 = vpack.c.bf16 %v4048, %v4047
      %v4112 = vpack.c.bf16 %v4080, %v4079
      %v4113 = vpack.c.bf16 %v4050, %v4049
      %v4114 = vpack.c.bf16 %v4082, %v4081
      %v4115 = vpack.c.bf16 %v4052, %v4051
      %v4116 = vpack.c.bf16 %v4084, %v4083
      %v4117 = vpack.c.bf16 %v4054, %v4053
      %v4118 = vpack.c.bf16 %v4086, %v4085
      %v4119 = vpack.c.bf16 %v4056, %v4055
      %v4120 = vpack.c.bf16 %v4088, %v4087
      %v4121 = vpack.c.bf16 %v4058, %v4057
      %v4122 = vpack.c.bf16 %v4090, %v4089
      %v4123 = vpack.c.bf16 %v4060, %v4059
      %v4124 = vpack.c.bf16 %v4092, %v4091
      %v4125 = vpack.c.bf16 %v4062, %v4061
      %v4126 = vpack.c.bf16 %v4094, %v4093
      %v4127 = vpack.c.bf16 %v4064, %v4063
      %v4128 = vpack.c.bf16 %v4096, %v4095
      %v4129 = vpack.c.bf16 %v4066, %v4065
      %v4130 = vpack.c.bf16 %v4098, %v4097
      %v4131 = vpack.c.bf16 %v4068, %v4067
      %v4132 = vpack.c.bf16 %v4100, %v4099
      %v4133 = vld [vmem:[%s3 + $0x180] sm:$0xf]
      %v4134 = vld [vmem:[%s3 + $0x184] sm:$0xf]
      %v4135 = vld [vmem:[%s3 + $0x188] sm:$0xf]
      %v4136 = vld [vmem:[%s3 + $0x18c] sm:$0xf]
      %v4137 = vld [vmem:[%s3 + $0x190] sm:$0xf]
      %v4138 = vld [vmem:[%s3 + $0x194] sm:$0xf]
      %v4139 = vld [vmem:[%s3 + $0x198] sm:$0xf]
      %v4140 = vld [vmem:[%s3 + $0x19c] sm:$0xf]
      %v4141 = vld [vmem:[%s3 + $0x1a0] sm:$0xf]
      %v4142 = vld [vmem:[%s3 + $0x1a4] sm:$0xf]
      %v4143 = vld [vmem:[%s3 + $0x1a8] sm:$0xf]
      %v4144 = vld [vmem:[%s3 + $0x1ac] sm:$0xf]
      %v4145 = vld [vmem:[%s3 + $0x1b0] sm:$0xf]
      %v4146 = vld [vmem:[%s3 + $0x1b4] sm:$0xf]
      %v4147 = vld [vmem:[%s3 + $0x1b8] sm:$0xf]
      %v4148 = vld [vmem:[%s3 + $0x1bc] sm:$0xf]
      %v4149 = vld [vmem:[%s3 + $0x1c0] sm:$0xf]
      %v4150 = vld [vmem:[%s3 + $0x1c4] sm:$0xf]
      %v4151 = vld [vmem:[%s3 + $0x1c8] sm:$0xf]
      %v4152 = vld [vmem:[%s3 + $0x1cc] sm:$0xf]
      %v4153 = vld [vmem:[%s3 + $0x1d0] sm:$0xf]
      %v4154 = vld [vmem:[%s3 + $0x1d4] sm:$0xf]
      %v4155 = vld [vmem:[%s3 + $0x1d8] sm:$0xf]
      %v4156 = vld [vmem:[%s3 + $0x1dc] sm:$0xf]
      %v4157 = vld [vmem:[%s3 + $0x1e0] sm:$0xf]
      %v4158 = vld [vmem:[%s3 + $0x1e4] sm:$0xf]
      %v4159 = vld [vmem:[%s3 + $0x1e8] sm:$0xf]
      %v4160 = vld [vmem:[%s3 + $0x1ec] sm:$0xf]
      %v4161 = vld [vmem:[%s3 + $0x1f0] sm:$0xf]
      %v4162 = vld [vmem:[%s3 + $0x1f4] sm:$0xf]
      %v4163 = vld [vmem:[%s3 + $0x1f8] sm:$0xf]
      %v4164 = vld [vmem:[%s3 + $0x1fc] sm:$0xf]
      %v4197 = vunpack.c.l.b16 %v4133
      %v4198 = vunpack.c.l.b16 %v4134
      %v4199 = vunpack.c.l.b16 %v4135
      %v4200 = vunpack.c.l.b16 %v4136
      %v4201 = vunpack.c.l.b16 %v4137
      %v4202 = vunpack.c.l.b16 %v4138
      %v4203 = vunpack.c.l.b16 %v4139
      %v4204 = vunpack.c.l.b16 %v4140
      %v4205 = vunpack.c.l.b16 %v4141
      %v4206 = vunpack.c.l.b16 %v4142
      %v4207 = vunpack.c.l.b16 %v4143
      %v4208 = vunpack.c.l.b16 %v4144
      %v4209 = vunpack.c.l.b16 %v4145
      %v4210 = vunpack.c.l.b16 %v4146
      %v4211 = vunpack.c.l.b16 %v4147
      %v4212 = vunpack.c.l.b16 %v4148
      %v4213 = vunpack.c.l.b16 %v4149
      %v4214 = vunpack.c.l.b16 %v4150
      %v4215 = vunpack.c.l.b16 %v4151
      %v4216 = vunpack.c.l.b16 %v4152
      %v4217 = vunpack.c.l.b16 %v4153
      %v4218 = vunpack.c.l.b16 %v4154
      %v4219 = vunpack.c.l.b16 %v4155
      %v4220 = vunpack.c.l.b16 %v4156
      %v4221 = vunpack.c.l.b16 %v4157
      %v4222 = vunpack.c.l.b16 %v4158
      %v4223 = vunpack.c.l.b16 %v4159
      %v4224 = vunpack.c.l.b16 %v4160
      %v4225 = vunpack.c.l.b16 %v4161
      %v4226 = vunpack.c.l.b16 %v4162
      %v4227 = vunpack.c.l.b16 %v4163
      %v4228 = vunpack.c.l.b16 %v4164
      %v4229 = vpack.c.b16 %v4198, %v4197
      %v4230 = vpack.c.b16 %v4200, %v4199
      %v4231 = vpack.c.b16 %v4202, %v4201
      %v4232 = vpack.c.b16 %v4204, %v4203
      %v4233 = vpack.c.b16 %v4206, %v4205
      %v4234 = vpack.c.b16 %v4208, %v4207
      %v4235 = vpack.c.b16 %v4210, %v4209
      %v4236 = vpack.c.b16 %v4212, %v4211
      %v4237 = vpack.c.b16 %v4214, %v4213
      %v4238 = vpack.c.b16 %v4216, %v4215
      %v4239 = vpack.c.b16 %v4218, %v4217
      %v4240 = vpack.c.b16 %v4220, %v4219
      %v4241 = vpack.c.b16 %v4222, %v4221
      %v4242 = vpack.c.b16 %v4224, %v4223
      %v4243 = vpack.c.b16 %v4226, %v4225
      %v4244 = vpack.c.b16 %v4228, %v4227
      %4261 = vmatprep.subr.bf16.mxu0 0
      %4262 = vmatpush1.bf16.msra.mxu0 %v4229
      %4263 = vmatprep.subr.bf16.mxu0 0
      %4264 = vmatpush1.bf16.msra.mxu0 %v4230
      %4265 = vmatprep.subr.bf16.mxu0 0
      %4266 = vmatpush1.bf16.msra.mxu0 %v4231
      %4267 = vmatprep.subr.bf16.mxu0 0
      %4268 = vmatpush1.bf16.msra.mxu0 %v4232
      %4269 = vmatprep.subr.bf16.mxu0 0
      %4270 = vmatpush1.bf16.msra.mxu0 %v4233
      %4271 = vmatprep.subr.bf16.mxu0 0
      %4272 = vmatpush1.bf16.msra.mxu0 %v4234
      %4273 = vmatprep.subr.bf16.mxu0 0
      %4274 = vmatpush1.bf16.msra.mxu0 %v4235
      %4275 = vmatprep.subr.bf16.mxu0 0
      %4276 = vmatpush1.bf16.msra.mxu0 %v4236
      %4277 = vmatprep.subr.bf16.mxu0 0
      %4278 = vmatpush1.bf16.msra.mxu0 %v4237
      %4279 = vmatprep.subr.bf16.mxu0 0
      %4280 = vmatpush1.bf16.msra.mxu0 %v4238
      %4281 = vmatprep.subr.bf16.mxu0 0
      %4282 = vmatpush1.bf16.msra.mxu0 %v4239
      %4283 = vmatprep.subr.bf16.mxu0 0
      %4284 = vmatpush1.bf16.msra.mxu0 %v4240
      %4285 = vmatprep.subr.bf16.mxu0 0
      %4286 = vmatpush1.bf16.msra.mxu0 %v4241
      %4287 = vmatprep.subr.bf16.mxu0 0
      %4288 = vmatpush1.bf16.msra.mxu0 %v4242
      %4289 = vmatprep.subr.bf16.mxu0 0
      %4290 = vmatpush1.bf16.msra.mxu0 %v4243
      %4291 = vmatprep.subr.bf16.mxu0 0
      %4292 = vmatpush1.bf16.msra.mxu0 %v4244
      %4293 = vmatprep.mubr.bf16.mxu0 %v4102
      %4294 = vmatmul.mubr.bf16.gmra.mrb[0].mxu0 %v4101
      %v4295 = vpop.f32.mrb[0].mxu0
      %v4296 = vadd.f32 0.0, %v4295
      %v4297 = vpop.f32.mrb[0].mxu0
      %v4298 = vpop.f32.mrb[0].mxu0
      %v4299 = vadd.f32 0.0, %v4298
      %v4300 = vpop.f32.mrb[0].mxu0
      %4301 = vmatprep.mubr.bf16.mxu0 %v4104
      %4302 = vmatmul.mubr.bf16.gmra.mrb[0].mxu0 %v4103
      %v4303 = vpop.f32.mrb[0].mxu0
      %v4304 = vadd.f32 0.0, %v4303
      %v4305 = vpop.f32.mrb[0].mxu0
      %v4306 = vpop.f32.mrb[0].mxu0
      %v4307 = vadd.f32 0.0, %v4306
      %v4308 = vpop.f32.mrb[0].mxu0
      %4309 = vmatprep.mubr.bf16.mxu0 %v4106
      %4310 = vmatmul.mubr.bf16.gmra.mrb[0].mxu0 %v4105
      %v4311 = vpop.f32.mrb[0].mxu0
      %v4312 = vadd.f32 0.0, %v4311
      %v4313 = vpop.f32.mrb[0].mxu0
      %v4314 = vpop.f32.mrb[0].mxu0
      %v4315 = vadd.f32 0.0, %v4314
      %v4316 = vpop.f32.mrb[0].mxu0
      %4317 = vmatprep.mubr.bf16.mxu0 %v4108
      %4318 = vmatmul.mubr.bf16.gmra.mrb[0].mxu0 %v4107
      %v4319 = vpop.f32.mrb[0].mxu0
      %v4320 = vadd.f32 0.0, %v4319
      %v4321 = vpop.f32.mrb[0].mxu0
      %v4322 = vpop.f32.mrb[0].mxu0
      %v4323 = vadd.f32 0.0, %v4322
      %v4324 = vpop.f32.mrb[0].mxu0
      %4325 = vmatprep.mubr.bf16.mxu0 %v4110
      %4326 = vmatmul.mubr.bf16.gmra.mrb[0].mxu0 %v4109
      %v4327 = vpop.f32.mrb[0].mxu0
      %v4328 = vadd.f32 0.0, %v4327
      %v4329 = vpop.f32.mrb[0].mxu0
      %v4330 = vpop.f32.mrb[0].mxu0
      %v4331 = vadd.f32 0.0, %v4330
      %v4332 = vpop.f32.mrb[0].mxu0
      %4333 = vmatprep.mubr.bf16.mxu0 %v4112
      %4334 = vmatmul.mubr.bf16.gmra.mrb[0].mxu0 %v4111
      %v4335 = vpop.f32.mrb[0].mxu0
      %v4336 = vadd.f32 0.0, %v4335
      %v4337 = vpop.f32.mrb[0].mxu0
      %v4338 = vpop.f32.mrb[0].mxu0
      %v4339 = vadd.f32 0.0, %v4338
      %v4340 = vpop.f32.mrb[0].mxu0
      %4341 = vmatprep.mubr.bf16.mxu0 %v4114
      %4342 = vmatmul.mubr.bf16.gmra.mrb[0].mxu0 %v4113
      %v4343 = vpop.f32.mrb[0].mxu0
      %v4344 = vadd.f32 0.0, %v4343
      %v4345 = vpop.f32.mrb[0].mxu0
      %v4346 = vpop.f32.mrb[0].mxu0
      %v4347 = vadd.f32 0.0, %v4346
      %v4348 = vpop.f32.mrb[0].mxu0
      %4349 = vmatprep.mubr.bf16.mxu0 %v4116
      %4350 = vmatmul.mubr.bf16.gmra.mrb[0].mxu0 %v4115
      %v4351 = vpop.f32.mrb[0].mxu0
      %v4352 = vadd.f32 0.0, %v4351
      %v4353 = vpop.f32.mrb[0].mxu0
      %v4354 = vpop.f32.mrb[0].mxu0
      %v4355 = vadd.f32 0.0, %v4354
      %v4356 = vpop.f32.mrb[0].mxu0
      %4357 = vmatprep.mubr.bf16.mxu0 %v4118
      %4358 = vmatmul.mubr.bf16.gmra.mrb[0].mxu0 %v4117
      %v4359 = vpop.f32.mrb[0].mxu0
      %v4360 = vadd.f32 0.0, %v4359
      %v4361 = vpop.f32.mrb[0].mxu0
      %v4362 = vpop.f32.mrb[0].mxu0
      %v4363 = vadd.f32 0.0, %v4362
      %v4364 = vpop.f32.mrb[0].mxu0
      %4365 = vmatprep.mubr.bf16.mxu0 %v4120
      %4366 = vmatmul.mubr.bf16.gmra.mrb[0].mxu0 %v4119
      %v4367 = vpop.f32.mrb[0].mxu0
      %v4368 = vadd.f32 0.0, %v4367
      %v4369 = vpop.f32.mrb[0].mxu0
      %v4370 = vpop.f32.mrb[0].mxu0
      %v4371 = vadd.f32 0.0, %v4370
      %v4372 = vpop.f32.mrb[0].mxu0
      %4373 = vmatprep.mubr.bf16.mxu0 %v4122
      %4374 = vmatmul.mubr.bf16.gmra.mrb[0].mxu0 %v4121
      %v4375 = vpop.f32.mrb[0].mxu0
      %v4376 = vadd.f32 0.0, %v4375
      %v4377 = vpop.f32.mrb[0].mxu0
      %v4378 = vpop.f32.mrb[0].mxu0
      %v4379 = vadd.f32 0.0, %v4378
      %v4380 = vpop.f32.mrb[0].mxu0
      %4381 = vmatprep.mubr.bf16.mxu0 %v4124
      %4382 = vmatmul.mubr.bf16.gmra.mrb[0].mxu0 %v4123
      %v4383 = vpop.f32.mrb[0].mxu0
      %v4384 = vadd.f32 0.0, %v4383
      %v4385 = vpop.f32.mrb[0].mxu0
      %v4386 = vpop.f32.mrb[0].mxu0
      %v4387 = vadd.f32 0.0, %v4386
      %v4388 = vpop.f32.mrb[0].mxu0
      %4389 = vmatprep.mubr.bf16.mxu0 %v4126
      %4390 = vmatmul.mubr.bf16.gmra.mrb[0].mxu0 %v4125
      %v4391 = vpop.f32.mrb[0].mxu0
      %v4392 = vadd.f32 0.0, %v4391
      %v4393 = vpop.f32.mrb[0].mxu0
      %v4394 = vpop.f32.mrb[0].mxu0
      %v4395 = vadd.f32 0.0, %v4394
      %v4396 = vpop.f32.mrb[0].mxu0
      %4397 = vmatprep.mubr.bf16.mxu0 %v4128
      %4398 = vmatmul.mubr.bf16.gmra.mrb[0].mxu0 %v4127
      %v4399 = vpop.f32.mrb[0].mxu0
      %v4400 = vadd.f32 0.0, %v4399
      %v4401 = vpop.f32.mrb[0].mxu0
      %v4402 = vpop.f32.mrb[0].mxu0
      %v4403 = vadd.f32 0.0, %v4402
      %v4404 = vpop.f32.mrb[0].mxu0
      %4405 = vmatprep.mubr.bf16.mxu0 %v4130
      %4406 = vmatmul.mubr.bf16.gmra.mrb[0].mxu0 %v4129
      %v4407 = vpop.f32.mrb[0].mxu0
      %v4408 = vadd.f32 0.0, %v4407
      %v4409 = vpop.f32.mrb[0].mxu0
      %v4410 = vpop.f32.mrb[0].mxu0
      %v4411 = vadd.f32 0.0, %v4410
      %v4412 = vpop.f32.mrb[0].mxu0
      %4413 = vmatprep.mubr.bf16.mxu0 %v4132
      %4414 = vmatmul.mubr.bf16.gmra.mrb[0].mxu0 %v4131
      %v4415 = vpop.f32.mrb[0].mxu0
      %v4416 = vadd.f32 0.0, %v4415
      %v4417 = vpop.f32.mrb[0].mxu0
      %v4418 = vpop.f32.mrb[0].mxu0
      %v4419 = vadd.f32 0.0, %v4418
      %v4420 = vpop.f32.mrb[0].mxu0
      %4421 = vdwg.mxu0
      %v4422 = vld [vmem:[#allocation6] sm:$0xff]
      %v4423 = vld [vmem:[#allocation6 + $0x8] sm:$0xff]
      %v4424 = vld [vmem:[#allocation6 + $0x10] sm:$0xff]
      %v4425 = vld [vmem:[#allocation6 + $0x18] sm:$0xff]
      %v4426 = vld [vmem:[#allocation6 + $0x20] sm:$0xff]
      %v4427 = vld [vmem:[#allocation6 + $0x28] sm:$0xff]
      %v4428 = vld [vmem:[#allocation6 + $0x30] sm:$0xff]
      %v4429 = vld [vmem:[#allocation6 + $0x38] sm:$0xff]
      %v4430 = vld [vmem:[#allocation6 + $0x40] sm:$0xff]
      %v4431 = vld [vmem:[#allocation6 + $0x48] sm:$0xff]
      %v4432 = vld [vmem:[#allocation6 + $0x50] sm:$0xff]
      %v4433 = vld [vmem:[#allocation6 + $0x58] sm:$0xff]
      %v4434 = vld [vmem:[#allocation6 + $0x60] sm:$0xff]
      %v4435 = vld [vmem:[#allocation6 + $0x68] sm:$0xff]
      %v4436 = vld [vmem:[#allocation6 + $0x70] sm:$0xff]
      %v4437 = vld [vmem:[#allocation6 + $0x78] sm:$0xff]
      %v4438 = vld [vmem:[#allocation6 + $0x80] sm:$0xff]
      %v4439 = vld [vmem:[#allocation6 + $0x88] sm:$0xff]
      %v4440 = vld [vmem:[#allocation6 + $0x90] sm:$0xff]
      %v4441 = vld [vmem:[#allocation6 + $0x98] sm:$0xff]
      %v4442 = vld [vmem:[#allocation6 + $0xa0] sm:$0xff]
      %v4443 = vld [vmem:[#allocation6 + $0xa8] sm:$0xff]
      %v4444 = vld [vmem:[#allocation6 + $0xb0] sm:$0xff]
      %v4445 = vld [vmem:[#allocation6 + $0xb8] sm:$0xff]
      %v4446 = vld [vmem:[#allocation6 + $0xc0] sm:$0xff]
      %v4447 = vld [vmem:[#allocation6 + $0xc8] sm:$0xff]
      %v4448 = vld [vmem:[#allocation6 + $0xd0] sm:$0xff]
      %v4449 = vld [vmem:[#allocation6 + $0xd8] sm:$0xff]
      %v4450 = vld [vmem:[#allocation6 + $0xe0] sm:$0xff]
      %v4451 = vld [vmem:[#allocation6 + $0xe8] sm:$0xff]
      %v4452 = vld [vmem:[#allocation6 + $0xf0] sm:$0xff]
      %v4453 = vld [vmem:[#allocation6 + $0xf8] sm:$0xff]
      %v4454 = vadd.f32 %v4422, %v4296
      %v4455 = vadd.f32 %v4423, %v4299
      %v4456 = vadd.f32 %v4424, %v4304
      %v4457 = vadd.f32 %v4425, %v4307
      %v4458 = vadd.f32 %v4426, %v4312
      %v4459 = vadd.f32 %v4427, %v4315
      %v4460 = vadd.f32 %v4428, %v4320
      %v4461 = vadd.f32 %v4429, %v4323
      %v4462 = vadd.f32 %v4430, %v4328
      %v4463 = vadd.f32 %v4431, %v4331
      %v4464 = vadd.f32 %v4432, %v4336
      %v4465 = vadd.f32 %v4433, %v4339
      %v4466 = vadd.f32 %v4434, %v4344
      %v4467 = vadd.f32 %v4435, %v4347
      %v4468 = vadd.f32 %v4436, %v4352
      %v4469 = vadd.f32 %v4437, %v4355
      %v4470 = vadd.f32 %v4438, %v4360
      %v4471 = vadd.f32 %v4439, %v4363
      %v4472 = vadd.f32 %v4440, %v4368
      %v4473 = vadd.f32 %v4441, %v4371
      %v4474 = vadd.f32 %v4442, %v4376
      %v4475 = vadd.f32 %v4443, %v4379
      %v4476 = vadd.f32 %v4444, %v4384
      %v4477 = vadd.f32 %v4445, %v4387
      %v4478 = vadd.f32 %v4446, %v4392
      %v4479 = vadd.f32 %v4447, %v4395
      %v4480 = vadd.f32 %v4448, %v4400
      %v4481 = vadd.f32 %v4449, %v4403
      %v4482 = vadd.f32 %v4450, %v4408
      %v4483 = vadd.f32 %v4451, %v4411
      %v4484 = vadd.f32 %v4452, %v4416
      %v4485 = vadd.f32 %v4453, %v4419
      %4486 = vst.msk [vmem:[#allocation6] sm:$0xff] %vm3042, %v4454
      %4487 = vst.msk [vmem:[#allocation6 + $0x8] sm:$0xff] %vm3042, %v4455
      %4488 = vst.msk [vmem:[#allocation6 + $0x10] sm:$0xff] %vm3042, %v4456
      %4489 = vst.msk [vmem:[#allocation6 + $0x18] sm:$0xff] %vm3042, %v4457
      %4490 = vst.msk [vmem:[#allocation6 + $0x20] sm:$0xff] %vm3042, %v4458
      %4491 = vst.msk [vmem:[#allocation6 + $0x28] sm:$0xff] %vm3042, %v4459
      %4492 = vst.msk [vmem:[#allocation6 + $0x30] sm:$0xff] %vm3042, %v4460
      %4493 = vst.msk [vmem:[#allocation6 + $0x38] sm:$0xff] %vm3042, %v4461
      %4494 = vst.msk [vmem:[#allocation6 + $0x40] sm:$0xff] %vm3042, %v4462
      %4495 = vst.msk [vmem:[#allocation6 + $0x48] sm:$0xff] %vm3042, %v4463
      %4496 = vst.msk [vmem:[#allocation6 + $0x50] sm:$0xff] %vm3042, %v4464
      %4497 = vst.msk [vmem:[#allocation6 + $0x58] sm:$0xff] %vm3042, %v4465
      %4498 = vst.msk [vmem:[#allocation6 + $0x60] sm:$0xff] %vm3042, %v4466
      %4499 = vst.msk [vmem:[#allocation6 + $0x68] sm:$0xff] %vm3042, %v4467
      %4500 = vst.msk [vmem:[#allocation6 + $0x70] sm:$0xff] %vm3042, %v4468
      %4501 = vst.msk [vmem:[#allocation6 + $0x78] sm:$0xff] %vm3042, %v4469
      %4502 = vst.msk [vmem:[#allocation6 + $0x80] sm:$0xff] %vm3042, %v4470
      %4503 = vst.msk [vmem:[#allocation6 + $0x88] sm:$0xff] %vm3042, %v4471
      %4504 = vst.msk [vmem:[#allocation6 + $0x90] sm:$0xff] %vm3042, %v4472
      %4505 = vst.msk [vmem:[#allocation6 + $0x98] sm:$0xff] %vm3042, %v4473
      %4506 = vst.msk [vmem:[#allocation6 + $0xa0] sm:$0xff] %vm3042, %v4474
      %4507 = vst.msk [vmem:[#allocation6 + $0xa8] sm:$0xff] %vm3042, %v4475
      %4508 = vst.msk [vmem:[#allocation6 + $0xb0] sm:$0xff] %vm3042, %v4476
      %4509 = vst.msk [vmem:[#allocation6 + $0xb8] sm:$0xff] %vm3042, %v4477
      %4510 = vst.msk [vmem:[#allocation6 + $0xc0] sm:$0xff] %vm3042, %v4478
      %4511 = vst.msk [vmem:[#allocation6 + $0xc8] sm:$0xff] %vm3042, %v4479
      %4512 = vst.msk [vmem:[#allocation6 + $0xd0] sm:$0xff] %vm3042, %v4480
      %4513 = vst.msk [vmem:[#allocation6 + $0xd8] sm:$0xff] %vm3042, %v4481
      %4514 = vst.msk [vmem:[#allocation6 + $0xe0] sm:$0xff] %vm3042, %v4482
      %4515 = vst.msk [vmem:[#allocation6 + $0xe8] sm:$0xff] %vm3042, %v4483
      %4516 = vst.msk [vmem:[#allocation6 + $0xf0] sm:$0xff] %vm3042, %v4484
      %4517 = vst.msk [vmem:[#allocation6 + $0xf8] sm:$0xff] %vm3042, %v4485
      %v4518 = vld [vmem:[%s2574 + $0x2] sm:$0xff]
      %v4519 = vld [vmem:[%s2574 + $0xa] sm:$0xff]
      %v4520 = vld [vmem:[%s2574 + $0x1a] sm:$0xff]
      %v4521 = vld [vmem:[%s2574 + $0x22] sm:$0xff]
      %v4522 = vld [vmem:[%s2574 + $0x32] sm:$0xff]
      %v4523 = vld [vmem:[%s2574 + $0x3a] sm:$0xff]
      %v4524 = vld [vmem:[%s2574 + $0x4a] sm:$0xff]
      %v4525 = vld [vmem:[%s2574 + $0x52] sm:$0xff]
      %v4526 = vld [vmem:[%s2574 + $0x62] sm:$0xff]
      %v4527 = vld [vmem:[%s2574 + $0x6a] sm:$0xff]
      %v4528 = vld [vmem:[%s2574 + $0x7a] sm:$0xff]
      %v4529 = vld [vmem:[%s2574 + $0x82] sm:$0xff]
      %v4530 = vld [vmem:[%s2574 + $0x92] sm:$0xff]
      %v4531 = vld [vmem:[%s2574 + $0x9a] sm:$0xff]
      %v4532 = vld [vmem:[%s2574 + $0xaa] sm:$0xff]
      %v4533 = vld [vmem:[%s2574 + $0xb2] sm:$0xff]
      %v4534 = vld [vmem:[%s2574 + $0xc2] sm:$0xff]
      %v4535 = vld [vmem:[%s2574 + $0xca] sm:$0xff]
      %v4536 = vld [vmem:[%s2574 + $0xda] sm:$0xff]
      %v4537 = vld [vmem:[%s2574 + $0xe2] sm:$0xff]
      %v4538 = vld [vmem:[%s2574 + $0xf2] sm:$0xff]
      %v4539 = vld [vmem:[%s2574 + $0xfa] sm:$0xff]
      %v4540 = vld [vmem:[%s2574 + $0x10a] sm:$0xff]
      %v4541 = vld [vmem:[%s2574 + $0x112] sm:$0xff]
      %v4542 = vld [vmem:[%s2574 + $0x122] sm:$0xff]
      %v4543 = vld [vmem:[%s2574 + $0x12a] sm:$0xff]
      %v4544 = vld [vmem:[%s2574 + $0x13a] sm:$0xff]
      %v4545 = vld [vmem:[%s2574 + $0x142] sm:$0xff]
      %v4546 = vld [vmem:[%s2574 + $0x152] sm:$0xff]
      %v4547 = vld [vmem:[%s2574 + $0x15a] sm:$0xff]
      %v4548 = vld [vmem:[%s2574 + $0x16a] sm:$0xff]
      %v4549 = vld [vmem:[%s2574 + $0x172] sm:$0xff]
      %v4550 = vpack.c.bf16 %v4519, %v4518
      %v4551 = vpack.c.bf16 %v4521, %v4520
      %v4552 = vpack.c.bf16 %v4523, %v4522
      %v4553 = vpack.c.bf16 %v4525, %v4524
      %v4554 = vpack.c.bf16 %v4527, %v4526
      %v4555 = vpack.c.bf16 %v4529, %v4528
      %v4556 = vpack.c.bf16 %v4531, %v4530
      %v4557 = vpack.c.bf16 %v4533, %v4532
      %v4558 = vpack.c.bf16 %v4535, %v4534
      %v4559 = vpack.c.bf16 %v4537, %v4536
      %v4560 = vpack.c.bf16 %v4539, %v4538
      %v4561 = vpack.c.bf16 %v4541, %v4540
      %v4562 = vpack.c.bf16 %v4543, %v4542
      %v4563 = vpack.c.bf16 %v4545, %v4544
      %v4564 = vpack.c.bf16 %v4547, %v4546
      %v4565 = vpack.c.bf16 %v4549, %v4548
      %v4566 = vld [vmem:[%s3 + $0x200] sm:$0xf]
      %v4567 = vld [vmem:[%s3 + $0x204] sm:$0xf]
      %v4568 = vld [vmem:[%s3 + $0x208] sm:$0xf]
      %v4569 = vld [vmem:[%s3 + $0x20c] sm:$0xf]
      %v4570 = vld [vmem:[%s3 + $0x210] sm:$0xf]
      %v4571 = vld [vmem:[%s3 + $0x214] sm:$0xf]
      %v4572 = vld [vmem:[%s3 + $0x218] sm:$0xf]
      %v4573 = vld [vmem:[%s3 + $0x21c] sm:$0xf]
      %v4574 = vld [vmem:[%s3 + $0x220] sm:$0xf]
      %v4575 = vld [vmem:[%s3 + $0x224] sm:$0xf]
      %v4576 = vld [vmem:[%s3 + $0x228] sm:$0xf]
      %v4577 = vld [vmem:[%s3 + $0x22c] sm:$0xf]
      %v4578 = vld [vmem:[%s3 + $0x230] sm:$0xf]
      %v4579 = vld [vmem:[%s3 + $0x234] sm:$0xf]
      %v4580 = vld [vmem:[%s3 + $0x238] sm:$0xf]
      %v4581 = vld [vmem:[%s3 + $0x23c] sm:$0xf]
      %v4598 = vunpack.c.l.b16 %v4566
      %v4599 = vunpack.c.l.b16 %v4567
      %v4600 = vunpack.c.l.b16 %v4568
      %v4601 = vunpack.c.l.b16 %v4569
      %v4602 = vunpack.c.l.b16 %v4570
      %v4603 = vunpack.c.l.b16 %v4571
      %v4604 = vunpack.c.l.b16 %v4572
      %v4605 = vunpack.c.l.b16 %v4573
      %v4606 = vunpack.c.l.b16 %v4574
      %v4607 = vunpack.c.l.b16 %v4575
      %v4608 = vunpack.c.l.b16 %v4576
      %v4609 = vunpack.c.l.b16 %v4577
      %v4610 = vunpack.c.l.b16 %v4578
      %v4611 = vunpack.c.l.b16 %v4579
      %v4612 = vunpack.c.l.b16 %v4580
      %v4613 = vunpack.c.l.b16 %v4581
      %v4614 = vpack.c.b16 %v4599, %v4598
      %v4615 = vpack.c.b16 %v4601, %v4600
      %v4616 = vpack.c.b16 %v4603, %v4602
      %v4617 = vpack.c.b16 %v4605, %v4604
      %v4618 = vpack.c.b16 %v4607, %v4606
      %v4619 = vpack.c.b16 %v4609, %v4608
      %v4620 = vpack.c.b16 %v4611, %v4610
      %v4621 = vpack.c.b16 %v4613, %v4612
      %4630 = vmatprep.subr.bf16.mxu0 0
      %4631 = vmatpush1.bf16.msra.mxu0 %v4614
      %4632 = vmatprep.subr.bf16.mxu0 0
      %4633 = vmatpush1.bf16.msra.mxu0 %v4615
      %4634 = vmatprep.subr.bf16.mxu0 0
      %4635 = vmatpush1.bf16.msra.mxu0 %v4616
      %4636 = vmatprep.subr.bf16.mxu0 0
      %4637 = vmatpush1.bf16.msra.mxu0 %v4617
      %4638 = vmatprep.subr.bf16.mxu0 0
      %4639 = vmatpush1.bf16.msra.mxu0 %v4618
      %4640 = vmatprep.subr.bf16.mxu0 0
      %4641 = vmatpush1.bf16.msra.mxu0 %v4619
      %4642 = vmatprep.subr.bf16.mxu0 0
      %4643 = vmatpush1.bf16.msra.mxu0 %v4620
      %4644 = vmatprep.subr.bf16.mxu0 0
      %4645 = vmatpush1.bf16.msra.mxu0 %v4621
      %4646 = vmatprep.subr.bf16.mxu0 0
      %4647 = vmatpush1.bf16.msra.mxu0 0
      %4648 = vmatprep.subr.bf16.mxu0 0
      %4649 = vmatpush1.bf16.msra.mxu0 0
      %4650 = vmatprep.subr.bf16.mxu0 0
      %4651 = vmatpush1.bf16.msra.mxu0 0
      %4652 = vmatprep.subr.bf16.mxu0 0
      %4653 = vmatpush1.bf16.msra.mxu0 0
      %4654 = vmatprep.subr.bf16.mxu0 0
      %4655 = vmatpush1.bf16.msra.mxu0 0
      %4656 = vmatprep.subr.bf16.mxu0 0
      %4657 = vmatpush1.bf16.msra.mxu0 0
      %4658 = vmatprep.subr.bf16.mxu0 0
      %4659 = vmatpush1.bf16.msra.mxu0 0
      %4660 = vmatprep.subr.bf16.mxu0 0
      %4661 = vmatpush1.bf16.msra.mxu0 0
      %4662 = vmatprep.mubr.bf16.mxu0 0
      %4663 = vmatmul.mubr.bf16.gmra.mrb[0].mxu0 %v4550
      %v4664 = vpop.f32.mrb[0].mxu0
      %v4665 = vadd.f32 0.0, %v4664
      %v4666 = vpop.f32.mrb[0].mxu0
      %v4667 = vpop.f32.mrb[0].mxu0
      %v4668 = vadd.f32 0.0, %v4667
      %v4669 = vpop.f32.mrb[0].mxu0
      %4670 = vmatprep.mubr.bf16.mxu0 0
      %4671 = vmatmul.mubr.bf16.gmra.mrb[0].mxu0 %v4551
      %v4672 = vpop.f32.mrb[0].mxu0
      %v4673 = vadd.f32 0.0, %v4672
      %v4674 = vpop.f32.mrb[0].mxu0
      %v4675 = vpop.f32.mrb[0].mxu0
      %v4676 = vadd.f32 0.0, %v4675
      %v4677 = vpop.f32.mrb[0].mxu0
      %4678 = vmatprep.mubr.bf16.mxu0 0
      %4679 = vmatmul.mubr.bf16.gmra.mrb[0].mxu0 %v4552
      %v4680 = vpop.f32.mrb[0].mxu0
      %v4681 = vadd.f32 0.0, %v4680
      %v4682 = vpop.f32.mrb[0].mxu0
      %v4683 = vpop.f32.mrb[0].mxu0
      %v4684 = vadd.f32 0.0, %v4683
      %v4685 = vpop.f32.mrb[0].mxu0
      %4686 = vmatprep.mubr.bf16.mxu0 0
      %4687 = vmatmul.mubr.bf16.gmra.mrb[0].mxu0 %v4553
      %v4688 = vpop.f32.mrb[0].mxu0
      %v4689 = vadd.f32 0.0, %v4688
      %v4690 = vpop.f32.mrb[0].mxu0
      %v4691 = vpop.f32.mrb[0].mxu0
      %v4692 = vadd.f32 0.0, %v4691
      %v4693 = vpop.f32.mrb[0].mxu0
      %4694 = vmatprep.mubr.bf16.mxu0 0
      %4695 = vmatmul.mubr.bf16.gmra.mrb[0].mxu0 %v4554
      %v4696 = vpop.f32.mrb[0].mxu0
      %v4697 = vadd.f32 0.0, %v4696
      %v4698 = vpop.f32.mrb[0].mxu0
      %v4699 = vpop.f32.mrb[0].mxu0
      %v4700 = vadd.f32 0.0, %v4699
      %v4701 = vpop.f32.mrb[0].mxu0
      %4702 = vmatprep.mubr.bf16.mxu0 0
      %4703 = vmatmul.mubr.bf16.gmra.mrb[0].mxu0 %v4555
      %v4704 = vpop.f32.mrb[0].mxu0
      %v4705 = vadd.f32 0.0, %v4704
      %v4706 = vpop.f32.mrb[0].mxu0
      %v4707 = vpop.f32.mrb[0].mxu0
      %v4708 = vadd.f32 0.0, %v4707
      %v4709 = vpop.f32.mrb[0].mxu0
      %4710 = vmatprep.mubr.bf16.mxu0 0
      %4711 = vmatmul.mubr.bf16.gmra.mrb[0].mxu0 %v4556
      %v4712 = vpop.f32.mrb[0].mxu0
      %v4713 = vadd.f32 0.0, %v4712
      %v4714 = vpop.f32.mrb[0].mxu0
      %v4715 = vpop.f32.mrb[0].mxu0
      %v4716 = vadd.f32 0.0, %v4715
      %v4717 = vpop.f32.mrb[0].mxu0
      %4718 = vmatprep.mubr.bf16.mxu0 0
      %4719 = vmatmul.mubr.bf16.gmra.mrb[0].mxu0 %v4557
      %v4720 = vpop.f32.mrb[0].mxu0
      %v4721 = vadd.f32 0.0, %v4720
      %v4722 = vpop.f32.mrb[0].mxu0
      %v4723 = vpop.f32.mrb[0].mxu0
      %v4724 = vadd.f32 0.0, %v4723
      %v4725 = vpop.f32.mrb[0].mxu0
      %4726 = vmatprep.mubr.bf16.mxu0 0
      %4727 = vmatmul.mubr.bf16.gmra.mrb[0].mxu0 %v4558
      %v4728 = vpop.f32.mrb[0].mxu0
      %v4729 = vadd.f32 0.0, %v4728
      %v4730 = vpop.f32.mrb[0].mxu0
      %v4731 = vpop.f32.mrb[0].mxu0
      %v4732 = vadd.f32 0.0, %v4731
      %v4733 = vpop.f32.mrb[0].mxu0
      %4734 = vmatprep.mubr.bf16.mxu0 0
      %4735 = vmatmul.mubr.bf16.gmra.mrb[0].mxu0 %v4559
      %v4736 = vpop.f32.mrb[0].mxu0
      %v4737 = vadd.f32 0.0, %v4736
      %v4738 = vpop.f32.mrb[0].mxu0
      %v4739 = vpop.f32.mrb[0].mxu0
      %v4740 = vadd.f32 0.0, %v4739
      %v4741 = vpop.f32.mrb[0].mxu0
      %4742 = vmatprep.mubr.bf16.mxu0 0
      %4743 = vmatmul.mubr.bf16.gmra.mrb[0].mxu0 %v4560
      %v4744 = vpop.f32.mrb[0].mxu0
      %v4745 = vadd.f32 0.0, %v4744
      %v4746 = vpop.f32.mrb[0].mxu0
      %v4747 = vpop.f32.mrb[0].mxu0
      %v4748 = vadd.f32 0.0, %v4747
      %v4749 = vpop.f32.mrb[0].mxu0
      %4750 = vmatprep.mubr.bf16.mxu0 0
      %4751 = vmatmul.mubr.bf16.gmra.mrb[0].mxu0 %v4561
      %v4752 = vpop.f32.mrb[0].mxu0
      %v4753 = vadd.f32 0.0, %v4752
      %v4754 = vpop.f32.mrb[0].mxu0
      %v4755 = vpop.f32.mrb[0].mxu0
      %v4756 = vadd.f32 0.0, %v4755
      %v4757 = vpop.f32.mrb[0].mxu0
      %4758 = vmatprep.mubr.bf16.mxu0 0
      %4759 = vmatmul.mubr.bf16.gmra.mrb[0].mxu0 %v4562
      %v4760 = vpop.f32.mrb[0].mxu0
      %v4761 = vadd.f32 0.0, %v4760
      %v4762 = vpop.f32.mrb[0].mxu0
      %v4763 = vpop.f32.mrb[0].mxu0
      %v4764 = vadd.f32 0.0, %v4763
      %v4765 = vpop.f32.mrb[0].mxu0
      %4766 = vmatprep.mubr.bf16.mxu0 0
      %4767 = vmatmul.mubr.bf16.gmra.mrb[0].mxu0 %v4563
      %v4768 = vpop.f32.mrb[0].mxu0
      %v4769 = vadd.f32 0.0, %v4768
      %v4770 = vpop.f32.mrb[0].mxu0
      %v4771 = vpop.f32.mrb[0].mxu0
      %v4772 = vadd.f32 0.0, %v4771
      %v4773 = vpop.f32.mrb[0].mxu0
      %4774 = vmatprep.mubr.bf16.mxu0 0
      %4775 = vmatmul.mubr.bf16.gmra.mrb[0].mxu0 %v4564
      %v4776 = vpop.f32.mrb[0].mxu0
      %v4777 = vadd.f32 0.0, %v4776
      %v4778 = vpop.f32.mrb[0].mxu0
      %v4779 = vpop.f32.mrb[0].mxu0
      %v4780 = vadd.f32 0.0, %v4779
      %v4781 = vpop.f32.mrb[0].mxu0
      %4782 = vmatprep.mubr.bf16.mxu0 0
      %4783 = vmatmul.mubr.bf16.gmra.mrb[0].mxu0 %v4565
      %v4784 = vpop.f32.mrb[0].mxu0
      %v4785 = vadd.f32 0.0, %v4784
      %v4786 = vpop.f32.mrb[0].mxu0
      %v4787 = vpop.f32.mrb[0].mxu0
      %v4788 = vadd.f32 0.0, %v4787
      %v4789 = vpop.f32.mrb[0].mxu0
      %4790 = vdwg.mxu0
      %v4791 = vld [vmem:[#allocation6] sm:$0xff]
      %v4792 = vld [vmem:[#allocation6 + $0x8] sm:$0xff]
      %v4793 = vld [vmem:[#allocation6 + $0x10] sm:$0xff]
      %v4794 = vld [vmem:[#allocation6 + $0x18] sm:$0xff]
      %v4795 = vld [vmem:[#allocation6 + $0x20] sm:$0xff]
      %v4796 = vld [vmem:[#allocation6 + $0x28] sm:$0xff]
      %v4797 = vld [vmem:[#allocation6 + $0x30] sm:$0xff]
      %v4798 = vld [vmem:[#allocation6 + $0x38] sm:$0xff]
      %v4799 = vld [vmem:[#allocation6 + $0x40] sm:$0xff]
      %v4800 = vld [vmem:[#allocation6 + $0x48] sm:$0xff]
      %v4801 = vld [vmem:[#allocation6 + $0x50] sm:$0xff]
      %v4802 = vld [vmem:[#allocation6 + $0x58] sm:$0xff]
      %v4803 = vld [vmem:[#allocation6 + $0x60] sm:$0xff]
      %v4804 = vld [vmem:[#allocation6 + $0x68] sm:$0xff]
      %v4805 = vld [vmem:[#allocation6 + $0x70] sm:$0xff]
      %v4806 = vld [vmem:[#allocation6 + $0x78] sm:$0xff]
      %v4807 = vld [vmem:[#allocation6 + $0x80] sm:$0xff]
      %v4808 = vld [vmem:[#allocation6 + $0x88] sm:$0xff]
      %v4809 = vld [vmem:[#allocation6 + $0x90] sm:$0xff]
      %v4810 = vld [vmem:[#allocation6 + $0x98] sm:$0xff]
      %v4811 = vld [vmem:[#allocation6 + $0xa0] sm:$0xff]
      %v4812 = vld [vmem:[#allocation6 + $0xa8] sm:$0xff]
      %v4813 = vld [vmem:[#allocation6 + $0xb0] sm:$0xff]
      %v4814 = vld [vmem:[#allocation6 + $0xb8] sm:$0xff]
      %v4815 = vld [vmem:[#allocation6 + $0xc0] sm:$0xff]
      %v4816 = vld [vmem:[#allocation6 + $0xc8] sm:$0xff]
      %v4817 = vld [vmem:[#allocation6 + $0xd0] sm:$0xff]
      %v4818 = vld [vmem:[#allocation6 + $0xd8] sm:$0xff]
      %v4819 = vld [vmem:[#allocation6 + $0xe0] sm:$0xff]
      %v4820 = vld [vmem:[#allocation6 + $0xe8] sm:$0xff]
      %v4821 = vld [vmem:[#allocation6 + $0xf0] sm:$0xff]
      %v4822 = vld [vmem:[#allocation6 + $0xf8] sm:$0xff]
      %v4823 = vadd.f32 %v4791, %v4665
      %v4824 = vadd.f32 %v4792, %v4668
      %v4825 = vadd.f32 %v4793, %v4673
      %v4826 = vadd.f32 %v4794, %v4676
      %v4827 = vadd.f32 %v4795, %v4681
      %v4828 = vadd.f32 %v4796, %v4684
      %v4829 = vadd.f32 %v4797, %v4689
      %v4830 = vadd.f32 %v4798, %v4692
      %v4831 = vadd.f32 %v4799, %v4697
      %v4832 = vadd.f32 %v4800, %v4700
      %v4833 = vadd.f32 %v4801, %v4705
      %v4834 = vadd.f32 %v4802, %v4708
      %v4835 = vadd.f32 %v4803, %v4713
      %v4836 = vadd.f32 %v4804, %v4716
      %v4837 = vadd.f32 %v4805, %v4721
      %v4838 = vadd.f32 %v4806, %v4724
      %v4839 = vadd.f32 %v4807, %v4729
      %v4840 = vadd.f32 %v4808, %v4732
      %v4841 = vadd.f32 %v4809, %v4737
      %v4842 = vadd.f32 %v4810, %v4740
      %v4843 = vadd.f32 %v4811, %v4745
      %v4844 = vadd.f32 %v4812, %v4748
      %v4845 = vadd.f32 %v4813, %v4753
      %v4846 = vadd.f32 %v4814, %v4756
      %v4847 = vadd.f32 %v4815, %v4761
      %v4848 = vadd.f32 %v4816, %v4764
      %v4849 = vadd.f32 %v4817, %v4769
      %v4850 = vadd.f32 %v4818, %v4772
      %v4851 = vadd.f32 %v4819, %v4777
      %v4852 = vadd.f32 %v4820, %v4780
      %v4853 = vadd.f32 %v4821, %v4785
      %v4854 = vadd.f32 %v4822, %v4788
      %4855 = vst.msk [vmem:[#allocation6] sm:$0xff] %vm3042, %v4823
      %4856 = vst.msk [vmem:[#allocation6 + $0x8] sm:$0xff] %vm3042, %v4824
      %4857 = vst.msk [vmem:[#allocation6 + $0x10] sm:$0xff] %vm3042, %v4825
      %4858 = vst.msk [vmem:[#allocation6 + $0x18] sm:$0xff] %vm3042, %v4826
      %4859 = vst.msk [vmem:[#allocation6 + $0x20] sm:$0xff] %vm3042, %v4827
      %4860 = vst.msk [vmem:[#allocation6 + $0x28] sm:$0xff] %vm3042, %v4828
      %4861 = vst.msk [vmem:[#allocation6 + $0x30] sm:$0xff] %vm3042, %v4829
      %4862 = vst.msk [vmem:[#allocation6 + $0x38] sm:$0xff] %vm3042, %v4830
      %4863 = vst.msk [vmem:[#allocation6 + $0x40] sm:$0xff] %vm3042, %v4831
      %4864 = vst.msk [vmem:[#allocation6 + $0x48] sm:$0xff] %vm3042, %v4832
      %4865 = vst.msk [vmem:[#allocation6 + $0x50] sm:$0xff] %vm3042, %v4833
      %4866 = vst.msk [vmem:[#allocation6 + $0x58] sm:$0xff] %vm3042, %v4834
      %4867 = vst.msk [vmem:[#allocation6 + $0x60] sm:$0xff] %vm3042, %v4835
      %4868 = vst.msk [vmem:[#allocation6 + $0x68] sm:$0xff] %vm3042, %v4836
      %4869 = vst.msk [vmem:[#allocation6 + $0x70] sm:$0xff] %vm3042, %v4837
      %4870 = vst.msk [vmem:[#allocation6 + $0x78] sm:$0xff] %vm3042, %v4838
      %4871 = vst.msk [vmem:[#allocation6 + $0x80] sm:$0xff] %vm3042, %v4839
      %4872 = vst.msk [vmem:[#allocation6 + $0x88] sm:$0xff] %vm3042, %v4840
      %4873 = vst.msk [vmem:[#allocation6 + $0x90] sm:$0xff] %vm3042, %v4841
      %4874 = vst.msk [vmem:[#allocation6 + $0x98] sm:$0xff] %vm3042, %v4842
      %4875 = vst.msk [vmem:[#allocation6 + $0xa0] sm:$0xff] %vm3042, %v4843
      %4876 = vst.msk [vmem:[#allocation6 + $0xa8] sm:$0xff] %vm3042, %v4844
      %4877 = vst.msk [vmem:[#allocation6 + $0xb0] sm:$0xff] %vm3042, %v4845
      %4878 = vst.msk [vmem:[#allocation6 + $0xb8] sm:$0xff] %vm3042, %v4846
      %4879 = vst.msk [vmem:[#allocation6 + $0xc0] sm:$0xff] %vm3042, %v4847
      %4880 = vst.msk [vmem:[#allocation6 + $0xc8] sm:$0xff] %vm3042, %v4848
      %4881 = vst.msk [vmem:[#allocation6 + $0xd0] sm:$0xff] %vm3042, %v4849
      %4882 = vst.msk [vmem:[#allocation6 + $0xd8] sm:$0xff] %vm3042, %v4850
      %4883 = vst.msk [vmem:[#allocation6 + $0xe0] sm:$0xff] %vm3042, %v4851
      %4884 = vst.msk [vmem:[#allocation6 + $0xe8] sm:$0xff] %vm3042, %v4852
      %4885 = vst.msk [vmem:[#allocation6 + $0xf0] sm:$0xff] %vm3042, %v4853
      %4886 = vst.msk [vmem:[#allocation6 + $0xf8] sm:$0xff] %vm3042, %v4854
      %v4887 = vld [vmem:[#allocation6] sm:$0xff]
      %v4888 = vld [vmem:[#allocation6 + $0x8] sm:$0xff]
      %v4889 = vld [vmem:[#allocation6 + $0x10] sm:$0xff]
      %v4890 = vld [vmem:[#allocation6 + $0x18] sm:$0xff]
      %v4891 = vld [vmem:[#allocation6 + $0x20] sm:$0xff]
      %v4892 = vld [vmem:[#allocation6 + $0x28] sm:$0xff]
      %v4893 = vld [vmem:[#allocation6 + $0x30] sm:$0xff]
      %v4894 = vld [vmem:[#allocation6 + $0x38] sm:$0xff]
      %v4895 = vld [vmem:[#allocation6 + $0x40] sm:$0xff]
      %v4896 = vld [vmem:[#allocation6 + $0x48] sm:$0xff]
      %v4897 = vld [vmem:[#allocation6 + $0x50] sm:$0xff]
      %v4898 = vld [vmem:[#allocation6 + $0x58] sm:$0xff]
      %v4899 = vld [vmem:[#allocation6 + $0x60] sm:$0xff]
      %v4900 = vld [vmem:[#allocation6 + $0x68] sm:$0xff]
      %v4901 = vld [vmem:[#allocation6 + $0x70] sm:$0xff]
      %v4902 = vld [vmem:[#allocation6 + $0x78] sm:$0xff]
      %v4903 = vld [vmem:[#allocation6 + $0x80] sm:$0xff]
      %v4904 = vld [vmem:[#allocation6 + $0x88] sm:$0xff]
      %v4905 = vld [vmem:[#allocation6 + $0x90] sm:$0xff]
      %v4906 = vld [vmem:[#allocation6 + $0x98] sm:$0xff]
      %v4907 = vld [vmem:[#allocation6 + $0xa0] sm:$0xff]
      %v4908 = vld [vmem:[#allocation6 + $0xa8] sm:$0xff]
      %v4909 = vld [vmem:[#allocation6 + $0xb0] sm:$0xff]
      %v4910 = vld [vmem:[#allocation6 + $0xb8] sm:$0xff]
      %v4911 = vld [vmem:[#allocation6 + $0xc0] sm:$0xff]
      %v4912 = vld [vmem:[#allocation6 + $0xc8] sm:$0xff]
      %v4913 = vld [vmem:[#allocation6 + $0xd0] sm:$0xff]
      %v4914 = vld [vmem:[#allocation6 + $0xd8] sm:$0xff]
      %v4915 = vld [vmem:[#allocation6 + $0xe0] sm:$0xff]
      %v4916 = vld [vmem:[#allocation6 + $0xe8] sm:$0xff]
      %v4917 = vld [vmem:[#allocation6 + $0xf0] sm:$0xff]
      %v4918 = vld [vmem:[#allocation6 + $0xf8] sm:$0xff]
      %vm4919 = vcmp.ge.f32.partialorder %v4887, 0.0
      %vm4920 = vcmp.ge.f32.partialorder %v4888, 0.0
      %vm4921 = vcmp.ge.f32.partialorder %v4889, 0.0
      %vm4922 = vcmp.ge.f32.partialorder %v4890, 0.0
      %vm4923 = vcmp.ge.f32.partialorder %v4891, 0.0
      %vm4924 = vcmp.ge.f32.partialorder %v4892, 0.0
      %vm4925 = vcmp.ge.f32.partialorder %v4893, 0.0
      %vm4926 = vcmp.ge.f32.partialorder %v4894, 0.0
      %vm4927 = vcmp.ge.f32.partialorder %v4895, 0.0
      %vm4928 = vcmp.ge.f32.partialorder %v4896, 0.0
      %vm4929 = vcmp.ge.f32.partialorder %v4897, 0.0
      %vm4930 = vcmp.ge.f32.partialorder %v4898, 0.0
      %vm4931 = vcmp.ge.f32.partialorder %v4899, 0.0
      %vm4932 = vcmp.ge.f32.partialorder %v4900, 0.0
      %vm4933 = vcmp.ge.f32.partialorder %v4901, 0.0
      %vm4934 = vcmp.ge.f32.partialorder %v4902, 0.0
      %vm4935 = vcmp.ge.f32.partialorder %v4903, 0.0
      %vm4936 = vcmp.ge.f32.partialorder %v4904, 0.0
      %vm4937 = vcmp.ge.f32.partialorder %v4905, 0.0
      %vm4938 = vcmp.ge.f32.partialorder %v4906, 0.0
      %vm4939 = vcmp.ge.f32.partialorder %v4907, 0.0
      %vm4940 = vcmp.ge.f32.partialorder %v4908, 0.0
      %vm4941 = vcmp.ge.f32.partialorder %v4909, 0.0
      %vm4942 = vcmp.ge.f32.partialorder %v4910, 0.0
      %vm4943 = vcmp.ge.f32.partialorder %v4911, 0.0
      %vm4944 = vcmp.ge.f32.partialorder %v4912, 0.0
      %vm4945 = vcmp.ge.f32.partialorder %v4913, 0.0
      %vm4946 = vcmp.ge.f32.partialorder %v4914, 0.0
      %vm4947 = vcmp.ge.f32.partialorder %v4915, 0.0
      %vm4948 = vcmp.ge.f32.partialorder %v4916, 0.0
      %vm4949 = vcmp.ge.f32.partialorder %v4917, 0.0
      %vm4950 = vcmp.ge.f32.partialorder %v4918, 0.0
      %v4951 = vmul.f32 %v4887, 0.1
      %v4952 = vmul.f32 %v4888, 0.1
      %v4953 = vmul.f32 %v4889, 0.1
      %v4954 = vmul.f32 %v4890, 0.1
      %v4955 = vmul.f32 %v4891, 0.1
      %v4956 = vmul.f32 %v4892, 0.1
      %v4957 = vmul.f32 %v4893, 0.1
      %v4958 = vmul.f32 %v4894, 0.1
      %v4959 = vmul.f32 %v4895, 0.1
      %v4960 = vmul.f32 %v4896, 0.1
      %v4961 = vmul.f32 %v4897, 0.1
      %v4962 = vmul.f32 %v4898, 0.1
      %v4963 = vmul.f32 %v4899, 0.1
      %v4964 = vmul.f32 %v4900, 0.1
      %v4965 = vmul.f32 %v4901, 0.1
      %v4966 = vmul.f32 %v4902, 0.1
      %v4967 = vmul.f32 %v4903, 0.1
      %v4968 = vmul.f32 %v4904, 0.1
      %v4969 = vmul.f32 %v4905, 0.1
      %v4970 = vmul.f32 %v4906, 0.1
      %v4971 = vmul.f32 %v4907, 0.1
      %v4972 = vmul.f32 %v4908, 0.1
      %v4973 = vmul.f32 %v4909, 0.1
      %v4974 = vmul.f32 %v4910, 0.1
      %v4975 = vmul.f32 %v4911, 0.1
      %v4976 = vmul.f32 %v4912, 0.1
      %v4977 = vmul.f32 %v4913, 0.1
      %v4978 = vmul.f32 %v4914, 0.1
      %v4979 = vmul.f32 %v4915, 0.1
      %v4980 = vmul.f32 %v4916, 0.1
      %v4981 = vmul.f32 %v4917, 0.1
      %v4982 = vmul.f32 %v4918, 0.1
      %v4983 = vsel %vm4919, %v4887, %v4951
      %v4984 = vsel %vm4920, %v4888, %v4952
      %v4985 = vsel %vm4921, %v4889, %v4953
      %v4986 = vsel %vm4922, %v4890, %v4954
      %v4987 = vsel %vm4923, %v4891, %v4955
      %v4988 = vsel %vm4924, %v4892, %v4956
      %v4989 = vsel %vm4925, %v4893, %v4957
      %v4990 = vsel %vm4926, %v4894, %v4958
      %v4991 = vsel %vm4927, %v4895, %v4959
      %v4992 = vsel %vm4928, %v4896, %v4960
      %v4993 = vsel %vm4929, %v4897, %v4961
      %v4994 = vsel %vm4930, %v4898, %v4962
      %v4995 = vsel %vm4931, %v4899, %v4963
      %v4996 = vsel %vm4932, %v4900, %v4964
      %v4997 = vsel %vm4933, %v4901, %v4965
      %v4998 = vsel %vm4934, %v4902, %v4966
      %v4999 = vsel %vm4935, %v4903, %v4967
      %v5000 = vsel %vm4936, %v4904, %v4968
      %v5001 = vsel %vm4937, %v4905, %v4969
      %v5002 = vsel %vm4938, %v4906, %v4970
      %v5003 = vsel %vm4939, %v4907, %v4971
      %v5004 = vsel %vm4940, %v4908, %v4972
      %v5005 = vsel %vm4941, %v4909, %v4973
      %v5006 = vsel %vm4942, %v4910, %v4974
      %v5007 = vsel %vm4943, %v4911, %v4975
      %v5008 = vsel %vm4944, %v4912, %v4976
      %v5009 = vsel %vm4945, %v4913, %v4977
      %v5010 = vsel %vm4946, %v4914, %v4978
      %v5011 = vsel %vm4947, %v4915, %v4979
      %v5012 = vsel %vm4948, %v4916, %v4980
      %v5013 = vsel %vm4949, %v4917, %v4981
      %v5014 = vsel %vm4950, %v4918, %v4982
      %s5015 = scalar_lea.vmem [#allocation5], 24
      %5016 = vst.msk [vmem:[%s5015 + $0x1] sm:$0xff] %vm3042, %v4983
      %5017 = vst.msk [vmem:[%s5015 + $0x9] sm:$0xff] %vm3042, %v4984
      %5018 = vst.msk [vmem:[%s5015 + $0x19] sm:$0xff] %vm3042, %v4985
      %5019 = vst.msk [vmem:[%s5015 + $0x21] sm:$0xff] %vm3042, %v4986
      %5020 = vst.msk [vmem:[%s5015 + $0x31] sm:$0xff] %vm3042, %v4987
      %5021 = vst.msk [vmem:[%s5015 + $0x39] sm:$0xff] %vm3042, %v4988
      %5022 = vst.msk [vmem:[%s5015 + $0x49] sm:$0xff] %vm3042, %v4989
      %5023 = vst.msk [vmem:[%s5015 + $0x51] sm:$0xff] %vm3042, %v4990
      %5024 = vst.msk [vmem:[%s5015 + $0x61] sm:$0xff] %vm3042, %v4991
      %5025 = vst.msk [vmem:[%s5015 + $0x69] sm:$0xff] %vm3042, %v4992
      %5026 = vst.msk [vmem:[%s5015 + $0x79] sm:$0xff] %vm3042, %v4993
      %5027 = vst.msk [vmem:[%s5015 + $0x81] sm:$0xff] %vm3042, %v4994
      %5028 = vst.msk [vmem:[%s5015 + $0x91] sm:$0xff] %vm3042, %v4995
      %5029 = vst.msk [vmem:[%s5015 + $0x99] sm:$0xff] %vm3042, %v4996
      %5030 = vst.msk [vmem:[%s5015 + $0xa9] sm:$0xff] %vm3042, %v4997
      %5031 = vst.msk [vmem:[%s5015 + $0xb1] sm:$0xff] %vm3042, %v4998
      %5032 = vst.msk [vmem:[%s5015 + $0xc1] sm:$0xff] %vm3042, %v4999
      %5033 = vst.msk [vmem:[%s5015 + $0xc9] sm:$0xff] %vm3042, %v5000
      %5034 = vst.msk [vmem:[%s5015 + $0xd9] sm:$0xff] %vm3042, %v5001
      %5035 = vst.msk [vmem:[%s5015 + $0xe1] sm:$0xff] %vm3042, %v5002
      %5036 = vst.msk [vmem:[%s5015 + $0xf1] sm:$0xff] %vm3042, %v5003
      %5037 = vst.msk [vmem:[%s5015 + $0xf9] sm:$0xff] %vm3042, %v5004
      %5038 = vst.msk [vmem:[%s5015 + $0x109] sm:$0xff] %vm3042, %v5005
      %5039 = vst.msk [vmem:[%s5015 + $0x111] sm:$0xff] %vm3042, %v5006
      %5040 = vst.msk [vmem:[%s5015 + $0x121] sm:$0xff] %vm3042, %v5007
      %5041 = vst.msk [vmem:[%s5015 + $0x129] sm:$0xff] %vm3042, %v5008
      %5042 = vst.msk [vmem:[%s5015 + $0x139] sm:$0xff] %vm3042, %v5009
      %5043 = vst.msk [vmem:[%s5015 + $0x141] sm:$0xff] %vm3042, %v5010
      %5044 = vst.msk [vmem:[%s5015 + $0x151] sm:$0xff] %vm3042, %v5011
      %5045 = vst.msk [vmem:[%s5015 + $0x159] sm:$0xff] %vm3042, %v5012
      %5046 = vst.msk [vmem:[%s5015 + $0x169] sm:$0xff] %vm3042, %v5013
      %5047 = vst.msk [vmem:[%s5015 + $0x171] sm:$0xff] %vm3042, %v5014
      %s5048 = scalar_lea.vmem [#allocation5], 48
      %v5049 = vld [vmem:[%s5048 + $0x1] sm:$0xff]
      %v5050 = vld [vmem:[%s5048 + $0x9] sm:$0xff]
      %5051 = vst.msk [vmem:[#allocation5 + $0x1] sm:$0xff] %vm3042, %v5049
      %5052 = vst.msk [vmem:[#allocation5 + $0x9] sm:$0xff] %vm3042, %v5050
      %s5053 = scalar_lea.vmem [#allocation5], 360
      %v5054 = vld [vmem:[%s5053 + $0x1] sm:$0xff]
      %v5055 = vld [vmem:[%s5053 + $0x9] sm:$0xff]
      %s5056 = scalar_lea.vmem [#allocation5], 408
      %5057 = vst.msk [vmem:[%s5056 + $0x1] sm:$0xff] %vm3042, %v5054
      %5058 = vst.msk [vmem:[%s5056 + $0x9] sm:$0xff] %vm3042, %v5055
      %v5059 = vld [vmem:[#allocation5 + $0x2] sm:$0x1]
      %v5060 = vld [vmem:[#allocation5 + $0x1a] sm:$0x1]
      %v5061 = vld [vmem:[#allocation5 + $0x32] sm:$0x1]
      %v5062 = vld [vmem:[#allocation5 + $0x4a] sm:$0x1]
      %v5063 = vld [vmem:[#allocation5 + $0x62] sm:$0x1]
      %v5064 = vld [vmem:[#allocation5 + $0x7a] sm:$0x1]
      %v5065 = vld [vmem:[#allocation5 + $0x92] sm:$0x1]
      %v5066 = vld [vmem:[#allocation5 + $0xaa] sm:$0x1]
      %v5067 = vld [vmem:[#allocation5 + $0xc2] sm:$0x1]
      %v5068 = vld [vmem:[#allocation5 + $0xda] sm:$0x1]
      %v5069 = vld [vmem:[#allocation5 + $0xf2] sm:$0x1]
      %v5070 = vld [vmem:[#allocation5 + $0x10a] sm:$0x1]
      %v5071 = vld [vmem:[#allocation5 + $0x122] sm:$0x1]
      %v5072 = vld [vmem:[#allocation5 + $0x13a] sm:$0x1]
      %v5073 = vld [vmem:[#allocation5 + $0x152] sm:$0x1]
      %v5074 = vld [vmem:[#allocation5 + $0x16a] sm:$0x1]
      %v5075 = vld [vmem:[#allocation5 + $0x182] sm:$0x1]
      %v5076 = vld [vmem:[#allocation5 + $0x19a] sm:$0x1]
      %vm5077 = vcmask 516096
      %5078 = vst.msk [vmem:[#allocation5] sm:$0x1] %vm5077, %v5059
      %5079 = vst.msk [vmem:[#allocation5 + $0x18] sm:$0x1] %vm5077, %v5060
      %5080 = vst.msk [vmem:[#allocation5 + $0x30] sm:$0x1] %vm5077, %v5061
      %5081 = vst.msk [vmem:[#allocation5 + $0x48] sm:$0x1] %vm5077, %v5062
      %5082 = vst.msk [vmem:[#allocation5 + $0x60] sm:$0x1] %vm5077, %v5063
      %5083 = vst.msk [vmem:[#allocation5 + $0x78] sm:$0x1] %vm5077, %v5064
      %5084 = vst.msk [vmem:[#allocation5 + $0x90] sm:$0x1] %vm5077, %v5065
      %5085 = vst.msk [vmem:[#allocation5 + $0xa8] sm:$0x1] %vm5077, %v5066
      %5086 = vst.msk [vmem:[#allocation5 + $0xc0] sm:$0x1] %vm5077, %v5067
      %5087 = vst.msk [vmem:[#allocation5 + $0xd8] sm:$0x1] %vm5077, %v5068
      %5088 = vst.msk [vmem:[#allocation5 + $0xf0] sm:$0x1] %vm5077, %v5069
      %5089 = vst.msk [vmem:[#allocation5 + $0x108] sm:$0x1] %vm5077, %v5070
      %5090 = vst.msk [vmem:[#allocation5 + $0x120] sm:$0x1] %vm5077, %v5071
      %5091 = vst.msk [vmem:[#allocation5 + $0x138] sm:$0x1] %vm5077, %v5072
      %5092 = vst.msk [vmem:[#allocation5 + $0x150] sm:$0x1] %vm5077, %v5073
      %5093 = vst.msk [vmem:[#allocation5 + $0x168] sm:$0x1] %vm5077, %v5074
      %5094 = vst.msk [vmem:[#allocation5 + $0x180] sm:$0x1] %vm5077, %v5075
      %5095 = vst.msk [vmem:[#allocation5 + $0x198] sm:$0x1] %vm5077, %v5076
      %v5096 = vld [vmem:[#allocation5 + $0xf] sm:$0x1]
      %v5097 = vld [vmem:[#allocation5 + $0x27] sm:$0x1]
      %v5098 = vld [vmem:[#allocation5 + $0x3f] sm:$0x1]
      %v5099 = vld [vmem:[#allocation5 + $0x57] sm:$0x1]
      %v5100 = vld [vmem:[#allocation5 + $0x6f] sm:$0x1]
      %v5101 = vld [vmem:[#allocation5 + $0x87] sm:$0x1]
      %v5102 = vld [vmem:[#allocation5 + $0x9f] sm:$0x1]
      %v5103 = vld [vmem:[#allocation5 + $0xb7] sm:$0x1]
      %v5104 = vld [vmem:[#allocation5 + $0xcf] sm:$0x1]
      %v5105 = vld [vmem:[#allocation5 + $0xe7] sm:$0x1]
      %v5106 = vld [vmem:[#allocation5 + $0xff] sm:$0x1]
      %v5107 = vld [vmem:[#allocation5 + $0x117] sm:$0x1]
      %v5108 = vld [vmem:[#allocation5 + $0x12f] sm:$0x1]
      %v5109 = vld [vmem:[#allocation5 + $0x147] sm:$0x1]
      %v5110 = vld [vmem:[#allocation5 + $0x15f] sm:$0x1]
      %v5111 = vld [vmem:[#allocation5 + $0x177] sm:$0x1]
      %v5112 = vld [vmem:[#allocation5 + $0x18f] sm:$0x1]
      %v5113 = vld [vmem:[#allocation5 + $0x1a7] sm:$0x1]
      %5114 = vst.msk [vmem:[#allocation5 + $0x11] sm:$0x1] %vm5077, %v5096
      %5115 = vst.msk [vmem:[#allocation5 + $0x29] sm:$0x1] %vm5077, %v5097
      %5116 = vst.msk [vmem:[#allocation5 + $0x41] sm:$0x1] %vm5077, %v5098
      %5117 = vst.msk [vmem:[#allocation5 + $0x59] sm:$0x1] %vm5077, %v5099
      %5118 = vst.msk [vmem:[#allocation5 + $0x71] sm:$0x1] %vm5077, %v5100
      %5119 = vst.msk [vmem:[#allocation5 + $0x89] sm:$0x1] %vm5077, %v5101
      %5120 = vst.msk [vmem:[#allocation5 + $0xa1] sm:$0x1] %vm5077, %v5102
      %5121 = vst.msk [vmem:[#allocation5 + $0xb9] sm:$0x1] %vm5077, %v5103
      %5122 = vst.msk [vmem:[#allocation5 + $0xd1] sm:$0x1] %vm5077, %v5104
      %5123 = vst.msk [vmem:[#allocation5 + $0xe9] sm:$0x1] %vm5077, %v5105
      %5124 = vst.msk [vmem:[#allocation5 + $0x101] sm:$0x1] %vm5077, %v5106
      %5125 = vst.msk [vmem:[#allocation5 + $0x119] sm:$0x1] %vm5077, %v5107
      %5126 = vst.msk [vmem:[#allocation5 + $0x131] sm:$0x1] %vm5077, %v5108
      %5127 = vst.msk [vmem:[#allocation5 + $0x149] sm:$0x1] %vm5077, %v5109
      %5128 = vst.msk [vmem:[#allocation5 + $0x161] sm:$0x1] %vm5077, %v5110
      %5129 = vst.msk [vmem:[#allocation5 + $0x179] sm:$0x1] %vm5077, %v5111
      %5130 = vst.msk [vmem:[#allocation5 + $0x191] sm:$0x1] %vm5077, %v5112
      %5131 = vst.msk [vmem:[#allocation5 + $0x1a9] sm:$0x1] %vm5077, %v5113
      %v5132 = vld [vmem:[#allocation5] sm:$0xff]
      %v5133 = vld [vmem:[#allocation5 + $0x8] sm:$0xff]
      %v5134 = vld [vmem:[#allocation5 + $0x18] sm:$0xff]
      %v5135 = vld [vmem:[#allocation5 + $0x20] sm:$0xff]
      %v5136 = vld [vmem:[#allocation5 + $0x30] sm:$0xff]
      %v5137 = vld [vmem:[#allocation5 + $0x38] sm:$0xff]
      %v5138 = vld [vmem:[#allocation5 + $0x48] sm:$0xff]
      %v5139 = vld [vmem:[#allocation5 + $0x50] sm:$0xff]
      %v5140 = vld [vmem:[#allocation5 + $0x60] sm:$0xff]
      %v5141 = vld [vmem:[#allocation5 + $0x68] sm:$0xff]
      %v5142 = vld [vmem:[#allocation5 + $0x78] sm:$0xff]
      %v5143 = vld [vmem:[#allocation5 + $0x80] sm:$0xff]
      %v5144 = vld [vmem:[#allocation5 + $0x90] sm:$0xff]
      %v5145 = vld [vmem:[#allocation5 + $0x98] sm:$0xff]
      %v5146 = vld [vmem:[#allocation5 + $0xa8] sm:$0xff]
      %v5147 = vld [vmem:[#allocation5 + $0xb0] sm:$0xff]
      %v5148 = vld [vmem:[#allocation5 + $0xc0] sm:$0xff]
      %v5149 = vld [vmem:[#allocation5 + $0xc8] sm:$0xff]
      %v5150 = vld [vmem:[#allocation5 + $0xd8] sm:$0xff]
      %v5151 = vld [vmem:[#allocation5 + $0xe0] sm:$0xff]
      %v5152 = vld [vmem:[#allocation5 + $0xf0] sm:$0xff]
      %v5153 = vld [vmem:[#allocation5 + $0xf8] sm:$0xff]
      %v5154 = vld [vmem:[#allocation5 + $0x108] sm:$0xff]
      %v5155 = vld [vmem:[#allocation5 + $0x110] sm:$0xff]
      %v5156 = vld [vmem:[#allocation5 + $0x120] sm:$0xff]
      %v5157 = vld [vmem:[#allocation5 + $0x128] sm:$0xff]
      %v5158 = vld [vmem:[#allocation5 + $0x138] sm:$0xff]
      %v5159 = vld [vmem:[#allocation5 + $0x140] sm:$0xff]
      %v5160 = vld [vmem:[#allocation5 + $0x150] sm:$0xff]
      %v5161 = vld [vmem:[#allocation5 + $0x158] sm:$0xff]
      %v5162 = vld [vmem:[#allocation5 + $0x168] sm:$0xff]
      %v5163 = vld [vmem:[#allocation5 + $0x170] sm:$0xff]
      %v5164 = vld [vmem:[#allocation5 + $0x1] sm:$0xff]
      %v5165 = vld [vmem:[#allocation5 + $0x9] sm:$0xff]
      %v5166 = vld [vmem:[#allocation5 + $0x19] sm:$0xff]
      %v5167 = vld [vmem:[#allocation5 + $0x21] sm:$0xff]
      %v5168 = vld [vmem:[#allocation5 + $0x31] sm:$0xff]
      %v5169 = vld [vmem:[#allocation5 + $0x39] sm:$0xff]
      %v5170 = vld [vmem:[#allocation5 + $0x49] sm:$0xff]
      %v5171 = vld [vmem:[#allocation5 + $0x51] sm:$0xff]
      %v5172 = vld [vmem:[#allocation5 + $0x61] sm:$0xff]
      %v5173 = vld [vmem:[#allocation5 + $0x69] sm:$0xff]
      %v5174 = vld [vmem:[#allocation5 + $0x79] sm:$0xff]
      %v5175 = vld [vmem:[#allocation5 + $0x81] sm:$0xff]
      %v5176 = vld [vmem:[#allocation5 + $0x91] sm:$0xff]
      %v5177 = vld [vmem:[#allocation5 + $0x99] sm:$0xff]
      %v5178 = vld [vmem:[#allocation5 + $0xa9] sm:$0xff]
      %v5179 = vld [vmem:[#allocation5 + $0xb1] sm:$0xff]
      %v5180 = vld [vmem:[#allocation5 + $0xc1] sm:$0xff]
      %v5181 = vld [vmem:[#allocation5 + $0xc9] sm:$0xff]
      %v5182 = vld [vmem:[#allocation5 + $0xd9] sm:$0xff]
      %v5183 = vld [vmem:[#allocation5 + $0xe1] sm:$0xff]
      %v5184 = vld [vmem:[#allocation5 + $0xf1] sm:$0xff]
      %v5185 = vld [vmem:[#allocation5 + $0xf9] sm:$0xff]
      %v5186 = vld [vmem:[#allocation5 + $0x109] sm:$0xff]
      %v5187 = vld [vmem:[#allocation5 + $0x111] sm:$0xff]
      %v5188 = vld [vmem:[#allocation5 + $0x121] sm:$0xff]
      %v5189 = vld [vmem:[#allocation5 + $0x129] sm:$0xff]
      %v5190 = vld [vmem:[#allocation5 + $0x139] sm:$0xff]
      %v5191 = vld [vmem:[#allocation5 + $0x141] sm:$0xff]
      %v5192 = vld [vmem:[#allocation5 + $0x151] sm:$0xff]
      %v5193 = vld [vmem:[#allocation5 + $0x159] sm:$0xff]
      %v5194 = vld [vmem:[#allocation5 + $0x169] sm:$0xff]
      %v5195 = vld [vmem:[#allocation5 + $0x171] sm:$0xff]
      %v5196 = vld [vmem:[#allocation5 + $0x2] sm:$0xff]
      %v5197 = vld [vmem:[#allocation5 + $0xa] sm:$0xff]
      %v5198 = vld [vmem:[#allocation5 + $0x1a] sm:$0xff]
      %v5199 = vld [vmem:[#allocation5 + $0x22] sm:$0xff]
      %v5200 = vld [vmem:[#allocation5 + $0x32] sm:$0xff]
      %v5201 = vld [vmem:[#allocation5 + $0x3a] sm:$0xff]
      %v5202 = vld [vmem:[#allocation5 + $0x4a] sm:$0xff]
      %v5203 = vld [vmem:[#allocation5 + $0x52] sm:$0xff]
      %v5204 = vld [vmem:[#allocation5 + $0x62] sm:$0xff]
      %v5205 = vld [vmem:[#allocation5 + $0x6a] sm:$0xff]
      %v5206 = vld [vmem:[#allocation5 + $0x7a] sm:$0xff]
      %v5207 = vld [vmem:[#allocation5 + $0x82] sm:$0xff]
      %v5208 = vld [vmem:[#allocation5 + $0x92] sm:$0xff]
      %v5209 = vld [vmem:[#allocation5 + $0x9a] sm:$0xff]
      %v5210 = vld [vmem:[#allocation5 + $0xaa] sm:$0xff]
      %v5211 = vld [vmem:[#allocation5 + $0xb2] sm:$0xff]
      %v5212 = vld [vmem:[#allocation5 + $0xc2] sm:$0xff]
      %v5213 = vld [vmem:[#allocation5 + $0xca] sm:$0xff]
      %v5214 = vld [vmem:[#allocation5 + $0xda] sm:$0xff]
      %v5215 = vld [vmem:[#allocation5 + $0xe2] sm:$0xff]
      %v5216 = vld [vmem:[#allocation5 + $0xf2] sm:$0xff]
      %v5217 = vld [vmem:[#allocation5 + $0xfa] sm:$0xff]
      %v5218 = vld [vmem:[#allocation5 + $0x10a] sm:$0xff]
      %v5219 = vld [vmem:[#allocation5 + $0x112] sm:$0xff]
      %v5220 = vld [vmem:[#allocation5 + $0x122] sm:$0xff]
      %v5221 = vld [vmem:[#allocation5 + $0x12a] sm:$0xff]
      %v5222 = vld [vmem:[#allocation5 + $0x13a] sm:$0xff]
      %v5223 = vld [vmem:[#allocation5 + $0x142] sm:$0xff]
      %v5224 = vld [vmem:[#allocation5 + $0x152] sm:$0xff]
      %v5225 = vld [vmem:[#allocation5 + $0x15a] sm:$0xff]
      %v5226 = vld [vmem:[#allocation5 + $0x16a] sm:$0xff]
      %v5227 = vld [vmem:[#allocation5 + $0x172] sm:$0xff]
      %v5228 = vld [vmem:[%s5015] sm:$0xff]
      %v5229 = vld [vmem:[%s5015 + $0x8] sm:$0xff]
      %v5230 = vld [vmem:[%s5015 + $0x18] sm:$0xff]
      %v5231 = vld [vmem:[%s5015 + $0x20] sm:$0xff]
      %v5232 = vld [vmem:[%s5015 + $0x30] sm:$0xff]
      %v5233 = vld [vmem:[%s5015 + $0x38] sm:$0xff]
      %v5234 = vld [vmem:[%s5015 + $0x48] sm:$0xff]
      %v5235 = vld [vmem:[%s5015 + $0x50] sm:$0xff]
      %v5236 = vld [vmem:[%s5015 + $0x60] sm:$0xff]
      %v5237 = vld [vmem:[%s5015 + $0x68] sm:$0xff]
      %v5238 = vld [vmem:[%s5015 + $0x78] sm:$0xff]
      %v5239 = vld [vmem:[%s5015 + $0x80] sm:$0xff]
      %v5240 = vld [vmem:[%s5015 + $0x90] sm:$0xff]
      %v5241 = vld [vmem:[%s5015 + $0x98] sm:$0xff]
      %v5242 = vld [vmem:[%s5015 + $0xa8] sm:$0xff]
      %v5243 = vld [vmem:[%s5015 + $0xb0] sm:$0xff]
      %v5244 = vld [vmem:[%s5015 + $0xc0] sm:$0xff]
      %v5245 = vld [vmem:[%s5015 + $0xc8] sm:$0xff]
      %v5246 = vld [vmem:[%s5015 + $0xd8] sm:$0xff]
      %v5247 = vld [vmem:[%s5015 + $0xe0] sm:$0xff]
      %v5248 = vld [vmem:[%s5015 + $0xf0] sm:$0xff]
      %v5249 = vld [vmem:[%s5015 + $0xf8] sm:$0xff]
      %v5250 = vld [vmem:[%s5015 + $0x108] sm:$0xff]
      %v5251 = vld [vmem:[%s5015 + $0x110] sm:$0xff]
      %v5252 = vld [vmem:[%s5015 + $0x120] sm:$0xff]
      %v5253 = vld [vmem:[%s5015 + $0x128] sm:$0xff]
      %v5254 = vld [vmem:[%s5015 + $0x138] sm:$0xff]
      %v5255 = vld [vmem:[%s5015 + $0x140] sm:$0xff]
      %v5256 = vld [vmem:[%s5015 + $0x150] sm:$0xff]
      %v5257 = vld [vmem:[%s5015 + $0x158] sm:$0xff]
      %v5258 = vld [vmem:[%s5015 + $0x168] sm:$0xff]
      %v5259 = vld [vmem:[%s5015 + $0x170] sm:$0xff]
      %5292 = vrot.lane.b32.xlu0 %v5164, 64
      %v5293 = vpop.permute.xlu0 %5292
      %5294 = vrot.lane.b32.xlu0 %v5165, 64
      %v5295 = vpop.permute.xlu0 %5294
      %5296 = vrot.lane.b32.xlu0 %v5166, 64
      %v5297 = vpop.permute.xlu0 %5296
      %5298 = vrot.lane.b32.xlu0 %v5167, 64
      %v5299 = vpop.permute.xlu0 %5298
      %5300 = vrot.lane.b32.xlu0 %v5168, 64
      %v5301 = vpop.permute.xlu0 %5300
      %5302 = vrot.lane.b32.xlu0 %v5169, 64
      %v5303 = vpop.permute.xlu0 %5302
      %5304 = vrot.lane.b32.xlu0 %v5170, 64
      %v5305 = vpop.permute.xlu0 %5304
      %5306 = vrot.lane.b32.xlu0 %v5171, 64
      %v5307 = vpop.permute.xlu0 %5306
      %5308 = vrot.lane.b32.xlu0 %v5172, 64
      %v5309 = vpop.permute.xlu0 %5308
      %5310 = vrot.lane.b32.xlu0 %v5173, 64
      %v5311 = vpop.permute.xlu0 %5310
      %5312 = vrot.lane.b32.xlu0 %v5174, 64
      %v5313 = vpop.permute.xlu0 %5312
      %5314 = vrot.lane.b32.xlu0 %v5175, 64
      %v5315 = vpop.permute.xlu0 %5314
      %5316 = vrot.lane.b32.xlu0 %v5176, 64
      %v5317 = vpop.permute.xlu0 %5316
      %5318 = vrot.lane.b32.xlu0 %v5177, 64
      %v5319 = vpop.permute.xlu0 %5318
      %5320 = vrot.lane.b32.xlu0 %v5178, 64
      %v5321 = vpop.permute.xlu0 %5320
      %5322 = vrot.lane.b32.xlu0 %v5179, 64
      %v5323 = vpop.permute.xlu0 %5322
      %5324 = vrot.lane.b32.xlu0 %v5180, 64
      %v5325 = vpop.permute.xlu0 %5324
      %5326 = vrot.lane.b32.xlu0 %v5181, 64
      %v5327 = vpop.permute.xlu0 %5326
      %5328 = vrot.lane.b32.xlu0 %v5182, 64
      %v5329 = vpop.permute.xlu0 %5328
      %5330 = vrot.lane.b32.xlu0 %v5183, 64
      %v5331 = vpop.permute.xlu0 %5330
      %5332 = vrot.lane.b32.xlu0 %v5184, 64
      %v5333 = vpop.permute.xlu0 %5332
      %5334 = vrot.lane.b32.xlu0 %v5185, 64
      %v5335 = vpop.permute.xlu0 %5334
      %5336 = vrot.lane.b32.xlu0 %v5186, 64
      %v5337 = vpop.permute.xlu0 %5336
      %5338 = vrot.lane.b32.xlu0 %v5187, 64
      %v5339 = vpop.permute.xlu0 %5338
      %5340 = vrot.lane.b32.xlu0 %v5188, 64
      %v5341 = vpop.permute.xlu0 %5340
      %5342 = vrot.lane.b32.xlu0 %v5189, 64
      %v5343 = vpop.permute.xlu0 %5342
      %5344 = vrot.lane.b32.xlu0 %v5190, 64
      %v5345 = vpop.permute.xlu0 %5344
      %5346 = vrot.lane.b32.xlu0 %v5191, 64
      %v5347 = vpop.permute.xlu0 %5346
      %5348 = vrot.lane.b32.xlu0 %v5192, 64
      %v5349 = vpop.permute.xlu0 %5348
      %5350 = vrot.lane.b32.xlu0 %v5193, 64
      %v5351 = vpop.permute.xlu0 %5350
      %5352 = vrot.lane.b32.xlu0 %v5194, 64
      %v5353 = vpop.permute.xlu0 %5352
      %5354 = vrot.lane.b32.xlu0 %v5195, 64
      %v5355 = vpop.permute.xlu0 %5354
      %5420 = vrot.lane.b32.xlu0 %v5228, 64
      %v5421 = vpop.permute.xlu0 %5420
      %5422 = vrot.lane.b32.xlu0 %v5229, 64
      %v5423 = vpop.permute.xlu0 %5422
      %5424 = vrot.lane.b32.xlu0 %v5230, 64
      %v5425 = vpop.permute.xlu0 %5424
      %5426 = vrot.lane.b32.xlu0 %v5231, 64
      %v5427 = vpop.permute.xlu0 %5426
      %5428 = vrot.lane.b32.xlu0 %v5232, 64
      %v5429 = vpop.permute.xlu0 %5428
      %5430 = vrot.lane.b32.xlu0 %v5233, 64
      %v5431 = vpop.permute.xlu0 %5430
      %5432 = vrot.lane.b32.xlu0 %v5234, 64
      %v5433 = vpop.permute.xlu0 %5432
      %5434 = vrot.lane.b32.xlu0 %v5235, 64
      %v5435 = vpop.permute.xlu0 %5434
      %5436 = vrot.lane.b32.xlu0 %v5236, 64
      %v5437 = vpop.permute.xlu0 %5436
      %5438 = vrot.lane.b32.xlu0 %v5237, 64
      %v5439 = vpop.permute.xlu0 %5438
      %5440 = vrot.lane.b32.xlu0 %v5238, 64
      %v5441 = vpop.permute.xlu0 %5440
      %5442 = vrot.lane.b32.xlu0 %v5239, 64
      %v5443 = vpop.permute.xlu0 %5442
      %5444 = vrot.lane.b32.xlu0 %v5240, 64
      %v5445 = vpop.permute.xlu0 %5444
      %5446 = vrot.lane.b32.xlu0 %v5241, 64
      %v5447 = vpop.permute.xlu0 %5446
      %5448 = vrot.lane.b32.xlu0 %v5242, 64
      %v5449 = vpop.permute.xlu0 %5448
      %5450 = vrot.lane.b32.xlu0 %v5243, 64
      %v5451 = vpop.permute.xlu0 %5450
      %5452 = vrot.lane.b32.xlu0 %v5244, 64
      %v5453 = vpop.permute.xlu0 %5452
      %5454 = vrot.lane.b32.xlu0 %v5245, 64
      %v5455 = vpop.permute.xlu0 %5454
      %5456 = vrot.lane.b32.xlu0 %v5246, 64
      %v5457 = vpop.permute.xlu0 %5456
      %5458 = vrot.lane.b32.xlu0 %v5247, 64
      %v5459 = vpop.permute.xlu0 %5458
      %5460 = vrot.lane.b32.xlu0 %v5248, 64
      %v5461 = vpop.permute.xlu0 %5460
      %5462 = vrot.lane.b32.xlu0 %v5249, 64
      %v5463 = vpop.permute.xlu0 %5462
      %5464 = vrot.lane.b32.xlu0 %v5250, 64
      %v5465 = vpop.permute.xlu0 %5464
      %5466 = vrot.lane.b32.xlu0 %v5251, 64
      %v5467 = vpop.permute.xlu0 %5466
      %5468 = vrot.lane.b32.xlu0 %v5252, 64
      %v5469 = vpop.permute.xlu0 %5468
      %5470 = vrot.lane.b32.xlu0 %v5253, 64
      %v5471 = vpop.permute.xlu0 %5470
      %5472 = vrot.lane.b32.xlu0 %v5254, 64
      %v5473 = vpop.permute.xlu0 %5472
      %5474 = vrot.lane.b32.xlu0 %v5255, 64
      %v5475 = vpop.permute.xlu0 %5474
      %5476 = vrot.lane.b32.xlu0 %v5256, 64
      %v5477 = vpop.permute.xlu0 %5476
      %5478 = vrot.lane.b32.xlu0 %v5257, 64
      %v5479 = vpop.permute.xlu0 %5478
      %5480 = vrot.lane.b32.xlu0 %v5258, 64
      %v5481 = vpop.permute.xlu0 %5480
      %5482 = vrot.lane.b32.xlu0 %v5259, 64
      %v5483 = vpop.permute.xlu0 %5482
      %v5516 = vsel %vm3042, %v5132, %v5293
      %v5517 = vsel %vm3042, %v5133, %v5295
      %v5518 = vsel %vm3042, %v5134, %v5297
      %v5519 = vsel %vm3042, %v5135, %v5299
      %v5520 = vsel %vm3042, %v5136, %v5301
      %v5521 = vsel %vm3042, %v5137, %v5303
      %v5522 = vsel %vm3042, %v5138, %v5305
      %v5523 = vsel %vm3042, %v5139, %v5307
      %v5524 = vsel %vm3042, %v5140, %v5309
      %v5525 = vsel %vm3042, %v5141, %v5311
      %v5526 = vsel %vm3042, %v5142, %v5313
      %v5527 = vsel %vm3042, %v5143, %v5315
      %v5528 = vsel %vm3042, %v5144, %v5317
      %v5529 = vsel %vm3042, %v5145, %v5319
      %v5530 = vsel %vm3042, %v5146, %v5321
      %v5531 = vsel %vm3042, %v5147, %v5323
      %v5532 = vsel %vm3042, %v5148, %v5325
      %v5533 = vsel %vm3042, %v5149, %v5327
      %v5534 = vsel %vm3042, %v5150, %v5329
      %v5535 = vsel %vm3042, %v5151, %v5331
      %v5536 = vsel %vm3042, %v5152, %v5333
      %v5537 = vsel %vm3042, %v5153, %v5335
      %v5538 = vsel %vm3042, %v5154, %v5337
      %v5539 = vsel %vm3042, %v5155, %v5339
      %v5540 = vsel %vm3042, %v5156, %v5341
      %v5541 = vsel %vm3042, %v5157, %v5343
      %v5542 = vsel %vm3042, %v5158, %v5345
      %v5543 = vsel %vm3042, %v5159, %v5347
      %v5544 = vsel %vm3042, %v5160, %v5349
      %v5545 = vsel %vm3042, %v5161, %v5351
      %v5546 = vsel %vm3042, %v5162, %v5353
      %v5547 = vsel %vm3042, %v5163, %v5355
      %v5548 = vsel %vm3042, %v5196, %v5421
      %v5549 = vsel %vm3042, %v5197, %v5423
      %v5550 = vsel %vm3042, %v5198, %v5425
      %v5551 = vsel %vm3042, %v5199, %v5427
      %v5552 = vsel %vm3042, %v5200, %v5429
      %v5553 = vsel %vm3042, %v5201, %v5431
      %v5554 = vsel %vm3042, %v5202, %v5433
      %v5555 = vsel %vm3042, %v5203, %v5435
      %v5556 = vsel %vm3042, %v5204, %v5437
      %v5557 = vsel %vm3042, %v5205, %v5439
      %v5558 = vsel %vm3042, %v5206, %v5441
      %v5559 = vsel %vm3042, %v5207, %v5443
      %v5560 = vsel %vm3042, %v5208, %v5445
      %v5561 = vsel %vm3042, %v5209, %v5447
      %v5562 = vsel %vm3042, %v5210, %v5449
      %v5563 = vsel %vm3042, %v5211, %v5451
      %v5564 = vsel %vm3042, %v5212, %v5453
      %v5565 = vsel %vm3042, %v5213, %v5455
      %v5566 = vsel %vm3042, %v5214, %v5457
      %v5567 = vsel %vm3042, %v5215, %v5459
      %v5568 = vsel %vm3042, %v5216, %v5461
      %v5569 = vsel %vm3042, %v5217, %v5463
      %v5570 = vsel %vm3042, %v5218, %v5465
      %v5571 = vsel %vm3042, %v5219, %v5467
      %v5572 = vsel %vm3042, %v5220, %v5469
      %v5573 = vsel %vm3042, %v5221, %v5471
      %v5574 = vsel %vm3042, %v5222, %v5473
      %v5575 = vsel %vm3042, %v5223, %v5475
      %v5576 = vsel %vm3042, %v5224, %v5477
      %v5577 = vsel %vm3042, %v5225, %v5479
      %v5578 = vsel %vm3042, %v5226, %v5481
      %v5579 = vsel %vm3042, %v5227, %v5483
      %v5580 = vld [vmem:[%s4] sm:$0xf]
      %v5581 = vpack.c.bf16 %v5517, %v5516
      %v5582 = vpack.c.bf16 %v5549, %v5548
      %v5583 = vpack.c.bf16 %v5519, %v5518
      %v5584 = vpack.c.bf16 %v5551, %v5550
      %v5585 = vpack.c.bf16 %v5521, %v5520
      %v5586 = vpack.c.bf16 %v5553, %v5552
      %v5587 = vpack.c.bf16 %v5523, %v5522
      %v5588 = vpack.c.bf16 %v5555, %v5554
      %v5589 = vpack.c.bf16 %v5525, %v5524
      %v5590 = vpack.c.bf16 %v5557, %v5556
      %v5591 = vpack.c.bf16 %v5527, %v5526
      %v5592 = vpack.c.bf16 %v5559, %v5558
      %v5593 = vpack.c.bf16 %v5529, %v5528
      %v5594 = vpack.c.bf16 %v5561, %v5560
      %v5595 = vpack.c.bf16 %v5531, %v5530
      %v5596 = vpack.c.bf16 %v5563, %v5562
      %v5597 = vpack.c.bf16 %v5533, %v5532
      %v5598 = vpack.c.bf16 %v5565, %v5564
      %v5599 = vpack.c.bf16 %v5535, %v5534
      %v5600 = vpack.c.bf16 %v5567, %v5566
      %v5601 = vpack.c.bf16 %v5537, %v5536
      %v5602 = vpack.c.bf16 %v5569, %v5568
      %v5603 = vpack.c.bf16 %v5539, %v5538
      %v5604 = vpack.c.bf16 %v5571, %v5570
      %v5605 = vpack.c.bf16 %v5541, %v5540
      %v5606 = vpack.c.bf16 %v5573, %v5572
      %v5607 = vpack.c.bf16 %v5543, %v5542
      %v5608 = vpack.c.bf16 %v5575, %v5574
      %v5609 = vpack.c.bf16 %v5545, %v5544
      %v5610 = vpack.c.bf16 %v5577, %v5576
      %v5611 = vpack.c.bf16 %v5547, %v5546
      %v5612 = vpack.c.bf16 %v5579, %v5578
      %v5613 = vld [vmem:[%s5015 + $0x1] sm:$0xff]
      %v5614 = vld [vmem:[%s5015 + $0x9] sm:$0xff]
      %v5615 = vld [vmem:[%s5015 + $0x19] sm:$0xff]
      %v5616 = vld [vmem:[%s5015 + $0x21] sm:$0xff]
      %v5617 = vld [vmem:[%s5015 + $0x31] sm:$0xff]
      %v5618 = vld [vmem:[%s5015 + $0x39] sm:$0xff]
      %v5619 = vld [vmem:[%s5015 + $0x49] sm:$0xff]
      %v5620 = vld [vmem:[%s5015 + $0x51] sm:$0xff]
      %v5621 = vld [vmem:[%s5015 + $0x61] sm:$0xff]
      %v5622 = vld [vmem:[%s5015 + $0x69] sm:$0xff]
      %v5623 = vld [vmem:[%s5015 + $0x79] sm:$0xff]
      %v5624 = vld [vmem:[%s5015 + $0x81] sm:$0xff]
      %v5625 = vld [vmem:[%s5015 + $0x91] sm:$0xff]
      %v5626 = vld [vmem:[%s5015 + $0x99] sm:$0xff]
      %v5627 = vld [vmem:[%s5015 + $0xa9] sm:$0xff]
      %v5628 = vld [vmem:[%s5015 + $0xb1] sm:$0xff]
      %v5629 = vld [vmem:[%s5015 + $0xc1] sm:$0xff]
      %v5630 = vld [vmem:[%s5015 + $0xc9] sm:$0xff]
      %v5631 = vld [vmem:[%s5015 + $0xd9] sm:$0xff]
      %v5632 = vld [vmem:[%s5015 + $0xe1] sm:$0xff]
      %v5633 = vld [vmem:[%s5015 + $0xf1] sm:$0xff]
      %v5634 = vld [vmem:[%s5015 + $0xf9] sm:$0xff]
      %v5635 = vld [vmem:[%s5015 + $0x109] sm:$0xff]
      %v5636 = vld [vmem:[%s5015 + $0x111] sm:$0xff]
      %v5637 = vld [vmem:[%s5015 + $0x121] sm:$0xff]
      %v5638 = vld [vmem:[%s5015 + $0x129] sm:$0xff]
      %v5639 = vld [vmem:[%s5015 + $0x139] sm:$0xff]
      %v5640 = vld [vmem:[%s5015 + $0x141] sm:$0xff]
      %v5641 = vld [vmem:[%s5015 + $0x151] sm:$0xff]
      %v5642 = vld [vmem:[%s5015 + $0x159] sm:$0xff]
      %v5643 = vld [vmem:[%s5015 + $0x169] sm:$0xff]
      %v5644 = vld [vmem:[%s5015 + $0x171] sm:$0xff]
      %v5645 = vld [vmem:[%s5015 + $0x2] sm:$0xff]
      %v5646 = vld [vmem:[%s5015 + $0xa] sm:$0xff]
      %v5647 = vld [vmem:[%s5015 + $0x1a] sm:$0xff]
      %v5648 = vld [vmem:[%s5015 + $0x22] sm:$0xff]
      %v5649 = vld [vmem:[%s5015 + $0x32] sm:$0xff]
      %v5650 = vld [vmem:[%s5015 + $0x3a] sm:$0xff]
      %v5651 = vld [vmem:[%s5015 + $0x4a] sm:$0xff]
      %v5652 = vld [vmem:[%s5015 + $0x52] sm:$0xff]
      %v5653 = vld [vmem:[%s5015 + $0x62] sm:$0xff]
      %v5654 = vld [vmem:[%s5015 + $0x6a] sm:$0xff]
      %v5655 = vld [vmem:[%s5015 + $0x7a] sm:$0xff]
      %v5656 = vld [vmem:[%s5015 + $0x82] sm:$0xff]
      %v5657 = vld [vmem:[%s5015 + $0x92] sm:$0xff]
      %v5658 = vld [vmem:[%s5015 + $0x9a] sm:$0xff]
      %v5659 = vld [vmem:[%s5015 + $0xaa] sm:$0xff]
      %v5660 = vld [vmem:[%s5015 + $0xb2] sm:$0xff]
      %v5661 = vld [vmem:[%s5015 + $0xc2] sm:$0xff]
      %v5662 = vld [vmem:[%s5015 + $0xca] sm:$0xff]
      %v5663 = vld [vmem:[%s5015 + $0xda] sm:$0xff]
      %v5664 = vld [vmem:[%s5015 + $0xe2] sm:$0xff]
      %v5665 = vld [vmem:[%s5015 + $0xf2] sm:$0xff]
      %v5666 = vld [vmem:[%s5015 + $0xfa] sm:$0xff]
      %v5667 = vld [vmem:[%s5015 + $0x10a] sm:$0xff]
      %v5668 = vld [vmem:[%s5015 + $0x112] sm:$0xff]
      %v5669 = vld [vmem:[%s5015 + $0x122] sm:$0xff]
      %v5670 = vld [vmem:[%s5015 + $0x12a] sm:$0xff]
      %v5671 = vld [vmem:[%s5015 + $0x13a] sm:$0xff]
      %v5672 = vld [vmem:[%s5015 + $0x142] sm:$0xff]
      %v5673 = vld [vmem:[%s5015 + $0x152] sm:$0xff]
      %v5674 = vld [vmem:[%s5015 + $0x15a] sm:$0xff]
      %v5675 = vld [vmem:[%s5015 + $0x16a] sm:$0xff]
      %v5676 = vld [vmem:[%s5015 + $0x172] sm:$0xff]
      %v5677 = vld [vmem:[%s5048] sm:$0xff]
      %v5678 = vld [vmem:[%s5048 + $0x8] sm:$0xff]
      %v5679 = vld [vmem:[%s5048 + $0x18] sm:$0xff]
      %v5680 = vld [vmem:[%s5048 + $0x20] sm:$0xff]
      %v5681 = vld [vmem:[%s5048 + $0x30] sm:$0xff]
      %v5682 = vld [vmem:[%s5048 + $0x38] sm:$0xff]
      %v5683 = vld [vmem:[%s5048 + $0x48] sm:$0xff]
      %v5684 = vld [vmem:[%s5048 + $0x50] sm:$0xff]
      %v5685 = vld [vmem:[%s5048 + $0x60] sm:$0xff]
      %v5686 = vld [vmem:[%s5048 + $0x68] sm:$0xff]
      %v5687 = vld [vmem:[%s5048 + $0x78] sm:$0xff]
      %v5688 = vld [vmem:[%s5048 + $0x80] sm:$0xff]
      %v5689 = vld [vmem:[%s5048 + $0x90] sm:$0xff]
      %v5690 = vld [vmem:[%s5048 + $0x98] sm:$0xff]
      %v5691 = vld [vmem:[%s5048 + $0xa8] sm:$0xff]
      %v5692 = vld [vmem:[%s5048 + $0xb0] sm:$0xff]
      %v5693 = vld [vmem:[%s5048 + $0xc0] sm:$0xff]
      %v5694 = vld [vmem:[%s5048 + $0xc8] sm:$0xff]
      %v5695 = vld [vmem:[%s5048 + $0xd8] sm:$0xff]
      %v5696 = vld [vmem:[%s5048 + $0xe0] sm:$0xff]
      %v5697 = vld [vmem:[%s5048 + $0xf0] sm:$0xff]
      %v5698 = vld [vmem:[%s5048 + $0xf8] sm:$0xff]
      %v5699 = vld [vmem:[%s5048 + $0x108] sm:$0xff]
      %v5700 = vld [vmem:[%s5048 + $0x110] sm:$0xff]
      %v5701 = vld [vmem:[%s5048 + $0x120] sm:$0xff]
      %v5702 = vld [vmem:[%s5048 + $0x128] sm:$0xff]
      %v5703 = vld [vmem:[%s5048 + $0x138] sm:$0xff]
      %v5704 = vld [vmem:[%s5048 + $0x140] sm:$0xff]
      %v5705 = vld [vmem:[%s5048 + $0x150] sm:$0xff]
      %v5706 = vld [vmem:[%s5048 + $0x158] sm:$0xff]
      %v5707 = vld [vmem:[%s5048 + $0x168] sm:$0xff]
      %v5708 = vld [vmem:[%s5048 + $0x170] sm:$0xff]
      %v5709 = vld [vmem:[%s5048 + $0x1] sm:$0xff]
      %v5710 = vld [vmem:[%s5048 + $0x9] sm:$0xff]
      %v5711 = vld [vmem:[%s5048 + $0x19] sm:$0xff]
      %v5712 = vld [vmem:[%s5048 + $0x21] sm:$0xff]
      %v5713 = vld [vmem:[%s5048 + $0x31] sm:$0xff]
      %v5714 = vld [vmem:[%s5048 + $0x39] sm:$0xff]
      %v5715 = vld [vmem:[%s5048 + $0x49] sm:$0xff]
      %v5716 = vld [vmem:[%s5048 + $0x51] sm:$0xff]
      %v5717 = vld [vmem:[%s5048 + $0x61] sm:$0xff]
      %v5718 = vld [vmem:[%s5048 + $0x69] sm:$0xff]
      %v5719 = vld [vmem:[%s5048 + $0x79] sm:$0xff]
      %v5720 = vld [vmem:[%s5048 + $0x81] sm:$0xff]
      %v5721 = vld [vmem:[%s5048 + $0x91] sm:$0xff]
      %v5722 = vld [vmem:[%s5048 + $0x99] sm:$0xff]
      %v5723 = vld [vmem:[%s5048 + $0xa9] sm:$0xff]
      %v5724 = vld [vmem:[%s5048 + $0xb1] sm:$0xff]
      %v5725 = vld [vmem:[%s5048 + $0xc1] sm:$0xff]
      %v5726 = vld [vmem:[%s5048 + $0xc9] sm:$0xff]
      %v5727 = vld [vmem:[%s5048 + $0xd9] sm:$0xff]
      %v5728 = vld [vmem:[%s5048 + $0xe1] sm:$0xff]
      %v5729 = vld [vmem:[%s5048 + $0xf1] sm:$0xff]
      %v5730 = vld [vmem:[%s5048 + $0xf9] sm:$0xff]
      %v5731 = vld [vmem:[%s5048 + $0x109] sm:$0xff]
      %v5732 = vld [vmem:[%s5048 + $0x111] sm:$0xff]
      %v5733 = vld [vmem:[%s5048 + $0x121] sm:$0xff]
      %v5734 = vld [vmem:[%s5048 + $0x129] sm:$0xff]
      %v5735 = vld [vmem:[%s5048 + $0x139] sm:$0xff]
      %v5736 = vld [vmem:[%s5048 + $0x141] sm:$0xff]
      %v5737 = vld [vmem:[%s5048 + $0x151] sm:$0xff]
      %v5738 = vld [vmem:[%s5048 + $0x159] sm:$0xff]
      %v5739 = vld [vmem:[%s5048 + $0x169] sm:$0xff]
      %v5740 = vld [vmem:[%s5048 + $0x171] sm:$0xff]
      %5773 = vrot.lane.b32.xlu0 %v5645, 64
      %v5774 = vpop.permute.xlu0 %5773
      %5775 = vrot.lane.b32.xlu0 %v5646, 64
      %v5776 = vpop.permute.xlu0 %5775
      %5777 = vrot.lane.b32.xlu0 %v5647, 64
      %v5778 = vpop.permute.xlu0 %5777
      %5779 = vrot.lane.b32.xlu0 %v5648, 64
      %v5780 = vpop.permute.xlu0 %5779
      %5781 = vrot.lane.b32.xlu0 %v5649, 64
      %v5782 = vpop.permute.xlu0 %5781
      %5783 = vrot.lane.b32.xlu0 %v5650, 64
      %v5784 = vpop.permute.xlu0 %5783
      %5785 = vrot.lane.b32.xlu0 %v5651, 64
      %v5786 = vpop.permute.xlu0 %5785
      %5787 = vrot.lane.b32.xlu0 %v5652, 64
      %v5788 = vpop.permute.xlu0 %5787
      %5789 = vrot.lane.b32.xlu0 %v5653, 64
      %v5790 = vpop.permute.xlu0 %5789
      %5791 = vrot.lane.b32.xlu0 %v5654, 64
      %v5792 = vpop.permute.xlu0 %5791
      %5793 = vrot.lane.b32.xlu0 %v5655, 64
      %v5794 = vpop.permute.xlu0 %5793
      %5795 = vrot.lane.b32.xlu0 %v5656, 64
      %v5796 = vpop.permute.xlu0 %5795
      %5797 = vrot.lane.b32.xlu0 %v5657, 64
      %v5798 = vpop.permute.xlu0 %5797
      %5799 = vrot.lane.b32.xlu0 %v5658, 64
      %v5800 = vpop.permute.xlu0 %5799
      %5801 = vrot.lane.b32.xlu0 %v5659, 64
      %v5802 = vpop.permute.xlu0 %5801
      %5803 = vrot.lane.b32.xlu0 %v5660, 64
      %v5804 = vpop.permute.xlu0 %5803
      %5805 = vrot.lane.b32.xlu0 %v5661, 64
      %v5806 = vpop.permute.xlu0 %5805
      %5807 = vrot.lane.b32.xlu0 %v5662, 64
      %v5808 = vpop.permute.xlu0 %5807
      %5809 = vrot.lane.b32.xlu0 %v5663, 64
      %v5810 = vpop.permute.xlu0 %5809
      %5811 = vrot.lane.b32.xlu0 %v5664, 64
      %v5812 = vpop.permute.xlu0 %5811
      %5813 = vrot.lane.b32.xlu0 %v5665, 64
      %v5814 = vpop.permute.xlu0 %5813
      %5815 = vrot.lane.b32.xlu0 %v5666, 64
      %v5816 = vpop.permute.xlu0 %5815
      %5817 = vrot.lane.b32.xlu0 %v5667, 64
      %v5818 = vpop.permute.xlu0 %5817
      %5819 = vrot.lane.b32.xlu0 %v5668, 64
      %v5820 = vpop.permute.xlu0 %5819
      %5821 = vrot.lane.b32.xlu0 %v5669, 64
      %v5822 = vpop.permute.xlu0 %5821
      %5823 = vrot.lane.b32.xlu0 %v5670, 64
      %v5824 = vpop.permute.xlu0 %5823
      %5825 = vrot.lane.b32.xlu0 %v5671, 64
      %v5826 = vpop.permute.xlu0 %5825
      %5827 = vrot.lane.b32.xlu0 %v5672, 64
      %v5828 = vpop.permute.xlu0 %5827
      %5829 = vrot.lane.b32.xlu0 %v5673, 64
      %v5830 = vpop.permute.xlu0 %5829
      %5831 = vrot.lane.b32.xlu0 %v5674, 64
      %v5832 = vpop.permute.xlu0 %5831
      %5833 = vrot.lane.b32.xlu0 %v5675, 64
      %v5834 = vpop.permute.xlu0 %5833
      %5835 = vrot.lane.b32.xlu0 %v5676, 64
      %v5836 = vpop.permute.xlu0 %5835
      %5901 = vrot.lane.b32.xlu0 %v5709, 64
      %v5902 = vpop.permute.xlu0 %5901
      %5903 = vrot.lane.b32.xlu0 %v5710, 64
      %v5904 = vpop.permute.xlu0 %5903
      %5905 = vrot.lane.b32.xlu0 %v5711, 64
      %v5906 = vpop.permute.xlu0 %5905
      %5907 = vrot.lane.b32.xlu0 %v5712, 64
      %v5908 = vpop.permute.xlu0 %5907
      %5909 = vrot.lane.b32.xlu0 %v5713, 64
      %v5910 = vpop.permute.xlu0 %5909
      %5911 = vrot.lane.b32.xlu0 %v5714, 64
      %v5912 = vpop.permute.xlu0 %5911
      %5913 = vrot.lane.b32.xlu0 %v5715, 64
      %v5914 = vpop.permute.xlu0 %5913
      %5915 = vrot.lane.b32.xlu0 %v5716, 64
      %v5916 = vpop.permute.xlu0 %5915
      %5917 = vrot.lane.b32.xlu0 %v5717, 64
      %v5918 = vpop.permute.xlu0 %5917
      %5919 = vrot.lane.b32.xlu0 %v5718, 64
      %v5920 = vpop.permute.xlu0 %5919
      %5921 = vrot.lane.b32.xlu0 %v5719, 64
      %v5922 = vpop.permute.xlu0 %5921
      %5923 = vrot.lane.b32.xlu0 %v5720, 64
      %v5924 = vpop.permute.xlu0 %5923
      %5925 = vrot.lane.b32.xlu0 %v5721, 64
      %v5926 = vpop.permute.xlu0 %5925
      %5927 = vrot.lane.b32.xlu0 %v5722, 64
      %v5928 = vpop.permute.xlu0 %5927
      %5929 = vrot.lane.b32.xlu0 %v5723, 64
      %v5930 = vpop.permute.xlu0 %5929
      %5931 = vrot.lane.b32.xlu0 %v5724, 64
      %v5932 = vpop.permute.xlu0 %5931
      %5933 = vrot.lane.b32.xlu0 %v5725, 64
      %v5934 = vpop.permute.xlu0 %5933
      %5935 = vrot.lane.b32.xlu0 %v5726, 64
      %v5936 = vpop.permute.xlu0 %5935
      %5937 = vrot.lane.b32.xlu0 %v5727, 64
      %v5938 = vpop.permute.xlu0 %5937
      %5939 = vrot.lane.b32.xlu0 %v5728, 64
      %v5940 = vpop.permute.xlu0 %5939
      %5941 = vrot.lane.b32.xlu0 %v5729, 64
      %v5942 = vpop.permute.xlu0 %5941
      %5943 = vrot.lane.b32.xlu0 %v5730, 64
      %v5944 = vpop.permute.xlu0 %5943
      %5945 = vrot.lane.b32.xlu0 %v5731, 64
      %v5946 = vpop.permute.xlu0 %5945
      %5947 = vrot.lane.b32.xlu0 %v5732, 64
      %v5948 = vpop.permute.xlu0 %5947
      %5949 = vrot.lane.b32.xlu0 %v5733, 64
      %v5950 = vpop.permute.xlu0 %5949
      %5951 = vrot.lane.b32.xlu0 %v5734, 64
      %v5952 = vpop.permute.xlu0 %5951
      %5953 = vrot.lane.b32.xlu0 %v5735, 64
      %v5954 = vpop.permute.xlu0 %5953
      %5955 = vrot.lane.b32.xlu0 %v5736, 64
      %v5956 = vpop.permute.xlu0 %5955
      %5957 = vrot.lane.b32.xlu0 %v5737, 64
      %v5958 = vpop.permute.xlu0 %5957
      %5959 = vrot.lane.b32.xlu0 %v5738, 64
      %v5960 = vpop.permute.xlu0 %5959
      %5961 = vrot.lane.b32.xlu0 %v5739, 64
      %v5962 = vpop.permute.xlu0 %5961
      %5963 = vrot.lane.b32.xlu0 %v5740, 64
      %v5964 = vpop.permute.xlu0 %5963
      %v5997 = vsel %vm3042, %v5613, %v5774
      %v5998 = vsel %vm3042, %v5614, %v5776
      %v5999 = vsel %vm3042, %v5615, %v5778
      %v6000 = vsel %vm3042, %v5616, %v5780
      %v6001 = vsel %vm3042, %v5617, %v5782
      %v6002 = vsel %vm3042, %v5618, %v5784
      %v6003 = vsel %vm3042, %v5619, %v5786
      %v6004 = vsel %vm3042, %v5620, %v5788
      %v6005 = vsel %vm3042, %v5621, %v5790
      %v6006 = vsel %vm3042, %v5622, %v5792
      %v6007 = vsel %vm3042, %v5623, %v5794
      %v6008 = vsel %vm3042, %v5624, %v5796
      %v6009 = vsel %vm3042, %v5625, %v5798
      %v6010 = vsel %vm3042, %v5626, %v5800
      %v6011 = vsel %vm3042, %v5627, %v5802
      %v6012 = vsel %vm3042, %v5628, %v5804
      %v6013 = vsel %vm3042, %v5629, %v5806
      %v6014 = vsel %vm3042, %v5630, %v5808
      %v6015 = vsel %vm3042, %v5631, %v5810
      %v6016 = vsel %vm3042, %v5632, %v5812
      %v6017 = vsel %vm3042, %v5633, %v5814
      %v6018 = vsel %vm3042, %v5634, %v5816
      %v6019 = vsel %vm3042, %v5635, %v5818
      %v6020 = vsel %vm3042, %v5636, %v5820
      %v6021 = vsel %vm3042, %v5637, %v5822
      %v6022 = vsel %vm3042, %v5638, %v5824
      %v6023 = vsel %vm3042, %v5639, %v5826
      %v6024 = vsel %vm3042, %v5640, %v5828
      %v6025 = vsel %vm3042, %v5641, %v5830
      %v6026 = vsel %vm3042, %v5642, %v5832
      %v6027 = vsel %vm3042, %v5643, %v5834
      %v6028 = vsel %vm3042, %v5644, %v5836
      %v6029 = vsel %vm3042, %v5677, %v5902
      %v6030 = vsel %vm3042, %v5678, %v5904
      %v6031 = vsel %vm3042, %v5679, %v5906
      %v6032 = vsel %vm3042, %v5680, %v5908
      %v6033 = vsel %vm3042, %v5681, %v5910
      %v6034 = vsel %vm3042, %v5682, %v5912
      %v6035 = vsel %vm3042, %v5683, %v5914
      %v6036 = vsel %vm3042, %v5684, %v5916
      %v6037 = vsel %vm3042, %v5685, %v5918
      %v6038 = vsel %vm3042, %v5686, %v5920
      %v6039 = vsel %vm3042, %v5687, %v5922
      %v6040 = vsel %vm3042, %v5688, %v5924
      %v6041 = vsel %vm3042, %v5689, %v5926
      %v6042 = vsel %vm3042, %v5690, %v5928
      %v6043 = vsel %vm3042, %v5691, %v5930
      %v6044 = vsel %vm3042, %v5692, %v5932
      %v6045 = vsel %vm3042, %v5693, %v5934
      %v6046 = vsel %vm3042, %v5694, %v5936
      %v6047 = vsel %vm3042, %v5695, %v5938
      %v6048 = vsel %vm3042, %v5696, %v5940
      %v6049 = vsel %vm3042, %v5697, %v5942
      %v6050 = vsel %vm3042, %v5698, %v5944
      %v6051 = vsel %vm3042, %v5699, %v5946
      %v6052 = vsel %vm3042, %v5700, %v5948
      %v6053 = vsel %vm3042, %v5701, %v5950
      %v6054 = vsel %vm3042, %v5702, %v5952
      %v6055 = vsel %vm3042, %v5703, %v5954
      %v6056 = vsel %vm3042, %v5704, %v5956
      %v6057 = vsel %vm3042, %v5705, %v5958
      %v6058 = vsel %vm3042, %v5706, %v5960
      %v6059 = vsel %vm3042, %v5707, %v5962
      %v6060 = vsel %vm3042, %v5708, %v5964
      %v6061 = vld [vmem:[%s4 + $0x4] sm:$0xf]
      %v6062 = vpack.c.bf16 %v5998, %v5997
      %v6063 = vpack.c.bf16 %v6030, %v6029
      %v6064 = vpack.c.bf16 %v6000, %v5999
      %v6065 = vpack.c.bf16 %v6032, %v6031
      %v6066 = vpack.c.bf16 %v6002, %v6001
      %v6067 = vpack.c.bf16 %v6034, %v6033
      %v6068 = vpack.c.bf16 %v6004, %v6003
      %v6069 = vpack.c.bf16 %v6036, %v6035
      %v6070 = vpack.c.bf16 %v6006, %v6005
      %v6071 = vpack.c.bf16 %v6038, %v6037
      %v6072 = vpack.c.bf16 %v6008, %v6007
      %v6073 = vpack.c.bf16 %v6040, %v6039
      %v6074 = vpack.c.bf16 %v6010, %v6009
      %v6075 = vpack.c.bf16 %v6042, %v6041
      %v6076 = vpack.c.bf16 %v6012, %v6011
      %v6077 = vpack.c.bf16 %v6044, %v6043
      %v6078 = vpack.c.bf16 %v6014, %v6013
      %v6079 = vpack.c.bf16 %v6046, %v6045
      %v6080 = vpack.c.bf16 %v6016, %v6015
      %v6081 = vpack.c.bf16 %v6048, %v6047
      %v6082 = vpack.c.bf16 %v6018, %v6017
      %v6083 = vpack.c.bf16 %v6050, %v6049
      %v6084 = vpack.c.bf16 %v6020, %v6019
      %v6085 = vpack.c.bf16 %v6052, %v6051
      %v6086 = vpack.c.bf16 %v6022, %v6021
      %v6087 = vpack.c.bf16 %v6054, %v6053
      %v6088 = vpack.c.bf16 %v6024, %v6023
      %v6089 = vpack.c.bf16 %v6056, %v6055
      %v6090 = vpack.c.bf16 %v6026, %v6025
      %v6091 = vpack.c.bf16 %v6058, %v6057
      %v6092 = vpack.c.bf16 %v6028, %v6027
      %v6093 = vpack.c.bf16 %v6060, %v6059
      %v6096 = vunpack.c.l.s4 1983009808
      %v6097 = vunpack.c.0.s8 %v6096
      %v6098 = vlaneseq
      %v6099 = vshrl.u32 %v6098, 7
      %v6100 = vsub.s32 %v6097, %v6099
      %v6101 = vrot.slane %v6061, %v6100
      %v6102 = vcombine.high %v6101, %v6101
      %6105 = vmatprep.subr.bf16.mxu0 %v6063
      %6106 = vmatpush1.bf16.xpose.msra.mxu0 %v6062
      %6107 = vmatprep.subr.bf16.mxu0 %v6065
      %6108 = vmatpush1.bf16.xpose.msra.mxu0 %v6064
      %6109 = vmatprep.subr.bf16.mxu0 %v6067
      %6110 = vmatpush1.bf16.xpose.msra.mxu0 %v6066
      %6111 = vmatprep.subr.bf16.mxu0 %v6069
      %6112 = vmatpush1.bf16.xpose.msra.mxu0 %v6068
      %6113 = vmatprep.subr.bf16.mxu0 %v6071
      %6114 = vmatpush1.bf16.xpose.msra.mxu0 %v6070
      %6115 = vmatprep.subr.bf16.mxu0 %v6073
      %6116 = vmatpush1.bf16.xpose.msra.mxu0 %v6072
      %6117 = vmatprep.subr.bf16.mxu0 %v6075
      %6118 = vmatpush1.bf16.xpose.msra.mxu0 %v6074
      %6119 = vmatprep.subr.bf16.mxu0 %v6077
      %6120 = vmatpush1.bf16.xpose.msra.mxu0 %v6076
      %6121 = vmatprep.subr.bf16.mxu0 %v6079
      %6122 = vmatpush1.bf16.xpose.msra.mxu0 %v6078
      %6123 = vmatprep.subr.bf16.mxu0 %v6081
      %6124 = vmatpush1.bf16.xpose.msra.mxu0 %v6080
      %6125 = vmatprep.subr.bf16.mxu0 %v6083
      %6126 = vmatpush1.bf16.xpose.msra.mxu0 %v6082
      %6127 = vmatprep.subr.bf16.mxu0 %v6085
      %6128 = vmatpush1.bf16.xpose.msra.mxu0 %v6084
      %6129 = vmatprep.subr.bf16.mxu0 %v6087
      %6130 = vmatpush1.bf16.xpose.msra.mxu0 %v6086
      %6131 = vmatprep.subr.bf16.mxu0 %v6089
      %6132 = vmatpush1.bf16.xpose.msra.mxu0 %v6088
      %6133 = vmatprep.subr.bf16.mxu0 %v6091
      %6134 = vmatpush1.bf16.xpose.msra.mxu0 %v6090
      %6135 = vmatprep.subr.bf16.mxu0 %v6093
      %6136 = vmatpush1.bf16.xpose.msra.mxu0 %v6092
      %6137 = vmatprep.mubr.bf16.mxu0 %v6102
      %6138 = vmatmul.mubr.bf16.gmra.mrb[0].mxu0 %v6101
      %v6139 = vpop.f32.mrb[0].mxu0
      %v6140 = vadd.f32 0.0, %v6139
      %v6141 = vpop.f32.mrb[0].mxu0
      %v6142 = vadd.f32 0.0, %v6141
      %v6143 = vpop.f32.mrb[0].mxu0
      %v6144 = vpop.f32.mrb[0].mxu0
      %6145 = vdwg.mxu0
      %v6148 = vunpack.c.l.s4 1983009808
      %v6149 = vunpack.c.0.s8 %v6148
      %v6150 = vlaneseq
      %v6151 = vshrl.u32 %v6150, 7
      %v6152 = vsub.s32 %v6149, %v6151
      %v6153 = vrot.slane %v5580, %v6152
      %v6154 = vcombine.high %v6153, %v6153
      %6157 = vmatprep.subr.bf16.mxu0 %v5582
      %6158 = vmatpush1.bf16.xpose.msra.mxu0 %v5581
      %6159 = vmatprep.subr.bf16.mxu0 %v5584
      %6160 = vmatpush1.bf16.xpose.msra.mxu0 %v5583
      %6161 = vmatprep.subr.bf16.mxu0 %v5586
      %6162 = vmatpush1.bf16.xpose.msra.mxu0 %v5585
      %6163 = vmatprep.subr.bf16.mxu0 %v5588
      %6164 = vmatpush1.bf16.xpose.msra.mxu0 %v5587
      %6165 = vmatprep.subr.bf16.mxu0 %v5590
      %6166 = vmatpush1.bf16.xpose.msra.mxu0 %v5589
      %6167 = vmatprep.subr.bf16.mxu0 %v5592
      %6168 = vmatpush1.bf16.xpose.msra.mxu0 %v5591
      %6169 = vmatprep.subr.bf16.mxu0 %v5594
      %6170 = vmatpush1.bf16.xpose.msra.mxu0 %v5593
      %6171 = vmatprep.subr.bf16.mxu0 %v5596
      %6172 = vmatpush1.bf16.xpose.msra.mxu0 %v5595
      %6173 = vmatprep.subr.bf16.mxu0 %v5598
      %6174 = vmatpush1.bf16.xpose.msra.mxu0 %v5597
      %6175 = vmatprep.subr.bf16.mxu0 %v5600
      %6176 = vmatpush1.bf16.xpose.msra.mxu0 %v5599
      %6177 = vmatprep.subr.bf16.mxu0 %v5602
      %6178 = vmatpush1.bf16.xpose.msra.mxu0 %v5601
      %6179 = vmatprep.subr.bf16.mxu0 %v5604
      %6180 = vmatpush1.bf16.xpose.msra.mxu0 %v5603
      %6181 = vmatprep.subr.bf16.mxu0 %v5606
      %6182 = vmatpush1.bf16.xpose.msra.mxu0 %v5605
      %6183 = vmatprep.subr.bf16.mxu0 %v5608
      %6184 = vmatpush1.bf16.xpose.msra.mxu0 %v5607
      %6185 = vmatprep.subr.bf16.mxu0 %v5610
      %6186 = vmatpush1.bf16.xpose.msra.mxu0 %v5609
      %6187 = vmatprep.subr.bf16.mxu0 %v5612
      %6188 = vmatpush1.bf16.xpose.msra.mxu0 %v5611
      %6189 = vmatprep.mubr.bf16.mxu0 %v6154
      %6190 = vmatmul.mubr.bf16.gmra.mrb[0].mxu0 %v6153
      %v6191 = vpop.f32.mrb[0].mxu0
      %v6192 = vadd.f32 %v6140, %v6191
      %v6193 = vpop.f32.mrb[0].mxu0
      %v6194 = vadd.f32 %v6142, %v6193
      %v6195 = vpop.f32.mrb[0].mxu0
      %v6196 = vpop.f32.mrb[0].mxu0
      %6197 = vdwg.mxu0
      %v6198 = vld [vmem:[%s5048 + $0x2] sm:$0xff]
      %v6199 = vld [vmem:[%s5048 + $0xa] sm:$0xff]
      %v6200 = vld [vmem:[%s5048 + $0x1a] sm:$0xff]
      %v6201 = vld [vmem:[%s5048 + $0x22] sm:$0xff]
      %v6202 = vld [vmem:[%s5048 + $0x32] sm:$0xff]
      %v6203 = vld [vmem:[%s5048 + $0x3a] sm:$0xff]
      %v6204 = vld [vmem:[%s5048 + $0x4a] sm:$0xff]
      %v6205 = vld [vmem:[%s5048 + $0x52] sm:$0xff]
      %v6206 = vld [vmem:[%s5048 + $0x62] sm:$0xff]
      %v6207 = vld [vmem:[%s5048 + $0x6a] sm:$0xff]
      %v6208 = vld [vmem:[%s5048 + $0x7a] sm:$0xff]
      %v6209 = vld [vmem:[%s5048 + $0x82] sm:$0xff]
      %v6210 = vld [vmem:[%s5048 + $0x92] sm:$0xff]
      %v6211 = vld [vmem:[%s5048 + $0x9a] sm:$0xff]
      %v6212 = vld [vmem:[%s5048 + $0xaa] sm:$0xff]
      %v6213 = vld [vmem:[%s5048 + $0xb2] sm:$0xff]
      %v6214 = vld [vmem:[%s5048 + $0xc2] sm:$0xff]
      %v6215 = vld [vmem:[%s5048 + $0xca] sm:$0xff]
      %v6216 = vld [vmem:[%s5048 + $0xda] sm:$0xff]
      %v6217 = vld [vmem:[%s5048 + $0xe2] sm:$0xff]
      %v6218 = vld [vmem:[%s5048 + $0xf2] sm:$0xff]
      %v6219 = vld [vmem:[%s5048 + $0xfa] sm:$0xff]
      %v6220 = vld [vmem:[%s5048 + $0x10a] sm:$0xff]
      %v6221 = vld [vmem:[%s5048 + $0x112] sm:$0xff]
      %v6222 = vld [vmem:[%s5048 + $0x122] sm:$0xff]
      %v6223 = vld [vmem:[%s5048 + $0x12a] sm:$0xff]
      %v6224 = vld [vmem:[%s5048 + $0x13a] sm:$0xff]
      %v6225 = vld [vmem:[%s5048 + $0x142] sm:$0xff]
      %v6226 = vld [vmem:[%s5048 + $0x152] sm:$0xff]
      %v6227 = vld [vmem:[%s5048 + $0x15a] sm:$0xff]
      %v6228 = vld [vmem:[%s5048 + $0x16a] sm:$0xff]
      %v6229 = vld [vmem:[%s5048 + $0x172] sm:$0xff]
      %v6230 = vld [vmem:[%s4 + $0x8] sm:$0x3]
      %v6231 = vpack.c.bf16 %v6199, %v6198
      %v6232 = vpack.c.bf16 %v6201, %v6200
      %v6233 = vpack.c.bf16 %v6203, %v6202
      %v6234 = vpack.c.bf16 %v6205, %v6204
      %v6235 = vpack.c.bf16 %v6207, %v6206
      %v6236 = vpack.c.bf16 %v6209, %v6208
      %v6237 = vpack.c.bf16 %v6211, %v6210
      %v6238 = vpack.c.bf16 %v6213, %v6212
      %v6239 = vpack.c.bf16 %v6215, %v6214
      %v6240 = vpack.c.bf16 %v6217, %v6216
      %v6241 = vpack.c.bf16 %v6219, %v6218
      %v6242 = vpack.c.bf16 %v6221, %v6220
      %v6243 = vpack.c.bf16 %v6223, %v6222
      %v6244 = vpack.c.bf16 %v6225, %v6224
      %v6245 = vpack.c.bf16 %v6227, %v6226
      %v6246 = vpack.c.bf16 %v6229, %v6228
      %v6248 = vsel %vm3042, %v6230, 0
      %v6251 = vsel %vm3042, %v6231, 0
      %v6254 = vsel %vm3042, %v6232, 0
      %v6257 = vsel %vm3042, %v6233, 0
      %v6260 = vsel %vm3042, %v6234, 0
      %v6263 = vsel %vm3042, %v6235, 0
      %v6266 = vsel %vm3042, %v6236, 0
      %v6269 = vsel %vm3042, %v6237, 0
      %v6272 = vsel %vm3042, %v6238, 0
      %v6275 = vsel %vm3042, %v6239, 0
      %v6278 = vsel %vm3042, %v6240, 0
      %v6281 = vsel %vm3042, %v6241, 0
      %v6284 = vsel %vm3042, %v6242, 0
      %v6287 = vsel %vm3042, %v6243, 0
      %v6290 = vsel %vm3042, %v6244, 0
      %v6293 = vsel %vm3042, %v6245, 0
      %v6296 = vsel %vm3042, %v6246, 0
      %6298 = vmatprep.subr.bf16.mxu0 0
      %6299 = vmatpush1.bf16.xpose.msra.mxu0 %v6251
      %6300 = vmatprep.subr.bf16.mxu0 0
      %6301 = vmatpush1.bf16.xpose.msra.mxu0 %v6254
      %6302 = vmatprep.subr.bf16.mxu0 0
      %6303 = vmatpush1.bf16.xpose.msra.mxu0 %v6257
      %6304 = vmatprep.subr.bf16.mxu0 0
      %6305 = vmatpush1.bf16.xpose.msra.mxu0 %v6260
      %6306 = vmatprep.subr.bf16.mxu0 0
      %6307 = vmatpush1.bf16.xpose.msra.mxu0 %v6263
      %6308 = vmatprep.subr.bf16.mxu0 0
      %6309 = vmatpush1.bf16.xpose.msra.mxu0 %v6266
      %6310 = vmatprep.subr.bf16.mxu0 0
      %6311 = vmatpush1.bf16.xpose.msra.mxu0 %v6269
      %6312 = vmatprep.subr.bf16.mxu0 0
      %6313 = vmatpush1.bf16.xpose.msra.mxu0 %v6272
      %6314 = vmatprep.subr.bf16.mxu0 0
      %6315 = vmatpush1.bf16.xpose.msra.mxu0 %v6275
      %6316 = vmatprep.subr.bf16.mxu0 0
      %6317 = vmatpush1.bf16.xpose.msra.mxu0 %v6278
      %6318 = vmatprep.subr.bf16.mxu0 0
      %6319 = vmatpush1.bf16.xpose.msra.mxu0 %v6281
      %6320 = vmatprep.subr.bf16.mxu0 0
      %6321 = vmatpush1.bf16.xpose.msra.mxu0 %v6284
      %6322 = vmatprep.subr.bf16.mxu0 0
      %6323 = vmatpush1.bf16.xpose.msra.mxu0 %v6287
      %6324 = vmatprep.subr.bf16.mxu0 0
      %6325 = vmatpush1.bf16.xpose.msra.mxu0 %v6290
      %6326 = vmatprep.subr.bf16.mxu0 0
      %6327 = vmatpush1.bf16.xpose.msra.mxu0 %v6293
      %6328 = vmatprep.subr.bf16.mxu0 0
      %6329 = vmatpush1.bf16.xpose.msra.mxu0 %v6296
      %6330 = vmatprep.mubr.bf16.mxu0 0
      %6331 = vmatmul.mubr.bf16.gmra.mrb[0].mxu0 %v6248
      %v6332 = vpop.f32.mrb[0].mxu0
      %v6333 = vadd.f32 0.0, %v6332
      %v6334 = vpop.f32.mrb[0].mxu0
      %v6335 = vadd.f32 0.0, %v6334
      %v6336 = vpop.f32.mrb[0].mxu0
      %v6337 = vpop.f32.mrb[0].mxu0
      %6338 = vdwg.mxu0
      %v6339 = vadd.f32 %v6192, %v6333
      %v6340 = vadd.f32 %v6194, %v6335
      %v6341 = vld [vmem:[%s234] sm:$0xff]
      %v6343 = vcombine.high %v6341, %v6341
      %v6345 = vsel %vm250, %v6341, 0.0
      %v6346 = vsel %vm250, %v6343, 0.0
      %v6347 = vadd.f32 %v6345, %v6346
      %6348 = vadd.xlane.f32.xlu0 %v6347
      %v6349 = vpop.xlane.xlu0 %6348
      %v6350 = vmul.f32 %v6349, %v256
      %v6353 = vunpack.c.l.s4 839922192
      %v6354 = vunpack.c.0.s8 %v6353
      %v6355 = vlaneseq
      %v6356 = vshrl.u32 %v6355, 7
      %v6357 = vsub.s32 %v6354, %v6356
      %v6358 = vrot.slane %v6350, %v6357
      %v6360 = vsub.f32 %v6341, %v6358
      %v6361 = vmul.f32 %v6360, %v6360
      %v6363 = vcombine.high %v6361, %v6361
      %v6365 = vsel %vm250, %v6361, 0.0
      %v6366 = vsel %vm250, %v6363, 0.0
      %v6367 = vadd.f32 %v6365, %v6366
      %6368 = vadd.xlane.f32.xlu0 %v6367
      %v6369 = vpop.xlane.xlu0 %6368
      %v6370 = vrcp.pop 255.0
      %v6371 = vmul.f32 %v6369, %v6370
      %v6372 = vrsqrt.pop %v6371
      %v6373 = vmul.f32 %v6371, %v6372
      %vm6374 = vcmp.eq.f32.partialorder %v6371, inf
      %v6375 = vsel %vm6374, %v6371, %v6373
      %vm6376 = vcmp.eq.f32.partialorder %v6371, 0.0
      %v6377 = vand.u32 %v6371, 2147483648
      %v6378 = vsel %vm6376, %v6377, %v6375
      %v6379 = vmul.f32 %v6378, %v6339
      %v6380 = vmul.f32 %v6378, %v6340
      %v6383 = vcombine.low %v6379, %v6380
      %v6385 = vadd.f32 %v6341, %v6383
      %6386 = vst [vmem:[%s244] sm:$0xff] %v6385
      %p6387 = scmp.lt.s32.totalorder %s16, 1
      %s6388 = scalar_select %p6387, %s16, 1
      %s6389 = smul.addr %s6388, 2
      %s6390 = smul.addr %s6389, 4
      %s6391 = scalar_lea.vmem %s5, %s6390
      // Predicated region
      $region41: #{spatial_offset_block_forward.1} parent=39 // pred_check
        %p6392 = pneg %p149
      $region42: #{spatial_offset_block_forward.1} parent=39 // pred_check_branch
        %6394 = sbr.rel (%p6392) target = $region44
      $region43: #{spatial_offset_block_forward.1} parent=39 // pred_region
        _
      $region44: #{spatial_offset_block_forward.1} parent=39 // pred_fallthru
        _
    $region40: #{spatial_offset_block_forward.1} parent=5 // pred_fallthru
      _
    %p6395 = scmp.le.s32.totalorder 2, %s11
    // Predicated region
    $region45: #{spatial_offset_block_forward.1} parent=5 // pred_check
      %p6396 = pneg %p6395
    $region46: #{spatial_offset_block_forward.1} parent=5 // pred_check_branch
      %6398 = sbr.rel (%p6396) target = $region48
    $region47: #{spatial_offset_block_forward.1} parent=5 // pred_region
      %s6399 = ssub.s32 %s11, 2
      // Predicated region
      $region49: #{spatial_offset_block_forward.1} parent=47 // pred_check
        %p6400 = pneg %p155
      $region50: #{spatial_offset_block_forward.1} parent=47 // pred_check_branch
        %6402 = sbr.rel (%p6400) target = $region52
      $region51: #{spatial_offset_block_forward.1} parent=47 // pred_region
        %p6403 = scmp.lt.s32.totalorder %s17, 1
        %s6404 = scalar_select %p6403, %s17, 1
        %s6405 = smul.addr %s6404, 2
        %s6406 = smul.addr %s6405, 4
        %s6407 = scalar_lea.vmem %s5, %s6406
      $region52: #{spatial_offset_block_forward.1} parent=47 // pred_fallthru
        _
    $region48: #{spatial_offset_block_forward.1} parent=5 // pred_fallthru
      _
  $region6: #{spatial_offset_block_forward.1} parent=0 // loop_footer
    %s15 = sadd.s32 1, %s11
  $region7: #{spatial_offset_block_forward.1} parent=0 // loop_footer_branch
    %10 = sbr.rel target = $region3
  $region8: #{spatial_offset_block_forward.1} parent=0 // loop_exit
    _

</llo_original>
